<compile_context>
chip_gen: v7x
topology: tpu7x:2x2x1
jax: 0.10.0
libtpu: 0.0.40
codegen_flags: <defaults>
</compile_context>

<pallas_src>
import functools

import jax
import jax.numpy as jnp
from jax import lax
from jax.experimental import pallas as pl
from jax.experimental.pallas import tpu as pltpu


# ----------------------------------------------------------------------------
# Pallas kernel 1: fused conv (phase-decomposed, shift-folded GEMM) + bias + act
# ----------------------------------------------------------------------------
def _conv_kernel(x_ref, w_ref, b_ref, o_ref, *, taps, act, slope):
    # x_ref : (P, Hh, Whq*Cin)    bf16   (P = stride*stride phases of one image)
    # w_ref : (G, Whq*Cin, Wout*Cout) bf16 (kw taps folded into block weights)
    # b_ref : (1, Wout*Cout)      f32
    # o_ref : (1, Hout, Wout*Cout) bf16  (lane-dense output slab)
    hout = o_ref.shape[1]
    acc = jnp.zeros(o_ref.shape[1:], jnp.float32)
    for g, (ph, oi) in enumerate(taps):
        lhs = x_ref[ph, oi:oi + hout, :]                       # (Hout, Whq*Cin)
        acc = acc + jnp.dot(lhs, w_ref[g],
                            preferred_element_type=jnp.float32)
    r = acc + b_ref[...]
    if act == "lrelu":
        r = jnp.where(r > 0, r, slope * r)
    elif act == "tanh":
        r = jnp.tanh(r)
    o_ref[0] = r.astype(o_ref.dtype)


def _expand_weights(w, stride, wout, whq):
    """Fold the kw column taps (and their shifts) into block GEMM weights.

    Returns:
      W_exp : (G, Whq*Cin, Wout*Cout) bf16
      taps  : static python list of (phase_index, row_offset) per group
    such that  out[h, w*Cout+f] = sum_g dot(x_phase[ph_g][oi_g+h, :], W_g)
    reproduces the dense conv exactly.
    """
    kh, kw, cin, cout = w.shape
    s = stride
    eye = jnp.eye(wout, dtype=jnp.float32)
    blocks, taps = [], []
    for i in range(kh):
        for q in range(s):
            js = [j for j in range(kw) if j % s == q]
            if not js:
                continue
            blk = jnp.zeros((whq, cin, wout, cout), jnp.float32)
            for j in js:
                oj = j // s
                sel = jnp.zeros((whq, wout), jnp.float32)
                sel = sel.at[oj:oj + wout, :].set(eye)          # sel[w+oj, w] = 1
                blk = blk + sel[:, None, :, None] * \
                    w[i, j].astype(jnp.float32)[None, :, None, :]
            blocks.append(blk.reshape(whq * cin, wout * cout))
            taps.append(((i % s) * s + q, i // s))
    w_exp = jnp.stack(blocks, axis=0).astype(jnp.bfloat16)
    return w_exp, taps


def conv2d(x, w, b, *, stride=1, padding=1, act="lrelu", slope=0.2):
    """x: NHWC (any float dtype), w: (kh,kw,Cin,Cout), b: (Cout,) -> NHWC bf16."""
    B, H, W, Cin = x.shape
    kh, kw, _, Cout = w.shape
    s = stride
    Hout = (H + 2 * padding - kh) // s + 1
    Wout = (W + 2 * padding - kw) // s + 1
    Hh = max((kh - 1) // s + Hout, (H + 2 * padding + s - 1) // s)
    Whq = max((kw - 1) // s + Wout, (W + 2 * padding + s - 1) // s)
    Hp2, Wp2 = s * Hh, s * Whq

    # spatial zero-pad (extra bottom/right rows are never read by valid taps)
    xp = jnp.pad(x, ((0, 0),
                     (padding, Hp2 - H - padding),
                     (padding, Wp2 - W - padding),
                     (0, 0)))
    # phase decomposition (space-to-batch); a plain free reshape when stride == 1
    P = s * s
    xph = (xp.reshape(B, Hh, s, Whq, s, Cin)
             .transpose(0, 2, 4, 1, 3, 5)
             .reshape(B * P, Hh, Whq * Cin)).astype(jnp.bfloat16)

    w_exp, taps = _expand_weights(w, s, Wout, Whq)
    b_exp = jnp.tile(b, Wout).reshape(1, Wout * Cout).astype(jnp.float32)
    G = w_exp.shape[0]

    out = pl.pallas_call(
        functools.partial(_conv_kernel, taps=taps, act=act, slope=slope),
        out_shape=jax.ShapeDtypeStruct((B, Hout, Wout * Cout), jnp.bfloat16),
        grid_spec=pltpu.PrefetchScalarGridSpec(
            num_scalar_prefetch=0,
            grid=(B,),
            in_specs=[
                pl.BlockSpec((P, Hh, Whq * Cin), lambda i: (i, 0, 0)),
                pl.BlockSpec((G, Whq * Cin, Wout * Cout), lambda i: (0, 0, 0)),
                pl.BlockSpec((1, Wout * Cout), lambda i: (0, 0)),
            ],
            out_specs=pl.BlockSpec((1, Hout, Wout * Cout), lambda i: (i, 0, 0)),
        ),
        compiler_params=pltpu.CompilerParams(dimension_semantics=("parallel",)),
    )(xph, w_exp, b_exp)
    return out.reshape(B, Hout, Wout, Cout)


# ----------------------------------------------------------------------------
# Pallas kernel 2: in-kernel correlation cost volume + online soft-argmax disparity
# ----------------------------------------------------------------------------
def _disp_kernel(fr_ref, fo_ref, o_ref, *, ndisp, direction):
    # fr_ref / fo_ref : (1, H, W, C) bf16; o_ref : (1, H, W) f32
    fr = fr_ref[0].astype(jnp.float32)
    fo = fo_ref[0].astype(jnp.float32)
    H, W, C = fr.shape
    NEG = jnp.float32(-1e30)
    inv_c = jnp.float32(1.0 / C)
    w_idx = lax.broadcasted_iota(jnp.int32, (H, W), 1)

    m = jnp.full((H, W), NEG, jnp.float32)
    l = jnp.zeros((H, W), jnp.float32)
    acc = jnp.zeros((H, W), jnp.float32)

    for d in range(ndisp):
        if d >= W:
            cost = jnp.full((H, W), NEG, jnp.float32)
        else:
            if d == 0:
                fos = fo
                cost = jnp.sum(fr * fos, axis=-1) * inv_c
            elif direction > 0:
                # left disparity: match the other view at column (w - d)
                fos = jnp.concatenate(
                    [jnp.zeros((H, d, C), jnp.float32), fo[:, :W - d, :]], axis=1)
                cost = jnp.sum(fr * fos, axis=-1) * inv_c
                cost = jnp.where(w_idx >= d, cost, NEG)
            else:
                # right disparity: match the other view at column (w + d)
                fos = jnp.concatenate(
                    [fo[:, d:, :], jnp.zeros((H, d, C), jnp.float32)], axis=1)
                cost = jnp.sum(fr * fos, axis=-1) * inv_c
                cost = jnp.where(w_idx < (W - d), cost, NEG)
        # online softmax-over-disparity accumulation
        m_new = jnp.maximum(m, cost)
        alpha = jnp.exp(m - m_new)
        p = jnp.exp(cost - m_new)
        l = l * alpha + p
        acc = acc * alpha + p * jnp.float32(d)
        m = m_new

    o_ref[0] = (acc * pl.reciprocal(l, approx=True)).astype(o_ref.dtype)


def soft_argmin_disp(f_ref, f_other, ndisp, direction):
    """Soft-argmax over a correlation volume generated in-kernel (no HBM blowup)."""
    N, H, W, C = f_ref.shape
    out = pl.pallas_call(
        functools.partial(_disp_kernel, ndisp=ndisp, direction=direction),
        out_shape=jax.ShapeDtypeStruct((N, H, W), jnp.float32),
        grid_spec=pltpu.PrefetchScalarGridSpec(
            num_scalar_prefetch=0,
            grid=(N,),
            in_specs=[
                pl.BlockSpec((1, H, W, C), lambda i: (i, 0, 0, 0)),
                pl.BlockSpec((1, H, W, C), lambda i: (i, 0, 0, 0)),
            ],
            out_specs=pl.BlockSpec((1, H, W), lambda i: (i, 0, 0)),
        ),
        compiler_params=pltpu.CompilerParams(dimension_semantics=("parallel",)),
    )(f_ref.astype(jnp.bfloat16), f_other.astype(jnp.bfloat16))
    return out.reshape(N, H, W, 1)


# ----------------------------------------------------------------------------
# Sub-networks (siblings stacked along batch so shared-weight convs run once)
# ----------------------------------------------------------------------------
def mixnet_forward(p, x, y):
    N = x.shape[0]
    f1 = conv2d(jnp.concatenate([x, y], 0), *p["enc1"], stride=2, padding=1)
    f2 = conv2d(f1, *p["enc2"], stride=2, padding=1)
    fx1, fy1 = f1[:N], f1[N:]
    fx2, fy2 = f2[:N], f2[N:]
    m1_in = jnp.concatenate([jnp.concatenate([fx1, fy1], -1),
                             jnp.concatenate([fy1, fx1], -1)], 0)
    m1 = conv2d(m1_in, *p["mix1"], stride=1, padding=0)
    m2_in = jnp.concatenate([jnp.concatenate([fx2, fy2], -1),
                             jnp.concatenate([fy2, fx2], -1)], 0)
    m2 = conv2d(m2_in, *p["mix2"], stride=1, padding=0)
    return m1[:N], m1[N:], m2[:N], m2[N:]


def dispdecode_forward(p, xmix_2ngf, ymix_2ngf, maxdisp):
    N = xmix_2ngf.shape[0]
    ndisp = max(maxdisp // 4, 1)
    f = conv2d(jnp.concatenate([xmix_2ngf, ymix_2ngf], 0),
               *p["dfeat"], stride=1, padding=1)
    fx, fy = f[:N], f[N:]
    dl_q = soft_argmin_disp(fx, fy, ndisp, direction=+1)   # left disparity
    dr_q = soft_argmin_disp(fy, fx, ndisp, direction=-1)   # right disparity

    def up4(d):   # full-res output (nearest x4, scaled to full-res disparity units)
        return jnp.repeat(jnp.repeat(d, 4, axis=1), 4, axis=2) * 4.0

    def up2(d):   # half-res guidance; same values as up4 followed by ::2 subsample
        return jnp.repeat(jnp.repeat(d, 2, axis=1), 2, axis=2) * 4.0

    return {"depthl": up4(dl_q), "depthr": up4(dr_q)}, up2(dl_q)


def featmix_forward(p, xmix_ngf, ymix_ngf_det, guide_half_det, maxdisp):
    g = (guide_half_det * (1.0 / float(maxdisp))).astype(jnp.bfloat16)
    inp = jnp.concatenate([xmix_ngf, ymix_ngf_det, g], axis=-1)
    mixed = conv2d(inp, *p["fmix"], stride=1, padding=1)
    return xmix_ngf + mixed


def imgdecode_forward(p, x, y, xfeat, yfeat):
    N = x.shape[0]
    feats = jnp.concatenate([xfeat, yfeat], 0)
    up = jnp.repeat(jnp.repeat(feats, 2, axis=1), 2, axis=2)   # back to full res
    h = conv2d(up, *p["dec1"], stride=1, padding=1)
    imgs = jnp.concatenate([x, y], 0).astype(h.dtype)
    h = jnp.concatenate([h, imgs], axis=-1)
    o = conv2d(h, *p["dec2"], stride=1, padding=1, act="tanh")
    return o[:N], o[N:]


def iasmnet_forward(params, x_nchw, y_nchw, maxdisp):
    x = jnp.transpose(x_nchw, (0, 2, 3, 1)).astype(jnp.bfloat16)   # NCHW -> NHWC
    y = jnp.transpose(y_nchw, (0, 2, 3, 1)).astype(jnp.bfloat16)
    xmix_ngf, ymix_ngf, xmix_2ngf, ymix_2ngf = mixnet_forward(params["mix"], x, y)
    outputs, guide_half = dispdecode_forward(params["disp"], xmix_2ngf, ymix_2ngf,
                                             maxdisp)
    xmix_ngf_mix = featmix_forward(
        params["fm"], xmix_ngf,
        lax.stop_gradient(ymix_ngf),          # ymix_ngf.detach()
        lax.stop_gradient(guide_half),        # depthl.detach() (half-res guidance)
        maxdisp)
    ximg, yimg = imgdecode_forward(params["img"], x, y, xmix_ngf_mix, ymix_ngf)
    out = {k: jnp.transpose(v, (0, 3, 1, 2)).astype(jnp.float32)
           for k, v in outputs.items()}
    out["xout"] = jnp.transpose(ximg, (0, 3, 1, 2)).astype(jnp.float32)
    out["yout"] = jnp.transpose(yimg, (0, 3, 1, 2)).astype(jnp.float32)
    return out


# ----------------------------------------------------------------------------
# Deterministic parameter construction
# ----------------------------------------------------------------------------
class ParamGen:
    def __init__(self, key):
        self.key = key

    def conv(self, kh, kw, cin, cout):
        self.key, k1 = jax.random.split(self.key)
        w = jax.random.normal(k1, (kh, kw, cin, cout), jnp.float32) * 0.1
        b = jnp.zeros((cout,), jnp.float32)
        return (w, b)


def init_params(key, input_nc, output_nc, ngf):
    pg = ParamGen(key)
    return {
        "mix": {
            "enc1": pg.conv(3, 3, input_nc, ngf),
            "enc2": pg.conv(3, 3, ngf, 2 * ngf),
            "mix1": pg.conv(1, 1, 2 * ngf, ngf),
            "mix2": pg.conv(1, 1, 4 * ngf, 2 * ngf),
        },
        "disp": {"dfeat": pg.conv(3, 3, 2 * ngf, 2 * ngf)},
        "fm": {"fmix": pg.conv(3, 3, 2 * ngf + 1, ngf)},
        "img": {"dec1": pg.conv(3, 3, ngf, ngf),
                "dec2": pg.conv(3, 3, ngf + input_nc, output_nc)},
    }


if __name__ == "__main__":
    B, input_nc, output_nc, H, W = 2, 3, 3, 16, 16
    ngf, num_downs, maxdisp = 8, 3, 16

    key = jax.random.PRNGKey(0)
    kx, ky, kp = jax.random.split(key, 3)
    x = jax.random.normal(kx, (B, input_nc, H, W), jnp.float32)
    y = jax.random.normal(ky, (B, input_nc, H, W), jnp.float32)
    params = init_params(kp, input_nc, output_nc, ngf)

    fwd = jax.jit(functools.partial(iasmnet_forward, maxdisp=maxdisp))
    outs = fwd(params, x, y)
    jax.block_until_ready(outs)

    assert outs["xout"].shape == (B, output_nc, H, W)
    assert outs["yout"].shape == (B, output_nc, H, W)
    assert outs["depthl"].shape == (B, 1, H, W)
    assert outs["depthr"].shape == (B, 1, H, W)
    assert all(bool(jnp.all(jnp.isfinite(v))) for v in outs.values())
    print("KERNEL_OK")
</pallas_src>

<mosaic_0001>
module attributes {stable_mosaic.version = 11 : i64} {
  func.func @_conv_kernel(%arg0: i32, %arg1: memref<4x9x27xbf16, #tpu.memory_space<vmem>>, %arg2: memref<6x27x64xbf16, #tpu.memory_space<vmem>>, %arg3: memref<1x64xf32, #tpu.memory_space<vmem>>, %arg4: memref<1x8x64xbf16, #tpu.memory_space<vmem>>) attributes {dimension_semantics = [#tpu.dimension_semantics<parallel>], iteration_bounds = array<i64: 4>, scalar_prefetch = 0 : i64, scratch_operands = 0 : i64, tpu.core_type = #tpu.core_type<tc>, window_params = [{transform_indices = @transform_0, window_bounds = array<i64: 4, 9, 27>}, {pipeline_mode = #tpu.pipeline_mode<synchronous>, transform_indices = @transform_1, window_bounds = array<i64: 6, 27, 64>}, {pipeline_mode = #tpu.pipeline_mode<synchronous>, transform_indices = @transform_2, window_bounds = array<i64: 1, 64>}, {transform_indices = @transform_3, window_bounds = array<i64: 1, 8, 64>}]} {
    %cst = arith.constant 0.000000e+00 : f32
    %0 = vector.broadcast %cst : f32 to vector<8x64xf32>
    %c0 = arith.constant 0 : index
    %c0_0 = arith.constant 0 : index
    %c0_1 = arith.constant 0 : index
    %1 = vector.load %arg1[%c0, %c0_0, %c0_1] : memref<4x9x27xbf16, #tpu.memory_space<vmem>>, vector<1x8x27xbf16>
    %2 = vector.shape_cast %1 : vector<1x8x27xbf16> to vector<8x27xbf16>
    %c0_2 = arith.constant 0 : index
    %c0_3 = arith.constant 0 : index
    %c0_4 = arith.constant 0 : index
    %3 = vector.load %arg2[%c0_2, %c0_3, %c0_4] : memref<6x27x64xbf16, #tpu.memory_space<vmem>>, vector<1x27x64xbf16>
    %4 = vector.shape_cast %3 : vector<1x27x64xbf16> to vector<27x64xbf16>
    %cst_5 = arith.constant dense<0.000000e+00> : vector<8x64xf32>
    %5 = tpu.matmul %2, %4, %cst_5 {dimension_numbers = #tpu.dot_dimension_numbers<[1], [0], [0], [1], [0, 0, 1, 1], [], []>} : vector<8x27xbf16>, vector<27x64xbf16>, vector<8x64xf32> -> vector<8x64xf32>
    %6 = arith.addf %0, %5 : vector<8x64xf32>
    %c1 = arith.constant 1 : index
    %c0_6 = arith.constant 0 : index
    %c0_7 = arith.constant 0 : index
    %7 = vector.load %arg1[%c1, %c0_6, %c0_7] : memref<4x9x27xbf16, #tpu.memory_space<vmem>>, vector<1x8x27xbf16>
    %8 = vector.shape_cast %7 : vector<1x8x27xbf16> to vector<8x27xbf16>
    %c1_8 = arith.constant 1 : index
    %c0_9 = arith.constant 0 : index
    %c0_10 = arith.constant 0 : index
    %9 = vector.load %arg2[%c1_8, %c0_9, %c0_10] : memref<6x27x64xbf16, #tpu.memory_space<vmem>>, vector<1x27x64xbf16>
    %10 = vector.shape_cast %9 : vector<1x27x64xbf16> to vector<27x64xbf16>
    %cst_11 = arith.constant dense<0.000000e+00> : vector<8x64xf32>
    %11 = tpu.matmul %8, %10, %cst_11 {dimension_numbers = #tpu.dot_dimension_numbers<[1], [0], [0], [1], [0, 0, 1, 1], [], []>} : vector<8x27xbf16>, vector<27x64xbf16>, vector<8x64xf32> -> vector<8x64xf32>
    %12 = arith.addf %6, %11 : vector<8x64xf32>
    %c2 = arith.constant 2 : index
    %c0_12 = arith.constant 0 : index
    %c0_13 = arith.constant 0 : index
    %13 = vector.load %arg1[%c2, %c0_12, %c0_13] : memref<4x9x27xbf16, #tpu.memory_space<vmem>>, vector<1x8x27xbf16>
    %14 = vector.shape_cast %13 : vector<1x8x27xbf16> to vector<8x27xbf16>
    %c2_14 = arith.constant 2 : index
    %c0_15 = arith.constant 0 : index
    %c0_16 = arith.constant 0 : index
    %15 = vector.load %arg2[%c2_14, %c0_15, %c0_16] : memref<6x27x64xbf16, #tpu.memory_space<vmem>>, vector<1x27x64xbf16>
    %16 = vector.shape_cast %15 : vector<1x27x64xbf16> to vector<27x64xbf16>
    %cst_17 = arith.constant dense<0.000000e+00> : vector<8x64xf32>
    %17 = tpu.matmul %14, %16, %cst_17 {dimension_numbers = #tpu.dot_dimension_numbers<[1], [0], [0], [1], [0, 0, 1, 1], [], []>} : vector<8x27xbf16>, vector<27x64xbf16>, vector<8x64xf32> -> vector<8x64xf32>
    %18 = arith.addf %12, %17 : vector<8x64xf32>
    %c3 = arith.constant 3 : index
    %c0_18 = arith.constant 0 : index
    %c0_19 = arith.constant 0 : index
    %19 = vector.load %arg1[%c3, %c0_18, %c0_19] : memref<4x9x27xbf16, #tpu.memory_space<vmem>>, vector<1x8x27xbf16>
    %20 = vector.shape_cast %19 : vector<1x8x27xbf16> to vector<8x27xbf16>
    %c3_20 = arith.constant 3 : index
    %c0_21 = arith.constant 0 : index
    %c0_22 = arith.constant 0 : index
    %21 = vector.load %arg2[%c3_20, %c0_21, %c0_22] : memref<6x27x64xbf16, #tpu.memory_space<vmem>>, vector<1x27x64xbf16>
    %22 = vector.shape_cast %21 : vector<1x27x64xbf16> to vector<27x64xbf16>
    %cst_23 = arith.constant dense<0.000000e+00> : vector<8x64xf32>
    %23 = tpu.matmul %20, %22, %cst_23 {dimension_numbers = #tpu.dot_dimension_numbers<[1], [0], [0], [1], [0, 0, 1, 1], [], []>} : vector<8x27xbf16>, vector<27x64xbf16>, vector<8x64xf32> -> vector<8x64xf32>
    %24 = arith.addf %18, %23 : vector<8x64xf32>
    %c0_24 = arith.constant 0 : index
    %c1_25 = arith.constant 1 : index
    %c0_26 = arith.constant 0 : index
    %25 = vector.load %arg1[%c0_24, %c1_25, %c0_26] : memref<4x9x27xbf16, #tpu.memory_space<vmem>>, vector<1x8x27xbf16>
    %26 = vector.shape_cast %25 : vector<1x8x27xbf16> to vector<8x27xbf16>
    %c4 = arith.constant 4 : index
    %c0_27 = arith.constant 0 : index
    %c0_28 = arith.constant 0 : index
    %27 = vector.load %arg2[%c4, %c0_27, %c0_28] : memref<6x27x64xbf16, #tpu.memory_space<vmem>>, vector<1x27x64xbf16>
    %28 = vector.shape_cast %27 : vector<1x27x64xbf16> to vector<27x64xbf16>
    %cst_29 = arith.constant dense<0.000000e+00> : vector<8x64xf32>
    %29 = tpu.matmul %26, %28, %cst_29 {dimension_numbers = #tpu.dot_dimension_numbers<[1], [0], [0], [1], [0, 0, 1, 1], [], []>} : vector<8x27xbf16>, vector<27x64xbf16>, vector<8x64xf32> -> vector<8x64xf32>
    %30 = arith.addf %24, %29 : vector<8x64xf32>
    %c1_30 = arith.constant 1 : index
    %c1_31 = arith.constant 1 : index
    %c0_32 = arith.constant 0 : index
    %31 = vector.load %arg1[%c1_30, %c1_31, %c0_32] : memref<4x9x27xbf16, #tpu.memory_space<vmem>>, vector<1x8x27xbf16>
    %32 = vector.shape_cast %31 : vector<1x8x27xbf16> to vector<8x27xbf16>
    %c5 = arith.constant 5 : index
    %c0_33 = arith.constant 0 : index
    %c0_34 = arith.constant 0 : index
    %33 = vector.load %arg2[%c5, %c0_33, %c0_34] : memref<6x27x64xbf16, #tpu.memory_space<vmem>>, vector<1x27x64xbf16>
    %34 = vector.shape_cast %33 : vector<1x27x64xbf16> to vector<27x64xbf16>
    %cst_35 = arith.constant dense<0.000000e+00> : vector<8x64xf32>
    %35 = tpu.matmul %32, %34, %cst_35 {dimension_numbers = #tpu.dot_dimension_numbers<[1], [0], [0], [1], [0, 0, 1, 1], [], []>} : vector<8x27xbf16>, vector<27x64xbf16>, vector<8x64xf32> -> vector<8x64xf32>
    %36 = arith.addf %30, %35 : vector<8x64xf32>
    %c0_36 = arith.constant 0 : index
    %c0_37 = arith.constant 0 : index
    %37 = vector.load %arg3[%c0_36, %c0_37] : memref<1x64xf32, #tpu.memory_space<vmem>>, vector<1x64xf32>
    %38 = vector.broadcast %37 : vector<1x64xf32> to vector<8x64xf32>
    %39 = arith.addf %36, %38 : vector<8x64xf32>
    %cst_38 = arith.constant 0.000000e+00 : f32
    %40 = vector.broadcast %cst_38 : f32 to vector<8x64xf32>
    %41 = arith.cmpf ogt, %39, %40 : vector<8x64xf32>
    %cst_39 = arith.constant 2.000000e-01 : f32
    %42 = vector.broadcast %cst_39 : f32 to vector<8x64xf32>
    %43 = arith.mulf %42, %39 : vector<8x64xf32>
    %44 = arith.select %41, %39, %43 : vector<8x64xi1>, vector<8x64xf32>
    %45 = arith.truncf %44 : vector<8x64xf32> to vector<8x64xbf16>
    %c0_40 = arith.constant 0 : index
    %c0_41 = arith.constant 0 : index
    %c0_42 = arith.constant 0 : index
    %46 = vector.load %arg4[%c0_40, %c0_41, %c0_42] : memref<1x8x64xbf16, #tpu.memory_space<vmem>>, vector<1x8x64xbf16>
    %47 = vector.shape_cast %46 : vector<1x8x64xbf16> to vector<8x64xbf16>
    %48 = vector.shape_cast %45 : vector<8x64xbf16> to vector<1x8x64xbf16>
    tpu.vector_store %arg4[%c0_40, %c0_41, %c0_42], %48 {strides = array<i32>} : memref<1x8x64xbf16, #tpu.memory_space<vmem>>, vector<1x8x64xbf16>,
    return
  }
  func.func @transform_0(%arg0: i32) -> (i32, i32, i32) {
    %c0_i32 = arith.constant 0 : i32
    %c0_i32_0 = arith.constant 0 : i32
    %c0_i32_1 = arith.constant 0 : i32
    return %arg0, %c0_i32, %c0_i32_0 : i32, i32, i32
  }
  func.func @transform_1(%arg0: i32) -> (i32, i32, i32) {
    %c0_i32 = arith.constant 0 : i32
    %c0_i32_0 = arith.constant 0 : i32
    %c0_i32_1 = arith.constant 0 : i32
    %c0_i32_2 = arith.constant 0 : i32
    return %c0_i32, %c0_i32_0, %c0_i32_1 : i32, i32, i32
  }
  func.func @transform_2(%arg0: i32) -> (i32, i32) {
    %c0_i32 = arith.constant 0 : i32
    %c0_i32_0 = arith.constant 0 : i32
    %c0_i32_1 = arith.constant 0 : i32
    return %c0_i32, %c0_i32_0 : i32, i32
  }
  func.func @transform_3(%arg0: i32) -> (i32, i32, i32) {
    %c0_i32 = arith.constant 0 : i32
    %c0_i32_0 = arith.constant 0 : i32
    %c0_i32_1 = arith.constant 0 : i32
    return %arg0, %c0_i32, %c0_i32_0 : i32, i32, i32
  }
}

module attributes {stable_mosaic.version = 11 : i64} {
  func.func @_conv_kernel(%arg0: i32, %arg1: memref<1x8x128xbf16, #tpu.memory_space<vmem>>, %arg2: memref<1x128x64xbf16, #tpu.memory_space<vmem>>, %arg3: memref<1x64xf32, #tpu.memory_space<vmem>>, %arg4: memref<1x8x64xbf16, #tpu.memory_space<vmem>>) attributes {dimension_semantics = [#tpu.dimension_semantics<parallel>], iteration_bounds = array<i64: 4>, scalar_prefetch = 0 : i64, scratch_operands = 0 : i64, tpu.core_type = #tpu.core_type<tc>, window_params = [{transform_indices = @transform_0, window_bounds = array<i64: 1, 8, 128>}, {pipeline_mode = #tpu.pipeline_mode<synchronous>, transform_indices = @transform_1, window_bounds = array<i64: 1, 128, 64>}, {pipeline_mode = #tpu.pipeline_mode<synchronous>, transform_indices = @transform_2, window_bounds = array<i64: 1, 64>}, {transform_indices = @transform_3, window_bounds = array<i64: 1, 8, 64>}]} {
    %cst = arith.constant 0.000000e+00 : f32
    %0 = vector.broadcast %cst : f32 to vector<8x64xf32>
    %c0 = arith.constant 0 : index
    %c0_0 = arith.constant 0 : index
    %c0_1 = arith.constant 0 : index
    %1 = vector.load %arg1[%c0, %c0_0, %c0_1] : memref<1x8x128xbf16, #tpu.memory_space<vmem>>, vector<1x8x128xbf16>
    %2 = vector.shape_cast %1 : vector<1x8x128xbf16> to vector<8x128xbf16>
    %c0_2 = arith.constant 0 : index
    %c0_3 = arith.constant 0 : index
    %c0_4 = arith.constant 0 : index
    %3 = vector.load %arg2[%c0_2, %c0_3, %c0_4] : memref<1x128x64xbf16, #tpu.memory_space<vmem>>, vector<1x128x64xbf16>
    %4 = vector.shape_cast %3 : vector<1x128x64xbf16> to vector<128x64xbf16>
    %cst_5 = arith.constant dense<0.000000e+00> : vector<8x64xf32>
    %5 = tpu.matmul %2, %4, %cst_5 {dimension_numbers = #tpu.dot_dimension_numbers<[1], [0], [0], [1], [0, 0, 1, 1], [], []>} : vector<8x128xbf16>, vector<128x64xbf16>, vector<8x64xf32> -> vector<8x64xf32>
    %6 = arith.addf %0, %5 : vector<8x64xf32>
    %c0_6 = arith.constant 0 : index
    %c0_7 = arith.constant 0 : index
    %7 = vector.load %arg3[%c0_6, %c0_7] : memref<1x64xf32, #tpu.memory_space<vmem>>, vector<1x64xf32>
    %8 = vector.broadcast %7 : vector<1x64xf32> to vector<8x64xf32>
    %9 = arith.addf %6, %8 : vector<8x64xf32>
    %cst_8 = arith.constant 0.000000e+00 : f32
    %10 = vector.broadcast %cst_8 : f32 to vector<8x64xf32>
    %11 = arith.cmpf ogt, %9, %10 : vector<8x64xf32>
    %cst_9 = arith.constant 2.000000e-01 : f32
    %12 = vector.broadcast %cst_9 : f32 to vector<8x64xf32>
    %13 = arith.mulf %12, %9 : vector<8x64xf32>
    %14 = arith.select %11, %9, %13 : vector<8x64xi1>, vector<8x64xf32>
    %15 = arith.truncf %14 : vector<8x64xf32> to vector<8x64xbf16>
    %c0_10 = arith.constant 0 : index
    %c0_11 = arith.constant 0 : index
    %c0_12 = arith.constant 0 : index
    %16 = vector.load %arg4[%c0_10, %c0_11, %c0_12] : memref<1x8x64xbf16, #tpu.memory_space<vmem>>, vector<1x8x64xbf16>
    %17 = vector.shape_cast %16 : vector<1x8x64xbf16> to vector<8x64xbf16>
    %18 = vector.shape_cast %15 : vector<8x64xbf16> to vector<1x8x64xbf16>
    tpu.vector_store %arg4[%c0_10, %c0_11, %c0_12], %18 {strides = array<i32>} : memref<1x8x64xbf16, #tpu.memory_space<vmem>>, vector<1x8x64xbf16>,
    return
  }
  func.func @transform_0(%arg0: i32) -> (i32, i32, i32) {
    %c0_i32 = arith.constant 0 : i32
    %c0_i32_0 = arith.constant 0 : i32
    %c0_i32_1 = arith.constant 0 : i32
    return %arg0, %c0_i32, %c0_i32_0 : i32, i32, i32
  }
  func.func @transform_1(%arg0: i32) -> (i32, i32, i32) {
    %c0_i32 = arith.constant 0 : i32
    %c0_i32_0 = arith.constant 0 : i32
    %c0_i32_1 = arith.constant 0 : i32
    %c0_i32_2 = arith.constant 0 : i32
    return %c0_i32, %c0_i32_0, %c0_i32_1 : i32, i32, i32
  }
  func.func @transform_2(%arg0: i32) -> (i32, i32) {
    %c0_i32 = arith.constant 0 : i32
    %c0_i32_0 = arith.constant 0 : i32
    %c0_i32_1 = arith.constant 0 : i32
    return %c0_i32, %c0_i32_0 : i32, i32
  }
  func.func @transform_3(%arg0: i32) -> (i32, i32, i32) {
    %c0_i32 = arith.constant 0 : i32
    %c0_i32_0 = arith.constant 0 : i32
    %c0_i32_1 = arith.constant 0 : i32
    return %arg0, %c0_i32, %c0_i32_0 : i32, i32, i32
  }
}

module attributes {stable_mosaic.version = 11 : i64} {
  func.func @_conv_kernel(%arg0: i32, %arg1: memref<4x5x40xbf16, #tpu.memory_space<vmem>>, %arg2: memref<6x40x64xbf16, #tpu.memory_space<vmem>>, %arg3: memref<1x64xf32, #tpu.memory_space<vmem>>, %arg4: memref<1x4x64xbf16, #tpu.memory_space<vmem>>) attributes {dimension_semantics = [#tpu.dimension_semantics<parallel>], iteration_bounds = array<i64: 4>, scalar_prefetch = 0 : i64, scratch_operands = 0 : i64, tpu.core_type = #tpu.core_type<tc>, window_params = [{transform_indices = @transform_0, window_bounds = array<i64: 4, 5, 40>}, {pipeline_mode = #tpu.pipeline_mode<synchronous>, transform_indices = @transform_1, window_bounds = array<i64: 6, 40, 64>}, {pipeline_mode = #tpu.pipeline_mode<synchronous>, transform_indices = @transform_2, window_bounds = array<i64: 1, 64>}, {transform_indices = @transform_3, window_bounds = array<i64: 1, 4, 64>}]} {
    %cst = arith.constant 0.000000e+00 : f32
    %0 = vector.broadcast %cst : f32 to vector<4x64xf32>
    %c0 = arith.constant 0 : index
    %c0_0 = arith.constant 0 : index
    %c0_1 = arith.constant 0 : index
    %1 = vector.load %arg1[%c0, %c0_0, %c0_1] : memref<4x5x40xbf16, #tpu.memory_space<vmem>>, vector<1x4x40xbf16>
    %2 = vector.shape_cast %1 : vector<1x4x40xbf16> to vector<4x40xbf16>
    %c0_2 = arith.constant 0 : index
    %c0_3 = arith.constant 0 : index
    %c0_4 = arith.constant 0 : index
    %3 = vector.load %arg2[%c0_2, %c0_3, %c0_4] : memref<6x40x64xbf16, #tpu.memory_space<vmem>>, vector<1x40x64xbf16>
    %4 = vector.shape_cast %3 : vector<1x40x64xbf16> to vector<40x64xbf16>
    %cst_5 = arith.constant dense<0.000000e+00> : vector<4x64xf32>
    %5 = tpu.matmul %2, %4, %cst_5 {dimension_numbers = #tpu.dot_dimension_numbers<[1], [0], [0], [1], [0, 0, 1, 1], [], []>} : vector<4x40xbf16>, vector<40x64xbf16>, vector<4x64xf32> -> vector<4x64xf32>
    %6 = arith.addf %0, %5 : vector<4x64xf32>
    %c1 = arith.constant 1 : index
    %c0_6 = arith.constant 0 : index
    %c0_7 = arith.constant 0 : index
    %7 = vector.load %arg1[%c1, %c0_6, %c0_7] : memref<4x5x40xbf16, #tpu.memory_space<vmem>>, vector<1x4x40xbf16>
    %8 = vector.shape_cast %7 : vector<1x4x40xbf16> to vector<4x40xbf16>
    %c1_8 = arith.constant 1 : index
    %c0_9 = arith.constant 0 : index
    %c0_10 = arith.constant 0 : index
    %9 = vector.load %arg2[%c1_8, %c0_9, %c0_10] : memref<6x40x64xbf16, #tpu.memory_space<vmem>>, vector<1x40x64xbf16>
    %10 = vector.shape_cast %9 : vector<1x40x64xbf16> to vector<40x64xbf16>
    %cst_11 = arith.constant dense<0.000000e+00> : vector<4x64xf32>
    %11 = tpu.matmul %8, %10, %cst_11 {dimension_numbers = #tpu.dot_dimension_numbers<[1], [0], [0], [1], [0, 0, 1, 1], [], []>} : vector<4x40xbf16>, vector<40x64xbf16>, vector<4x64xf32> -> vector<4x64xf32>
    %12 = arith.addf %6, %11 : vector<4x64xf32>
    %c2 = arith.constant 2 : index
    %c0_12 = arith.constant 0 : index
    %c0_13 = arith.constant 0 : index
    %13 = vector.load %arg1[%c2, %c0_12, %c0_13] : memref<4x5x40xbf16, #tpu.memory_space<vmem>>, vector<1x4x40xbf16>
    %14 = vector.shape_cast %13 : vector<1x4x40xbf16> to vector<4x40xbf16>
    %c2_14 = arith.constant 2 : index
    %c0_15 = arith.constant 0 : index
    %c0_16 = arith.constant 0 : index
    %15 = vector.load %arg2[%c2_14, %c0_15, %c0_16] : memref<6x40x64xbf16, #tpu.memory_space<vmem>>, vector<1x40x64xbf16>
    %16 = vector.shape_cast %15 : vector<1x40x64xbf16> to vector<40x64xbf16>
    %cst_17 = arith.constant dense<0.000000e+00> : vector<4x64xf32>
    %17 = tpu.matmul %14, %16, %cst_17 {dimension_numbers = #tpu.dot_dimension_numbers<[1], [0], [0], [1], [0, 0, 1, 1], [], []>} : vector<4x40xbf16>, vector<40x64xbf16>, vector<4x64xf32> -> vector<4x64xf32>
    %18 = arith.addf %12, %17 : vector<4x64xf32>
    %c3 = arith.constant 3 : index
    %c0_18 = arith.constant 0 : index
    %c0_19 = arith.constant 0 : index
    %19 = vector.load %arg1[%c3, %c0_18, %c0_19] : memref<4x5x40xbf16, #tpu.memory_space<vmem>>, vector<1x4x40xbf16>
    %20 = vector.shape_cast %19 : vector<1x4x40xbf16> to vector<4x40xbf16>
    %c3_20 = arith.constant 3 : index
    %c0_21 = arith.constant 0 : index
    %c0_22 = arith.constant 0 : index
    %21 = vector.load %arg2[%c3_20, %c0_21, %c0_22] : memref<6x40x64xbf16, #tpu.memory_space<vmem>>, vector<1x40x64xbf16>
    %22 = vector.shape_cast %21 : vector<1x40x64xbf16> to vector<40x64xbf16>
    %cst_23 = arith.constant dense<0.000000e+00> : vector<4x64xf32>
    %23 = tpu.matmul %20, %22, %cst_23 {dimension_numbers = #tpu.dot_dimension_numbers<[1], [0], [0], [1], [0, 0, 1, 1], [], []>} : vector<4x40xbf16>, vector<40x64xbf16>, vector<4x64xf32> -> vector<4x64xf32>
    %24 = arith.addf %18, %23 : vector<4x64xf32>
    %c0_24 = arith.constant 0 : index
    %c1_25 = arith.constant 1 : index
    %c0_26 = arith.constant 0 : index
    %25 = vector.load %arg1[%c0_24, %c1_25, %c0_26] : memref<4x5x40xbf16, #tpu.memory_space<vmem>>, vector<1x4x40xbf16>
    %26 = vector.shape_cast %25 : vector<1x4x40xbf16> to vector<4x40xbf16>
    %c4 = arith.constant 4 : index
    %c0_27 = arith.constant 0 : index
    %c0_28 = arith.constant 0 : index
    %27 = vector.load %arg2[%c4, %c0_27, %c0_28] : memref<6x40x64xbf16, #tpu.memory_space<vmem>>, vector<1x40x64xbf16>
    %28 = vector.shape_cast %27 : vector<1x40x64xbf16> to vector<40x64xbf16>
    %cst_29 = arith.constant dense<0.000000e+00> : vector<4x64xf32>
    %29 = tpu.matmul %26, %28, %cst_29 {dimension_numbers = #tpu.dot_dimension_numbers<[1], [0], [0], [1], [0, 0, 1, 1], [], []>} : vector<4x40xbf16>, vector<40x64xbf16>, vector<4x64xf32> -> vector<4x64xf32>
    %30 = arith.addf %24, %29 : vector<4x64xf32>
    %c1_30 = arith.constant 1 : index
    %c1_31 = arith.constant 1 : index
    %c0_32 = arith.constant 0 : index
    %31 = vector.load %arg1[%c1_30, %c1_31, %c0_32] : memref<4x5x40xbf16, #tpu.memory_space<vmem>>, vector<1x4x40xbf16>
    %32 = vector.shape_cast %31 : vector<1x4x40xbf16> to vector<4x40xbf16>
    %c5 = arith.constant 5 : index
    %c0_33 = arith.constant 0 : index
    %c0_34 = arith.constant 0 : index
    %33 = vector.load %arg2[%c5, %c0_33, %c0_34] : memref<6x40x64xbf16, #tpu.memory_space<vmem>>, vector<1x40x64xbf16>
    %34 = vector.shape_cast %33 : vector<1x40x64xbf16> to vector<40x64xbf16>
    %cst_35 = arith.constant dense<0.000000e+00> : vector<4x64xf32>
    %35 = tpu.matmul %32, %34, %cst_35 {dimension_numbers = #tpu.dot_dimension_numbers<[1], [0], [0], [1], [0, 0, 1, 1], [], []>} : vector<4x40xbf16>, vector<40x64xbf16>, vector<4x64xf32> -> vector<4x64xf32>
    %36 = arith.addf %30, %35 : vector<4x64xf32>
    %c0_36 = arith.constant 0 : index
    %c0_37 = arith.constant 0 : index
    %37 = vector.load %arg3[%c0_36, %c0_37] : memref<1x64xf32, #tpu.memory_space<vmem>>, vector<1x64xf32>
    %38 = vector.broadcast %37 : vector<1x64xf32> to vector<4x64xf32>
    %39 = arith.addf %36, %38 : vector<4x64xf32>
    %cst_38 = arith.constant 0.000000e+00 : f32
    %40 = vector.broadcast %cst_38 : f32 to vector<4x64xf32>
    %41 = arith.cmpf ogt, %39, %40 : vector<4x64xf32>
    %cst_39 = arith.constant 2.000000e-01 : f32
    %42 = vector.broadcast %cst_39 : f32 to vector<4x64xf32>
    %43 = arith.mulf %42, %39 : vector<4x64xf32>
    %44 = arith.select %41, %39, %43 : vector<4x64xi1>, vector<4x64xf32>
    %45 = arith.truncf %44 : vector<4x64xf32> to vector<4x64xbf16>
    %c0_40 = arith.constant 0 : index
    %c0_41 = arith.constant 0 : index
    %c0_42 = arith.constant 0 : index
    %46 = vector.load %arg4[%c0_40, %c0_41, %c0_42] : memref<1x4x64xbf16, #tpu.memory_space<vmem>>, vector<1x4x64xbf16>
    %47 = vector.shape_cast %46 : vector<1x4x64xbf16> to vector<4x64xbf16>
    %48 = vector.shape_cast %45 : vector<4x64xbf16> to vector<1x4x64xbf16>
    tpu.vector_store %arg4[%c0_40, %c0_41, %c0_42], %48 {strides = array<i32>} : memref<1x4x64xbf16, #tpu.memory_space<vmem>>, vector<1x4x64xbf16>,
    return
  }
  func.func @transform_0(%arg0: i32) -> (i32, i32, i32) {
    %c0_i32 = arith.constant 0 : i32
    %c0_i32_0 = arith.constant 0 : i32
    %c0_i32_1 = arith.constant 0 : i32
    return %arg0, %c0_i32, %c0_i32_0 : i32, i32, i32
  }
  func.func @transform_1(%arg0: i32) -> (i32, i32, i32) {
    %c0_i32 = arith.constant 0 : i32
    %c0_i32_0 = arith.constant 0 : i32
    %c0_i32_1 = arith.constant 0 : i32
    %c0_i32_2 = arith.constant 0 : i32
    return %c0_i32, %c0_i32_0, %c0_i32_1 : i32, i32, i32
  }
  func.func @transform_2(%arg0: i32) -> (i32, i32) {
    %c0_i32 = arith.constant 0 : i32
    %c0_i32_0 = arith.constant 0 : i32
    %c0_i32_1 = arith.constant 0 : i32
    return %c0_i32, %c0_i32_0 : i32, i32
  }
  func.func @transform_3(%arg0: i32) -> (i32, i32, i32) {
    %c0_i32 = arith.constant 0 : i32
    %c0_i32_0 = arith.constant 0 : i32
    %c0_i32_1 = arith.constant 0 : i32
    return %arg0, %c0_i32, %c0_i32_0 : i32, i32, i32
  }
}

module attributes {stable_mosaic.version = 11 : i64} {
  func.func @_conv_kernel(%arg0: i32, %arg1: memref<1x4x128xbf16, #tpu.memory_space<vmem>>, %arg2: memref<1x128x64xbf16, #tpu.memory_space<vmem>>, %arg3: memref<1x64xf32, #tpu.memory_space<vmem>>, %arg4: memref<1x4x64xbf16, #tpu.memory_space<vmem>>) attributes {dimension_semantics = [#tpu.dimension_semantics<parallel>], iteration_bounds = array<i64: 4>, scalar_prefetch = 0 : i64, scratch_operands = 0 : i64, tpu.core_type = #tpu.core_type<tc>, window_params = [{transform_indices = @transform_0, window_bounds = array<i64: 1, 4, 128>}, {pipeline_mode = #tpu.pipeline_mode<synchronous>, transform_indices = @transform_1, window_bounds = array<i64: 1, 128, 64>}, {pipeline_mode = #tpu.pipeline_mode<synchronous>, transform_indices = @transform_2, window_bounds = array<i64: 1, 64>}, {transform_indices = @transform_3, window_bounds = array<i64: 1, 4, 64>}]} {
    %cst = arith.constant 0.000000e+00 : f32
    %0 = vector.broadcast %cst : f32 to vector<4x64xf32>
    %c0 = arith.constant 0 : index
    %c0_0 = arith.constant 0 : index
    %c0_1 = arith.constant 0 : index
    %1 = vector.load %arg1[%c0, %c0_0, %c0_1] : memref<1x4x128xbf16, #tpu.memory_space<vmem>>, vector<1x4x128xbf16>
    %2 = vector.shape_cast %1 : vector<1x4x128xbf16> to vector<4x128xbf16>
    %c0_2 = arith.constant 0 : index
    %c0_3 = arith.constant 0 : index
    %c0_4 = arith.constant 0 : index
    %3 = vector.load %arg2[%c0_2, %c0_3, %c0_4] : memref<1x128x64xbf16, #tpu.memory_space<vmem>>, vector<1x128x64xbf16>
    %4 = vector.shape_cast %3 : vector<1x128x64xbf16> to vector<128x64xbf16>
    %cst_5 = arith.constant dense<0.000000e+00> : vector<4x64xf32>
    %5 = tpu.matmul %2, %4, %cst_5 {dimension_numbers = #tpu.dot_dimension_numbers<[1], [0], [0], [1], [0, 0, 1, 1], [], []>} : vector<4x128xbf16>, vector<128x64xbf16>, vector<4x64xf32> -> vector<4x64xf32>
    %6 = arith.addf %0, %5 : vector<4x64xf32>
    %c0_6 = arith.constant 0 : index
    %c0_7 = arith.constant 0 : index
    %7 = vector.load %arg3[%c0_6, %c0_7] : memref<1x64xf32, #tpu.memory_space<vmem>>, vector<1x64xf32>
    %8 = vector.broadcast %7 : vector<1x64xf32> to vector<4x64xf32>
    %9 = arith.addf %6, %8 : vector<4x64xf32>
    %cst_8 = arith.constant 0.000000e+00 : f32
    %10 = vector.broadcast %cst_8 : f32 to vector<4x64xf32>
    %11 = arith.cmpf ogt, %9, %10 : vector<4x64xf32>
    %cst_9 = arith.constant 2.000000e-01 : f32
    %12 = vector.broadcast %cst_9 : f32 to vector<4x64xf32>
    %13 = arith.mulf %12, %9 : vector<4x64xf32>
    %14 = arith.select %11, %9, %13 : vector<4x64xi1>, vector<4x64xf32>
    %15 = arith.truncf %14 : vector<4x64xf32> to vector<4x64xbf16>
    %c0_10 = arith.constant 0 : index
    %c0_11 = arith.constant 0 : index
    %c0_12 = arith.constant 0 : index
    %16 = vector.load %arg4[%c0_10, %c0_11, %c0_12] : memref<1x4x64xbf16, #tpu.memory_space<vmem>>, vector<1x4x64xbf16>
    %17 = vector.shape_cast %16 : vector<1x4x64xbf16> to vector<4x64xbf16>
    %18 = vector.shape_cast %15 : vector<4x64xbf16> to vector<1x4x64xbf16>
    tpu.vector_store %arg4[%c0_10, %c0_11, %c0_12], %18 {strides = array<i32>} : memref<1x4x64xbf16, #tpu.memory_space<vmem>>, vector<1x4x64xbf16>,
    return
  }
  func.func @transform_0(%arg0: i32) -> (i32, i32, i32) {
    %c0_i32 = arith.constant 0 : i32
    %c0_i32_0 = arith.constant 0 : i32
    %c0_i32_1 = arith.constant 0 : i32
    return %arg0, %c0_i32, %c0_i32_0 : i32, i32, i32
  }
  func.func @transform_1(%arg0: i32) -> (i32, i32, i32) {
    %c0_i32 = arith.constant 0 : i32
    %c0_i32_0 = arith.constant 0 : i32
    %c0_i32_1 = arith.constant 0 : i32
    %c0_i32_2 = arith.constant 0 : i32
    return %c0_i32, %c0_i32_0, %c0_i32_1 : i32, i32, i32
  }
  func.func @transform_2(%arg0: i32) -> (i32, i32) {
    %c0_i32 = arith.constant 0 : i32
    %c0_i32_0 = arith.constant 0 : i32
    %c0_i32_1 = arith.constant 0 : i32
    return %c0_i32, %c0_i32_0 : i32, i32
  }
  func.func @transform_3(%arg0: i32) -> (i32, i32, i32) {
    %c0_i32 = arith.constant 0 : i32
    %c0_i32_0 = arith.constant 0 : i32
    %c0_i32_1 = arith.constant 0 : i32
    return %arg0, %c0_i32, %c0_i32_0 : i32, i32, i32
  }
}

module attributes {stable_mosaic.version = 11 : i64} {
  func.func @_conv_kernel(%arg0: i32, %arg1: memref<1x6x96xbf16, #tpu.memory_space<vmem>>, %arg2: memref<3x96x64xbf16, #tpu.memory_space<vmem>>, %arg3: memref<1x64xf32, #tpu.memory_space<vmem>>, %arg4: memref<1x4x64xbf16, #tpu.memory_space<vmem>>) attributes {dimension_semantics = [#tpu.dimension_semantics<parallel>], iteration_bounds = array<i64: 4>, scalar_prefetch = 0 : i64, scratch_operands = 0 : i64, tpu.core_type = #tpu.core_type<tc>, window_params = [{transform_indices = @transform_0, window_bounds = array<i64: 1, 6, 96>}, {pipeline_mode = #tpu.pipeline_mode<synchronous>, transform_indices = @transform_1, window_bounds = array<i64: 3, 96, 64>}, {pipeline_mode = #tpu.pipeline_mode<synchronous>, transform_indices = @transform_2, window_bounds = array<i64: 1, 64>}, {transform_indices = @transform_3, window_bounds = array<i64: 1, 4, 64>}]} {
    %cst = arith.constant 0.000000e+00 : f32
    %0 = vector.broadcast %cst : f32 to vector<4x64xf32>
    %c0 = arith.constant 0 : index
    %c0_0 = arith.constant 0 : index
    %c0_1 = arith.constant 0 : index
    %1 = vector.load %arg1[%c0, %c0_0, %c0_1] : memref<1x6x96xbf16, #tpu.memory_space<vmem>>, vector<1x4x96xbf16>
    %2 = vector.shape_cast %1 : vector<1x4x96xbf16> to vector<4x96xbf16>
    %c0_2 = arith.constant 0 : index
    %c0_3 = arith.constant 0 : index
    %c0_4 = arith.constant 0 : index
    %3 = vector.load %arg2[%c0_2, %c0_3, %c0_4] : memref<3x96x64xbf16, #tpu.memory_space<vmem>>, vector<1x96x64xbf16>
    %4 = vector.shape_cast %3 : vector<1x96x64xbf16> to vector<96x64xbf16>
    %cst_5 = arith.constant dense<0.000000e+00> : vector<4x64xf32>
    %5 = tpu.matmul %2, %4, %cst_5 {dimension_numbers = #tpu.dot_dimension_numbers<[1], [0], [0], [1], [0, 0, 1, 1], [], []>} : vector<4x96xbf16>, vector<96x64xbf16>, vector<4x64xf32> -> vector<4x64xf32>
    %6 = arith.addf %0, %5 : vector<4x64xf32>
    %c0_6 = arith.constant 0 : index
    %c1 = arith.constant 1 : index
    %c0_7 = arith.constant 0 : index
    %7 = vector.load %arg1[%c0_6, %c1, %c0_7] : memref<1x6x96xbf16, #tpu.memory_space<vmem>>, vector<1x4x96xbf16>
    %8 = vector.shape_cast %7 : vector<1x4x96xbf16> to vector<4x96xbf16>
    %c1_8 = arith.constant 1 : index
    %c0_9 = arith.constant 0 : index
    %c0_10 = arith.constant 0 : index
    %9 = vector.load %arg2[%c1_8, %c0_9, %c0_10] : memref<3x96x64xbf16, #tpu.memory_space<vmem>>, vector<1x96x64xbf16>
    %10 = vector.shape_cast %9 : vector<1x96x64xbf16> to vector<96x64xbf16>
    %cst_11 = arith.constant dense<0.000000e+00> : vector<4x64xf32>
    %11 = tpu.matmul %8, %10, %cst_11 {dimension_numbers = #tpu.dot_dimension_numbers<[1], [0], [0], [1], [0, 0, 1, 1], [], []>} : vector<4x96xbf16>, vector<96x64xbf16>, vector<4x64xf32> -> vector<4x64xf32>
    %12 = arith.addf %6, %11 : vector<4x64xf32>
    %c0_12 = arith.constant 0 : index
    %c2 = arith.constant 2 : index
    %c0_13 = arith.constant 0 : index
    %13 = vector.load %arg1[%c0_12, %c2, %c0_13] : memref<1x6x96xbf16, #tpu.memory_space<vmem>>, vector<1x4x96xbf16>
    %14 = vector.shape_cast %13 : vector<1x4x96xbf16> to vector<4x96xbf16>
    %c2_14 = arith.constant 2 : index
    %c0_15 = arith.constant 0 : index
    %c0_16 = arith.constant 0 : index
    %15 = vector.load %arg2[%c2_14, %c0_15, %c0_16] : memref<3x96x64xbf16, #tpu.memory_space<vmem>>, vector<1x96x64xbf16>
    %16 = vector.shape_cast %15 : vector<1x96x64xbf16> to vector<96x64xbf16>
    %cst_17 = arith.constant dense<0.000000e+00> : vector<4x64xf32>
    %17 = tpu.matmul %14, %16, %cst_17 {dimension_numbers = #tpu.dot_dimension_numbers<[1], [0], [0], [1], [0, 0, 1, 1], [], []>} : vector<4x96xbf16>, vector<96x64xbf16>, vector<4x64xf32> -> vector<4x64xf32>
    %18 = arith.addf %12, %17 : vector<4x64xf32>
    %c0_18 = arith.constant 0 : index
    %c0_19 = arith.constant 0 : index
    %19 = vector.load %arg3[%c0_18, %c0_19] : memref<1x64xf32, #tpu.memory_space<vmem>>, vector<1x64xf32>
    %20 = vector.broadcast %19 : vector<1x64xf32> to vector<4x64xf32>
    %21 = arith.addf %18, %20 : vector<4x64xf32>
    %cst_20 = arith.constant 0.000000e+00 : f32
    %22 = vector.broadcast %cst_20 : f32 to vector<4x64xf32>
    %23 = arith.cmpf ogt, %21, %22 : vector<4x64xf32>
    %cst_21 = arith.constant 2.000000e-01 : f32
    %24 = vector.broadcast %cst_21 : f32 to vector<4x64xf32>
    %25 = arith.mulf %24, %21 : vector<4x64xf32>
    %26 = arith.select %23, %21, %25 : vector<4x64xi1>, vector<4x64xf32>
    %27 = arith.truncf %26 : vector<4x64xf32> to vector<4x64xbf16>
    %c0_22 = arith.constant 0 : index
    %c0_23 = arith.constant 0 : index
    %c0_24 = arith.constant 0 : index
    %28 = vector.load %arg4[%c0_22, %c0_23, %c0_24] : memref<1x4x64xbf16, #tpu.memory_space<vmem>>, vector<1x4x64xbf16>
    %29 = vector.shape_cast %28 : vector<1x4x64xbf16> to vector<4x64xbf16>
    %30 = vector.shape_cast %27 : vector<4x64xbf16> to vector<1x4x64xbf16>
    tpu.vector_store %arg4[%c0_22, %c0_23, %c0_24], %30 {strides = array<i32>} : memref<1x4x64xbf16, #tpu.memory_space<vmem>>, vector<1x4x64xbf16>,
    return
  }
  func.func @transform_0(%arg0: i32) -> (i32, i32, i32) {
    %c0_i32 = arith.constant 0 : i32
    %c0_i32_0 = arith.constant 0 : i32
    %c0_i32_1 = arith.constant 0 : i32
    return %arg0, %c0_i32, %c0_i32_0 : i32, i32, i32
  }
  func.func @transform_1(%arg0: i32) -> (i32, i32, i32) {
    %c0_i32 = arith.constant 0 : i32
    %c0_i32_0 = arith.constant 0 : i32
    %c0_i32_1 = arith.constant 0 : i32
    %c0_i32_2 = arith.constant 0 : i32
    return %c0_i32, %c0_i32_0, %c0_i32_1 : i32, i32, i32
  }
  func.func @transform_2(%arg0: i32) -> (i32, i32) {
    %c0_i32 = arith.constant 0 : i32
    %c0_i32_0 = arith.constant 0 : i32
    %c0_i32_1 = arith.constant 0 : i32
    return %c0_i32, %c0_i32_0 : i32, i32
  }
  func.func @transform_3(%arg0: i32) -> (i32, i32, i32) {
    %c0_i32 = arith.constant 0 : i32
    %c0_i32_0 = arith.constant 0 : i32
    %c0_i32_1 = arith.constant 0 : i32
    return %arg0, %c0_i32, %c0_i32_0 : i32, i32, i32
  }
}

module attributes {stable_mosaic.version = 11 : i64} {
  func.func @_disp_kernel(%arg0: i32, %arg1: memref<1x4x4x16xbf16, #tpu.memory_space<vmem>>, %arg2: memref<1x4x4x16xbf16, #tpu.memory_space<vmem>>, %arg3: memref<1x4x4xf32, #tpu.memory_space<vmem>>) attributes {dimension_semantics = [#tpu.dimension_semantics<parallel>], iteration_bounds = array<i64: 2>, scalar_prefetch = 0 : i64, scratch_operands = 0 : i64, tpu.core_type = #tpu.core_type<tc>, window_params = [{transform_indices = @transform_0, window_bounds = array<i64: 1, 4, 4, 16>}, {transform_indices = @transform_1, window_bounds = array<i64: 1, 4, 4, 16>}, {transform_indices = @transform_2, window_bounds = array<i64: 1, 4, 4>}]} {
    %c0 = arith.constant 0 : index
    %c0_0 = arith.constant 0 : index
    %c0_1 = arith.constant 0 : index
    %c0_2 = arith.constant 0 : index
    %0 = vector.load %arg1[%c0, %c0_0, %c0_1, %c0_2] : memref<1x4x4x16xbf16, #tpu.memory_space<vmem>>, vector<1x4x4x16xbf16>
    %1 = vector.shape_cast %0 : vector<1x4x4x16xbf16> to vector<4x4x16xbf16>
    %2 = arith.extf %1 : vector<4x4x16xbf16> to vector<4x4x16xf32>
    %c0_3 = arith.constant 0 : index
    %c0_4 = arith.constant 0 : index
    %c0_5 = arith.constant 0 : index
    %c0_6 = arith.constant 0 : index
    %3 = vector.load %arg2[%c0_3, %c0_4, %c0_5, %c0_6] : memref<1x4x4x16xbf16, #tpu.memory_space<vmem>>, vector<1x4x4x16xbf16>
    %4 = vector.shape_cast %3 : vector<1x4x4x16xbf16> to vector<4x4x16xbf16>
    %5 = arith.extf %4 : vector<4x4x16xbf16> to vector<4x4x16xf32>
    %6 = tpu.iota {dimensions = array<i32: 1>} : vector<4x4xi32>
    %cst = arith.constant -1.000000e+30 : f32
    %7 = vector.broadcast %cst : f32 to vector<4x4xf32>
    %cst_7 = arith.constant 0.000000e+00 : f32
    %8 = vector.broadcast %cst_7 : f32 to vector<4x4xf32>
    %cst_8 = arith.constant 0.000000e+00 : f32
    %9 = vector.broadcast %cst_8 : f32 to vector<4x4xf32>
    %10 = arith.mulf %2, %5 : vector<4x4x16xf32>
    %cst_9 = arith.constant dense<0.000000e+00> : vector<4x4xf32>
    %11 = vector.multi_reduction <add>, %10, %cst_9 [2] : vector<4x4x16xf32> to vector<4x4xf32>
    %cst_10 = arith.constant 6.250000e-02 : f32
    %12 = vector.broadcast %cst_10 : f32 to vector<4x4xf32>
    %13 = arith.mulf %11, %12 : vector<4x4xf32>
    %14 = arith.maximumf %7, %13 : vector<4x4xf32>
    %15 = arith.subf %7, %14 : vector<4x4xf32>
    %16 = math.exp %15 : vector<4x4xf32>
    %17 = arith.subf %13, %14 : vector<4x4xf32>
    %18 = math.exp %17 : vector<4x4xf32>
    %19 = arith.mulf %8, %16 : vector<4x4xf32>
    %20 = arith.addf %19, %18 : vector<4x4xf32>
    %21 = arith.mulf %9, %16 : vector<4x4xf32>
    %cst_11 = arith.constant 0.000000e+00 : f32
    %22 = vector.broadcast %cst_11 : f32 to vector<4x4xf32>
    %23 = arith.mulf %18, %22 : vector<4x4xf32>
    %24 = arith.addf %21, %23 : vector<4x4xf32>
    %cst_12 = arith.constant 0.000000e+00 : f32
    %25 = vector.broadcast %cst_12 : f32 to vector<4x1x16xf32>
    %26 = vector.extract_strided_slice %5 {offsets = [0, 0, 0], sizes = [4, 3, 16], strides = [1, 1, 1]} : vector<4x4x16xf32> to vector<4x3x16xf32>
    %27 = tpu.concatenate %25, %26 in 1 : vector<4x1x16xf32>, vector<4x3x16xf32> -> vector<4x4x16xf32>
    %28 = arith.mulf %2, %27 : vector<4x4x16xf32>
    %cst_13 = arith.constant dense<0.000000e+00> : vector<4x4xf32>
    %29 = vector.multi_reduction <add>, %28, %cst_13 [2] : vector<4x4x16xf32> to vector<4x4xf32>
    %cst_14 = arith.constant 6.250000e-02 : f32
    %30 = vector.broadcast %cst_14 : f32 to vector<4x4xf32>
    %31 = arith.mulf %29, %30 : vector<4x4xf32>
    %c1_i32 = arith.constant 1 : i32
    %32 = vector.broadcast %c1_i32 : i32 to vector<4x4xi32>
    %33 = arith.cmpi sge, %6, %32 : vector<4x4xi32>
    %cst_15 = arith.constant -1.000000e+30 : f32
    %34 = vector.broadcast %cst_15 : f32 to vector<4x4xf32>
    %35 = arith.select %33, %31, %34 : vector<4x4xi1>, vector<4x4xf32>
    %36 = arith.maximumf %14, %35 : vector<4x4xf32>
    %37 = arith.subf %14, %36 : vector<4x4xf32>
    %38 = math.exp %37 : vector<4x4xf32>
    %39 = arith.subf %35, %36 : vector<4x4xf32>
    %40 = math.exp %39 : vector<4x4xf32>
    %41 = arith.mulf %20, %38 : vector<4x4xf32>
    %42 = arith.addf %41, %40 : vector<4x4xf32>
    %43 = arith.mulf %24, %38 : vector<4x4xf32>
    %cst_16 = arith.constant 1.000000e+00 : f32
    %44 = vector.broadcast %cst_16 : f32 to vector<4x4xf32>
    %45 = arith.mulf %40, %44 : vector<4x4xf32>
    %46 = arith.addf %43, %45 : vector<4x4xf32>
    %cst_17 = arith.constant 0.000000e+00 : f32
    %47 = vector.broadcast %cst_17 : f32 to vector<4x2x16xf32>
    %48 = vector.extract_strided_slice %5 {offsets = [0, 0, 0], sizes = [4, 2, 16], strides = [1, 1, 1]} : vector<4x4x16xf32> to vector<4x2x16xf32>
    %49 = tpu.concatenate %47, %48 in 1 : vector<4x2x16xf32>, vector<4x2x16xf32> -> vector<4x4x16xf32>
    %50 = arith.mulf %2, %49 : vector<4x4x16xf32>
    %cst_18 = arith.constant dense<0.000000e+00> : vector<4x4xf32>
    %51 = vector.multi_reduction <add>, %50, %cst_18 [2] : vector<4x4x16xf32> to vector<4x4xf32>
    %cst_19 = arith.constant 6.250000e-02 : f32
    %52 = vector.broadcast %cst_19 : f32 to vector<4x4xf32>
    %53 = arith.mulf %51, %52 : vector<4x4xf32>
    %c2_i32 = arith.constant 2 : i32
    %54 = vector.broadcast %c2_i32 : i32 to vector<4x4xi32>
    %55 = arith.cmpi sge, %6, %54 : vector<4x4xi32>
    %cst_20 = arith.constant -1.000000e+30 : f32
    %56 = vector.broadcast %cst_20 : f32 to vector<4x4xf32>
    %57 = arith.select %55, %53, %56 : vector<4x4xi1>, vector<4x4xf32>
    %58 = arith.maximumf %36, %57 : vector<4x4xf32>
    %59 = arith.subf %36, %58 : vector<4x4xf32>
    %60 = math.exp %59 : vector<4x4xf32>
    %61 = arith.subf %57, %58 : vector<4x4xf32>
    %62 = math.exp %61 : vector<4x4xf32>
    %63 = arith.mulf %42, %60 : vector<4x4xf32>
    %64 = arith.addf %63, %62 : vector<4x4xf32>
    %65 = arith.mulf %46, %60 : vector<4x4xf32>
    %cst_21 = arith.constant 2.000000e+00 : f32
    %66 = vector.broadcast %cst_21 : f32 to vector<4x4xf32>
    %67 = arith.mulf %62, %66 : vector<4x4xf32>
    %68 = arith.addf %65, %67 : vector<4x4xf32>
    %cst_22 = arith.constant 0.000000e+00 : f32
    %69 = vector.broadcast %cst_22 : f32 to vector<4x3x16xf32>
    %70 = vector.extract_strided_slice %5 {offsets = [0, 0, 0], sizes = [4, 1, 16], strides = [1, 1, 1]} : vector<4x4x16xf32> to vector<4x1x16xf32>
    %71 = tpu.concatenate %69, %70 in 1 : vector<4x3x16xf32>, vector<4x1x16xf32> -> vector<4x4x16xf32>
    %72 = arith.mulf %2, %71 : vector<4x4x16xf32>
    %cst_23 = arith.constant dense<0.000000e+00> : vector<4x4xf32>
    %73 = vector.multi_reduction <add>, %72, %cst_23 [2] : vector<4x4x16xf32> to vector<4x4xf32>
    %cst_24 = arith.constant 6.250000e-02 : f32
    %74 = vector.broadcast %cst_24 : f32 to vector<4x4xf32>
    %75 = arith.mulf %73, %74 : vector<4x4xf32>
    %c3_i32 = arith.constant 3 : i32
    %76 = vector.broadcast %c3_i32 : i32 to vector<4x4xi32>
    %77 = arith.cmpi sge, %6, %76 : vector<4x4xi32>
    %cst_25 = arith.constant -1.000000e+30 : f32
    %78 = vector.broadcast %cst_25 : f32 to vector<4x4xf32>
    %79 = arith.select %77, %75, %78 : vector<4x4xi1>, vector<4x4xf32>
    %80 = arith.maximumf %58, %79 : vector<4x4xf32>
    %81 = arith.subf %58, %80 : vector<4x4xf32>
    %82 = math.exp %81 : vector<4x4xf32>
    %83 = arith.subf %79, %80 : vector<4x4xf32>
    %84 = math.exp %83 : vector<4x4xf32>
    %85 = arith.mulf %64, %82 : vector<4x4xf32>
    %86 = arith.addf %85, %84 : vector<4x4xf32>
    %87 = arith.mulf %68, %82 : vector<4x4xf32>
    %cst_26 = arith.constant 3.000000e+00 : f32
    %88 = vector.broadcast %cst_26 : f32 to vector<4x4xf32>
    %89 = arith.mulf %84, %88 : vector<4x4xf32>
    %90 = arith.addf %87, %89 : vector<4x4xf32>
    %91 = tpu.reciprocal %86 {approx = true} : vector<4x4xf32> -> vector<4x4xf32>
    %92 = arith.mulf %90, %91 : vector<4x4xf32>
    %c0_27 = arith.constant 0 : index
    %c0_28 = arith.constant 0 : index
    %c0_29 = arith.constant 0 : index
    %93 = vector.load %arg3[%c0_27, %c0_28, %c0_29] : memref<1x4x4xf32, #tpu.memory_space<vmem>>, vector<1x4x4xf32>
    %94 = vector.shape_cast %93 : vector<1x4x4xf32> to vector<4x4xf32>
    %95 = vector.shape_cast %92 : vector<4x4xf32> to vector<1x4x4xf32>
    tpu.vector_store %arg3[%c0_27, %c0_28, %c0_29], %95 {strides = array<i32>} : memref<1x4x4xf32, #tpu.memory_space<vmem>>, vector<1x4x4xf32>,
    return
  }
  func.func @transform_0(%arg0: i32) -> (i32, i32, i32, i32) {
    %c0_i32 = arith.constant 0 : i32
    %c0_i32_0 = arith.constant 0 : i32
    %c0_i32_1 = arith.constant 0 : i32
    %c0_i32_2 = arith.constant 0 : i32
    return %arg0, %c0_i32, %c0_i32_0, %c0_i32_1 : i32, i32, i32, i32
  }
  func.func @transform_1(%arg0: i32) -> (i32, i32, i32, i32) {
    %c0_i32 = arith.constant 0 : i32
    %c0_i32_0 = arith.constant 0 : i32
    %c0_i32_1 = arith.constant 0 : i32
    %c0_i32_2 = arith.constant 0 : i32
    return %arg0, %c0_i32, %c0_i32_0, %c0_i32_1 : i32, i32, i32, i32
  }
  func.func @transform_2(%arg0: i32) -> (i32, i32, i32) {
    %c0_i32 = arith.constant 0 : i32
    %c0_i32_0 = arith.constant 0 : i32
    %c0_i32_1 = arith.constant 0 : i32
    return %arg0, %c0_i32, %c0_i32_0 : i32, i32, i32
  }
}

module attributes {stable_mosaic.version = 11 : i64} {
  func.func @_conv_kernel(%arg0: i32, %arg1: memref<1x10x170xbf16, #tpu.memory_space<vmem>>, %arg2: memref<3x170x64xbf16, #tpu.memory_space<vmem>>, %arg3: memref<1x64xf32, #tpu.memory_space<vmem>>, %arg4: memref<1x8x64xbf16, #tpu.memory_space<vmem>>) attributes {dimension_semantics = [#tpu.dimension_semantics<parallel>], iteration_bounds = array<i64: 2>, scalar_prefetch = 0 : i64, scratch_operands = 0 : i64, tpu.core_type = #tpu.core_type<tc>, window_params = [{transform_indices = @transform_0, window_bounds = array<i64: 1, 10, 170>}, {pipeline_mode = #tpu.pipeline_mode<synchronous>, transform_indices = @transform_1, window_bounds = array<i64: 3, 170, 64>}, {pipeline_mode = #tpu.pipeline_mode<synchronous>, transform_indices = @transform_2, window_bounds = array<i64: 1, 64>}, {transform_indices = @transform_3, window_bounds = array<i64: 1, 8, 64>}]} {
    %cst = arith.constant 0.000000e+00 : f32
    %0 = vector.broadcast %cst : f32 to vector<8x64xf32>
    %c0 = arith.constant 0 : index
    %c0_0 = arith.constant 0 : index
    %c0_1 = arith.constant 0 : index
    %1 = vector.load %arg1[%c0, %c0_0, %c0_1] : memref<1x10x170xbf16, #tpu.memory_space<vmem>>, vector<1x8x170xbf16>
    %2 = vector.shape_cast %1 : vector<1x8x170xbf16> to vector<8x170xbf16>
    %c0_2 = arith.constant 0 : index
    %c0_3 = arith.constant 0 : index
    %c0_4 = arith.constant 0 : index
    %3 = vector.load %arg2[%c0_2, %c0_3, %c0_4] : memref<3x170x64xbf16, #tpu.memory_space<vmem>>, vector<1x170x64xbf16>
    %4 = vector.shape_cast %3 : vector<1x170x64xbf16> to vector<170x64xbf16>
    %cst_5 = arith.constant dense<0.000000e+00> : vector<8x64xf32>
    %5 = tpu.matmul %2, %4, %cst_5 {dimension_numbers = #tpu.dot_dimension_numbers<[1], [0], [0], [1], [0, 0, 1, 1], [], []>} : vector<8x170xbf16>, vector<170x64xbf16>, vector<8x64xf32> -> vector<8x64xf32>
    %6 = arith.addf %0, %5 : vector<8x64xf32>
    %c0_6 = arith.constant 0 : index
    %c1 = arith.constant 1 : index
    %c0_7 = arith.constant 0 : index
    %7 = vector.load %arg1[%c0_6, %c1, %c0_7] : memref<1x10x170xbf16, #tpu.memory_space<vmem>>, vector<1x8x170xbf16>
    %8 = vector.shape_cast %7 : vector<1x8x170xbf16> to vector<8x170xbf16>
    %c1_8 = arith.constant 1 : index
    %c0_9 = arith.constant 0 : index
    %c0_10 = arith.constant 0 : index
    %9 = vector.load %arg2[%c1_8, %c0_9, %c0_10] : memref<3x170x64xbf16, #tpu.memory_space<vmem>>, vector<1x170x64xbf16>
    %10 = vector.shape_cast %9 : vector<1x170x64xbf16> to vector<170x64xbf16>
    %cst_11 = arith.constant dense<0.000000e+00> : vector<8x64xf32>
    %11 = tpu.matmul %8, %10, %cst_11 {dimension_numbers = #tpu.dot_dimension_numbers<[1], [0], [0], [1], [0, 0, 1, 1], [], []>} : vector<8x170xbf16>, vector<170x64xbf16>, vector<8x64xf32> -> vector<8x64xf32>
    %12 = arith.addf %6, %11 : vector<8x64xf32>
    %c0_12 = arith.constant 0 : index
    %c2 = arith.constant 2 : index
    %c0_13 = arith.constant 0 : index
    %13 = vector.load %arg1[%c0_12, %c2, %c0_13] : memref<1x10x170xbf16, #tpu.memory_space<vmem>>, vector<1x8x170xbf16>
    %14 = vector.shape_cast %13 : vector<1x8x170xbf16> to vector<8x170xbf16>
    %c2_14 = arith.constant 2 : index
    %c0_15 = arith.constant 0 : index
    %c0_16 = arith.constant 0 : index
    %15 = vector.load %arg2[%c2_14, %c0_15, %c0_16] : memref<3x170x64xbf16, #tpu.memory_space<vmem>>, vector<1x170x64xbf16>
    %16 = vector.shape_cast %15 : vector<1x170x64xbf16> to vector<170x64xbf16>
    %cst_17 = arith.constant dense<0.000000e+00> : vector<8x64xf32>
    %17 = tpu.matmul %14, %16, %cst_17 {dimension_numbers = #tpu.dot_dimension_numbers<[1], [0], [0], [1], [0, 0, 1, 1], [], []>} : vector<8x170xbf16>, vector<170x64xbf16>, vector<8x64xf32> -> vector<8x64xf32>
    %18 = arith.addf %12, %17 : vector<8x64xf32>
    %c0_18 = arith.constant 0 : index
    %c0_19 = arith.constant 0 : index
    %19 = vector.load %arg3[%c0_18, %c0_19] : memref<1x64xf32, #tpu.memory_space<vmem>>, vector<1x64xf32>
    %20 = vector.broadcast %19 : vector<1x64xf32> to vector<8x64xf32>
    %21 = arith.addf %18, %20 : vector<8x64xf32>
    %cst_20 = arith.constant 0.000000e+00 : f32
    %22 = vector.broadcast %cst_20 : f32 to vector<8x64xf32>
    %23 = arith.cmpf ogt, %21, %22 : vector<8x64xf32>
    %cst_21 = arith.constant 2.000000e-01 : f32
    %24 = vector.broadcast %cst_21 : f32 to vector<8x64xf32>
    %25 = arith.mulf %24, %21 : vector<8x64xf32>
    %26 = arith.select %23, %21, %25 : vector<8x64xi1>, vector<8x64xf32>
    %27 = arith.truncf %26 : vector<8x64xf32> to vector<8x64xbf16>
    %c0_22 = arith.constant 0 : index
    %c0_23 = arith.constant 0 : index
    %c0_24 = arith.constant 0 : index
    %28 = vector.load %arg4[%c0_22, %c0_23, %c0_24] : memref<1x8x64xbf16, #tpu.memory_space<vmem>>, vector<1x8x64xbf16>
    %29 = vector.shape_cast %28 : vector<1x8x64xbf16> to vector<8x64xbf16>
    %30 = vector.shape_cast %27 : vector<8x64xbf16> to vector<1x8x64xbf16>
    tpu.vector_store %arg4[%c0_22, %c0_23, %c0_24], %30 {strides = array<i32>} : memref<1x8x64xbf16, #tpu.memory_space<vmem>>, vector<1x8x64xbf16>,
    return
  }
  func.func @transform_0(%arg0: i32) -> (i32, i32, i32) {
    %c0_i32 = arith.constant 0 : i32
    %c0_i32_0 = arith.constant 0 : i32
    %c0_i32_1 = arith.constant 0 : i32
    return %arg0, %c0_i32, %c0_i32_0 : i32, i32, i32
  }
  func.func @transform_1(%arg0: i32) -> (i32, i32, i32) {
    %c0_i32 = arith.constant 0 : i32
    %c0_i32_0 = arith.constant 0 : i32
    %c0_i32_1 = arith.constant 0 : i32
    %c0_i32_2 = arith.constant 0 : i32
    return %c0_i32, %c0_i32_0, %c0_i32_1 : i32, i32, i32
  }
  func.func @transform_2(%arg0: i32) -> (i32, i32) {
    %c0_i32 = arith.constant 0 : i32
    %c0_i32_0 = arith.constant 0 : i32
    %c0_i32_1 = arith.constant 0 : i32
    return %c0_i32, %c0_i32_0 : i32, i32
  }
  func.func @transform_3(%arg0: i32) -> (i32, i32, i32) {
    %c0_i32 = arith.constant 0 : i32
    %c0_i32_0 = arith.constant 0 : i32
    %c0_i32_1 = arith.constant 0 : i32
    return %arg0, %c0_i32, %c0_i32_0 : i32, i32, i32
  }
}

module attributes {stable_mosaic.version = 11 : i64} {
  func.func @_conv_kernel(%arg0: i32, %arg1: memref<1x18x144xbf16, #tpu.memory_space<vmem>>, %arg2: memref<3x144x128xbf16, #tpu.memory_space<vmem>>, %arg3: memref<1x128xf32, #tpu.memory_space<vmem>>, %arg4: memref<1x16x128xbf16, #tpu.memory_space<vmem>>) attributes {dimension_semantics = [#tpu.dimension_semantics<parallel>], iteration_bounds = array<i64: 4>, scalar_prefetch = 0 : i64, scratch_operands = 0 : i64, tpu.core_type = #tpu.core_type<tc>, window_params = [{transform_indices = @transform_0, window_bounds = array<i64: 1, 18, 144>}, {pipeline_mode = #tpu.pipeline_mode<synchronous>, transform_indices = @transform_1, window_bounds = array<i64: 3, 144, 128>}, {pipeline_mode = #tpu.pipeline_mode<synchronous>, transform_indices = @transform_2, window_bounds = array<i64: 1, 128>}, {transform_indices = @transform_3, window_bounds = array<i64: 1, 16, 128>}]} {
    %cst = arith.constant 0.000000e+00 : f32
    %0 = vector.broadcast %cst : f32 to vector<16x128xf32>
    %c0 = arith.constant 0 : index
    %c0_0 = arith.constant 0 : index
    %c0_1 = arith.constant 0 : index
    %1 = vector.load %arg1[%c0, %c0_0, %c0_1] : memref<1x18x144xbf16, #tpu.memory_space<vmem>>, vector<1x16x144xbf16>
    %2 = vector.shape_cast %1 : vector<1x16x144xbf16> to vector<16x144xbf16>
    %c0_2 = arith.constant 0 : index
    %c0_3 = arith.constant 0 : index
    %c0_4 = arith.constant 0 : index
    %3 = vector.load %arg2[%c0_2, %c0_3, %c0_4] : memref<3x144x128xbf16, #tpu.memory_space<vmem>>, vector<1x144x128xbf16>
    %4 = vector.shape_cast %3 : vector<1x144x128xbf16> to vector<144x128xbf16>
    %cst_5 = arith.constant dense<0.000000e+00> : vector<16x128xf32>
    %5 = tpu.matmul %2, %4, %cst_5 {dimension_numbers = #tpu.dot_dimension_numbers<[1], [0], [0], [1], [0, 0, 1, 1], [], []>} : vector<16x144xbf16>, vector<144x128xbf16>, vector<16x128xf32> -> vector<16x128xf32>
    %6 = arith.addf %0, %5 : vector<16x128xf32>
    %c0_6 = arith.constant 0 : index
    %c1 = arith.constant 1 : index
    %c0_7 = arith.constant 0 : index
    %7 = vector.load %arg1[%c0_6, %c1, %c0_7] : memref<1x18x144xbf16, #tpu.memory_space<vmem>>, vector<1x16x144xbf16>
    %8 = vector.shape_cast %7 : vector<1x16x144xbf16> to vector<16x144xbf16>
    %c1_8 = arith.constant 1 : index
    %c0_9 = arith.constant 0 : index
    %c0_10 = arith.constant 0 : index
    %9 = vector.load %arg2[%c1_8, %c0_9, %c0_10] : memref<3x144x128xbf16, #tpu.memory_space<vmem>>, vector<1x144x128xbf16>
    %10 = vector.shape_cast %9 : vector<1x144x128xbf16> to vector<144x128xbf16>
    %cst_11 = arith.constant dense<0.000000e+00> : vector<16x128xf32>
    %11 = tpu.matmul %8, %10, %cst_11 {dimension_numbers = #tpu.dot_dimension_numbers<[1], [0], [0], [1], [0, 0, 1, 1], [], []>} : vector<16x144xbf16>, vector<144x128xbf16>, vector<16x128xf32> -> vector<16x128xf32>
    %12 = arith.addf %6, %11 : vector<16x128xf32>
    %c0_12 = arith.constant 0 : index
    %c2 = arith.constant 2 : index
    %c0_13 = arith.constant 0 : index
    %13 = vector.load %arg1[%c0_12, %c2, %c0_13] : memref<1x18x144xbf16, #tpu.memory_space<vmem>>, vector<1x16x144xbf16>
    %14 = vector.shape_cast %13 : vector<1x16x144xbf16> to vector<16x144xbf16>
    %c2_14 = arith.constant 2 : index
    %c0_15 = arith.constant 0 : index
    %c0_16 = arith.constant 0 : index
    %15 = vector.load %arg2[%c2_14, %c0_15, %c0_16] : memref<3x144x128xbf16, #tpu.memory_space<vmem>>, vector<1x144x128xbf16>
    %16 = vector.shape_cast %15 : vector<1x144x128xbf16> to vector<144x128xbf16>
    %cst_17 = arith.constant dense<0.000000e+00> : vector<16x128xf32>
    %17 = tpu.matmul %14, %16, %cst_17 {dimension_numbers = #tpu.dot_dimension_numbers<[1], [0], [0], [1], [0, 0, 1, 1], [], []>} : vector<16x144xbf16>, vector<144x128xbf16>, vector<16x128xf32> -> vector<16x128xf32>
    %18 = arith.addf %12, %17 : vector<16x128xf32>
    %c0_18 = arith.constant 0 : index
    %c0_19 = arith.constant 0 : index
    %19 = vector.load %arg3[%c0_18, %c0_19] : memref<1x128xf32, #tpu.memory_space<vmem>>, vector<1x128xf32>
    %20 = vector.broadcast %19 : vector<1x128xf32> to vector<16x128xf32>
    %21 = arith.addf %18, %20 : vector<16x128xf32>
    %cst_20 = arith.constant 0.000000e+00 : f32
    %22 = vector.broadcast %cst_20 : f32 to vector<16x128xf32>
    %23 = arith.cmpf ogt, %21, %22 : vector<16x128xf32>
    %cst_21 = arith.constant 2.000000e-01 : f32
    %24 = vector.broadcast %cst_21 : f32 to vector<16x128xf32>
    %25 = arith.mulf %24, %21 : vector<16x128xf32>
    %26 = arith.select %23, %21, %25 : vector<16x128xi1>, vector<16x128xf32>
    %27 = arith.truncf %26 : vector<16x128xf32> to vector<16x128xbf16>
    %c0_22 = arith.constant 0 : index
    %c0_23 = arith.constant 0 : index
    %c0_24 = arith.constant 0 : index
    %28 = vector.load %arg4[%c0_22, %c0_23, %c0_24] : memref<1x16x128xbf16, #tpu.memory_space<vmem>>, vector<1x16x128xbf16>
    %29 = vector.shape_cast %28 : vector<1x16x128xbf16> to vector<16x128xbf16>
    %30 = vector.shape_cast %27 : vector<16x128xbf16> to vector<1x16x128xbf16>
    tpu.vector_store %arg4[%c0_22, %c0_23, %c0_24], %30 {strides = array<i32>} : memref<1x16x128xbf16, #tpu.memory_space<vmem>>, vector<1x16x128xbf16>,
    return
  }
  func.func @transform_0(%arg0: i32) -> (i32, i32, i32) {
    %c0_i32 = arith.constant 0 : i32
    %c0_i32_0 = arith.constant 0 : i32
    %c0_i32_1 = arith.constant 0 : i32
    return %arg0, %c0_i32, %c0_i32_0 : i32, i32, i32
  }
  func.func @transform_1(%arg0: i32) -> (i32, i32, i32) {
    %c0_i32 = arith.constant 0 : i32
    %c0_i32_0 = arith.constant 0 : i32
    %c0_i32_1 = arith.constant 0 : i32
    %c0_i32_2 = arith.constant 0 : i32
    return %c0_i32, %c0_i32_0, %c0_i32_1 : i32, i32, i32
  }
  func.func @transform_2(%arg0: i32) -> (i32, i32) {
    %c0_i32 = arith.constant 0 : i32
    %c0_i32_0 = arith.constant 0 : i32
    %c0_i32_1 = arith.constant 0 : i32
    return %c0_i32, %c0_i32_0 : i32, i32
  }
  func.func @transform_3(%arg0: i32) -> (i32, i32, i32) {
    %c0_i32 = arith.constant 0 : i32
    %c0_i32_0 = arith.constant 0 : i32
    %c0_i32_1 = arith.constant 0 : i32
    return %arg0, %c0_i32, %c0_i32_0 : i32, i32, i32
  }
}

module attributes {stable_mosaic.version = 11 : i64} {
  func.func @_conv_kernel(%arg0: i32, %arg1: memref<1x18x198xbf16, #tpu.memory_space<vmem>>, %arg2: memref<3x198x48xbf16, #tpu.memory_space<vmem>>, %arg3: memref<1x48xf32, #tpu.memory_space<vmem>>, %arg4: memref<1x16x48xbf16, #tpu.memory_space<vmem>>) attributes {dimension_semantics = [#tpu.dimension_semantics<parallel>], iteration_bounds = array<i64: 4>, scalar_prefetch = 0 : i64, scratch_operands = 0 : i64, tpu.core_type = #tpu.core_type<tc>, window_params = [{transform_indices = @transform_0, window_bounds = array<i64: 1, 18, 198>}, {pipeline_mode = #tpu.pipeline_mode<synchronous>, transform_indices = @transform_1, window_bounds = array<i64: 3, 198, 48>}, {pipeline_mode = #tpu.pipeline_mode<synchronous>, transform_indices = @transform_2, window_bounds = array<i64: 1, 48>}, {transform_indices = @transform_3, window_bounds = array<i64: 1, 16, 48>}]} {
    %cst = arith.constant 0.000000e+00 : f32
    %0 = vector.broadcast %cst : f32 to vector<16x48xf32>
    %c0 = arith.constant 0 : index
    %c0_0 = arith.constant 0 : index
    %c0_1 = arith.constant 0 : index
    %1 = vector.load %arg1[%c0, %c0_0, %c0_1] : memref<1x18x198xbf16, #tpu.memory_space<vmem>>, vector<1x16x198xbf16>
    %2 = vector.shape_cast %1 : vector<1x16x198xbf16> to vector<16x198xbf16>
    %c0_2 = arith.constant 0 : index
    %c0_3 = arith.constant 0 : index
    %c0_4 = arith.constant 0 : index
    %3 = vector.load %arg2[%c0_2, %c0_3, %c0_4] : memref<3x198x48xbf16, #tpu.memory_space<vmem>>, vector<1x198x48xbf16>
    %4 = vector.shape_cast %3 : vector<1x198x48xbf16> to vector<198x48xbf16>
    %cst_5 = arith.constant dense<0.000000e+00> : vector<16x48xf32>
    %5 = tpu.matmul %2, %4, %cst_5 {dimension_numbers = #tpu.dot_dimension_numbers<[1], [0], [0], [1], [0, 0, 1, 1], [], []>} : vector<16x198xbf16>, vector<198x48xbf16>, vector<16x48xf32> -> vector<16x48xf32>
    %6 = arith.addf %0, %5 : vector<16x48xf32>
    %c0_6 = arith.constant 0 : index
    %c1 = arith.constant 1 : index
    %c0_7 = arith.constant 0 : index
    %7 = vector.load %arg1[%c0_6, %c1, %c0_7] : memref<1x18x198xbf16, #tpu.memory_space<vmem>>, vector<1x16x198xbf16>
    %8 = vector.shape_cast %7 : vector<1x16x198xbf16> to vector<16x198xbf16>
    %c1_8 = arith.constant 1 : index
    %c0_9 = arith.constant 0 : index
    %c0_10 = arith.constant 0 : index
    %9 = vector.load %arg2[%c1_8, %c0_9, %c0_10] : memref<3x198x48xbf16, #tpu.memory_space<vmem>>, vector<1x198x48xbf16>
    %10 = vector.shape_cast %9 : vector<1x198x48xbf16> to vector<198x48xbf16>
    %cst_11 = arith.constant dense<0.000000e+00> : vector<16x48xf32>
    %11 = tpu.matmul %8, %10, %cst_11 {dimension_numbers = #tpu.dot_dimension_numbers<[1], [0], [0], [1], [0, 0, 1, 1], [], []>} : vector<16x198xbf16>, vector<198x48xbf16>, vector<16x48xf32> -> vector<16x48xf32>
    %12 = arith.addf %6, %11 : vector<16x48xf32>
    %c0_12 = arith.constant 0 : index
    %c2 = arith.constant 2 : index
    %c0_13 = arith.constant 0 : index
    %13 = vector.load %arg1[%c0_12, %c2, %c0_13] : memref<1x18x198xbf16, #tpu.memory_space<vmem>>, vector<1x16x198xbf16>
    %14 = vector.shape_cast %13 : vector<1x16x198xbf16> to vector<16x198xbf16>
    %c2_14 = arith.constant 2 : index
    %c0_15 = arith.constant 0 : index
    %c0_16 = arith.constant 0 : index
    %15 = vector.load %arg2[%c2_14, %c0_15, %c0_16] : memref<3x198x48xbf16, #tpu.memory_space<vmem>>, vector<1x198x48xbf16>
    %16 = vector.shape_cast %15 : vector<1x198x48xbf16> to vector<198x48xbf16>
    %cst_17 = arith.constant dense<0.000000e+00> : vector<16x48xf32>
    %17 = tpu.matmul %14, %16, %cst_17 {dimension_numbers = #tpu.dot_dimension_numbers<[1], [0], [0], [1], [0, 0, 1, 1], [], []>} : vector<16x198xbf16>, vector<198x48xbf16>, vector<16x48xf32> -> vector<16x48xf32>
    %18 = arith.addf %12, %17 : vector<16x48xf32>
    %c0_18 = arith.constant 0 : index
    %c0_19 = arith.constant 0 : index
    %19 = vector.load %arg3[%c0_18, %c0_19] : memref<1x48xf32, #tpu.memory_space<vmem>>, vector<1x48xf32>
    %20 = vector.broadcast %19 : vector<1x48xf32> to vector<16x48xf32>
    %21 = arith.addf %18, %20 : vector<16x48xf32>
    %22 = math.tanh %21 : vector<16x48xf32>
    %23 = arith.truncf %22 : vector<16x48xf32> to vector<16x48xbf16>
    %c0_20 = arith.constant 0 : index
    %c0_21 = arith.constant 0 : index
    %c0_22 = arith.constant 0 : index
    %24 = vector.load %arg4[%c0_20, %c0_21, %c0_22] : memref<1x16x48xbf16, #tpu.memory_space<vmem>>, vector<1x16x48xbf16>
    %25 = vector.shape_cast %24 : vector<1x16x48xbf16> to vector<16x48xbf16>
    %26 = vector.shape_cast %23 : vector<16x48xbf16> to vector<1x16x48xbf16>
    tpu.vector_store %arg4[%c0_20, %c0_21, %c0_22], %26 {strides = array<i32>} : memref<1x16x48xbf16, #tpu.memory_space<vmem>>, vector<1x16x48xbf16>,
    return
  }
  func.func @transform_0(%arg0: i32) -> (i32, i32, i32) {
    %c0_i32 = arith.constant 0 : i32
    %c0_i32_0 = arith.constant 0 : i32
    %c0_i32_1 = arith.constant 0 : i32
    return %arg0, %c0_i32, %c0_i32_0 : i32, i32, i32
  }
  func.func @transform_1(%arg0: i32) -> (i32, i32, i32) {
    %c0_i32 = arith.constant 0 : i32
    %c0_i32_0 = arith.constant 0 : i32
    %c0_i32_1 = arith.constant 0 : i32
    %c0_i32_2 = arith.constant 0 : i32
    return %c0_i32, %c0_i32_0, %c0_i32_1 : i32, i32, i32
  }
  func.func @transform_2(%arg0: i32) -> (i32, i32) {
    %c0_i32 = arith.constant 0 : i32
    %c0_i32_0 = arith.constant 0 : i32
    %c0_i32_1 = arith.constant 0 : i32
    return %c0_i32, %c0_i32_0 : i32, i32
  }
  func.func @transform_3(%arg0: i32) -> (i32, i32, i32) {
    %c0_i32 = arith.constant 0 : i32
    %c0_i32_0 = arith.constant 0 : i32
    %c0_i32_1 = arith.constant 0 : i32
    return %arg0, %c0_i32, %c0_i32_0 : i32, i32, i32
  }
}

module attributes {stable_mosaic.version = 11 : i64} {
  func.func @_disp_kernel(%arg0: i32, %arg1: memref<1x4x4x16xbf16, #tpu.memory_space<vmem>>, %arg2: memref<1x4x4x16xbf16, #tpu.memory_space<vmem>>, %arg3: memref<1x4x4xf32, #tpu.memory_space<vmem>>) attributes {dimension_semantics = [#tpu.dimension_semantics<parallel>], iteration_bounds = array<i64: 2>, scalar_prefetch = 0 : i64, scratch_operands = 0 : i64, tpu.core_type = #tpu.core_type<tc>, window_params = [{transform_indices = @transform_0, window_bounds = array<i64: 1, 4, 4, 16>}, {transform_indices = @transform_1, window_bounds = array<i64: 1, 4, 4, 16>}, {transform_indices = @transform_2, window_bounds = array<i64: 1, 4, 4>}]} {
    %c0 = arith.constant 0 : index
    %c0_0 = arith.constant 0 : index
    %c0_1 = arith.constant 0 : index
    %c0_2 = arith.constant 0 : index
    %0 = vector.load %arg1[%c0, %c0_0, %c0_1, %c0_2] : memref<1x4x4x16xbf16, #tpu.memory_space<vmem>>, vector<1x4x4x16xbf16>
    %1 = vector.shape_cast %0 : vector<1x4x4x16xbf16> to vector<4x4x16xbf16>
    %2 = arith.extf %1 : vector<4x4x16xbf16> to vector<4x4x16xf32>
    %c0_3 = arith.constant 0 : index
    %c0_4 = arith.constant 0 : index
    %c0_5 = arith.constant 0 : index
    %c0_6 = arith.constant 0 : index
    %3 = vector.load %arg2[%c0_3, %c0_4, %c0_5, %c0_6] : memref<1x4x4x16xbf16, #tpu.memory_space<vmem>>, vector<1x4x4x16xbf16>
    %4 = vector.shape_cast %3 : vector<1x4x4x16xbf16> to vector<4x4x16xbf16>
    %5 = arith.extf %4 : vector<4x4x16xbf16> to vector<4x4x16xf32>
    %6 = tpu.iota {dimensions = array<i32: 1>} : vector<4x4xi32>
    %cst = arith.constant -1.000000e+30 : f32
    %7 = vector.broadcast %cst : f32 to vector<4x4xf32>
    %cst_7 = arith.constant 0.000000e+00 : f32
    %8 = vector.broadcast %cst_7 : f32 to vector<4x4xf32>
    %cst_8 = arith.constant 0.000000e+00 : f32
    %9 = vector.broadcast %cst_8 : f32 to vector<4x4xf32>
    %10 = arith.mulf %2, %5 : vector<4x4x16xf32>
    %cst_9 = arith.constant dense<0.000000e+00> : vector<4x4xf32>
    %11 = vector.multi_reduction <add>, %10, %cst_9 [2] : vector<4x4x16xf32> to vector<4x4xf32>
    %cst_10 = arith.constant 6.250000e-02 : f32
    %12 = vector.broadcast %cst_10 : f32 to vector<4x4xf32>
    %13 = arith.mulf %11, %12 : vector<4x4xf32>
    %14 = arith.maximumf %7, %13 : vector<4x4xf32>
    %15 = arith.subf %7, %14 : vector<4x4xf32>
    %16 = math.exp %15 : vector<4x4xf32>
    %17 = arith.subf %13, %14 : vector<4x4xf32>
    %18 = math.exp %17 : vector<4x4xf32>
    %19 = arith.mulf %8, %16 : vector<4x4xf32>
    %20 = arith.addf %19, %18 : vector<4x4xf32>
    %21 = arith.mulf %9, %16 : vector<4x4xf32>
    %cst_11 = arith.constant 0.000000e+00 : f32
    %22 = vector.broadcast %cst_11 : f32 to vector<4x4xf32>
    %23 = arith.mulf %18, %22 : vector<4x4xf32>
    %24 = arith.addf %21, %23 : vector<4x4xf32>
    %25 = vector.extract_strided_slice %5 {offsets = [0, 1, 0], sizes = [4, 3, 16], strides = [1, 1, 1]} : vector<4x4x16xf32> to vector<4x3x16xf32>
    %cst_12 = arith.constant 0.000000e+00 : f32
    %26 = vector.broadcast %cst_12 : f32 to vector<4x1x16xf32>
    %27 = tpu.concatenate %25, %26 in 1 : vector<4x3x16xf32>, vector<4x1x16xf32> -> vector<4x4x16xf32>
    %28 = arith.mulf %2, %27 : vector<4x4x16xf32>
    %cst_13 = arith.constant dense<0.000000e+00> : vector<4x4xf32>
    %29 = vector.multi_reduction <add>, %28, %cst_13 [2] : vector<4x4x16xf32> to vector<4x4xf32>
    %cst_14 = arith.constant 6.250000e-02 : f32
    %30 = vector.broadcast %cst_14 : f32 to vector<4x4xf32>
    %31 = arith.mulf %29, %30 : vector<4x4xf32>
    %c3_i32 = arith.constant 3 : i32
    %32 = vector.broadcast %c3_i32 : i32 to vector<4x4xi32>
    %33 = arith.cmpi slt, %6, %32 : vector<4x4xi32>
    %cst_15 = arith.constant -1.000000e+30 : f32
    %34 = vector.broadcast %cst_15 : f32 to vector<4x4xf32>
    %35 = arith.select %33, %31, %34 : vector<4x4xi1>, vector<4x4xf32>
    %36 = arith.maximumf %14, %35 : vector<4x4xf32>
    %37 = arith.subf %14, %36 : vector<4x4xf32>
    %38 = math.exp %37 : vector<4x4xf32>
    %39 = arith.subf %35, %36 : vector<4x4xf32>
    %40 = math.exp %39 : vector<4x4xf32>
    %41 = arith.mulf %20, %38 : vector<4x4xf32>
    %42 = arith.addf %41, %40 : vector<4x4xf32>
    %43 = arith.mulf %24, %38 : vector<4x4xf32>
    %cst_16 = arith.constant 1.000000e+00 : f32
    %44 = vector.broadcast %cst_16 : f32 to vector<4x4xf32>
    %45 = arith.mulf %40, %44 : vector<4x4xf32>
    %46 = arith.addf %43, %45 : vector<4x4xf32>
    %47 = vector.extract_strided_slice %5 {offsets = [0, 2, 0], sizes = [4, 2, 16], strides = [1, 1, 1]} : vector<4x4x16xf32> to vector<4x2x16xf32>
    %cst_17 = arith.constant 0.000000e+00 : f32
    %48 = vector.broadcast %cst_17 : f32 to vector<4x2x16xf32>
    %49 = tpu.concatenate %47, %48 in 1 : vector<4x2x16xf32>, vector<4x2x16xf32> -> vector<4x4x16xf32>
    %50 = arith.mulf %2, %49 : vector<4x4x16xf32>
    %cst_18 = arith.constant dense<0.000000e+00> : vector<4x4xf32>
    %51 = vector.multi_reduction <add>, %50, %cst_18 [2] : vector<4x4x16xf32> to vector<4x4xf32>
    %cst_19 = arith.constant 6.250000e-02 : f32
    %52 = vector.broadcast %cst_19 : f32 to vector<4x4xf32>
    %53 = arith.mulf %51, %52 : vector<4x4xf32>
    %c2_i32 = arith.constant 2 : i32
    %54 = vector.broadcast %c2_i32 : i32 to vector<4x4xi32>
    %55 = arith.cmpi slt, %6, %54 : vector<4x4xi32>
    %cst_20 = arith.constant -1.000000e+30 : f32
    %56 = vector.broadcast %cst_20 : f32 to vector<4x4xf32>
    %57 = arith.select %55, %53, %56 : vector<4x4xi1>, vector<4x4xf32>
    %58 = arith.maximumf %36, %57 : vector<4x4xf32>
    %59 = arith.subf %36, %58 : vector<4x4xf32>
    %60 = math.exp %59 : vector<4x4xf32>
    %61 = arith.subf %57, %58 : vector<4x4xf32>
    %62 = math.exp %61 : vector<4x4xf32>
    %63 = arith.mulf %42, %60 : vector<4x4xf32>
    %64 = arith.addf %63, %62 : vector<4x4xf32>
    %65 = arith.mulf %46, %60 : vector<4x4xf32>
    %cst_21 = arith.constant 2.000000e+00 : f32
    %66 = vector.broadcast %cst_21 : f32 to vector<4x4xf32>
    %67 = arith.mulf %62, %66 : vector<4x4xf32>
    %68 = arith.addf %65, %67 : vector<4x4xf32>
    %69 = vector.extract_strided_slice %5 {offsets = [0, 3, 0], sizes = [4, 1, 16], strides = [1, 1, 1]} : vector<4x4x16xf32> to vector<4x1x16xf32>
    %cst_22 = arith.constant 0.000000e+00 : f32
    %70 = vector.broadcast %cst_22 : f32 to vector<4x3x16xf32>
    %71 = tpu.concatenate %69, %70 in 1 : vector<4x1x16xf32>, vector<4x3x16xf32> -> vector<4x4x16xf32>
    %72 = arith.mulf %2, %71 : vector<4x4x16xf32>
    %cst_23 = arith.constant dense<0.000000e+00> : vector<4x4xf32>
    %73 = vector.multi_reduction <add>, %72, %cst_23 [2] : vector<4x4x16xf32> to vector<4x4xf32>
    %cst_24 = arith.constant 6.250000e-02 : f32
    %74 = vector.broadcast %cst_24 : f32 to vector<4x4xf32>
    %75 = arith.mulf %73, %74 : vector<4x4xf32>
    %c1_i32 = arith.constant 1 : i32
    %76 = vector.broadcast %c1_i32 : i32 to vector<4x4xi32>
    %77 = arith.cmpi slt, %6, %76 : vector<4x4xi32>
    %cst_25 = arith.constant -1.000000e+30 : f32
    %78 = vector.broadcast %cst_25 : f32 to vector<4x4xf32>
    %79 = arith.select %77, %75, %78 : vector<4x4xi1>, vector<4x4xf32>
    %80 = arith.maximumf %58, %79 : vector<4x4xf32>
    %81 = arith.subf %58, %80 : vector<4x4xf32>
    %82 = math.exp %81 : vector<4x4xf32>
    %83 = arith.subf %79, %80 : vector<4x4xf32>
    %84 = math.exp %83 : vector<4x4xf32>
    %85 = arith.mulf %64, %82 : vector<4x4xf32>
    %86 = arith.addf %85, %84 : vector<4x4xf32>
    %87 = arith.mulf %68, %82 : vector<4x4xf32>
    %cst_26 = arith.constant 3.000000e+00 : f32
    %88 = vector.broadcast %cst_26 : f32 to vector<4x4xf32>
    %89 = arith.mulf %84, %88 : vector<4x4xf32>
    %90 = arith.addf %87, %89 : vector<4x4xf32>
    %91 = tpu.reciprocal %86 {approx = true} : vector<4x4xf32> -> vector<4x4xf32>
    %92 = arith.mulf %90, %91 : vector<4x4xf32>
    %c0_27 = arith.constant 0 : index
    %c0_28 = arith.constant 0 : index
    %c0_29 = arith.constant 0 : index
    %93 = vector.load %arg3[%c0_27, %c0_28, %c0_29] : memref<1x4x4xf32, #tpu.memory_space<vmem>>, vector<1x4x4xf32>
    %94 = vector.shape_cast %93 : vector<1x4x4xf32> to vector<4x4xf32>
    %95 = vector.shape_cast %92 : vector<4x4xf32> to vector<1x4x4xf32>
    tpu.vector_store %arg3[%c0_27, %c0_28, %c0_29], %95 {strides = array<i32>} : memref<1x4x4xf32, #tpu.memory_space<vmem>>, vector<1x4x4xf32>,
    return
  }
  func.func @transform_0(%arg0: i32) -> (i32, i32, i32, i32) {
    %c0_i32 = arith.constant 0 : i32
    %c0_i32_0 = arith.constant 0 : i32
    %c0_i32_1 = arith.constant 0 : i32
    %c0_i32_2 = arith.constant 0 : i32
    return %arg0, %c0_i32, %c0_i32_0, %c0_i32_1 : i32, i32, i32, i32
  }
  func.func @transform_1(%arg0: i32) -> (i32, i32, i32, i32) {
    %c0_i32 = arith.constant 0 : i32
    %c0_i32_0 = arith.constant 0 : i32
    %c0_i32_1 = arith.constant 0 : i32
    %c0_i32_2 = arith.constant 0 : i32
    return %arg0, %c0_i32, %c0_i32_0, %c0_i32_1 : i32, i32, i32, i32
  }
  func.func @transform_2(%arg0: i32) -> (i32, i32, i32) {
    %c0_i32 = arith.constant 0 : i32
    %c0_i32_0 = arith.constant 0 : i32
    %c0_i32_1 = arith.constant 0 : i32
    return %arg0, %c0_i32, %c0_i32_0 : i32, i32, i32
  }
}

</mosaic_0001>

<llo_original>
// kernel: tile.43
$region0: #{tile.43}
  #allocation0 [shape = 's32[1]{0}', space=sflag, size = 0x4, scoped, tag = 'scoped memory for tile.43']
  %s0 = inlined_call_operand.vmem [shape: f32[8], index: 0, kind: input, shape index: {}]
  %s1 = inlined_call_operand.vmem [shape: f32[8,8], index: 1, kind: output, shape index: {}]
  // Predicated region
  $region2: #{tile.43} parent=0 // pred_check
    _
  $region3: #{tile.43} parent=0 // pred_check_branch
    %3 = sbr.rel (0) target = $region5
  $region4: #{tile.43} parent=0 // pred_region
    _
  $region5: #{tile.43} parent=0 // pred_fallthru
    _
  %v4 = vld [vmem:[%s0] ss:$0 sm:$0xff]
  %5 = vst [vmem:[%s1] sm:$0xff] %v4

// kernel: tile.44
$region0: #{tile.44}
  %s0 = inlined_call_operand.vmem [shape: f32[8,8], index: 0, kind: input, shape index: {}]
  %s1 = inlined_call_operand.vmem [shape: f32[1,64], index: 1, kind: output, shape index: {}]
  $region1: #{tile.44} parent=0
    #allocation0 [shape = 'u8[4096]{0}', space=vmem, size = 0x1000, scoped, tag = 'scoped mem for output reshape']
    %v2 = vld [vmem:[%s0] sm:$0x1]
    %vm3 = vcmask 64512
    %4 = vst.msk [vmem:[#allocation0] sm:$0x1] %vm3, %v2
    %s5 = scalar_lea.vmem %s0, 7
    %v6 = vld [vmem:[%s5] sm:$0x1]
    %7 = vrot.lane.b32.xlu0 %v6, 56
    %v8 = vpop.permute.xlu0 %7
    %vm9 = vcmask 523712
    %10 = vst.msk [vmem:[#allocation0] sm:$0x1] %vm9, %v8
    %s11 = scalar_lea.vmem %s0, 6
    %v12 = vld [vmem:[%s11] sm:$0x1]
    %13 = vrot.lane.b32.xlu0 %v12, 48
    %v14 = vpop.permute.xlu0 %13
    %vm15 = vcmask 458112
    %16 = vst.msk [vmem:[#allocation0] sm:$0x1] %vm15, %v14
    %s17 = scalar_lea.vmem %s0, 5
    %v18 = vld [vmem:[%s17] sm:$0x1]
    %19 = vrot.lane.b32.xlu0 %v18, 40
    %v20 = vpop.permute.xlu0 %19
    %vm21 = vcmask 392512
    %22 = vst.msk [vmem:[#allocation0] sm:$0x1] %vm21, %v20
    %s23 = scalar_lea.vmem %s0, 4
    %v24 = vld [vmem:[%s23] sm:$0x1]
    %25 = vrot.lane.b32.xlu0 %v24, 32
    %v26 = vpop.permute.xlu0 %25
    %vm27 = vcmask 326912
    %28 = vst.msk [vmem:[#allocation0] sm:$0x1] %vm27, %v26
    %s29 = scalar_lea.vmem %s0, 3
    %v30 = vld [vmem:[%s29] sm:$0x1]
    %31 = vrot.lane.b32.xlu0 %v30, 24
    %v32 = vpop.permute.xlu0 %31
    %vm33 = vcmask 261312
    %34 = vst.msk [vmem:[#allocation0] sm:$0x1] %vm33, %v32
    %s35 = scalar_lea.vmem %s0, 2
    %v36 = vld [vmem:[%s35] sm:$0x1]
    %37 = vrot.lane.b32.xlu0 %v36, 16
    %v38 = vpop.permute.xlu0 %37
    %vm39 = vcmask 195712
    %40 = vst.msk [vmem:[#allocation0] sm:$0x1] %vm39, %v38
    %s41 = scalar_lea.vmem %s0, 1
    %v42 = vld [vmem:[%s41] sm:$0x1]
    %43 = vrot.lane.b32.xlu0 %v42, 8
    %v44 = vpop.permute.xlu0 %43
    %vm45 = vcmask 130112
    %46 = vst.msk [vmem:[#allocation0] sm:$0x1] %vm45, %v44
    %s48 = sshllo.u32 0, 1
    %v50 = vld [vmem:[#allocation0] sm:%s48]
    %s51 = sshllo.u32 0, 1
    %52 = vst [vmem:[%s1] sm:%s51] %v50

// kernel: iasmnet_forward.10
$region0: #{iasmnet_forward.10}
  #allocation0 [shape = 'u32[]', space=smem, size = 0x4, offset = 0x4, fixed_abs, tag = 'smem constant byte address 0x4 - core index']
  #allocation1 [shape = 'u32[144,128]{1,0:T(1,128)}', space=vmem, size = 0x12000, scoped, tag = 'internal scratch']
  %s0 = inlined_call_operand.vmem [shape: bf16[16,9,27], index: 0, kind: input, shape index: {}]
  %s1 = inlined_call_operand.vmem [shape: bf16[6,27,64], index: 1, kind: input, shape index: {}]
  %s2 = inlined_call_operand.vmem [shape: f32[1,64], index: 2, kind: input, shape index: {}]
  %s3 = inlined_call_operand.vmem [shape: bf16[4,8,64], index: 3, kind: output, shape index: {}]
  %s4 = sld [smem:[#allocation0]]
  $region45: #{iasmnet_forward.10} parent=0
    _
  %s6 = ssub.s32 1, %s4
  %s7 = scalar_select 0, %s6, %s4
  loop: start=0, step=1, limit=6
  $region2: #{iasmnet_forward.10} parent=0 // loop_pre_header
    _
  $region3: #{iasmnet_forward.10} parent=0 // loop_header
    %s9 = sphi 0, %s13
    %p10 = scmp.ge.s32.totalorder %s9, 6
    %s19 = sphi 0, %s21
    %s22 = sphi 0, %s19
    %s23 = sphi 0, %s22
    %s39 = sphi 0, %s23
    %s43 = sphi 0, %s43
    %s45 = sphi 0, %s43
    %s46 = sphi 0, %s45
    %s60 = sphi 0, %s46
    %s64 = sphi 0, %s64
    %s66 = sphi 0, %s64
    %s67 = sphi 0, %s66
    %s81 = sphi 0, %s67
    %s87 = sphi 0, %s89
    %s90 = sphi 0, %s87
    %s91 = sphi 0, %s90
    %s107 = sphi 0, %s91
  $region4: #{iasmnet_forward.10} parent=0 // loop_header_branch
    %12 = sbr.rel (%p10) target = $region8
  $region5: #{iasmnet_forward.10} parent=0 // loop_body
    %s14 = ssub.s32 %s9, 1
    %s15 = ssub.s32 %s9, 2
    %s16 = sadd.s32 %s9, 1
    %s17 = ssub.s32 %s9, %s16
    %p18 = scmp.eq.s32.totalorder %s17, 0
    %s20 = sadd.s32 %s19, 1
    %s21 = scalar_select %p18, %s19, %s20
    %p24 = pneg %p18
    %p25 = scmp.eq.s32.totalorder %s9, 3
    %p26 = por %p24, %p25
    %p27 = scmp.ne.s32.totalorder %s19, %s22
    %p28 = scmp.eq.s32.totalorder %s9, 0
    %p29 = por %p27, %p28
    %p30 = scmp.ne.s32.totalorder %s19, %s22
    %p31 = scmp.eq.s32.totalorder %s14, 3
    %p32 = por %p30, %p31
    %p33 = scmp.ne.s32.totalorder %s22, %s23
    %p34 = scmp.eq.s32.totalorder %s14, 0
    %p35 = por %p33, %p34
    %p36 = scmp.ne.s32.totalorder %s22, %s23
    %p37 = scmp.eq.s32.totalorder %s15, 3
    %p38 = por %p36, %p37
    %p40 = scmp.ne.s32.totalorder %s23, %s39
    %p41 = scmp.eq.s32.totalorder %s15, 0
    %p42 = por %p40, %p41
    %s44 = sadd.s32 %s43, 1
    %p47 = scmp.eq.s32.totalorder %s9, 3
    %p48 = scmp.ne.s32.totalorder %s43, %s45
    %p49 = scmp.eq.s32.totalorder %s9, 0
    %p50 = por %p48, %p49
    %p51 = scmp.ne.s32.totalorder %s43, %s45
    %p52 = scmp.eq.s32.totalorder %s14, 3
    %p53 = por %p51, %p52
    %p54 = scmp.ne.s32.totalorder %s45, %s46
    %p55 = scmp.eq.s32.totalorder %s14, 0
    %p56 = por %p54, %p55
    %p57 = scmp.ne.s32.totalorder %s45, %s46
    %p58 = scmp.eq.s32.totalorder %s15, 3
    %p59 = por %p57, %p58
    %p61 = scmp.ne.s32.totalorder %s46, %s60
    %p62 = scmp.eq.s32.totalorder %s15, 0
    %p63 = por %p61, %p62
    %s65 = sadd.s32 %s64, 1
    %p68 = scmp.eq.s32.totalorder %s9, 3
    %p69 = scmp.ne.s32.totalorder %s64, %s66
    %p70 = scmp.eq.s32.totalorder %s9, 0
    %p71 = por %p69, %p70
    %p72 = scmp.ne.s32.totalorder %s64, %s66
    %p73 = scmp.eq.s32.totalorder %s14, 3
    %p74 = por %p72, %p73
    %p75 = scmp.ne.s32.totalorder %s66, %s67
    %p76 = scmp.eq.s32.totalorder %s14, 0
    %p77 = por %p75, %p76
    %p78 = scmp.ne.s32.totalorder %s66, %s67
    %p79 = scmp.eq.s32.totalorder %s15, 3
    %p80 = por %p78, %p79
    %p82 = scmp.ne.s32.totalorder %s67, %s81
    %p83 = scmp.eq.s32.totalorder %s15, 0
    %p84 = por %p82, %p83
    %s85 = ssub.s32 %s9, %s16
    %p86 = scmp.eq.s32.totalorder %s85, 0
    %s88 = sadd.s32 %s87, 1
    %s89 = scalar_select %p86, %s87, %s88
    %p92 = pneg %p86
    %p93 = scmp.eq.s32.totalorder %s9, 3
    %p94 = por %p92, %p93
    %p95 = scmp.ne.s32.totalorder %s87, %s90
    %p96 = scmp.eq.s32.totalorder %s9, 0
    %p97 = por %p95, %p96
    %p98 = scmp.ne.s32.totalorder %s87, %s90
    %p99 = scmp.eq.s32.totalorder %s14, 3
    %p100 = por %p98, %p99
    %p101 = scmp.ne.s32.totalorder %s90, %s91
    %p102 = scmp.eq.s32.totalorder %s14, 0
    %p103 = por %p101, %p102
    %p104 = scmp.ne.s32.totalorder %s90, %s91
    %p105 = scmp.eq.s32.totalorder %s15, 3
    %p106 = por %p104, %p105
    %p108 = scmp.ne.s32.totalorder %s91, %s107
    %p109 = scmp.eq.s32.totalorder %s15, 0
    %p110 = por %p108, %p109
    %p111 = scmp.le.s32.totalorder 1, %s9
    %p112 = scmp.lt.s32.totalorder %s9, 5
    %p113 = pnand %p111, %p112
    %p114 = pneg %p113
    // Predicated region
    $region9: #{iasmnet_forward.10} parent=5 // pred_check
      _
    $region10: #{iasmnet_forward.10} parent=5 // pred_check_branch
      %116 = sbr.rel (%p113) target = $region12
    $region11: #{iasmnet_forward.10} parent=5 // pred_region
      %s117 = ssub.s32 %s9, 1
      // Predicated region
      $region13: #{iasmnet_forward.10} parent=11 // pred_check
        %p118 = pneg %p56
      $region14: #{iasmnet_forward.10} parent=11 // pred_check_branch
        %120 = sbr.rel (%p118) target = $region16
      $region15: #{iasmnet_forward.10} parent=11 // pred_region
        _
      $region16: #{iasmnet_forward.10} parent=11 // pred_fallthru
        _
      // Predicated region
      $region17: #{iasmnet_forward.10} parent=11 // pred_check
        %p121 = pneg %p77
      $region18: #{iasmnet_forward.10} parent=11 // pred_check_branch
        %123 = sbr.rel (%p121) target = $region20
      $region19: #{iasmnet_forward.10} parent=11 // pred_region
        _
      $region20: #{iasmnet_forward.10} parent=11 // pred_fallthru
        _
    $region12: #{iasmnet_forward.10} parent=5 // pred_fallthru
      _
    %p124 = scmp.lt.s32.totalorder %s9, 4
    // Predicated region
    $region21: #{iasmnet_forward.10} parent=5 // pred_check
      %p125 = pneg %p124
    $region22: #{iasmnet_forward.10} parent=5 // pred_check_branch
      %127 = sbr.rel (%p125) target = $region24
    $region23: #{iasmnet_forward.10} parent=5 // pred_region
      // Predicated region
      $region25: #{iasmnet_forward.10} parent=23 // pred_check
        %p128 = pneg %p29
      $region26: #{iasmnet_forward.10} parent=23 // pred_check_branch
        %130 = sbr.rel (%p128) target = $region28
      $region27: #{iasmnet_forward.10} parent=23 // pred_region
        %s131 = smul.u32 4, %s9
        %p132 = scmp.lt.s32.totalorder %s131, 15
        %s133 = scalar_select %p132, %s131, 15
        %s134 = smul.addr %s133, 2
        %s135 = smul.addr %s134, 4
        %s136 = scalar_lea.vmem %s0, %s135
        %s137 = smul.u32 4, %s9
      $region28: #{iasmnet_forward.10} parent=23 // pred_fallthru
        _
    $region24: #{iasmnet_forward.10} parent=5 // pred_fallthru
      _
    %p138 = scmp.le.s32.totalorder 1, %s9
    %p139 = scmp.lt.s32.totalorder %s9, 5
    %p140 = pnand %p138, %p139
    %p141 = pneg %p140
    // Predicated region
    $region29: #{iasmnet_forward.10} parent=5 // pred_check
      _
    $region30: #{iasmnet_forward.10} parent=5 // pred_check_branch
      %143 = sbr.rel (%p140) target = $region32
    $region31: #{iasmnet_forward.10} parent=5 // pred_region
      %s144 = ssub.s32 %s9, 1
      %s145 = smul.u32 4, %s14
      %p146 = scmp.lt.s32.totalorder %s145, 15
      %s147 = scalar_select %p146, %s145, 15
      %s148 = smul.addr %s147, 2
      %s149 = smul.addr %s148, 4
      %s150 = scalar_lea.vmem %s0, %s149
      %p151 = pneg %p35
      %p152 = pneg %p32
      %p153 = pneg %p56
      %p154 = pneg %p53
      %p155 = pneg %p77
      %p156 = pneg %p74
      %p157 = pneg %p103
      %p158 = pneg %p100
      %p159 = scmp.lt.s32.totalorder %s14, 3
      %s160 = scalar_select %p159, %s14, 3
      %s161 = smul.addr %s160, 4
      %s162 = scalar_lea.vmem %s3, %s161
      %s163 = smul.u32 4, %s14
      %p164 = scmp.lt.s32.totalorder %s163, 15
      %s165 = scalar_select %p164, %s163, 15
      %s166 = smul.addr %s165, 2
      %s167 = smul.addr %s166, 4
      %s168 = scalar_lea.vmem %s0, %s167
      %s169 = smul.u32 4, %s14
      %p170 = scmp.lt.s32.totalorder %s14, 3
      %s171 = scalar_select %p170, %s14, 3
      %s172 = smul.addr %s171, 4
      %s173 = scalar_lea.vmem %s3, %s172
      %v175 = vld [vmem:[%s168] sm:$0xf]
      %v176 = vld [vmem:[%s1] sm:$0xf]
      %v177 = vld [vmem:[%s1 + $0x4] sm:$0xf]
      %v178 = vld [vmem:[%s1 + $0x8] sm:$0xf]
      %v179 = vld [vmem:[%s1 + $0xc] sm:$0x3]
      %s180 = scalar_lea.vmem %s168, 8
      %v181 = vld [vmem:[%s180] sm:$0xf]
      %s182 = scalar_lea.vmem %s1, 16
      %v183 = vld [vmem:[%s182] sm:$0xf]
      %v184 = vld [vmem:[%s182 + $0x4] sm:$0xf]
      %v185 = vld [vmem:[%s182 + $0x8] sm:$0xf]
      %v186 = vld [vmem:[%s182 + $0xc] sm:$0x3]
      %v191 = vunpack.c.l.b16 %v183
      %v192 = vunpack.c.l.b16 %v184
      %v193 = vunpack.c.l.b16 %v185
      %v194 = vunpack.c.l.b16 %v186
      %v195 = vpack.c.b16 %v192, %v191
      %v196 = vpack.c.b16 %v194, %v193
      %vm198 = vcmask 220160
      %v200 = vsel %vm198, %v181, 0
      %vm202 = vcmask 1044480
      %vm203 = vcmask 1045504
      %v204 = vsel %vm202, 4294967295, 65535
      %v205 = vsel %vm203, %v204, 0
      %v207 = vand.u32 %v196, %v205
      %209 = vmatprep.subr.bf16.mxu0 0
      %210 = vmatpush1.bf16.msra.mxu0 %v195
      %211 = vmatprep.subr.bf16.mxu0 0
      %212 = vmatpush1.bf16.msra.mxu0 %v207
      %213 = vmatprep.subr.bf16.mxu0 0
      %214 = vmatpush1.bf16.msra.mxu0 0
      %215 = vmatprep.subr.bf16.mxu0 0
      %216 = vmatpush1.bf16.msra.mxu0 0
      %217 = vmatprep.subr.bf16.mxu0 0
      %218 = vmatpush1.bf16.msra.mxu0 0
      %219 = vmatprep.subr.bf16.mxu0 0
      %220 = vmatpush1.bf16.msra.mxu0 0
      %221 = vmatprep.subr.bf16.mxu0 0
      %222 = vmatpush1.bf16.msra.mxu0 0
      %223 = vmatprep.subr.bf16.mxu0 0
      %224 = vmatpush1.bf16.msra.mxu0 0
      %225 = vmatprep.subr.bf16.mxu0 0
      %226 = vmatpush1.bf16.msra.mxu0 0
      %227 = vmatprep.subr.bf16.mxu0 0
      %228 = vmatpush1.bf16.msra.mxu0 0
      %229 = vmatprep.subr.bf16.mxu0 0
      %230 = vmatpush1.bf16.msra.mxu0 0
      %231 = vmatprep.subr.bf16.mxu0 0
      %232 = vmatpush1.bf16.msra.mxu0 0
      %233 = vmatprep.subr.bf16.mxu0 0
      %234 = vmatpush1.bf16.msra.mxu0 0
      %235 = vmatprep.subr.bf16.mxu0 0
      %236 = vmatpush1.bf16.msra.mxu0 0
      %237 = vmatprep.subr.bf16.mxu0 0
      %238 = vmatpush1.bf16.msra.mxu0 0
      %239 = vmatprep.subr.bf16.mxu0 0
      %240 = vmatpush1.bf16.msra.mxu0 0
      %241 = vmatprep.mubr.bf16.mxu0 0
      %242 = vmatmul.mubr.bf16.gmra.mrb[0].mxu0 %v200
      %v243 = vpop.f32.mrb[0].mxu0
      %v244 = vadd.f32 0.0, %v243
      %v245 = vpop.f32.mrb[0].mxu0
      %v246 = vpop.f32.mrb[0].mxu0
      %v247 = vpop.f32.mrb[0].mxu0
      %248 = vdwg.mxu0
      %v253 = vunpack.c.l.b16 %v176
      %v254 = vunpack.c.l.b16 %v177
      %v255 = vunpack.c.l.b16 %v178
      %v256 = vunpack.c.l.b16 %v179
      %v257 = vpack.c.b16 %v254, %v253
      %v258 = vpack.c.b16 %v256, %v255
      %v261 = vsel %vm198, %v175, 0
      %v264 = vand.u32 %v258, %v205
      %266 = vmatprep.subr.bf16.mxu0 0
      %267 = vmatpush1.bf16.msra.mxu0 %v257
      %268 = vmatprep.subr.bf16.mxu0 0
      %269 = vmatpush1.bf16.msra.mxu0 %v264
      %270 = vmatprep.subr.bf16.mxu0 0
      %271 = vmatpush1.bf16.msra.mxu0 0
      %272 = vmatprep.subr.bf16.mxu0 0
      %273 = vmatpush1.bf16.msra.mxu0 0
      %274 = vmatprep.subr.bf16.mxu0 0
      %275 = vmatpush1.bf16.msra.mxu0 0
      %276 = vmatprep.subr.bf16.mxu0 0
      %277 = vmatpush1.bf16.msra.mxu0 0
      %278 = vmatprep.subr.bf16.mxu0 0
      %279 = vmatpush1.bf16.msra.mxu0 0
      %280 = vmatprep.subr.bf16.mxu0 0
      %281 = vmatpush1.bf16.msra.mxu0 0
      %282 = vmatprep.subr.bf16.mxu0 0
      %283 = vmatpush1.bf16.msra.mxu0 0
      %284 = vmatprep.subr.bf16.mxu0 0
      %285 = vmatpush1.bf16.msra.mxu0 0
      %286 = vmatprep.subr.bf16.mxu0 0
      %287 = vmatpush1.bf16.msra.mxu0 0
      %288 = vmatprep.subr.bf16.mxu0 0
      %289 = vmatpush1.bf16.msra.mxu0 0
      %290 = vmatprep.subr.bf16.mxu0 0
      %291 = vmatpush1.bf16.msra.mxu0 0
      %292 = vmatprep.subr.bf16.mxu0 0
      %293 = vmatpush1.bf16.msra.mxu0 0
      %294 = vmatprep.subr.bf16.mxu0 0
      %295 = vmatpush1.bf16.msra.mxu0 0
      %296 = vmatprep.subr.bf16.mxu0 0
      %297 = vmatpush1.bf16.msra.mxu0 0
      %298 = vmatprep.mubr.bf16.mxu0 0
      %299 = vmatmul.mubr.bf16.gmra.mrb[0].mxu0 %v261
      %v300 = vpop.f32.mrb[0].mxu0
      %v301 = vadd.f32 %v244, %v300
      %v302 = vpop.f32.mrb[0].mxu0
      %v303 = vpop.f32.mrb[0].mxu0
      %v304 = vpop.f32.mrb[0].mxu0
      %305 = vdwg.mxu0
      %s306 = scalar_lea.vmem %s168, 16
      %v307 = vld [vmem:[%s306] sm:$0xf]
      %s308 = scalar_lea.vmem %s1, 32
      %v309 = vld [vmem:[%s308] sm:$0xf]
      %v310 = vld [vmem:[%s308 + $0x4] sm:$0xf]
      %v311 = vld [vmem:[%s308 + $0x8] sm:$0xf]
      %v312 = vld [vmem:[%s308 + $0xc] sm:$0x3]
      %v317 = vunpack.c.l.b16 %v309
      %v318 = vunpack.c.l.b16 %v310
      %v319 = vunpack.c.l.b16 %v311
      %v320 = vunpack.c.l.b16 %v312
      %v321 = vpack.c.b16 %v318, %v317
      %v322 = vpack.c.b16 %v320, %v319
      %v325 = vsel %vm198, %v307, 0
      %v328 = vand.u32 %v322, %v205
      %330 = vmatprep.subr.bf16.mxu0 0
      %331 = vmatpush1.bf16.msra.mxu0 %v321
      %332 = vmatprep.subr.bf16.mxu0 0
      %333 = vmatpush1.bf16.msra.mxu0 %v328
      %334 = vmatprep.subr.bf16.mxu0 0
      %335 = vmatpush1.bf16.msra.mxu0 0
      %336 = vmatprep.subr.bf16.mxu0 0
      %337 = vmatpush1.bf16.msra.mxu0 0
      %338 = vmatprep.subr.bf16.mxu0 0
      %339 = vmatpush1.bf16.msra.mxu0 0
      %340 = vmatprep.subr.bf16.mxu0 0
      %341 = vmatpush1.bf16.msra.mxu0 0
      %342 = vmatprep.subr.bf16.mxu0 0
      %343 = vmatpush1.bf16.msra.mxu0 0
      %344 = vmatprep.subr.bf16.mxu0 0
      %345 = vmatpush1.bf16.msra.mxu0 0
      %346 = vmatprep.subr.bf16.mxu0 0
      %347 = vmatpush1.bf16.msra.mxu0 0
      %348 = vmatprep.subr.bf16.mxu0 0
      %349 = vmatpush1.bf16.msra.mxu0 0
      %350 = vmatprep.subr.bf16.mxu0 0
      %351 = vmatpush1.bf16.msra.mxu0 0
      %352 = vmatprep.subr.bf16.mxu0 0
      %353 = vmatpush1.bf16.msra.mxu0 0
      %354 = vmatprep.subr.bf16.mxu0 0
      %355 = vmatpush1.bf16.msra.mxu0 0
      %356 = vmatprep.subr.bf16.mxu0 0
      %357 = vmatpush1.bf16.msra.mxu0 0
      %358 = vmatprep.subr.bf16.mxu0 0
      %359 = vmatpush1.bf16.msra.mxu0 0
      %360 = vmatprep.subr.bf16.mxu0 0
      %361 = vmatpush1.bf16.msra.mxu0 0
      %362 = vmatprep.mubr.bf16.mxu0 0
      %363 = vmatmul.mubr.bf16.gmra.mrb[0].mxu0 %v325
      %v364 = vpop.f32.mrb[0].mxu0
      %v365 = vadd.f32 0.0, %v364
      %v366 = vpop.f32.mrb[0].mxu0
      %v367 = vpop.f32.mrb[0].mxu0
      %v368 = vpop.f32.mrb[0].mxu0
      %369 = vdwg.mxu0
      %v370 = vadd.f32 %v301, %v365
      %s371 = scalar_lea.vmem %s168, 24
      %v372 = vld [vmem:[%s371] sm:$0xf]
      %s373 = scalar_lea.vmem %s1, 48
      %v374 = vld [vmem:[%s373] sm:$0xf]
      %v375 = vld [vmem:[%s373 + $0x4] sm:$0xf]
      %v376 = vld [vmem:[%s373 + $0x8] sm:$0xf]
      %v377 = vld [vmem:[%s373 + $0xc] sm:$0x3]
      %v382 = vunpack.c.l.b16 %v374
      %v383 = vunpack.c.l.b16 %v375
      %v384 = vunpack.c.l.b16 %v376
      %v385 = vunpack.c.l.b16 %v377
      %v386 = vpack.c.b16 %v383, %v382
      %v387 = vpack.c.b16 %v385, %v384
      %v390 = vsel %vm198, %v372, 0
      %v393 = vand.u32 %v387, %v205
      %395 = vmatprep.subr.bf16.mxu0 0
      %396 = vmatpush1.bf16.msra.mxu0 %v386
      %397 = vmatprep.subr.bf16.mxu0 0
      %398 = vmatpush1.bf16.msra.mxu0 %v393
      %399 = vmatprep.subr.bf16.mxu0 0
      %400 = vmatpush1.bf16.msra.mxu0 0
      %401 = vmatprep.subr.bf16.mxu0 0
      %402 = vmatpush1.bf16.msra.mxu0 0
      %403 = vmatprep.subr.bf16.mxu0 0
      %404 = vmatpush1.bf16.msra.mxu0 0
      %405 = vmatprep.subr.bf16.mxu0 0
      %406 = vmatpush1.bf16.msra.mxu0 0
      %407 = vmatprep.subr.bf16.mxu0 0
      %408 = vmatpush1.bf16.msra.mxu0 0
      %409 = vmatprep.subr.bf16.mxu0 0
      %410 = vmatpush1.bf16.msra.mxu0 0
      %411 = vmatprep.subr.bf16.mxu0 0
      %412 = vmatpush1.bf16.msra.mxu0 0
      %413 = vmatprep.subr.bf16.mxu0 0
      %414 = vmatpush1.bf16.msra.mxu0 0
      %415 = vmatprep.subr.bf16.mxu0 0
      %416 = vmatpush1.bf16.msra.mxu0 0
      %417 = vmatprep.subr.bf16.mxu0 0
      %418 = vmatpush1.bf16.msra.mxu0 0
      %419 = vmatprep.subr.bf16.mxu0 0
      %420 = vmatpush1.bf16.msra.mxu0 0
      %421 = vmatprep.subr.bf16.mxu0 0
      %422 = vmatpush1.bf16.msra.mxu0 0
      %423 = vmatprep.subr.bf16.mxu0 0
      %424 = vmatpush1.bf16.msra.mxu0 0
      %425 = vmatprep.subr.bf16.mxu0 0
      %426 = vmatpush1.bf16.msra.mxu0 0
      %427 = vmatprep.mubr.bf16.mxu0 0
      %428 = vmatmul.mubr.bf16.gmra.mrb[0].mxu0 %v390
      %v429 = vpop.f32.mrb[0].mxu0
      %v430 = vadd.f32 0.0, %v429
      %v431 = vpop.f32.mrb[0].mxu0
      %v432 = vpop.f32.mrb[0].mxu0
      %v433 = vpop.f32.mrb[0].mxu0
      %434 = vdwg.mxu0
      %v435 = vadd.f32 %v370, %v430
      %v436 = vld [vmem:[%s168] sm:$0xf]
      %v437 = vld [vmem:[%s168 + $0x4] sm:$0x1]
      %s438 = scalar_lea.vmem %s1, 64
      %v439 = vld [vmem:[%s438] sm:$0xf]
      %v440 = vld [vmem:[%s438 + $0x4] sm:$0xf]
      %v441 = vld [vmem:[%s438 + $0x8] sm:$0xf]
      %v442 = vld [vmem:[%s438 + $0xc] sm:$0x3]
      %v445 = vunpack.c.l.b16 %v436
      %v446 = vunpack.c.l.b16 %v437
      %v447 = vpack.c.b16 %v446, %v445
      %v449 = vshrl.u32 %v447, 16
      %v451 = vshll.u32 %v447, 16
      %v453 = vrot.slane %v451, 1
      %v454 = vor.u32 %v449, %v453
      %v459 = vunpack.c.l.b16 %v439
      %v460 = vunpack.c.l.b16 %v440
      %v461 = vunpack.c.l.b16 %v441
      %v462 = vunpack.c.l.b16 %v442
      %v463 = vpack.c.b16 %v460, %v459
      %v464 = vpack.c.b16 %v462, %v461
      %v467 = vsel %vm198, %v454, 0
      %v470 = vand.u32 %v464, %v205
      %472 = vmatprep.subr.bf16.mxu0 0
      %473 = vmatpush1.bf16.msra.mxu0 %v463
      %474 = vmatprep.subr.bf16.mxu0 0
      %475 = vmatpush1.bf16.msra.mxu0 %v470
      %476 = vmatprep.subr.bf16.mxu0 0
      %477 = vmatpush1.bf16.msra.mxu0 0
      %478 = vmatprep.subr.bf16.mxu0 0
      %479 = vmatpush1.bf16.msra.mxu0 0
      %480 = vmatprep.subr.bf16.mxu0 0
      %481 = vmatpush1.bf16.msra.mxu0 0
      %482 = vmatprep.subr.bf16.mxu0 0
      %483 = vmatpush1.bf16.msra.mxu0 0
      %484 = vmatprep.subr.bf16.mxu0 0
      %485 = vmatpush1.bf16.msra.mxu0 0
      %486 = vmatprep.subr.bf16.mxu0 0
      %487 = vmatpush1.bf16.msra.mxu0 0
      %488 = vmatprep.subr.bf16.mxu0 0
      %489 = vmatpush1.bf16.msra.mxu0 0
      %490 = vmatprep.subr.bf16.mxu0 0
      %491 = vmatpush1.bf16.msra.mxu0 0
      %492 = vmatprep.subr.bf16.mxu0 0
      %493 = vmatpush1.bf16.msra.mxu0 0
      %494 = vmatprep.subr.bf16.mxu0 0
      %495 = vmatpush1.bf16.msra.mxu0 0
      %496 = vmatprep.subr.bf16.mxu0 0
      %497 = vmatpush1.bf16.msra.mxu0 0
      %498 = vmatprep.subr.bf16.mxu0 0
      %499 = vmatpush1.bf16.msra.mxu0 0
      %500 = vmatprep.subr.bf16.mxu0 0
      %501 = vmatpush1.bf16.msra.mxu0 0
      %502 = vmatprep.subr.bf16.mxu0 0
      %503 = vmatpush1.bf16.msra.mxu0 0
      %504 = vmatprep.mubr.bf16.mxu0 0
      %505 = vmatmul.mubr.bf16.gmra.mrb[0].mxu0 %v467
      %v506 = vpop.f32.mrb[0].mxu0
      %v507 = vadd.f32 0.0, %v506
      %v508 = vpop.f32.mrb[0].mxu0
      %v509 = vpop.f32.mrb[0].mxu0
      %v510 = vpop.f32.mrb[0].mxu0
      %511 = vdwg.mxu0
      %v512 = vadd.f32 %v435, %v507
      %v513 = vld [vmem:[%s180] sm:$0xf]
      %v514 = vld [vmem:[%s180 + $0x4] sm:$0x1]
      %s515 = scalar_lea.vmem %s1, 80
      %v516 = vld [vmem:[%s515] sm:$0xf]
      %v517 = vld [vmem:[%s515 + $0x4] sm:$0xf]
      %v518 = vld [vmem:[%s515 + $0x8] sm:$0xf]
      %v519 = vld [vmem:[%s515 + $0xc] sm:$0x3]
      %v522 = vunpack.c.l.b16 %v513
      %v523 = vunpack.c.l.b16 %v514
      %v524 = vpack.c.b16 %v523, %v522
      %v526 = vshrl.u32 %v524, 16
      %v528 = vshll.u32 %v524, 16
      %v530 = vrot.slane %v528, 1
      %v531 = vor.u32 %v526, %v530
      %v536 = vunpack.c.l.b16 %v516
      %v537 = vunpack.c.l.b16 %v517
      %v538 = vunpack.c.l.b16 %v518
      %v539 = vunpack.c.l.b16 %v519
      %v540 = vpack.c.b16 %v537, %v536
      %v541 = vpack.c.b16 %v539, %v538
      %v544 = vsel %vm198, %v531, 0
      %v547 = vand.u32 %v541, %v205
      %549 = vmatprep.subr.bf16.mxu0 0
      %550 = vmatpush1.bf16.msra.mxu0 %v540
      %551 = vmatprep.subr.bf16.mxu0 0
      %552 = vmatpush1.bf16.msra.mxu0 %v547
      %553 = vmatprep.subr.bf16.mxu0 0
      %554 = vmatpush1.bf16.msra.mxu0 0
      %555 = vmatprep.subr.bf16.mxu0 0
      %556 = vmatpush1.bf16.msra.mxu0 0
      %557 = vmatprep.subr.bf16.mxu0 0
      %558 = vmatpush1.bf16.msra.mxu0 0
      %559 = vmatprep.subr.bf16.mxu0 0
      %560 = vmatpush1.bf16.msra.mxu0 0
      %561 = vmatprep.subr.bf16.mxu0 0
      %562 = vmatpush1.bf16.msra.mxu0 0
      %563 = vmatprep.subr.bf16.mxu0 0
      %564 = vmatpush1.bf16.msra.mxu0 0
      %565 = vmatprep.subr.bf16.mxu0 0
      %566 = vmatpush1.bf16.msra.mxu0 0
      %567 = vmatprep.subr.bf16.mxu0 0
      %568 = vmatpush1.bf16.msra.mxu0 0
      %569 = vmatprep.subr.bf16.mxu0 0
      %570 = vmatpush1.bf16.msra.mxu0 0
      %571 = vmatprep.subr.bf16.mxu0 0
      %572 = vmatpush1.bf16.msra.mxu0 0
      %573 = vmatprep.subr.bf16.mxu0 0
      %574 = vmatpush1.bf16.msra.mxu0 0
      %575 = vmatprep.subr.bf16.mxu0 0
      %576 = vmatpush1.bf16.msra.mxu0 0
      %577 = vmatprep.subr.bf16.mxu0 0
      %578 = vmatpush1.bf16.msra.mxu0 0
      %579 = vmatprep.subr.bf16.mxu0 0
      %580 = vmatpush1.bf16.msra.mxu0 0
      %581 = vmatprep.mubr.bf16.mxu0 0
      %582 = vmatmul.mubr.bf16.gmra.mrb[0].mxu0 %v544
      %v583 = vpop.f32.mrb[0].mxu0
      %v584 = vadd.f32 0.0, %v583
      %v585 = vpop.f32.mrb[0].mxu0
      %v586 = vpop.f32.mrb[0].mxu0
      %v587 = vpop.f32.mrb[0].mxu0
      %588 = vdwg.mxu0
      %v589 = vadd.f32 %v512, %v584
      %v590 = vld [vmem:[%s2] sm:$0x1]
      %v592 = vlaneseq
      %v593 = vshrl.u32 %v592, 7
      %v594 = vsub.s32 0, %v593
      %v595 = vrot.slane %v590, %v594
      %v597 = vadd.f32 %v589, %v595
      %vm598 = vcmp.gt.f32.partialorder %v597, 0.0
      %v599 = vmul.f32 %v597, 0.2
      %v600 = vsel %vm598, %v597, %v599
      %v601 = vpack.c.bf16 %v600, %v600
      %vm602 = vcmask 519168
      %603 = vst.msk [vmem:[%s173] sm:$0xf] %vm602, %v601
      %p604 = scmp.lt.s32.totalorder %s14, 3
      %s605 = scalar_select %p604, %s14, 3
      %s606 = smul.addr %s605, 4
      %s607 = scalar_lea.vmem %s3, %s606
      // Predicated region
      $region33: #{iasmnet_forward.10} parent=31 // pred_check
        %p608 = pneg %p100
      $region34: #{iasmnet_forward.10} parent=31 // pred_check_branch
        %610 = sbr.rel (%p608) target = $region36
      $region35: #{iasmnet_forward.10} parent=31 // pred_region
        _
      $region36: #{iasmnet_forward.10} parent=31 // pred_fallthru
        _
    $region32: #{iasmnet_forward.10} parent=5 // pred_fallthru
      _
    %p611 = scmp.le.s32.totalorder 2, %s9
    // Predicated region
    $region37: #{iasmnet_forward.10} parent=5 // pred_check
      %p612 = pneg %p611
    $region38: #{iasmnet_forward.10} parent=5 // pred_check_branch
      %614 = sbr.rel (%p612) target = $region40
    $region39: #{iasmnet_forward.10} parent=5 // pred_region
      %s615 = ssub.s32 %s9, 2
      // Predicated region
      $region41: #{iasmnet_forward.10} parent=39 // pred_check
        %p616 = pneg %p106
      $region42: #{iasmnet_forward.10} parent=39 // pred_check_branch
        %618 = sbr.rel (%p616) target = $region44
      $region43: #{iasmnet_forward.10} parent=39 // pred_region
        %p619 = scmp.lt.s32.totalorder %s15, 3
        %s620 = scalar_select %p619, %s15, 3
        %s621 = smul.addr %s620, 4
        %s622 = scalar_lea.vmem %s3, %s621
      $region44: #{iasmnet_forward.10} parent=39 // pred_fallthru
        _
    $region40: #{iasmnet_forward.10} parent=5 // pred_fallthru
      _
  $region6: #{iasmnet_forward.10} parent=0 // loop_footer
    %s13 = sadd.s32 1, %s9
  $region7: #{iasmnet_forward.10} parent=0 // loop_footer_branch
    %8 = sbr.rel target = $region3
  $region8: #{iasmnet_forward.10} parent=0 // loop_exit
    _

// kernel: iasmnet_forward.12
$region0: #{iasmnet_forward.12}
  #allocation0 [shape = 'u32[]', space=smem, size = 0x4, offset = 0x4, fixed_abs, tag = 'smem constant byte address 0x4 - core index']
  #allocation1 [shape = 'u32[144,128]{1,0:T(1,128)}', space=vmem, size = 0x12000, scoped, tag = 'internal scratch']
  %s0 = inlined_call_operand.vmem [shape: bf16[4,8,128], index: 0, kind: input, shape index: {}]
  %s1 = inlined_call_operand.vmem [shape: bf16[1,128,64], index: 1, kind: input, shape index: {}]
  %s2 = inlined_call_operand.vmem [shape: f32[1,64], index: 2, kind: input, shape index: {}]
  %s3 = inlined_call_operand.vmem [shape: bf16[4,8,64], index: 3, kind: output, shape index: {}]
  %s4 = sld [smem:[#allocation0]]
  $region45: #{iasmnet_forward.12} parent=0
    _
  %s6 = ssub.s32 1, %s4
  %s7 = scalar_select 0, %s6, %s4
  loop: start=0, step=1, limit=6
  $region2: #{iasmnet_forward.12} parent=0 // loop_pre_header
    _
  $region3: #{iasmnet_forward.12} parent=0 // loop_header
    %s9 = sphi 0, %s13
    %p10 = scmp.ge.s32.totalorder %s9, 6
    %s19 = sphi 0, %s21
    %s22 = sphi 0, %s19
    %s23 = sphi 0, %s22
    %s39 = sphi 0, %s23
    %s43 = sphi 0, %s43
    %s45 = sphi 0, %s43
    %s46 = sphi 0, %s45
    %s60 = sphi 0, %s46
    %s64 = sphi 0, %s64
    %s66 = sphi 0, %s64
    %s67 = sphi 0, %s66
    %s81 = sphi 0, %s67
    %s87 = sphi 0, %s89
    %s90 = sphi 0, %s87
    %s91 = sphi 0, %s90
    %s107 = sphi 0, %s91
  $region4: #{iasmnet_forward.12} parent=0 // loop_header_branch
    %12 = sbr.rel (%p10) target = $region8
  $region5: #{iasmnet_forward.12} parent=0 // loop_body
    %s14 = ssub.s32 %s9, 1
    %s15 = ssub.s32 %s9, 2
    %s16 = sadd.s32 %s9, 1
    %s17 = ssub.s32 %s9, %s16
    %p18 = scmp.eq.s32.totalorder %s17, 0
    %s20 = sadd.s32 %s19, 1
    %s21 = scalar_select %p18, %s19, %s20
    %p24 = pneg %p18
    %p25 = scmp.eq.s32.totalorder %s9, 3
    %p26 = por %p24, %p25
    %p27 = scmp.ne.s32.totalorder %s19, %s22
    %p28 = scmp.eq.s32.totalorder %s9, 0
    %p29 = por %p27, %p28
    %p30 = scmp.ne.s32.totalorder %s19, %s22
    %p31 = scmp.eq.s32.totalorder %s14, 3
    %p32 = por %p30, %p31
    %p33 = scmp.ne.s32.totalorder %s22, %s23
    %p34 = scmp.eq.s32.totalorder %s14, 0
    %p35 = por %p33, %p34
    %p36 = scmp.ne.s32.totalorder %s22, %s23
    %p37 = scmp.eq.s32.totalorder %s15, 3
    %p38 = por %p36, %p37
    %p40 = scmp.ne.s32.totalorder %s23, %s39
    %p41 = scmp.eq.s32.totalorder %s15, 0
    %p42 = por %p40, %p41
    %s44 = sadd.s32 %s43, 1
    %p47 = scmp.eq.s32.totalorder %s9, 3
    %p48 = scmp.ne.s32.totalorder %s43, %s45
    %p49 = scmp.eq.s32.totalorder %s9, 0
    %p50 = por %p48, %p49
    %p51 = scmp.ne.s32.totalorder %s43, %s45
    %p52 = scmp.eq.s32.totalorder %s14, 3
    %p53 = por %p51, %p52
    %p54 = scmp.ne.s32.totalorder %s45, %s46
    %p55 = scmp.eq.s32.totalorder %s14, 0
    %p56 = por %p54, %p55
    %p57 = scmp.ne.s32.totalorder %s45, %s46
    %p58 = scmp.eq.s32.totalorder %s15, 3
    %p59 = por %p57, %p58
    %p61 = scmp.ne.s32.totalorder %s46, %s60
    %p62 = scmp.eq.s32.totalorder %s15, 0
    %p63 = por %p61, %p62
    %s65 = sadd.s32 %s64, 1
    %p68 = scmp.eq.s32.totalorder %s9, 3
    %p69 = scmp.ne.s32.totalorder %s64, %s66
    %p70 = scmp.eq.s32.totalorder %s9, 0
    %p71 = por %p69, %p70
    %p72 = scmp.ne.s32.totalorder %s64, %s66
    %p73 = scmp.eq.s32.totalorder %s14, 3
    %p74 = por %p72, %p73
    %p75 = scmp.ne.s32.totalorder %s66, %s67
    %p76 = scmp.eq.s32.totalorder %s14, 0
    %p77 = por %p75, %p76
    %p78 = scmp.ne.s32.totalorder %s66, %s67
    %p79 = scmp.eq.s32.totalorder %s15, 3
    %p80 = por %p78, %p79
    %p82 = scmp.ne.s32.totalorder %s67, %s81
    %p83 = scmp.eq.s32.totalorder %s15, 0
    %p84 = por %p82, %p83
    %s85 = ssub.s32 %s9, %s16
    %p86 = scmp.eq.s32.totalorder %s85, 0
    %s88 = sadd.s32 %s87, 1
    %s89 = scalar_select %p86, %s87, %s88
    %p92 = pneg %p86
    %p93 = scmp.eq.s32.totalorder %s9, 3
    %p94 = por %p92, %p93
    %p95 = scmp.ne.s32.totalorder %s87, %s90
    %p96 = scmp.eq.s32.totalorder %s9, 0
    %p97 = por %p95, %p96
    %p98 = scmp.ne.s32.totalorder %s87, %s90
    %p99 = scmp.eq.s32.totalorder %s14, 3
    %p100 = por %p98, %p99
    %p101 = scmp.ne.s32.totalorder %s90, %s91
    %p102 = scmp.eq.s32.totalorder %s14, 0
    %p103 = por %p101, %p102
    %p104 = scmp.ne.s32.totalorder %s90, %s91
    %p105 = scmp.eq.s32.totalorder %s15, 3
    %p106 = por %p104, %p105
    %p108 = scmp.ne.s32.totalorder %s91, %s107
    %p109 = scmp.eq.s32.totalorder %s15, 0
    %p110 = por %p108, %p109
    %p111 = scmp.le.s32.totalorder 1, %s9
    %p112 = scmp.lt.s32.totalorder %s9, 5
    %p113 = pnand %p111, %p112
    %p114 = pneg %p113
    // Predicated region
    $region9: #{iasmnet_forward.12} parent=5 // pred_check
      _
    $region10: #{iasmnet_forward.12} parent=5 // pred_check_branch
      %116 = sbr.rel (%p113) target = $region12
    $region11: #{iasmnet_forward.12} parent=5 // pred_region
      %s117 = ssub.s32 %s9, 1
      // Predicated region
      $region13: #{iasmnet_forward.12} parent=11 // pred_check
        %p118 = pneg %p56
      $region14: #{iasmnet_forward.12} parent=11 // pred_check_branch
        %120 = sbr.rel (%p118) target = $region16
      $region15: #{iasmnet_forward.12} parent=11 // pred_region
        _
      $region16: #{iasmnet_forward.12} parent=11 // pred_fallthru
        _
      // Predicated region
      $region17: #{iasmnet_forward.12} parent=11 // pred_check
        %p121 = pneg %p77
      $region18: #{iasmnet_forward.12} parent=11 // pred_check_branch
        %123 = sbr.rel (%p121) target = $region20
      $region19: #{iasmnet_forward.12} parent=11 // pred_region
        _
      $region20: #{iasmnet_forward.12} parent=11 // pred_fallthru
        _
    $region12: #{iasmnet_forward.12} parent=5 // pred_fallthru
      _
    %p124 = scmp.lt.s32.totalorder %s9, 4
    // Predicated region
    $region21: #{iasmnet_forward.12} parent=5 // pred_check
      %p125 = pneg %p124
    $region22: #{iasmnet_forward.12} parent=5 // pred_check_branch
      %127 = sbr.rel (%p125) target = $region24
    $region23: #{iasmnet_forward.12} parent=5 // pred_region
      // Predicated region
      $region25: #{iasmnet_forward.12} parent=23 // pred_check
        %p128 = pneg %p29
      $region26: #{iasmnet_forward.12} parent=23 // pred_check_branch
        %130 = sbr.rel (%p128) target = $region28
      $region27: #{iasmnet_forward.12} parent=23 // pred_region
        %p131 = scmp.lt.s32.totalorder %s9, 3
        %s132 = scalar_select %p131, %s9, 3
        %s133 = smul.addr %s132, 4
        %s134 = scalar_lea.vmem %s0, %s133
      $region28: #{iasmnet_forward.12} parent=23 // pred_fallthru
        _
    $region24: #{iasmnet_forward.12} parent=5 // pred_fallthru
      _
    %p135 = scmp.le.s32.totalorder 1, %s9
    %p136 = scmp.lt.s32.totalorder %s9, 5
    %p137 = pnand %p135, %p136
    %p138 = pneg %p137
    // Predicated region
    $region29: #{iasmnet_forward.12} parent=5 // pred_check
      _
    $region30: #{iasmnet_forward.12} parent=5 // pred_check_branch
      %140 = sbr.rel (%p137) target = $region32
    $region31: #{iasmnet_forward.12} parent=5 // pred_region
      %s141 = ssub.s32 %s9, 1
      %p142 = scmp.lt.s32.totalorder %s14, 3
      %s143 = scalar_select %p142, %s14, 3
      %s144 = smul.addr %s143, 4
      %s145 = scalar_lea.vmem %s0, %s144
      %p146 = pneg %p35
      %p147 = pneg %p32
      %p148 = pneg %p56
      %p149 = pneg %p53
      %p150 = pneg %p77
      %p151 = pneg %p74
      %p152 = pneg %p103
      %p153 = pneg %p100
      %p154 = scmp.lt.s32.totalorder %s14, 3
      %s155 = scalar_select %p154, %s14, 3
      %s156 = smul.addr %s155, 4
      %s157 = scalar_lea.vmem %s3, %s156
      %p158 = scmp.lt.s32.totalorder %s14, 3
      %s159 = scalar_select %p158, %s14, 3
      %s160 = smul.addr %s159, 4
      %s161 = scalar_lea.vmem %s0, %s160
      %p162 = scmp.lt.s32.totalorder %s14, 3
      %s163 = scalar_select %p162, %s14, 3
      %s164 = smul.addr %s163, 4
      %s165 = scalar_lea.vmem %s3, %s164
      %v167 = vld [vmem:[%s161] sm:$0xf]
      %v168 = vld [vmem:[%s1] sm:$0xf]
      %v169 = vld [vmem:[%s1 + $0x4] sm:$0xf]
      %v170 = vld [vmem:[%s1 + $0x8] sm:$0xf]
      %v171 = vld [vmem:[%s1 + $0xc] sm:$0xf]
      %v172 = vld [vmem:[%s1 + $0x10] sm:$0xf]
      %v173 = vld [vmem:[%s1 + $0x14] sm:$0xf]
      %v174 = vld [vmem:[%s1 + $0x18] sm:$0xf]
      %v175 = vld [vmem:[%s1 + $0x1c] sm:$0xf]
      %v176 = vld [vmem:[%s1 + $0x20] sm:$0xf]
      %v177 = vld [vmem:[%s1 + $0x24] sm:$0xf]
      %v178 = vld [vmem:[%s1 + $0x28] sm:$0xf]
      %v179 = vld [vmem:[%s1 + $0x2c] sm:$0xf]
      %v180 = vld [vmem:[%s1 + $0x30] sm:$0xf]
      %v181 = vld [vmem:[%s1 + $0x34] sm:$0xf]
      %v182 = vld [vmem:[%s1 + $0x38] sm:$0xf]
      %v183 = vld [vmem:[%s1 + $0x3c] sm:$0xf]
      %v184 = vld [vmem:[%s2] sm:$0x1]
      %v186 = vlaneseq
      %v187 = vshrl.u32 %v186, 7
      %v188 = vsub.s32 0, %v187
      %v189 = vrot.slane %v184, %v188
      %v207 = vunpack.c.l.b16 %v168
      %v208 = vunpack.c.l.b16 %v169
      %v209 = vunpack.c.l.b16 %v170
      %v210 = vunpack.c.l.b16 %v171
      %v211 = vunpack.c.l.b16 %v172
      %v212 = vunpack.c.l.b16 %v173
      %v213 = vunpack.c.l.b16 %v174
      %v214 = vunpack.c.l.b16 %v175
      %v215 = vunpack.c.l.b16 %v176
      %v216 = vunpack.c.l.b16 %v177
      %v217 = vunpack.c.l.b16 %v178
      %v218 = vunpack.c.l.b16 %v179
      %v219 = vunpack.c.l.b16 %v180
      %v220 = vunpack.c.l.b16 %v181
      %v221 = vunpack.c.l.b16 %v182
      %v222 = vunpack.c.l.b16 %v183
      %v223 = vpack.c.b16 %v208, %v207
      %v224 = vpack.c.b16 %v210, %v209
      %v225 = vpack.c.b16 %v212, %v211
      %v226 = vpack.c.b16 %v214, %v213
      %v227 = vpack.c.b16 %v216, %v215
      %v228 = vpack.c.b16 %v218, %v217
      %v229 = vpack.c.b16 %v220, %v219
      %v230 = vpack.c.b16 %v222, %v221
      %239 = vmatprep.subr.bf16.mxu0 0
      %240 = vmatpush1.bf16.msra.mxu0 %v223
      %241 = vmatprep.subr.bf16.mxu0 0
      %242 = vmatpush1.bf16.msra.mxu0 %v224
      %243 = vmatprep.subr.bf16.mxu0 0
      %244 = vmatpush1.bf16.msra.mxu0 %v225
      %245 = vmatprep.subr.bf16.mxu0 0
      %246 = vmatpush1.bf16.msra.mxu0 %v226
      %247 = vmatprep.subr.bf16.mxu0 0
      %248 = vmatpush1.bf16.msra.mxu0 %v227
      %249 = vmatprep.subr.bf16.mxu0 0
      %250 = vmatpush1.bf16.msra.mxu0 %v228
      %251 = vmatprep.subr.bf16.mxu0 0
      %252 = vmatpush1.bf16.msra.mxu0 %v229
      %253 = vmatprep.subr.bf16.mxu0 0
      %254 = vmatpush1.bf16.msra.mxu0 %v230
      %255 = vmatprep.subr.bf16.mxu0 0
      %256 = vmatpush1.bf16.msra.mxu0 0
      %257 = vmatprep.subr.bf16.mxu0 0
      %258 = vmatpush1.bf16.msra.mxu0 0
      %259 = vmatprep.subr.bf16.mxu0 0
      %260 = vmatpush1.bf16.msra.mxu0 0
      %261 = vmatprep.subr.bf16.mxu0 0
      %262 = vmatpush1.bf16.msra.mxu0 0
      %263 = vmatprep.subr.bf16.mxu0 0
      %264 = vmatpush1.bf16.msra.mxu0 0
      %265 = vmatprep.subr.bf16.mxu0 0
      %266 = vmatpush1.bf16.msra.mxu0 0
      %267 = vmatprep.subr.bf16.mxu0 0
      %268 = vmatpush1.bf16.msra.mxu0 0
      %269 = vmatprep.subr.bf16.mxu0 0
      %270 = vmatpush1.bf16.msra.mxu0 0
      %271 = vmatprep.mubr.bf16.mxu0 0
      %272 = vmatmul.mubr.bf16.gmra.mrb[0].mxu0 %v167
      %v273 = vpop.f32.mrb[0].mxu0
      %v274 = vadd.f32 %v189, %v273
      %v275 = vpop.f32.mrb[0].mxu0
      %v276 = vpop.f32.mrb[0].mxu0
      %v277 = vpop.f32.mrb[0].mxu0
      %278 = vdwg.mxu0
      %vm279 = vcmp.gt.f32.partialorder %v274, 0.0
      %v280 = vmul.f32 %v274, 0.2
      %v281 = vsel %vm279, %v274, %v280
      %v282 = vpack.c.bf16 %v281, %v281
      %vm283 = vcmask 519168
      %284 = vst.msk [vmem:[%s165] sm:$0xf] %vm283, %v282
      %p285 = scmp.lt.s32.totalorder %s14, 3
      %s286 = scalar_select %p285, %s14, 3
      %s287 = smul.addr %s286, 4
      %s288 = scalar_lea.vmem %s3, %s287
      // Predicated region
      $region33: #{iasmnet_forward.12} parent=31 // pred_check
        %p289 = pneg %p100
      $region34: #{iasmnet_forward.12} parent=31 // pred_check_branch
        %291 = sbr.rel (%p289) target = $region36
      $region35: #{iasmnet_forward.12} parent=31 // pred_region
        _
      $region36: #{iasmnet_forward.12} parent=31 // pred_fallthru
        _
    $region32: #{iasmnet_forward.12} parent=5 // pred_fallthru
      _
    %p292 = scmp.le.s32.totalorder 2, %s9
    // Predicated region
    $region37: #{iasmnet_forward.12} parent=5 // pred_check
      %p293 = pneg %p292
    $region38: #{iasmnet_forward.12} parent=5 // pred_check_branch
      %295 = sbr.rel (%p293) target = $region40
    $region39: #{iasmnet_forward.12} parent=5 // pred_region
      %s296 = ssub.s32 %s9, 2
      // Predicated region
      $region41: #{iasmnet_forward.12} parent=39 // pred_check
        %p297 = pneg %p106
      $region42: #{iasmnet_forward.12} parent=39 // pred_check_branch
        %299 = sbr.rel (%p297) target = $region44
      $region43: #{iasmnet_forward.12} parent=39 // pred_region
        %p300 = scmp.lt.s32.totalorder %s15, 3
        %s301 = scalar_select %p300, %s15, 3
        %s302 = smul.addr %s301, 4
        %s303 = scalar_lea.vmem %s3, %s302
      $region44: #{iasmnet_forward.12} parent=39 // pred_fallthru
        _
    $region40: #{iasmnet_forward.12} parent=5 // pred_fallthru
      _
  $region6: #{iasmnet_forward.12} parent=0 // loop_footer
    %s13 = sadd.s32 1, %s9
  $region7: #{iasmnet_forward.12} parent=0 // loop_footer_branch
    %8 = sbr.rel target = $region3
  $region8: #{iasmnet_forward.12} parent=0 // loop_exit
    _

// kernel: tile.48
$region0: #{tile.48}
  #allocation0 [shape = 's32[1]{0}', space=sflag, size = 0x4, scoped, tag = 'scoped memory for tile.48']
  %s0 = inlined_call_operand.vmem [shape: f32[16], index: 0, kind: input, shape index: {}]
  %s1 = inlined_call_operand.vmem [shape: f32[4,16], index: 1, kind: output, shape index: {}]
  // Predicated region
  $region2: #{tile.48} parent=0 // pred_check
    _
  $region3: #{tile.48} parent=0 // pred_check_branch
    %3 = sbr.rel (0) target = $region5
  $region4: #{tile.48} parent=0 // pred_region
    _
  $region5: #{tile.48} parent=0 // pred_fallthru
    _
  %v4 = vld [vmem:[%s0] ss:$0 sm:$0xff]
  %5 = vst [vmem:[%s1] sm:$0xf] %v4

// kernel: tile.49
$region0: #{tile.49}
  %s0 = inlined_call_operand.vmem [shape: f32[4,16], index: 0, kind: input, shape index: {}]
  %s1 = inlined_call_operand.vmem [shape: f32[1,64], index: 1, kind: output, shape index: {}]
  $region1: #{tile.49} parent=0
    #allocation0 [shape = 'u8[4096]{0}', space=vmem, size = 0x1000, scoped, tag = 'scoped mem for output reshape']
    #allocation1 [shape = 'u8[4096]{0}', space=vmem, size = 0x1000, scoped, tag = 'scoped mem for input reshape']
    %s3 = sshllo.u32 0, 4
    %v4 = vld [vmem:[%s0] sm:%s3]
    %5 = vst [vmem:[#allocation1] sm:%s3] %v4
    %v6 = vld [vmem:[#allocation1] sm:$0x1]
    %vm7 = vcmask 130048
    %8 = vst.msk [vmem:[#allocation0] sm:$0x1] %vm7, %v6
    %s9 = scalar_lea.vmem [#allocation1], 3
    %v10 = vld [vmem:[%s9] sm:$0x1]
    %11 = vrot.lane.b32.xlu0 %v10, 48
    %v12 = vpop.permute.xlu0 %11
    %vm13 = vcmask 523648
    %14 = vst.msk [vmem:[#allocation0] sm:$0x1] %vm13, %v12
    %s15 = scalar_lea.vmem [#allocation1], 2
    %v16 = vld [vmem:[%s15] sm:$0x1]
    %17 = vrot.lane.b32.xlu0 %v16, 32
    %v18 = vpop.permute.xlu0 %17
    %vm19 = vcmask 392448
    %20 = vst.msk [vmem:[#allocation0] sm:$0x1] %vm19, %v18
    %s21 = scalar_lea.vmem [#allocation1], 1
    %v22 = vld [vmem:[%s21] sm:$0x1]
    %23 = vrot.lane.b32.xlu0 %v22, 16
    %v24 = vpop.permute.xlu0 %23
    %vm25 = vcmask 261248
    %26 = vst.msk [vmem:[#allocation0] sm:$0x1] %vm25, %v24
    %s28 = sshllo.u32 0, 1
    %v30 = vld [vmem:[#allocation0] sm:%s28]
    %s31 = sshllo.u32 0, 1
    %32 = vst [vmem:[%s1] sm:%s31] %v30

// kernel: iasmnet_forward.11
$region0: #{iasmnet_forward.11}
  #allocation0 [shape = 'u32[]', space=smem, size = 0x4, offset = 0x4, fixed_abs, tag = 'smem constant byte address 0x4 - core index']
  #allocation1 [shape = 'u32[144,128]{1,0:T(1,128)}', space=vmem, size = 0x12000, scoped, tag = 'internal scratch']
  %s0 = inlined_call_operand.vmem [shape: bf16[16,5,40], index: 0, kind: input, shape index: {}]
  %s1 = inlined_call_operand.vmem [shape: bf16[6,40,64], index: 1, kind: input, shape index: {}]
  %s2 = inlined_call_operand.vmem [shape: f32[1,64], index: 2, kind: input, shape index: {}]
  %s3 = inlined_call_operand.vmem [shape: bf16[4,4,64], index: 3, kind: output, shape index: {}]
  %s4 = sld [smem:[#allocation0]]
  $region45: #{iasmnet_forward.11} parent=0
    _
  %s6 = ssub.s32 1, %s4
  %s7 = scalar_select 0, %s6, %s4
  loop: start=0, step=1, limit=6
  $region2: #{iasmnet_forward.11} parent=0 // loop_pre_header
    _
  $region3: #{iasmnet_forward.11} parent=0 // loop_header
    %s9 = sphi 0, %s13
    %p10 = scmp.ge.s32.totalorder %s9, 6
    %s19 = sphi 0, %s21
    %s22 = sphi 0, %s19
    %s23 = sphi 0, %s22
    %s39 = sphi 0, %s23
    %s43 = sphi 0, %s43
    %s45 = sphi 0, %s43
    %s46 = sphi 0, %s45
    %s60 = sphi 0, %s46
    %s64 = sphi 0, %s64
    %s66 = sphi 0, %s64
    %s67 = sphi 0, %s66
    %s81 = sphi 0, %s67
    %s87 = sphi 0, %s89
    %s90 = sphi 0, %s87
    %s91 = sphi 0, %s90
    %s107 = sphi 0, %s91
  $region4: #{iasmnet_forward.11} parent=0 // loop_header_branch
    %12 = sbr.rel (%p10) target = $region8
  $region5: #{iasmnet_forward.11} parent=0 // loop_body
    %s14 = ssub.s32 %s9, 1
    %s15 = ssub.s32 %s9, 2
    %s16 = sadd.s32 %s9, 1
    %s17 = ssub.s32 %s9, %s16
    %p18 = scmp.eq.s32.totalorder %s17, 0
    %s20 = sadd.s32 %s19, 1
    %s21 = scalar_select %p18, %s19, %s20
    %p24 = pneg %p18
    %p25 = scmp.eq.s32.totalorder %s9, 3
    %p26 = por %p24, %p25
    %p27 = scmp.ne.s32.totalorder %s19, %s22
    %p28 = scmp.eq.s32.totalorder %s9, 0
    %p29 = por %p27, %p28
    %p30 = scmp.ne.s32.totalorder %s19, %s22
    %p31 = scmp.eq.s32.totalorder %s14, 3
    %p32 = por %p30, %p31
    %p33 = scmp.ne.s32.totalorder %s22, %s23
    %p34 = scmp.eq.s32.totalorder %s14, 0
    %p35 = por %p33, %p34
    %p36 = scmp.ne.s32.totalorder %s22, %s23
    %p37 = scmp.eq.s32.totalorder %s15, 3
    %p38 = por %p36, %p37
    %p40 = scmp.ne.s32.totalorder %s23, %s39
    %p41 = scmp.eq.s32.totalorder %s15, 0
    %p42 = por %p40, %p41
    %s44 = sadd.s32 %s43, 1
    %p47 = scmp.eq.s32.totalorder %s9, 3
    %p48 = scmp.ne.s32.totalorder %s43, %s45
    %p49 = scmp.eq.s32.totalorder %s9, 0
    %p50 = por %p48, %p49
    %p51 = scmp.ne.s32.totalorder %s43, %s45
    %p52 = scmp.eq.s32.totalorder %s14, 3
    %p53 = por %p51, %p52
    %p54 = scmp.ne.s32.totalorder %s45, %s46
    %p55 = scmp.eq.s32.totalorder %s14, 0
    %p56 = por %p54, %p55
    %p57 = scmp.ne.s32.totalorder %s45, %s46
    %p58 = scmp.eq.s32.totalorder %s15, 3
    %p59 = por %p57, %p58
    %p61 = scmp.ne.s32.totalorder %s46, %s60
    %p62 = scmp.eq.s32.totalorder %s15, 0
    %p63 = por %p61, %p62
    %s65 = sadd.s32 %s64, 1
    %p68 = scmp.eq.s32.totalorder %s9, 3
    %p69 = scmp.ne.s32.totalorder %s64, %s66
    %p70 = scmp.eq.s32.totalorder %s9, 0
    %p71 = por %p69, %p70
    %p72 = scmp.ne.s32.totalorder %s64, %s66
    %p73 = scmp.eq.s32.totalorder %s14, 3
    %p74 = por %p72, %p73
    %p75 = scmp.ne.s32.totalorder %s66, %s67
    %p76 = scmp.eq.s32.totalorder %s14, 0
    %p77 = por %p75, %p76
    %p78 = scmp.ne.s32.totalorder %s66, %s67
    %p79 = scmp.eq.s32.totalorder %s15, 3
    %p80 = por %p78, %p79
    %p82 = scmp.ne.s32.totalorder %s67, %s81
    %p83 = scmp.eq.s32.totalorder %s15, 0
    %p84 = por %p82, %p83
    %s85 = ssub.s32 %s9, %s16
    %p86 = scmp.eq.s32.totalorder %s85, 0
    %s88 = sadd.s32 %s87, 1
    %s89 = scalar_select %p86, %s87, %s88
    %p92 = pneg %p86
    %p93 = scmp.eq.s32.totalorder %s9, 3
    %p94 = por %p92, %p93
    %p95 = scmp.ne.s32.totalorder %s87, %s90
    %p96 = scmp.eq.s32.totalorder %s9, 0
    %p97 = por %p95, %p96
    %p98 = scmp.ne.s32.totalorder %s87, %s90
    %p99 = scmp.eq.s32.totalorder %s14, 3
    %p100 = por %p98, %p99
    %p101 = scmp.ne.s32.totalorder %s90, %s91
    %p102 = scmp.eq.s32.totalorder %s14, 0
    %p103 = por %p101, %p102
    %p104 = scmp.ne.s32.totalorder %s90, %s91
    %p105 = scmp.eq.s32.totalorder %s15, 3
    %p106 = por %p104, %p105
    %p108 = scmp.ne.s32.totalorder %s91, %s107
    %p109 = scmp.eq.s32.totalorder %s15, 0
    %p110 = por %p108, %p109
    %p111 = scmp.le.s32.totalorder 1, %s9
    %p112 = scmp.lt.s32.totalorder %s9, 5
    %p113 = pnand %p111, %p112
    %p114 = pneg %p113
    // Predicated region
    $region9: #{iasmnet_forward.11} parent=5 // pred_check
      _
    $region10: #{iasmnet_forward.11} parent=5 // pred_check_branch
      %116 = sbr.rel (%p113) target = $region12
    $region11: #{iasmnet_forward.11} parent=5 // pred_region
      %s117 = ssub.s32 %s9, 1
      // Predicated region
      $region13: #{iasmnet_forward.11} parent=11 // pred_check
        %p118 = pneg %p56
      $region14: #{iasmnet_forward.11} parent=11 // pred_check_branch
        %120 = sbr.rel (%p118) target = $region16
      $region15: #{iasmnet_forward.11} parent=11 // pred_region
        _
      $region16: #{iasmnet_forward.11} parent=11 // pred_fallthru
        _
      // Predicated region
      $region17: #{iasmnet_forward.11} parent=11 // pred_check
        %p121 = pneg %p77
      $region18: #{iasmnet_forward.11} parent=11 // pred_check_branch
        %123 = sbr.rel (%p121) target = $region20
      $region19: #{iasmnet_forward.11} parent=11 // pred_region
        _
      $region20: #{iasmnet_forward.11} parent=11 // pred_fallthru
        _
    $region12: #{iasmnet_forward.11} parent=5 // pred_fallthru
      _
    %p124 = scmp.lt.s32.totalorder %s9, 4
    // Predicated region
    $region21: #{iasmnet_forward.11} parent=5 // pred_check
      %p125 = pneg %p124
    $region22: #{iasmnet_forward.11} parent=5 // pred_check_branch
      %127 = sbr.rel (%p125) target = $region24
    $region23: #{iasmnet_forward.11} parent=5 // pred_region
      // Predicated region
      $region25: #{iasmnet_forward.11} parent=23 // pred_check
        %p128 = pneg %p29
      $region26: #{iasmnet_forward.11} parent=23 // pred_check_branch
        %130 = sbr.rel (%p128) target = $region28
      $region27: #{iasmnet_forward.11} parent=23 // pred_region
        %s131 = smul.u32 4, %s9
        %p132 = scmp.lt.s32.totalorder %s131, 15
        %s133 = scalar_select %p132, %s131, 15
        %s134 = smul.addr %s133, 4
        %s135 = scalar_lea.vmem %s0, %s134
        %s136 = smul.u32 4, %s9
      $region28: #{iasmnet_forward.11} parent=23 // pred_fallthru
        _
    $region24: #{iasmnet_forward.11} parent=5 // pred_fallthru
      _
    %p137 = scmp.le.s32.totalorder 1, %s9
    %p138 = scmp.lt.s32.totalorder %s9, 5
    %p139 = pnand %p137, %p138
    %p140 = pneg %p139
    // Predicated region
    $region29: #{iasmnet_forward.11} parent=5 // pred_check
      _
    $region30: #{iasmnet_forward.11} parent=5 // pred_check_branch
      %142 = sbr.rel (%p139) target = $region32
    $region31: #{iasmnet_forward.11} parent=5 // pred_region
      %s143 = ssub.s32 %s9, 1
      %s144 = smul.u32 4, %s14
      %p145 = scmp.lt.s32.totalorder %s144, 15
      %s146 = scalar_select %p145, %s144, 15
      %s147 = smul.addr %s146, 4
      %s148 = scalar_lea.vmem %s0, %s147
      %p149 = pneg %p35
      %p150 = pneg %p32
      %p151 = pneg %p56
      %p152 = pneg %p53
      %p153 = pneg %p77
      %p154 = pneg %p74
      %p155 = pneg %p103
      %p156 = pneg %p100
      %p157 = scmp.lt.s32.totalorder %s14, 3
      %s158 = scalar_select %p157, %s14, 3
      %s159 = smul.addr %s158, 2
      %s160 = scalar_lea.vmem %s3, %s159
      %s161 = smul.u32 4, %s14
      %p162 = scmp.lt.s32.totalorder %s161, 15
      %s163 = scalar_select %p162, %s161, 15
      %s164 = smul.addr %s163, 4
      %s165 = scalar_lea.vmem %s0, %s164
      %s166 = smul.u32 4, %s14
      %p167 = scmp.lt.s32.totalorder %s14, 3
      %s168 = scalar_select %p167, %s14, 3
      %s169 = smul.addr %s168, 2
      %s170 = scalar_lea.vmem %s3, %s169
      %v172 = vld [vmem:[%s165] sm:$0x3]
      %v173 = vld [vmem:[%s1] sm:$0xf]
      %v174 = vld [vmem:[%s1 + $0x4] sm:$0xf]
      %v175 = vld [vmem:[%s1 + $0x8] sm:$0xf]
      %v176 = vld [vmem:[%s1 + $0xc] sm:$0xf]
      %v177 = vld [vmem:[%s1 + $0x10] sm:$0xf]
      %s178 = scalar_lea.vmem %s165, 4
      %v179 = vld [vmem:[%s178] sm:$0x3]
      %s180 = scalar_lea.vmem %s1, 20
      %v181 = vld [vmem:[%s180] sm:$0xf]
      %v182 = vld [vmem:[%s180 + $0x4] sm:$0xf]
      %v183 = vld [vmem:[%s180 + $0x8] sm:$0xf]
      %v184 = vld [vmem:[%s180 + $0xc] sm:$0xf]
      %v185 = vld [vmem:[%s180 + $0x10] sm:$0xf]
      %v191 = vunpack.c.l.b16 %v181
      %v192 = vunpack.c.l.b16 %v182
      %v193 = vunpack.c.l.b16 %v183
      %v194 = vunpack.c.l.b16 %v184
      %v195 = vunpack.c.l.b16 %v185
      %v196 = vpack.c.b16 %v192, %v191
      %v197 = vpack.c.b16 %v194, %v193
      %v198 = vpack.c.b16 %v195, %v195
      %vm201 = vcmask 326656
      %v203 = vsel %vm201, %v179, 0
      %vm205 = vcmask 1043456
      %v207 = vsel %vm205, %v198, 0
      %209 = vmatprep.subr.bf16.mxu0 0
      %210 = vmatpush1.bf16.msra.mxu0 %v196
      %211 = vmatprep.subr.bf16.mxu0 0
      %212 = vmatpush1.bf16.msra.mxu0 %v197
      %213 = vmatprep.subr.bf16.mxu0 0
      %214 = vmatpush1.bf16.msra.mxu0 %v207
      %215 = vmatprep.subr.bf16.mxu0 0
      %216 = vmatpush1.bf16.msra.mxu0 0
      %217 = vmatprep.subr.bf16.mxu0 0
      %218 = vmatpush1.bf16.msra.mxu0 0
      %219 = vmatprep.subr.bf16.mxu0 0
      %220 = vmatpush1.bf16.msra.mxu0 0
      %221 = vmatprep.subr.bf16.mxu0 0
      %222 = vmatpush1.bf16.msra.mxu0 0
      %223 = vmatprep.subr.bf16.mxu0 0
      %224 = vmatpush1.bf16.msra.mxu0 0
      %225 = vmatprep.subr.bf16.mxu0 0
      %226 = vmatpush1.bf16.msra.mxu0 0
      %227 = vmatprep.subr.bf16.mxu0 0
      %228 = vmatpush1.bf16.msra.mxu0 0
      %229 = vmatprep.subr.bf16.mxu0 0
      %230 = vmatpush1.bf16.msra.mxu0 0
      %231 = vmatprep.subr.bf16.mxu0 0
      %232 = vmatpush1.bf16.msra.mxu0 0
      %233 = vmatprep.subr.bf16.mxu0 0
      %234 = vmatpush1.bf16.msra.mxu0 0
      %235 = vmatprep.subr.bf16.mxu0 0
      %236 = vmatpush1.bf16.msra.mxu0 0
      %237 = vmatprep.subr.bf16.mxu0 0
      %238 = vmatpush1.bf16.msra.mxu0 0
      %239 = vmatprep.subr.bf16.mxu0 0
      %240 = vmatpush1.bf16.msra.mxu0 0
      %241 = vmatprep.mubr.bf16.mxu0 0
      %242 = vmatmul.mubr.bf16.gmra.mrb[0].mxu0 %v203
      %v243 = vpop.f32.mrb[0].mxu0
      %v244 = vadd.f32 0.0, %v243
      %v245 = vpop.f32.mrb[0].mxu0
      %v246 = vpop.f32.mrb[0].mxu0
      %v247 = vpop.f32.mrb[0].mxu0
      %248 = vdwg.mxu0
      %v254 = vunpack.c.l.b16 %v173
      %v255 = vunpack.c.l.b16 %v174
      %v256 = vunpack.c.l.b16 %v175
      %v257 = vunpack.c.l.b16 %v176
      %v258 = vunpack.c.l.b16 %v177
      %v259 = vpack.c.b16 %v255, %v254
      %v260 = vpack.c.b16 %v257, %v256
      %v261 = vpack.c.b16 %v258, %v258
      %v265 = vsel %vm201, %v172, 0
      %v268 = vsel %vm205, %v261, 0
      %270 = vmatprep.subr.bf16.mxu0 0
      %271 = vmatpush1.bf16.msra.mxu0 %v259
      %272 = vmatprep.subr.bf16.mxu0 0
      %273 = vmatpush1.bf16.msra.mxu0 %v260
      %274 = vmatprep.subr.bf16.mxu0 0
      %275 = vmatpush1.bf16.msra.mxu0 %v268
      %276 = vmatprep.subr.bf16.mxu0 0
      %277 = vmatpush1.bf16.msra.mxu0 0
      %278 = vmatprep.subr.bf16.mxu0 0
      %279 = vmatpush1.bf16.msra.mxu0 0
      %280 = vmatprep.subr.bf16.mxu0 0
      %281 = vmatpush1.bf16.msra.mxu0 0
      %282 = vmatprep.subr.bf16.mxu0 0
      %283 = vmatpush1.bf16.msra.mxu0 0
      %284 = vmatprep.subr.bf16.mxu0 0
      %285 = vmatpush1.bf16.msra.mxu0 0
      %286 = vmatprep.subr.bf16.mxu0 0
      %287 = vmatpush1.bf16.msra.mxu0 0
      %288 = vmatprep.subr.bf16.mxu0 0
      %289 = vmatpush1.bf16.msra.mxu0 0
      %290 = vmatprep.subr.bf16.mxu0 0
      %291 = vmatpush1.bf16.msra.mxu0 0
      %292 = vmatprep.subr.bf16.mxu0 0
      %293 = vmatpush1.bf16.msra.mxu0 0
      %294 = vmatprep.subr.bf16.mxu0 0
      %295 = vmatpush1.bf16.msra.mxu0 0
      %296 = vmatprep.subr.bf16.mxu0 0
      %297 = vmatpush1.bf16.msra.mxu0 0
      %298 = vmatprep.subr.bf16.mxu0 0
      %299 = vmatpush1.bf16.msra.mxu0 0
      %300 = vmatprep.subr.bf16.mxu0 0
      %301 = vmatpush1.bf16.msra.mxu0 0
      %302 = vmatprep.mubr.bf16.mxu0 0
      %303 = vmatmul.mubr.bf16.gmra.mrb[0].mxu0 %v265
      %v304 = vpop.f32.mrb[0].mxu0
      %v305 = vadd.f32 %v244, %v304
      %v306 = vpop.f32.mrb[0].mxu0
      %v307 = vpop.f32.mrb[0].mxu0
      %v308 = vpop.f32.mrb[0].mxu0
      %309 = vdwg.mxu0
      %s310 = scalar_lea.vmem %s165, 8
      %v311 = vld [vmem:[%s310] sm:$0x3]
      %s312 = scalar_lea.vmem %s1, 40
      %v313 = vld [vmem:[%s312] sm:$0xf]
      %v314 = vld [vmem:[%s312 + $0x4] sm:$0xf]
      %v315 = vld [vmem:[%s312 + $0x8] sm:$0xf]
      %v316 = vld [vmem:[%s312 + $0xc] sm:$0xf]
      %v317 = vld [vmem:[%s312 + $0x10] sm:$0xf]
      %v323 = vunpack.c.l.b16 %v313
      %v324 = vunpack.c.l.b16 %v314
      %v325 = vunpack.c.l.b16 %v315
      %v326 = vunpack.c.l.b16 %v316
      %v327 = vunpack.c.l.b16 %v317
      %v328 = vpack.c.b16 %v324, %v323
      %v329 = vpack.c.b16 %v326, %v325
      %v330 = vpack.c.b16 %v327, %v327
      %v334 = vsel %vm201, %v311, 0
      %v337 = vsel %vm205, %v330, 0
      %339 = vmatprep.subr.bf16.mxu0 0
      %340 = vmatpush1.bf16.msra.mxu0 %v328
      %341 = vmatprep.subr.bf16.mxu0 0
      %342 = vmatpush1.bf16.msra.mxu0 %v329
      %343 = vmatprep.subr.bf16.mxu0 0
      %344 = vmatpush1.bf16.msra.mxu0 %v337
      %345 = vmatprep.subr.bf16.mxu0 0
      %346 = vmatpush1.bf16.msra.mxu0 0
      %347 = vmatprep.subr.bf16.mxu0 0
      %348 = vmatpush1.bf16.msra.mxu0 0
      %349 = vmatprep.subr.bf16.mxu0 0
      %350 = vmatpush1.bf16.msra.mxu0 0
      %351 = vmatprep.subr.bf16.mxu0 0
      %352 = vmatpush1.bf16.msra.mxu0 0
      %353 = vmatprep.subr.bf16.mxu0 0
      %354 = vmatpush1.bf16.msra.mxu0 0
      %355 = vmatprep.subr.bf16.mxu0 0
      %356 = vmatpush1.bf16.msra.mxu0 0
      %357 = vmatprep.subr.bf16.mxu0 0
      %358 = vmatpush1.bf16.msra.mxu0 0
      %359 = vmatprep.subr.bf16.mxu0 0
      %360 = vmatpush1.bf16.msra.mxu0 0
      %361 = vmatprep.subr.bf16.mxu0 0
      %362 = vmatpush1.bf16.msra.mxu0 0
      %363 = vmatprep.subr.bf16.mxu0 0
      %364 = vmatpush1.bf16.msra.mxu0 0
      %365 = vmatprep.subr.bf16.mxu0 0
      %366 = vmatpush1.bf16.msra.mxu0 0
      %367 = vmatprep.subr.bf16.mxu0 0
      %368 = vmatpush1.bf16.msra.mxu0 0
      %369 = vmatprep.subr.bf16.mxu0 0
      %370 = vmatpush1.bf16.msra.mxu0 0
      %371 = vmatprep.mubr.bf16.mxu0 0
      %372 = vmatmul.mubr.bf16.gmra.mrb[0].mxu0 %v334
      %v373 = vpop.f32.mrb[0].mxu0
      %v374 = vadd.f32 0.0, %v373
      %v375 = vpop.f32.mrb[0].mxu0
      %v376 = vpop.f32.mrb[0].mxu0
      %v377 = vpop.f32.mrb[0].mxu0
      %378 = vdwg.mxu0
      %v379 = vadd.f32 %v305, %v374
      %s380 = scalar_lea.vmem %s165, 12
      %v381 = vld [vmem:[%s380] sm:$0x3]
      %s382 = scalar_lea.vmem %s1, 60
      %v383 = vld [vmem:[%s382] sm:$0xf]
      %v384 = vld [vmem:[%s382 + $0x4] sm:$0xf]
      %v385 = vld [vmem:[%s382 + $0x8] sm:$0xf]
      %v386 = vld [vmem:[%s382 + $0xc] sm:$0xf]
      %v387 = vld [vmem:[%s382 + $0x10] sm:$0xf]
      %v393 = vunpack.c.l.b16 %v383
      %v394 = vunpack.c.l.b16 %v384
      %v395 = vunpack.c.l.b16 %v385
      %v396 = vunpack.c.l.b16 %v386
      %v397 = vunpack.c.l.b16 %v387
      %v398 = vpack.c.b16 %v394, %v393
      %v399 = vpack.c.b16 %v396, %v395
      %v400 = vpack.c.b16 %v397, %v397
      %v404 = vsel %vm201, %v381, 0
      %v407 = vsel %vm205, %v400, 0
      %409 = vmatprep.subr.bf16.mxu0 0
      %410 = vmatpush1.bf16.msra.mxu0 %v398
      %411 = vmatprep.subr.bf16.mxu0 0
      %412 = vmatpush1.bf16.msra.mxu0 %v399
      %413 = vmatprep.subr.bf16.mxu0 0
      %414 = vmatpush1.bf16.msra.mxu0 %v407
      %415 = vmatprep.subr.bf16.mxu0 0
      %416 = vmatpush1.bf16.msra.mxu0 0
      %417 = vmatprep.subr.bf16.mxu0 0
      %418 = vmatpush1.bf16.msra.mxu0 0
      %419 = vmatprep.subr.bf16.mxu0 0
      %420 = vmatpush1.bf16.msra.mxu0 0
      %421 = vmatprep.subr.bf16.mxu0 0
      %422 = vmatpush1.bf16.msra.mxu0 0
      %423 = vmatprep.subr.bf16.mxu0 0
      %424 = vmatpush1.bf16.msra.mxu0 0
      %425 = vmatprep.subr.bf16.mxu0 0
      %426 = vmatpush1.bf16.msra.mxu0 0
      %427 = vmatprep.subr.bf16.mxu0 0
      %428 = vmatpush1.bf16.msra.mxu0 0
      %429 = vmatprep.subr.bf16.mxu0 0
      %430 = vmatpush1.bf16.msra.mxu0 0
      %431 = vmatprep.subr.bf16.mxu0 0
      %432 = vmatpush1.bf16.msra.mxu0 0
      %433 = vmatprep.subr.bf16.mxu0 0
      %434 = vmatpush1.bf16.msra.mxu0 0
      %435 = vmatprep.subr.bf16.mxu0 0
      %436 = vmatpush1.bf16.msra.mxu0 0
      %437 = vmatprep.subr.bf16.mxu0 0
      %438 = vmatpush1.bf16.msra.mxu0 0
      %439 = vmatprep.subr.bf16.mxu0 0
      %440 = vmatpush1.bf16.msra.mxu0 0
      %441 = vmatprep.mubr.bf16.mxu0 0
      %442 = vmatmul.mubr.bf16.gmra.mrb[0].mxu0 %v404
      %v443 = vpop.f32.mrb[0].mxu0
      %v444 = vadd.f32 0.0, %v443
      %v445 = vpop.f32.mrb[0].mxu0
      %v446 = vpop.f32.mrb[0].mxu0
      %v447 = vpop.f32.mrb[0].mxu0
      %448 = vdwg.mxu0
      %v449 = vadd.f32 %v379, %v444
      %v450 = vld [vmem:[%s165] sm:$0x7]
      %s451 = scalar_lea.vmem %s1, 80
      %v452 = vld [vmem:[%s451] sm:$0xf]
      %v453 = vld [vmem:[%s451 + $0x4] sm:$0xf]
      %v454 = vld [vmem:[%s451 + $0x8] sm:$0xf]
      %v455 = vld [vmem:[%s451 + $0xc] sm:$0xf]
      %v456 = vld [vmem:[%s451 + $0x10] sm:$0xf]
      %v458 = vunpack.c.l.b16 %v450
      %v459 = vpack.c.b16 %v458, %v458
      %v461 = vshrl.u32 %v459, 16
      %v463 = vshll.u32 %v459, 16
      %v465 = vrot.slane %v463, 1
      %v466 = vor.u32 %v461, %v465
      %v472 = vunpack.c.l.b16 %v452
      %v473 = vunpack.c.l.b16 %v453
      %v474 = vunpack.c.l.b16 %v454
      %v475 = vunpack.c.l.b16 %v455
      %v476 = vunpack.c.l.b16 %v456
      %v477 = vpack.c.b16 %v473, %v472
      %v478 = vpack.c.b16 %v475, %v474
      %v479 = vpack.c.b16 %v476, %v476
      %v483 = vsel %vm201, %v466, 0
      %v486 = vsel %vm205, %v479, 0
      %488 = vmatprep.subr.bf16.mxu0 0
      %489 = vmatpush1.bf16.msra.mxu0 %v477
      %490 = vmatprep.subr.bf16.mxu0 0
      %491 = vmatpush1.bf16.msra.mxu0 %v478
      %492 = vmatprep.subr.bf16.mxu0 0
      %493 = vmatpush1.bf16.msra.mxu0 %v486
      %494 = vmatprep.subr.bf16.mxu0 0
      %495 = vmatpush1.bf16.msra.mxu0 0
      %496 = vmatprep.subr.bf16.mxu0 0
      %497 = vmatpush1.bf16.msra.mxu0 0
      %498 = vmatprep.subr.bf16.mxu0 0
      %499 = vmatpush1.bf16.msra.mxu0 0
      %500 = vmatprep.subr.bf16.mxu0 0
      %501 = vmatpush1.bf16.msra.mxu0 0
      %502 = vmatprep.subr.bf16.mxu0 0
      %503 = vmatpush1.bf16.msra.mxu0 0
      %504 = vmatprep.subr.bf16.mxu0 0
      %505 = vmatpush1.bf16.msra.mxu0 0
      %506 = vmatprep.subr.bf16.mxu0 0
      %507 = vmatpush1.bf16.msra.mxu0 0
      %508 = vmatprep.subr.bf16.mxu0 0
      %509 = vmatpush1.bf16.msra.mxu0 0
      %510 = vmatprep.subr.bf16.mxu0 0
      %511 = vmatpush1.bf16.msra.mxu0 0
      %512 = vmatprep.subr.bf16.mxu0 0
      %513 = vmatpush1.bf16.msra.mxu0 0
      %514 = vmatprep.subr.bf16.mxu0 0
      %515 = vmatpush1.bf16.msra.mxu0 0
      %516 = vmatprep.subr.bf16.mxu0 0
      %517 = vmatpush1.bf16.msra.mxu0 0
      %518 = vmatprep.subr.bf16.mxu0 0
      %519 = vmatpush1.bf16.msra.mxu0 0
      %520 = vmatprep.mubr.bf16.mxu0 0
      %521 = vmatmul.mubr.bf16.gmra.mrb[0].mxu0 %v483
      %v522 = vpop.f32.mrb[0].mxu0
      %v523 = vadd.f32 0.0, %v522
      %v524 = vpop.f32.mrb[0].mxu0
      %v525 = vpop.f32.mrb[0].mxu0
      %v526 = vpop.f32.mrb[0].mxu0
      %527 = vdwg.mxu0
      %v528 = vadd.f32 %v449, %v523
      %v529 = vld [vmem:[%s178] sm:$0x7]
      %s530 = scalar_lea.vmem %s1, 100
      %v531 = vld [vmem:[%s530] sm:$0xf]
      %v532 = vld [vmem:[%s530 + $0x4] sm:$0xf]
      %v533 = vld [vmem:[%s530 + $0x8] sm:$0xf]
      %v534 = vld [vmem:[%s530 + $0xc] sm:$0xf]
      %v535 = vld [vmem:[%s530 + $0x10] sm:$0xf]
      %v537 = vunpack.c.l.b16 %v529
      %v538 = vpack.c.b16 %v537, %v537
      %v540 = vshrl.u32 %v538, 16
      %v542 = vshll.u32 %v538, 16
      %v544 = vrot.slane %v542, 1
      %v545 = vor.u32 %v540, %v544
      %v551 = vunpack.c.l.b16 %v531
      %v552 = vunpack.c.l.b16 %v532
      %v553 = vunpack.c.l.b16 %v533
      %v554 = vunpack.c.l.b16 %v534
      %v555 = vunpack.c.l.b16 %v535
      %v556 = vpack.c.b16 %v552, %v551
      %v557 = vpack.c.b16 %v554, %v553
      %v558 = vpack.c.b16 %v555, %v555
      %v562 = vsel %vm201, %v545, 0
      %v565 = vsel %vm205, %v558, 0
      %567 = vmatprep.subr.bf16.mxu0 0
      %568 = vmatpush1.bf16.msra.mxu0 %v556
      %569 = vmatprep.subr.bf16.mxu0 0
      %570 = vmatpush1.bf16.msra.mxu0 %v557
      %571 = vmatprep.subr.bf16.mxu0 0
      %572 = vmatpush1.bf16.msra.mxu0 %v565
      %573 = vmatprep.subr.bf16.mxu0 0
      %574 = vmatpush1.bf16.msra.mxu0 0
      %575 = vmatprep.subr.bf16.mxu0 0
      %576 = vmatpush1.bf16.msra.mxu0 0
      %577 = vmatprep.subr.bf16.mxu0 0
      %578 = vmatpush1.bf16.msra.mxu0 0
      %579 = vmatprep.subr.bf16.mxu0 0
      %580 = vmatpush1.bf16.msra.mxu0 0
      %581 = vmatprep.subr.bf16.mxu0 0
      %582 = vmatpush1.bf16.msra.mxu0 0
      %583 = vmatprep.subr.bf16.mxu0 0
      %584 = vmatpush1.bf16.msra.mxu0 0
      %585 = vmatprep.subr.bf16.mxu0 0
      %586 = vmatpush1.bf16.msra.mxu0 0
      %587 = vmatprep.subr.bf16.mxu0 0
      %588 = vmatpush1.bf16.msra.mxu0 0
      %589 = vmatprep.subr.bf16.mxu0 0
      %590 = vmatpush1.bf16.msra.mxu0 0
      %591 = vmatprep.subr.bf16.mxu0 0
      %592 = vmatpush1.bf16.msra.mxu0 0
      %593 = vmatprep.subr.bf16.mxu0 0
      %594 = vmatpush1.bf16.msra.mxu0 0
      %595 = vmatprep.subr.bf16.mxu0 0
      %596 = vmatpush1.bf16.msra.mxu0 0
      %597 = vmatprep.subr.bf16.mxu0 0
      %598 = vmatpush1.bf16.msra.mxu0 0
      %599 = vmatprep.mubr.bf16.mxu0 0
      %600 = vmatmul.mubr.bf16.gmra.mrb[0].mxu0 %v562
      %v601 = vpop.f32.mrb[0].mxu0
      %v602 = vadd.f32 0.0, %v601
      %v603 = vpop.f32.mrb[0].mxu0
      %v604 = vpop.f32.mrb[0].mxu0
      %v605 = vpop.f32.mrb[0].mxu0
      %606 = vdwg.mxu0
      %v607 = vadd.f32 %v528, %v602
      %v608 = vld [vmem:[%s2] sm:$0x1]
      %v610 = vlaneseq
      %v611 = vshrl.u32 %v610, 7
      %v612 = vsub.s32 0, %v611
      %v613 = vrot.slane %v608, %v612
      %v615 = vadd.f32 %v607, %v613
      %vm616 = vcmp.gt.f32.partialorder %v615, 0.0
      %v617 = vmul.f32 %v615, 0.2
      %v618 = vsel %vm616, %v615, %v617
      %v619 = vpack.c.bf16 %v618, %v618
      %vm620 = vcmask 517120
      %621 = vst.msk [vmem:[%s170] sm:$0x3] %vm620, %v619
      %p622 = scmp.lt.s32.totalorder %s14, 3
      %s623 = scalar_select %p622, %s14, 3
      %s624 = smul.addr %s623, 2
      %s625 = scalar_lea.vmem %s3, %s624
      // Predicated region
      $region33: #{iasmnet_forward.11} parent=31 // pred_check
        %p626 = pneg %p100
      $region34: #{iasmnet_forward.11} parent=31 // pred_check_branch
        %628 = sbr.rel (%p626) target = $region36
      $region35: #{iasmnet_forward.11} parent=31 // pred_region
        _
      $region36: #{iasmnet_forward.11} parent=31 // pred_fallthru
        _
    $region32: #{iasmnet_forward.11} parent=5 // pred_fallthru
      _
    %p629 = scmp.le.s32.totalorder 2, %s9
    // Predicated region
    $region37: #{iasmnet_forward.11} parent=5 // pred_check
      %p630 = pneg %p629
    $region38: #{iasmnet_forward.11} parent=5 // pred_check_branch
      %632 = sbr.rel (%p630) target = $region40
    $region39: #{iasmnet_forward.11} parent=5 // pred_region
      %s633 = ssub.s32 %s9, 2
      // Predicated region
      $region41: #{iasmnet_forward.11} parent=39 // pred_check
        %p634 = pneg %p106
      $region42: #{iasmnet_forward.11} parent=39 // pred_check_branch
        %636 = sbr.rel (%p634) target = $region44
      $region43: #{iasmnet_forward.11} parent=39 // pred_region
        %p637 = scmp.lt.s32.totalorder %s15, 3
        %s638 = scalar_select %p637, %s15, 3
        %s639 = smul.addr %s638, 2
        %s640 = scalar_lea.vmem %s3, %s639
      $region44: #{iasmnet_forward.11} parent=39 // pred_fallthru
        _
    $region40: #{iasmnet_forward.11} parent=5 // pred_fallthru
      _
  $region6: #{iasmnet_forward.11} parent=0 // loop_footer
    %s13 = sadd.s32 1, %s9
  $region7: #{iasmnet_forward.11} parent=0 // loop_footer_branch
    %8 = sbr.rel target = $region3
  $region8: #{iasmnet_forward.11} parent=0 // loop_exit
    _

// kernel: iasmnet_forward.13
$region0: #{iasmnet_forward.13}
  #allocation0 [shape = 'u32[]', space=smem, size = 0x4, offset = 0x4, fixed_abs, tag = 'smem constant byte address 0x4 - core index']
  #allocation1 [shape = 'u32[144,128]{1,0:T(1,128)}', space=vmem, size = 0x12000, scoped, tag = 'internal scratch']
  %s0 = inlined_call_operand.vmem [shape: bf16[4,4,128], index: 0, kind: input, shape index: {}]
  %s1 = inlined_call_operand.vmem [shape: bf16[1,128,64], index: 1, kind: input, shape index: {}]
  %s2 = inlined_call_operand.vmem [shape: f32[1,64], index: 2, kind: input, shape index: {}]
  %s3 = inlined_call_operand.vmem [shape: bf16[4,4,64], index: 3, kind: output, shape index: {}]
  %s4 = sld [smem:[#allocation0]]
  $region45: #{iasmnet_forward.13} parent=0
    _
  %s6 = ssub.s32 1, %s4
  %s7 = scalar_select 0, %s6, %s4
  loop: start=0, step=1, limit=6
  $region2: #{iasmnet_forward.13} parent=0 // loop_pre_header
    _
  $region3: #{iasmnet_forward.13} parent=0 // loop_header
    %s9 = sphi 0, %s13
    %p10 = scmp.ge.s32.totalorder %s9, 6
    %s19 = sphi 0, %s21
    %s22 = sphi 0, %s19
    %s23 = sphi 0, %s22
    %s39 = sphi 0, %s23
    %s43 = sphi 0, %s43
    %s45 = sphi 0, %s43
    %s46 = sphi 0, %s45
    %s60 = sphi 0, %s46
    %s64 = sphi 0, %s64
    %s66 = sphi 0, %s64
    %s67 = sphi 0, %s66
    %s81 = sphi 0, %s67
    %s87 = sphi 0, %s89
    %s90 = sphi 0, %s87
    %s91 = sphi 0, %s90
    %s107 = sphi 0, %s91
  $region4: #{iasmnet_forward.13} parent=0 // loop_header_branch
    %12 = sbr.rel (%p10) target = $region8
  $region5: #{iasmnet_forward.13} parent=0 // loop_body
    %s14 = ssub.s32 %s9, 1
    %s15 = ssub.s32 %s9, 2
    %s16 = sadd.s32 %s9, 1
    %s17 = ssub.s32 %s9, %s16
    %p18 = scmp.eq.s32.totalorder %s17, 0
    %s20 = sadd.s32 %s19, 1
    %s21 = scalar_select %p18, %s19, %s20
    %p24 = pneg %p18
    %p25 = scmp.eq.s32.totalorder %s9, 3
    %p26 = por %p24, %p25
    %p27 = scmp.ne.s32.totalorder %s19, %s22
    %p28 = scmp.eq.s32.totalorder %s9, 0
    %p29 = por %p27, %p28
    %p30 = scmp.ne.s32.totalorder %s19, %s22
    %p31 = scmp.eq.s32.totalorder %s14, 3
    %p32 = por %p30, %p31
    %p33 = scmp.ne.s32.totalorder %s22, %s23
    %p34 = scmp.eq.s32.totalorder %s14, 0
    %p35 = por %p33, %p34
    %p36 = scmp.ne.s32.totalorder %s22, %s23
    %p37 = scmp.eq.s32.totalorder %s15, 3
    %p38 = por %p36, %p37
    %p40 = scmp.ne.s32.totalorder %s23, %s39
    %p41 = scmp.eq.s32.totalorder %s15, 0
    %p42 = por %p40, %p41
    %s44 = sadd.s32 %s43, 1
    %p47 = scmp.eq.s32.totalorder %s9, 3
    %p48 = scmp.ne.s32.totalorder %s43, %s45
    %p49 = scmp.eq.s32.totalorder %s9, 0
    %p50 = por %p48, %p49
    %p51 = scmp.ne.s32.totalorder %s43, %s45
    %p52 = scmp.eq.s32.totalorder %s14, 3
    %p53 = por %p51, %p52
    %p54 = scmp.ne.s32.totalorder %s45, %s46
    %p55 = scmp.eq.s32.totalorder %s14, 0
    %p56 = por %p54, %p55
    %p57 = scmp.ne.s32.totalorder %s45, %s46
    %p58 = scmp.eq.s32.totalorder %s15, 3
    %p59 = por %p57, %p58
    %p61 = scmp.ne.s32.totalorder %s46, %s60
    %p62 = scmp.eq.s32.totalorder %s15, 0
    %p63 = por %p61, %p62
    %s65 = sadd.s32 %s64, 1
    %p68 = scmp.eq.s32.totalorder %s9, 3
    %p69 = scmp.ne.s32.totalorder %s64, %s66
    %p70 = scmp.eq.s32.totalorder %s9, 0
    %p71 = por %p69, %p70
    %p72 = scmp.ne.s32.totalorder %s64, %s66
    %p73 = scmp.eq.s32.totalorder %s14, 3
    %p74 = por %p72, %p73
    %p75 = scmp.ne.s32.totalorder %s66, %s67
    %p76 = scmp.eq.s32.totalorder %s14, 0
    %p77 = por %p75, %p76
    %p78 = scmp.ne.s32.totalorder %s66, %s67
    %p79 = scmp.eq.s32.totalorder %s15, 3
    %p80 = por %p78, %p79
    %p82 = scmp.ne.s32.totalorder %s67, %s81
    %p83 = scmp.eq.s32.totalorder %s15, 0
    %p84 = por %p82, %p83
    %s85 = ssub.s32 %s9, %s16
    %p86 = scmp.eq.s32.totalorder %s85, 0
    %s88 = sadd.s32 %s87, 1
    %s89 = scalar_select %p86, %s87, %s88
    %p92 = pneg %p86
    %p93 = scmp.eq.s32.totalorder %s9, 3
    %p94 = por %p92, %p93
    %p95 = scmp.ne.s32.totalorder %s87, %s90
    %p96 = scmp.eq.s32.totalorder %s9, 0
    %p97 = por %p95, %p96
    %p98 = scmp.ne.s32.totalorder %s87, %s90
    %p99 = scmp.eq.s32.totalorder %s14, 3
    %p100 = por %p98, %p99
    %p101 = scmp.ne.s32.totalorder %s90, %s91
    %p102 = scmp.eq.s32.totalorder %s14, 0
    %p103 = por %p101, %p102
    %p104 = scmp.ne.s32.totalorder %s90, %s91
    %p105 = scmp.eq.s32.totalorder %s15, 3
    %p106 = por %p104, %p105
    %p108 = scmp.ne.s32.totalorder %s91, %s107
    %p109 = scmp.eq.s32.totalorder %s15, 0
    %p110 = por %p108, %p109
    %p111 = scmp.le.s32.totalorder 1, %s9
    %p112 = scmp.lt.s32.totalorder %s9, 5
    %p113 = pnand %p111, %p112
    %p114 = pneg %p113
    // Predicated region
    $region9: #{iasmnet_forward.13} parent=5 // pred_check
      _
    $region10: #{iasmnet_forward.13} parent=5 // pred_check_branch
      %116 = sbr.rel (%p113) target = $region12
    $region11: #{iasmnet_forward.13} parent=5 // pred_region
      %s117 = ssub.s32 %s9, 1
      // Predicated region
      $region13: #{iasmnet_forward.13} parent=11 // pred_check
        %p118 = pneg %p56
      $region14: #{iasmnet_forward.13} parent=11 // pred_check_branch
        %120 = sbr.rel (%p118) target = $region16
      $region15: #{iasmnet_forward.13} parent=11 // pred_region
        _
      $region16: #{iasmnet_forward.13} parent=11 // pred_fallthru
        _
      // Predicated region
      $region17: #{iasmnet_forward.13} parent=11 // pred_check
        %p121 = pneg %p77
      $region18: #{iasmnet_forward.13} parent=11 // pred_check_branch
        %123 = sbr.rel (%p121) target = $region20
      $region19: #{iasmnet_forward.13} parent=11 // pred_region
        _
      $region20: #{iasmnet_forward.13} parent=11 // pred_fallthru
        _
    $region12: #{iasmnet_forward.13} parent=5 // pred_fallthru
      _
    %p124 = scmp.lt.s32.totalorder %s9, 4
    // Predicated region
    $region21: #{iasmnet_forward.13} parent=5 // pred_check
      %p125 = pneg %p124
    $region22: #{iasmnet_forward.13} parent=5 // pred_check_branch
      %127 = sbr.rel (%p125) target = $region24
    $region23: #{iasmnet_forward.13} parent=5 // pred_region
      // Predicated region
      $region25: #{iasmnet_forward.13} parent=23 // pred_check
        %p128 = pneg %p29
      $region26: #{iasmnet_forward.13} parent=23 // pred_check_branch
        %130 = sbr.rel (%p128) target = $region28
      $region27: #{iasmnet_forward.13} parent=23 // pred_region
        %p131 = scmp.lt.s32.totalorder %s9, 3
        %s132 = scalar_select %p131, %s9, 3
        %s133 = smul.addr %s132, 2
        %s134 = scalar_lea.vmem %s0, %s133
      $region28: #{iasmnet_forward.13} parent=23 // pred_fallthru
        _
    $region24: #{iasmnet_forward.13} parent=5 // pred_fallthru
      _
    %p135 = scmp.le.s32.totalorder 1, %s9
    %p136 = scmp.lt.s32.totalorder %s9, 5
    %p137 = pnand %p135, %p136
    %p138 = pneg %p137
    // Predicated region
    $region29: #{iasmnet_forward.13} parent=5 // pred_check
      _
    $region30: #{iasmnet_forward.13} parent=5 // pred_check_branch
      %140 = sbr.rel (%p137) target = $region32
    $region31: #{iasmnet_forward.13} parent=5 // pred_region
      %s141 = ssub.s32 %s9, 1
      %p142 = scmp.lt.s32.totalorder %s14, 3
      %s143 = scalar_select %p142, %s14, 3
      %s144 = smul.addr %s143, 2
      %s145 = scalar_lea.vmem %s0, %s144
      %p146 = pneg %p35
      %p147 = pneg %p32
      %p148 = pneg %p56
      %p149 = pneg %p53
      %p150 = pneg %p77
      %p151 = pneg %p74
      %p152 = pneg %p103
      %p153 = pneg %p100
      %p154 = scmp.lt.s32.totalorder %s14, 3
      %s155 = scalar_select %p154, %s14, 3
      %s156 = smul.addr %s155, 2
      %s157 = scalar_lea.vmem %s3, %s156
      %p158 = scmp.lt.s32.totalorder %s14, 3
      %s159 = scalar_select %p158, %s14, 3
      %s160 = smul.addr %s159, 2
      %s161 = scalar_lea.vmem %s0, %s160
      %p162 = scmp.lt.s32.totalorder %s14, 3
      %s163 = scalar_select %p162, %s14, 3
      %s164 = smul.addr %s163, 2
      %s165 = scalar_lea.vmem %s3, %s164
      %v167 = vld [vmem:[%s161] sm:$0x3]
      %v168 = vld [vmem:[%s1] sm:$0xf]
      %v169 = vld [vmem:[%s1 + $0x4] sm:$0xf]
      %v170 = vld [vmem:[%s1 + $0x8] sm:$0xf]
      %v171 = vld [vmem:[%s1 + $0xc] sm:$0xf]
      %v172 = vld [vmem:[%s1 + $0x10] sm:$0xf]
      %v173 = vld [vmem:[%s1 + $0x14] sm:$0xf]
      %v174 = vld [vmem:[%s1 + $0x18] sm:$0xf]
      %v175 = vld [vmem:[%s1 + $0x1c] sm:$0xf]
      %v176 = vld [vmem:[%s1 + $0x20] sm:$0xf]
      %v177 = vld [vmem:[%s1 + $0x24] sm:$0xf]
      %v178 = vld [vmem:[%s1 + $0x28] sm:$0xf]
      %v179 = vld [vmem:[%s1 + $0x2c] sm:$0xf]
      %v180 = vld [vmem:[%s1 + $0x30] sm:$0xf]
      %v181 = vld [vmem:[%s1 + $0x34] sm:$0xf]
      %v182 = vld [vmem:[%s1 + $0x38] sm:$0xf]
      %v183 = vld [vmem:[%s1 + $0x3c] sm:$0xf]
      %v184 = vld [vmem:[%s2] sm:$0x1]
      %v186 = vlaneseq
      %v187 = vshrl.u32 %v186, 7
      %v188 = vsub.s32 0, %v187
      %v189 = vrot.slane %v184, %v188
      %v207 = vunpack.c.l.b16 %v168
      %v208 = vunpack.c.l.b16 %v169
      %v209 = vunpack.c.l.b16 %v170
      %v210 = vunpack.c.l.b16 %v171
      %v211 = vunpack.c.l.b16 %v172
      %v212 = vunpack.c.l.b16 %v173
      %v213 = vunpack.c.l.b16 %v174
      %v214 = vunpack.c.l.b16 %v175
      %v215 = vunpack.c.l.b16 %v176
      %v216 = vunpack.c.l.b16 %v177
      %v217 = vunpack.c.l.b16 %v178
      %v218 = vunpack.c.l.b16 %v179
      %v219 = vunpack.c.l.b16 %v180
      %v220 = vunpack.c.l.b16 %v181
      %v221 = vunpack.c.l.b16 %v182
      %v222 = vunpack.c.l.b16 %v183
      %v223 = vpack.c.b16 %v208, %v207
      %v224 = vpack.c.b16 %v210, %v209
      %v225 = vpack.c.b16 %v212, %v211
      %v226 = vpack.c.b16 %v214, %v213
      %v227 = vpack.c.b16 %v216, %v215
      %v228 = vpack.c.b16 %v218, %v217
      %v229 = vpack.c.b16 %v220, %v219
      %v230 = vpack.c.b16 %v222, %v221
      %239 = vmatprep.subr.bf16.mxu0 0
      %240 = vmatpush1.bf16.msra.mxu0 %v223
      %241 = vmatprep.subr.bf16.mxu0 0
      %242 = vmatpush1.bf16.msra.mxu0 %v224
      %243 = vmatprep.subr.bf16.mxu0 0
      %244 = vmatpush1.bf16.msra.mxu0 %v225
      %245 = vmatprep.subr.bf16.mxu0 0
      %246 = vmatpush1.bf16.msra.mxu0 %v226
      %247 = vmatprep.subr.bf16.mxu0 0
      %248 = vmatpush1.bf16.msra.mxu0 %v227
      %249 = vmatprep.subr.bf16.mxu0 0
      %250 = vmatpush1.bf16.msra.mxu0 %v228
      %251 = vmatprep.subr.bf16.mxu0 0
      %252 = vmatpush1.bf16.msra.mxu0 %v229
      %253 = vmatprep.subr.bf16.mxu0 0
      %254 = vmatpush1.bf16.msra.mxu0 %v230
      %255 = vmatprep.subr.bf16.mxu0 0
      %256 = vmatpush1.bf16.msra.mxu0 0
      %257 = vmatprep.subr.bf16.mxu0 0
      %258 = vmatpush1.bf16.msra.mxu0 0
      %259 = vmatprep.subr.bf16.mxu0 0
      %260 = vmatpush1.bf16.msra.mxu0 0
      %261 = vmatprep.subr.bf16.mxu0 0
      %262 = vmatpush1.bf16.msra.mxu0 0
      %263 = vmatprep.subr.bf16.mxu0 0
      %264 = vmatpush1.bf16.msra.mxu0 0
      %265 = vmatprep.subr.bf16.mxu0 0
      %266 = vmatpush1.bf16.msra.mxu0 0
      %267 = vmatprep.subr.bf16.mxu0 0
      %268 = vmatpush1.bf16.msra.mxu0 0
      %269 = vmatprep.subr.bf16.mxu0 0
      %270 = vmatpush1.bf16.msra.mxu0 0
      %271 = vmatprep.mubr.bf16.mxu0 0
      %272 = vmatmul.mubr.bf16.gmra.mrb[0].mxu0 %v167
      %v273 = vpop.f32.mrb[0].mxu0
      %v274 = vadd.f32 %v189, %v273
      %v275 = vpop.f32.mrb[0].mxu0
      %v276 = vpop.f32.mrb[0].mxu0
      %v277 = vpop.f32.mrb[0].mxu0
      %278 = vdwg.mxu0
      %vm279 = vcmp.gt.f32.partialorder %v274, 0.0
      %v280 = vmul.f32 %v274, 0.2
      %v281 = vsel %vm279, %v274, %v280
      %v282 = vpack.c.bf16 %v281, %v281
      %vm283 = vcmask 517120
      %284 = vst.msk [vmem:[%s165] sm:$0x3] %vm283, %v282
      %p285 = scmp.lt.s32.totalorder %s14, 3
      %s286 = scalar_select %p285, %s14, 3
      %s287 = smul.addr %s286, 2
      %s288 = scalar_lea.vmem %s3, %s287
      // Predicated region
      $region33: #{iasmnet_forward.13} parent=31 // pred_check
        %p289 = pneg %p100
      $region34: #{iasmnet_forward.13} parent=31 // pred_check_branch
        %291 = sbr.rel (%p289) target = $region36
      $region35: #{iasmnet_forward.13} parent=31 // pred_region
        _
      $region36: #{iasmnet_forward.13} parent=31 // pred_fallthru
        _
    $region32: #{iasmnet_forward.13} parent=5 // pred_fallthru
      _
    %p292 = scmp.le.s32.totalorder 2, %s9
    // Predicated region
    $region37: #{iasmnet_forward.13} parent=5 // pred_check
      %p293 = pneg %p292
    $region38: #{iasmnet_forward.13} parent=5 // pred_check_branch
      %295 = sbr.rel (%p293) target = $region40
    $region39: #{iasmnet_forward.13} parent=5 // pred_region
      %s296 = ssub.s32 %s9, 2
      // Predicated region
      $region41: #{iasmnet_forward.13} parent=39 // pred_check
        %p297 = pneg %p106
      $region42: #{iasmnet_forward.13} parent=39 // pred_check_branch
        %299 = sbr.rel (%p297) target = $region44
      $region43: #{iasmnet_forward.13} parent=39 // pred_region
        %p300 = scmp.lt.s32.totalorder %s15, 3
        %s301 = scalar_select %p300, %s15, 3
        %s302 = smul.addr %s301, 2
        %s303 = scalar_lea.vmem %s3, %s302
      $region44: #{iasmnet_forward.13} parent=39 // pred_fallthru
        _
    $region40: #{iasmnet_forward.13} parent=5 // pred_fallthru
      _
  $region6: #{iasmnet_forward.13} parent=0 // loop_footer
    %s13 = sadd.s32 1, %s9
  $region7: #{iasmnet_forward.13} parent=0 // loop_footer_branch
    %8 = sbr.rel target = $region3
  $region8: #{iasmnet_forward.13} parent=0 // loop_exit
    _

// kernel: iasmnet_forward.14
$region0: #{iasmnet_forward.14}
  #allocation0 [shape = 'u32[]', space=smem, size = 0x4, offset = 0x4, fixed_abs, tag = 'smem constant byte address 0x4 - core index']
  #allocation1 [shape = 'u32[144,128]{1,0:T(1,128)}', space=vmem, size = 0x12000, scoped, tag = 'internal scratch']
  %s0 = inlined_call_operand.vmem [shape: bf16[4,6,96], index: 0, kind: input, shape index: {}]
  %s1 = inlined_call_operand.vmem [shape: bf16[3,96,64], index: 1, kind: input, shape index: {}]
  %s2 = inlined_call_operand.vmem [shape: f32[1,64], index: 2, kind: input, shape index: {}]
  %s3 = inlined_call_operand.vmem [shape: bf16[4,4,64], index: 3, kind: output, shape index: {}]
  %s4 = sld [smem:[#allocation0]]
  $region45: #{iasmnet_forward.14} parent=0
    _
  %s6 = ssub.s32 1, %s4
  %s7 = scalar_select 0, %s6, %s4
  loop: start=0, step=1, limit=6
  $region2: #{iasmnet_forward.14} parent=0 // loop_pre_header
    _
  $region3: #{iasmnet_forward.14} parent=0 // loop_header
    %s9 = sphi 0, %s13
    %p10 = scmp.ge.s32.totalorder %s9, 6
    %s19 = sphi 0, %s21
    %s22 = sphi 0, %s19
    %s23 = sphi 0, %s22
    %s39 = sphi 0, %s23
    %s43 = sphi 0, %s43
    %s45 = sphi 0, %s43
    %s46 = sphi 0, %s45
    %s60 = sphi 0, %s46
    %s64 = sphi 0, %s64
    %s66 = sphi 0, %s64
    %s67 = sphi 0, %s66
    %s81 = sphi 0, %s67
    %s87 = sphi 0, %s89
    %s90 = sphi 0, %s87
    %s91 = sphi 0, %s90
    %s107 = sphi 0, %s91
  $region4: #{iasmnet_forward.14} parent=0 // loop_header_branch
    %12 = sbr.rel (%p10) target = $region8
  $region5: #{iasmnet_forward.14} parent=0 // loop_body
    %s14 = ssub.s32 %s9, 1
    %s15 = ssub.s32 %s9, 2
    %s16 = sadd.s32 %s9, 1
    %s17 = ssub.s32 %s9, %s16
    %p18 = scmp.eq.s32.totalorder %s17, 0
    %s20 = sadd.s32 %s19, 1
    %s21 = scalar_select %p18, %s19, %s20
    %p24 = pneg %p18
    %p25 = scmp.eq.s32.totalorder %s9, 3
    %p26 = por %p24, %p25
    %p27 = scmp.ne.s32.totalorder %s19, %s22
    %p28 = scmp.eq.s32.totalorder %s9, 0
    %p29 = por %p27, %p28
    %p30 = scmp.ne.s32.totalorder %s19, %s22
    %p31 = scmp.eq.s32.totalorder %s14, 3
    %p32 = por %p30, %p31
    %p33 = scmp.ne.s32.totalorder %s22, %s23
    %p34 = scmp.eq.s32.totalorder %s14, 0
    %p35 = por %p33, %p34
    %p36 = scmp.ne.s32.totalorder %s22, %s23
    %p37 = scmp.eq.s32.totalorder %s15, 3
    %p38 = por %p36, %p37
    %p40 = scmp.ne.s32.totalorder %s23, %s39
    %p41 = scmp.eq.s32.totalorder %s15, 0
    %p42 = por %p40, %p41
    %s44 = sadd.s32 %s43, 1
    %p47 = scmp.eq.s32.totalorder %s9, 3
    %p48 = scmp.ne.s32.totalorder %s43, %s45
    %p49 = scmp.eq.s32.totalorder %s9, 0
    %p50 = por %p48, %p49
    %p51 = scmp.ne.s32.totalorder %s43, %s45
    %p52 = scmp.eq.s32.totalorder %s14, 3
    %p53 = por %p51, %p52
    %p54 = scmp.ne.s32.totalorder %s45, %s46
    %p55 = scmp.eq.s32.totalorder %s14, 0
    %p56 = por %p54, %p55
    %p57 = scmp.ne.s32.totalorder %s45, %s46
    %p58 = scmp.eq.s32.totalorder %s15, 3
    %p59 = por %p57, %p58
    %p61 = scmp.ne.s32.totalorder %s46, %s60
    %p62 = scmp.eq.s32.totalorder %s15, 0
    %p63 = por %p61, %p62
    %s65 = sadd.s32 %s64, 1
    %p68 = scmp.eq.s32.totalorder %s9, 3
    %p69 = scmp.ne.s32.totalorder %s64, %s66
    %p70 = scmp.eq.s32.totalorder %s9, 0
    %p71 = por %p69, %p70
    %p72 = scmp.ne.s32.totalorder %s64, %s66
    %p73 = scmp.eq.s32.totalorder %s14, 3
    %p74 = por %p72, %p73
    %p75 = scmp.ne.s32.totalorder %s66, %s67
    %p76 = scmp.eq.s32.totalorder %s14, 0
    %p77 = por %p75, %p76
    %p78 = scmp.ne.s32.totalorder %s66, %s67
    %p79 = scmp.eq.s32.totalorder %s15, 3
    %p80 = por %p78, %p79
    %p82 = scmp.ne.s32.totalorder %s67, %s81
    %p83 = scmp.eq.s32.totalorder %s15, 0
    %p84 = por %p82, %p83
    %s85 = ssub.s32 %s9, %s16
    %p86 = scmp.eq.s32.totalorder %s85, 0
    %s88 = sadd.s32 %s87, 1
    %s89 = scalar_select %p86, %s87, %s88
    %p92 = pneg %p86
    %p93 = scmp.eq.s32.totalorder %s9, 3
    %p94 = por %p92, %p93
    %p95 = scmp.ne.s32.totalorder %s87, %s90
    %p96 = scmp.eq.s32.totalorder %s9, 0
    %p97 = por %p95, %p96
    %p98 = scmp.ne.s32.totalorder %s87, %s90
    %p99 = scmp.eq.s32.totalorder %s14, 3
    %p100 = por %p98, %p99
    %p101 = scmp.ne.s32.totalorder %s90, %s91
    %p102 = scmp.eq.s32.totalorder %s14, 0
    %p103 = por %p101, %p102
    %p104 = scmp.ne.s32.totalorder %s90, %s91
    %p105 = scmp.eq.s32.totalorder %s15, 3
    %p106 = por %p104, %p105
    %p108 = scmp.ne.s32.totalorder %s91, %s107
    %p109 = scmp.eq.s32.totalorder %s15, 0
    %p110 = por %p108, %p109
    %p111 = scmp.le.s32.totalorder 1, %s9
    %p112 = scmp.lt.s32.totalorder %s9, 5
    %p113 = pnand %p111, %p112
    %p114 = pneg %p113
    // Predicated region
    $region9: #{iasmnet_forward.14} parent=5 // pred_check
      _
    $region10: #{iasmnet_forward.14} parent=5 // pred_check_branch
      %116 = sbr.rel (%p113) target = $region12
    $region11: #{iasmnet_forward.14} parent=5 // pred_region
      %s117 = ssub.s32 %s9, 1
      // Predicated region
      $region13: #{iasmnet_forward.14} parent=11 // pred_check
        %p118 = pneg %p56
      $region14: #{iasmnet_forward.14} parent=11 // pred_check_branch
        %120 = sbr.rel (%p118) target = $region16
      $region15: #{iasmnet_forward.14} parent=11 // pred_region
        _
      $region16: #{iasmnet_forward.14} parent=11 // pred_fallthru
        _
      // Predicated region
      $region17: #{iasmnet_forward.14} parent=11 // pred_check
        %p121 = pneg %p77
      $region18: #{iasmnet_forward.14} parent=11 // pred_check_branch
        %123 = sbr.rel (%p121) target = $region20
      $region19: #{iasmnet_forward.14} parent=11 // pred_region
        _
      $region20: #{iasmnet_forward.14} parent=11 // pred_fallthru
        _
    $region12: #{iasmnet_forward.14} parent=5 // pred_fallthru
      _
    %p124 = scmp.lt.s32.totalorder %s9, 4
    // Predicated region
    $region21: #{iasmnet_forward.14} parent=5 // pred_check
      %p125 = pneg %p124
    $region22: #{iasmnet_forward.14} parent=5 // pred_check_branch
      %127 = sbr.rel (%p125) target = $region24
    $region23: #{iasmnet_forward.14} parent=5 // pred_region
      // Predicated region
      $region25: #{iasmnet_forward.14} parent=23 // pred_check
        %p128 = pneg %p29
      $region26: #{iasmnet_forward.14} parent=23 // pred_check_branch
        %130 = sbr.rel (%p128) target = $region28
      $region27: #{iasmnet_forward.14} parent=23 // pred_region
        %p131 = scmp.lt.s32.totalorder %s9, 3
        %s132 = scalar_select %p131, %s9, 3
        %s133 = smul.addr %s132, 4
        %s134 = scalar_lea.vmem %s0, %s133
      $region28: #{iasmnet_forward.14} parent=23 // pred_fallthru
        _
    $region24: #{iasmnet_forward.14} parent=5 // pred_fallthru
      _
    %p135 = scmp.le.s32.totalorder 1, %s9
    %p136 = scmp.lt.s32.totalorder %s9, 5
    %p137 = pnand %p135, %p136
    %p138 = pneg %p137
    // Predicated region
    $region29: #{iasmnet_forward.14} parent=5 // pred_check
      _
    $region30: #{iasmnet_forward.14} parent=5 // pred_check_branch
      %140 = sbr.rel (%p137) target = $region32
    $region31: #{iasmnet_forward.14} parent=5 // pred_region
      %s141 = ssub.s32 %s9, 1
      %p142 = scmp.lt.s32.totalorder %s14, 3
      %s143 = scalar_select %p142, %s14, 3
      %s144 = smul.addr %s143, 4
      %s145 = scalar_lea.vmem %s0, %s144
      %p146 = pneg %p35
      %p147 = pneg %p32
      %p148 = pneg %p56
      %p149 = pneg %p53
      %p150 = pneg %p77
      %p151 = pneg %p74
      %p152 = pneg %p103
      %p153 = pneg %p100
      %p154 = scmp.lt.s32.totalorder %s14, 3
      %s155 = scalar_select %p154, %s14, 3
      %s156 = smul.addr %s155, 2
      %s157 = scalar_lea.vmem %s3, %s156
      %p158 = scmp.lt.s32.totalorder %s14, 3
      %s159 = scalar_select %p158, %s14, 3
      %s160 = smul.addr %s159, 4
      %s161 = scalar_lea.vmem %s0, %s160
      %p162 = scmp.lt.s32.totalorder %s14, 3
      %s163 = scalar_select %p162, %s14, 3
      %s164 = smul.addr %s163, 2
      %s165 = scalar_lea.vmem %s3, %s164
      %v167 = vld [vmem:[%s161] sm:$0x3]
      %v168 = vld [vmem:[%s1] sm:$0xf]
      %v169 = vld [vmem:[%s1 + $0x4] sm:$0xf]
      %v170 = vld [vmem:[%s1 + $0x8] sm:$0xf]
      %v171 = vld [vmem:[%s1 + $0xc] sm:$0xf]
      %v172 = vld [vmem:[%s1 + $0x10] sm:$0xf]
      %v173 = vld [vmem:[%s1 + $0x14] sm:$0xf]
      %v174 = vld [vmem:[%s1 + $0x18] sm:$0xf]
      %v175 = vld [vmem:[%s1 + $0x1c] sm:$0xf]
      %v176 = vld [vmem:[%s1 + $0x20] sm:$0xf]
      %v177 = vld [vmem:[%s1 + $0x24] sm:$0xf]
      %v178 = vld [vmem:[%s1 + $0x28] sm:$0xf]
      %v179 = vld [vmem:[%s1 + $0x2c] sm:$0xf]
      %v180 = vld [vmem:[%s161] sm:$0x7]
      %s181 = scalar_lea.vmem %s1, 48
      %v182 = vld [vmem:[%s181] sm:$0xf]
      %v183 = vld [vmem:[%s181 + $0x4] sm:$0xf]
      %v184 = vld [vmem:[%s181 + $0x8] sm:$0xf]
      %v185 = vld [vmem:[%s181 + $0xc] sm:$0xf]
      %v186 = vld [vmem:[%s181 + $0x10] sm:$0xf]
      %v187 = vld [vmem:[%s181 + $0x14] sm:$0xf]
      %v188 = vld [vmem:[%s181 + $0x18] sm:$0xf]
      %v189 = vld [vmem:[%s181 + $0x1c] sm:$0xf]
      %v190 = vld [vmem:[%s181 + $0x20] sm:$0xf]
      %v191 = vld [vmem:[%s181 + $0x24] sm:$0xf]
      %v192 = vld [vmem:[%s181 + $0x28] sm:$0xf]
      %v193 = vld [vmem:[%s181 + $0x2c] sm:$0xf]
      %v195 = vunpack.c.l.b16 %v180
      %v196 = vpack.c.b16 %v195, %v195
      %v198 = vshrl.u32 %v196, 16
      %v200 = vshll.u32 %v196, 16
      %v202 = vrot.slane %v200, 1
      %v203 = vor.u32 %v198, %v202
      %v216 = vunpack.c.l.b16 %v182
      %v217 = vunpack.c.l.b16 %v183
      %v218 = vunpack.c.l.b16 %v184
      %v219 = vunpack.c.l.b16 %v185
      %v220 = vunpack.c.l.b16 %v186
      %v221 = vunpack.c.l.b16 %v187
      %v222 = vunpack.c.l.b16 %v188
      %v223 = vunpack.c.l.b16 %v189
      %v224 = vunpack.c.l.b16 %v190
      %v225 = vunpack.c.l.b16 %v191
      %v226 = vunpack.c.l.b16 %v192
      %v227 = vunpack.c.l.b16 %v193
      %v228 = vpack.c.b16 %v217, %v216
      %v229 = vpack.c.b16 %v219, %v218
      %v230 = vpack.c.b16 %v221, %v220
      %v231 = vpack.c.b16 %v223, %v222
      %v232 = vpack.c.b16 %v225, %v224
      %v233 = vpack.c.b16 %v227, %v226
      %vm240 = vcmask 785408
      %v242 = vsel %vm240, %v203, 0
      %244 = vmatprep.subr.bf16.mxu0 0
      %245 = vmatpush1.bf16.msra.mxu0 %v228
      %246 = vmatprep.subr.bf16.mxu0 0
      %247 = vmatpush1.bf16.msra.mxu0 %v229
      %248 = vmatprep.subr.bf16.mxu0 0
      %249 = vmatpush1.bf16.msra.mxu0 %v230
      %250 = vmatprep.subr.bf16.mxu0 0
      %251 = vmatpush1.bf16.msra.mxu0 %v231
      %252 = vmatprep.subr.bf16.mxu0 0
      %253 = vmatpush1.bf16.msra.mxu0 %v232
      %254 = vmatprep.subr.bf16.mxu0 0
      %255 = vmatpush1.bf16.msra.mxu0 %v233
      %256 = vmatprep.subr.bf16.mxu0 0
      %257 = vmatpush1.bf16.msra.mxu0 0
      %258 = vmatprep.subr.bf16.mxu0 0
      %259 = vmatpush1.bf16.msra.mxu0 0
      %260 = vmatprep.subr.bf16.mxu0 0
      %261 = vmatpush1.bf16.msra.mxu0 0
      %262 = vmatprep.subr.bf16.mxu0 0
      %263 = vmatpush1.bf16.msra.mxu0 0
      %264 = vmatprep.subr.bf16.mxu0 0
      %265 = vmatpush1.bf16.msra.mxu0 0
      %266 = vmatprep.subr.bf16.mxu0 0
      %267 = vmatpush1.bf16.msra.mxu0 0
      %268 = vmatprep.subr.bf16.mxu0 0
      %269 = vmatpush1.bf16.msra.mxu0 0
      %270 = vmatprep.subr.bf16.mxu0 0
      %271 = vmatpush1.bf16.msra.mxu0 0
      %272 = vmatprep.subr.bf16.mxu0 0
      %273 = vmatpush1.bf16.msra.mxu0 0
      %274 = vmatprep.subr.bf16.mxu0 0
      %275 = vmatpush1.bf16.msra.mxu0 0
      %276 = vmatprep.mubr.bf16.mxu0 0
      %277 = vmatmul.mubr.bf16.gmra.mrb[0].mxu0 %v242
      %v278 = vpop.f32.mrb[0].mxu0
      %v279 = vadd.f32 0.0, %v278
      %v280 = vpop.f32.mrb[0].mxu0
      %v281 = vpop.f32.mrb[0].mxu0
      %v282 = vpop.f32.mrb[0].mxu0
      %283 = vdwg.mxu0
      %v296 = vunpack.c.l.b16 %v168
      %v297 = vunpack.c.l.b16 %v169
      %v298 = vunpack.c.l.b16 %v170
      %v299 = vunpack.c.l.b16 %v171
      %v300 = vunpack.c.l.b16 %v172
      %v301 = vunpack.c.l.b16 %v173
      %v302 = vunpack.c.l.b16 %v174
      %v303 = vunpack.c.l.b16 %v175
      %v304 = vunpack.c.l.b16 %v176
      %v305 = vunpack.c.l.b16 %v177
      %v306 = vunpack.c.l.b16 %v178
      %v307 = vunpack.c.l.b16 %v179
      %v308 = vpack.c.b16 %v297, %v296
      %v309 = vpack.c.b16 %v299, %v298
      %v310 = vpack.c.b16 %v301, %v300
      %v311 = vpack.c.b16 %v303, %v302
      %v312 = vpack.c.b16 %v305, %v304
      %v313 = vpack.c.b16 %v307, %v306
      %v321 = vsel %vm240, %v167, 0
      %323 = vmatprep.subr.bf16.mxu0 0
      %324 = vmatpush1.bf16.msra.mxu0 %v308
      %325 = vmatprep.subr.bf16.mxu0 0
      %326 = vmatpush1.bf16.msra.mxu0 %v309
      %327 = vmatprep.subr.bf16.mxu0 0
      %328 = vmatpush1.bf16.msra.mxu0 %v310
      %329 = vmatprep.subr.bf16.mxu0 0
      %330 = vmatpush1.bf16.msra.mxu0 %v311
      %331 = vmatprep.subr.bf16.mxu0 0
      %332 = vmatpush1.bf16.msra.mxu0 %v312
      %333 = vmatprep.subr.bf16.mxu0 0
      %334 = vmatpush1.bf16.msra.mxu0 %v313
      %335 = vmatprep.subr.bf16.mxu0 0
      %336 = vmatpush1.bf16.msra.mxu0 0
      %337 = vmatprep.subr.bf16.mxu0 0
      %338 = vmatpush1.bf16.msra.mxu0 0
      %339 = vmatprep.subr.bf16.mxu0 0
      %340 = vmatpush1.bf16.msra.mxu0 0
      %341 = vmatprep.subr.bf16.mxu0 0
      %342 = vmatpush1.bf16.msra.mxu0 0
      %343 = vmatprep.subr.bf16.mxu0 0
      %344 = vmatpush1.bf16.msra.mxu0 0
      %345 = vmatprep.subr.bf16.mxu0 0
      %346 = vmatpush1.bf16.msra.mxu0 0
      %347 = vmatprep.subr.bf16.mxu0 0
      %348 = vmatpush1.bf16.msra.mxu0 0
      %349 = vmatprep.subr.bf16.mxu0 0
      %350 = vmatpush1.bf16.msra.mxu0 0
      %351 = vmatprep.subr.bf16.mxu0 0
      %352 = vmatpush1.bf16.msra.mxu0 0
      %353 = vmatprep.subr.bf16.mxu0 0
      %354 = vmatpush1.bf16.msra.mxu0 0
      %355 = vmatprep.mubr.bf16.mxu0 0
      %356 = vmatmul.mubr.bf16.gmra.mrb[0].mxu0 %v321
      %v357 = vpop.f32.mrb[0].mxu0
      %v358 = vadd.f32 %v279, %v357
      %v359 = vpop.f32.mrb[0].mxu0
      %v360 = vpop.f32.mrb[0].mxu0
      %v361 = vpop.f32.mrb[0].mxu0
      %362 = vdwg.mxu0
      %v363 = vld [vmem:[%s161] sm:$0x6]
      %s364 = scalar_lea.vmem %s1, 96
      %v365 = vld [vmem:[%s364] sm:$0xf]
      %v366 = vld [vmem:[%s364 + $0x4] sm:$0xf]
      %v367 = vld [vmem:[%s364 + $0x8] sm:$0xf]
      %v368 = vld [vmem:[%s364 + $0xc] sm:$0xf]
      %v369 = vld [vmem:[%s364 + $0x10] sm:$0xf]
      %v370 = vld [vmem:[%s364 + $0x14] sm:$0xf]
      %v371 = vld [vmem:[%s364 + $0x18] sm:$0xf]
      %v372 = vld [vmem:[%s364 + $0x1c] sm:$0xf]
      %v373 = vld [vmem:[%s364 + $0x20] sm:$0xf]
      %v374 = vld [vmem:[%s364 + $0x24] sm:$0xf]
      %v375 = vld [vmem:[%s364 + $0x28] sm:$0xf]
      %v376 = vld [vmem:[%s364 + $0x2c] sm:$0xf]
      %v378 = vunpack.c.l.b16 %v363
      %v379 = vpack.c.b16 %v378, %v378
      %v380 = vrot.slane %v379, 1
      %v393 = vunpack.c.l.b16 %v365
      %v394 = vunpack.c.l.b16 %v366
      %v395 = vunpack.c.l.b16 %v367
      %v396 = vunpack.c.l.b16 %v368
      %v397 = vunpack.c.l.b16 %v369
      %v398 = vunpack.c.l.b16 %v370
      %v399 = vunpack.c.l.b16 %v371
      %v400 = vunpack.c.l.b16 %v372
      %v401 = vunpack.c.l.b16 %v373
      %v402 = vunpack.c.l.b16 %v374
      %v403 = vunpack.c.l.b16 %v375
      %v404 = vunpack.c.l.b16 %v376
      %v405 = vpack.c.b16 %v394, %v393
      %v406 = vpack.c.b16 %v396, %v395
      %v407 = vpack.c.b16 %v398, %v397
      %v408 = vpack.c.b16 %v400, %v399
      %v409 = vpack.c.b16 %v402, %v401
      %v410 = vpack.c.b16 %v404, %v403
      %v418 = vsel %vm240, %v380, 0
      %420 = vmatprep.subr.bf16.mxu0 0
      %421 = vmatpush1.bf16.msra.mxu0 %v405
      %422 = vmatprep.subr.bf16.mxu0 0
      %423 = vmatpush1.bf16.msra.mxu0 %v406
      %424 = vmatprep.subr.bf16.mxu0 0
      %425 = vmatpush1.bf16.msra.mxu0 %v407
      %426 = vmatprep.subr.bf16.mxu0 0
      %427 = vmatpush1.bf16.msra.mxu0 %v408
      %428 = vmatprep.subr.bf16.mxu0 0
      %429 = vmatpush1.bf16.msra.mxu0 %v409
      %430 = vmatprep.subr.bf16.mxu0 0
      %431 = vmatpush1.bf16.msra.mxu0 %v410
      %432 = vmatprep.subr.bf16.mxu0 0
      %433 = vmatpush1.bf16.msra.mxu0 0
      %434 = vmatprep.subr.bf16.mxu0 0
      %435 = vmatpush1.bf16.msra.mxu0 0
      %436 = vmatprep.subr.bf16.mxu0 0
      %437 = vmatpush1.bf16.msra.mxu0 0
      %438 = vmatprep.subr.bf16.mxu0 0
      %439 = vmatpush1.bf16.msra.mxu0 0
      %440 = vmatprep.subr.bf16.mxu0 0
      %441 = vmatpush1.bf16.msra.mxu0 0
      %442 = vmatprep.subr.bf16.mxu0 0
      %443 = vmatpush1.bf16.msra.mxu0 0
      %444 = vmatprep.subr.bf16.mxu0 0
      %445 = vmatpush1.bf16.msra.mxu0 0
      %446 = vmatprep.subr.bf16.mxu0 0
      %447 = vmatpush1.bf16.msra.mxu0 0
      %448 = vmatprep.subr.bf16.mxu0 0
      %449 = vmatpush1.bf16.msra.mxu0 0
      %450 = vmatprep.subr.bf16.mxu0 0
      %451 = vmatpush1.bf16.msra.mxu0 0
      %452 = vmatprep.mubr.bf16.mxu0 0
      %453 = vmatmul.mubr.bf16.gmra.mrb[0].mxu0 %v418
      %v454 = vpop.f32.mrb[0].mxu0
      %v455 = vadd.f32 0.0, %v454
      %v456 = vpop.f32.mrb[0].mxu0
      %v457 = vpop.f32.mrb[0].mxu0
      %v458 = vpop.f32.mrb[0].mxu0
      %459 = vdwg.mxu0
      %v460 = vadd.f32 %v358, %v455
      %v461 = vld [vmem:[%s2] sm:$0x1]
      %v463 = vlaneseq
      %v464 = vshrl.u32 %v463, 7
      %v465 = vsub.s32 0, %v464
      %v466 = vrot.slane %v461, %v465
      %v468 = vadd.f32 %v460, %v466
      %vm469 = vcmp.gt.f32.partialorder %v468, 0.0
      %v470 = vmul.f32 %v468, 0.2
      %v471 = vsel %vm469, %v468, %v470
      %v472 = vpack.c.bf16 %v471, %v471
      %vm473 = vcmask 517120
      %474 = vst.msk [vmem:[%s165] sm:$0x3] %vm473, %v472
      %p475 = scmp.lt.s32.totalorder %s14, 3
      %s476 = scalar_select %p475, %s14, 3
      %s477 = smul.addr %s476, 2
      %s478 = scalar_lea.vmem %s3, %s477
      // Predicated region
      $region33: #{iasmnet_forward.14} parent=31 // pred_check
        %p479 = pneg %p100
      $region34: #{iasmnet_forward.14} parent=31 // pred_check_branch
        %481 = sbr.rel (%p479) target = $region36
      $region35: #{iasmnet_forward.14} parent=31 // pred_region
        _
      $region36: #{iasmnet_forward.14} parent=31 // pred_fallthru
        _
    $region32: #{iasmnet_forward.14} parent=5 // pred_fallthru
      _
    %p482 = scmp.le.s32.totalorder 2, %s9
    // Predicated region
    $region37: #{iasmnet_forward.14} parent=5 // pred_check
      %p483 = pneg %p482
    $region38: #{iasmnet_forward.14} parent=5 // pred_check_branch
      %485 = sbr.rel (%p483) target = $region40
    $region39: #{iasmnet_forward.14} parent=5 // pred_region
      %s486 = ssub.s32 %s9, 2
      // Predicated region
      $region41: #{iasmnet_forward.14} parent=39 // pred_check
        %p487 = pneg %p106
      $region42: #{iasmnet_forward.14} parent=39 // pred_check_branch
        %489 = sbr.rel (%p487) target = $region44
      $region43: #{iasmnet_forward.14} parent=39 // pred_region
        %p490 = scmp.lt.s32.totalorder %s15, 3
        %s491 = scalar_select %p490, %s15, 3
        %s492 = smul.addr %s491, 2
        %s493 = scalar_lea.vmem %s3, %s492
      $region44: #{iasmnet_forward.14} parent=39 // pred_fallthru
        _
    $region40: #{iasmnet_forward.14} parent=5 // pred_fallthru
      _
  $region6: #{iasmnet_forward.14} parent=0 // loop_footer
    %s13 = sadd.s32 1, %s9
  $region7: #{iasmnet_forward.14} parent=0 // loop_footer_branch
    %8 = sbr.rel target = $region3
  $region8: #{iasmnet_forward.14} parent=0 // loop_exit
    _

// kernel: iasmnet_forward.15
$region0: #{iasmnet_forward.15}
  #allocation0 [shape = 'u32[]', space=smem, size = 0x4, offset = 0x4, fixed_abs, tag = 'smem constant byte address 0x4 - core index']
  #allocation1 [shape = 'u32[144,128]{1,0:T(1,128)}', space=vmem, size = 0x12000, scoped, tag = 'internal scratch']
  %s0 = inlined_call_operand.vmem [shape: bf16[2,4,4,16], index: 0, kind: input, shape index: {}]
  %s1 = inlined_call_operand.vmem [shape: bf16[2,4,4,16], index: 1, kind: input, shape index: {}]
  %s2 = inlined_call_operand.vmem [shape: f32[2,4,4], index: 2, kind: output, shape index: {}]
  %s3 = sld [smem:[#allocation0]]
  $region41: #{iasmnet_forward.15} parent=0
    _
  %s5 = ssub.s32 1, %s3
  %s6 = scalar_select 0, %s5, %s3
  loop: start=0, step=1, limit=4
  $region2: #{iasmnet_forward.15} parent=0 // loop_pre_header
    _
  $region3: #{iasmnet_forward.15} parent=0 // loop_header
    %s8 = sphi 0, %s12
    %p9 = scmp.ge.s32.totalorder %s8, 4
    %s18 = sphi 0, %s20
    %s21 = sphi 0, %s18
    %s22 = sphi 0, %s21
    %s38 = sphi 0, %s22
    %s44 = sphi 0, %s46
    %s47 = sphi 0, %s44
    %s48 = sphi 0, %s47
    %s64 = sphi 0, %s48
    %s70 = sphi 0, %s72
    %s73 = sphi 0, %s70
    %s74 = sphi 0, %s73
    %s90 = sphi 0, %s74
  $region4: #{iasmnet_forward.15} parent=0 // loop_header_branch
    %11 = sbr.rel (%p9) target = $region8
  $region5: #{iasmnet_forward.15} parent=0 // loop_body
    %s13 = ssub.s32 %s8, 1
    %s14 = ssub.s32 %s8, 2
    %s15 = sadd.s32 %s8, 1
    %s16 = ssub.s32 %s8, %s15
    %p17 = scmp.eq.s32.totalorder %s16, 0
    %s19 = sadd.s32 %s18, 1
    %s20 = scalar_select %p17, %s18, %s19
    %p23 = pneg %p17
    %p24 = scmp.eq.s32.totalorder %s8, 1
    %p25 = por %p23, %p24
    %p26 = scmp.ne.s32.totalorder %s18, %s21
    %p27 = scmp.eq.s32.totalorder %s8, 0
    %p28 = por %p26, %p27
    %p29 = scmp.ne.s32.totalorder %s18, %s21
    %p30 = scmp.eq.s32.totalorder %s13, 1
    %p31 = por %p29, %p30
    %p32 = scmp.ne.s32.totalorder %s21, %s22
    %p33 = scmp.eq.s32.totalorder %s13, 0
    %p34 = por %p32, %p33
    %p35 = scmp.ne.s32.totalorder %s21, %s22
    %p36 = scmp.eq.s32.totalorder %s14, 1
    %p37 = por %p35, %p36
    %p39 = scmp.ne.s32.totalorder %s22, %s38
    %p40 = scmp.eq.s32.totalorder %s14, 0
    %p41 = por %p39, %p40
    %s42 = ssub.s32 %s8, %s15
    %p43 = scmp.eq.s32.totalorder %s42, 0
    %s45 = sadd.s32 %s44, 1
    %s46 = scalar_select %p43, %s44, %s45
    %p49 = pneg %p43
    %p50 = scmp.eq.s32.totalorder %s8, 1
    %p51 = por %p49, %p50
    %p52 = scmp.ne.s32.totalorder %s44, %s47
    %p53 = scmp.eq.s32.totalorder %s8, 0
    %p54 = por %p52, %p53
    %p55 = scmp.ne.s32.totalorder %s44, %s47
    %p56 = scmp.eq.s32.totalorder %s13, 1
    %p57 = por %p55, %p56
    %p58 = scmp.ne.s32.totalorder %s47, %s48
    %p59 = scmp.eq.s32.totalorder %s13, 0
    %p60 = por %p58, %p59
    %p61 = scmp.ne.s32.totalorder %s47, %s48
    %p62 = scmp.eq.s32.totalorder %s14, 1
    %p63 = por %p61, %p62
    %p65 = scmp.ne.s32.totalorder %s48, %s64
    %p66 = scmp.eq.s32.totalorder %s14, 0
    %p67 = por %p65, %p66
    %s68 = ssub.s32 %s8, %s15
    %p69 = scmp.eq.s32.totalorder %s68, 0
    %s71 = sadd.s32 %s70, 1
    %s72 = scalar_select %p69, %s70, %s71
    %p75 = pneg %p69
    %p76 = scmp.eq.s32.totalorder %s8, 1
    %p77 = por %p75, %p76
    %p78 = scmp.ne.s32.totalorder %s70, %s73
    %p79 = scmp.eq.s32.totalorder %s8, 0
    %p80 = por %p78, %p79
    %p81 = scmp.ne.s32.totalorder %s70, %s73
    %p82 = scmp.eq.s32.totalorder %s13, 1
    %p83 = por %p81, %p82
    %p84 = scmp.ne.s32.totalorder %s73, %s74
    %p85 = scmp.eq.s32.totalorder %s13, 0
    %p86 = por %p84, %p85
    %p87 = scmp.ne.s32.totalorder %s73, %s74
    %p88 = scmp.eq.s32.totalorder %s14, 1
    %p89 = por %p87, %p88
    %p91 = scmp.ne.s32.totalorder %s74, %s90
    %p92 = scmp.eq.s32.totalorder %s14, 0
    %p93 = por %p91, %p92
    %p94 = scmp.le.s32.totalorder 1, %s8
    %p95 = scmp.lt.s32.totalorder %s8, 3
    %p96 = pnand %p94, %p95
    %p97 = pneg %p96
    // Predicated region
    $region9: #{iasmnet_forward.15} parent=5 // pred_check
      _
    $region10: #{iasmnet_forward.15} parent=5 // pred_check_branch
      %99 = sbr.rel (%p96) target = $region12
    $region11: #{iasmnet_forward.15} parent=5 // pred_region
      %s100 = ssub.s32 %s8, 1
    $region12: #{iasmnet_forward.15} parent=5 // pred_fallthru
      _
    %p101 = scmp.lt.s32.totalorder %s8, 2
    // Predicated region
    $region13: #{iasmnet_forward.15} parent=5 // pred_check
      %p102 = pneg %p101
    $region14: #{iasmnet_forward.15} parent=5 // pred_check_branch
      %104 = sbr.rel (%p102) target = $region16
    $region15: #{iasmnet_forward.15} parent=5 // pred_region
      // Predicated region
      $region17: #{iasmnet_forward.15} parent=15 // pred_check
        %p105 = pneg %p28
      $region18: #{iasmnet_forward.15} parent=15 // pred_check_branch
        %107 = sbr.rel (%p105) target = $region20
      $region19: #{iasmnet_forward.15} parent=15 // pred_region
        %p108 = scmp.lt.s32.totalorder %s8, 1
        %s109 = scalar_select %p108, %s8, 1
        %s110 = smul.addr %s109, 4
        %s111 = smul.addr %s110, 2
        %s112 = scalar_lea.vmem %s0, %s111
      $region20: #{iasmnet_forward.15} parent=15 // pred_fallthru
        _
      // Predicated region
      $region21: #{iasmnet_forward.15} parent=15 // pred_check
        %p113 = pneg %p54
      $region22: #{iasmnet_forward.15} parent=15 // pred_check_branch
        %115 = sbr.rel (%p113) target = $region24
      $region23: #{iasmnet_forward.15} parent=15 // pred_region
        %p116 = scmp.lt.s32.totalorder %s8, 1
        %s117 = scalar_select %p116, %s8, 1
        %s118 = smul.addr %s117, 4
        %s119 = smul.addr %s118, 2
        %s120 = scalar_lea.vmem %s1, %s119
      $region24: #{iasmnet_forward.15} parent=15 // pred_fallthru
        _
    $region16: #{iasmnet_forward.15} parent=5 // pred_fallthru
      _
    %p121 = scmp.le.s32.totalorder 1, %s8
    %p122 = scmp.lt.s32.totalorder %s8, 3
    %p123 = pnand %p121, %p122
    %p124 = pneg %p123
    // Predicated region
    $region25: #{iasmnet_forward.15} parent=5 // pred_check
      _
    $region26: #{iasmnet_forward.15} parent=5 // pred_check_branch
      %126 = sbr.rel (%p123) target = $region28
    $region27: #{iasmnet_forward.15} parent=5 // pred_region
      %s127 = ssub.s32 %s8, 1
      %p128 = scmp.lt.s32.totalorder %s13, 1
      %s129 = scalar_select %p128, %s13, 1
      %s130 = smul.addr %s129, 4
      %s131 = smul.addr %s130, 2
      %s132 = scalar_lea.vmem %s0, %s131
      %p133 = pneg %p34
      %p134 = pneg %p31
      %p135 = scmp.lt.s32.totalorder %s13, 1
      %s136 = scalar_select %p135, %s13, 1
      %s137 = smul.addr %s136, 4
      %s138 = smul.addr %s137, 2
      %s139 = scalar_lea.vmem %s1, %s138
      %p140 = pneg %p60
      %p141 = pneg %p57
      %p142 = pneg %p86
      %p143 = pneg %p83
      %p144 = scmp.lt.s32.totalorder %s13, 1
      %s145 = scalar_select %p144, %s13, 1
      %s146 = smul.addr %s145, 4
      %s147 = scalar_lea.vmem %s2, %s146
      %p148 = scmp.lt.s32.totalorder %s13, 1
      %s149 = scalar_select %p148, %s13, 1
      %s150 = smul.addr %s149, 4
      %s151 = smul.addr %s150, 2
      %s152 = scalar_lea.vmem %s0, %s151
      %p153 = scmp.lt.s32.totalorder %s13, 1
      %s154 = scalar_select %p153, %s13, 1
      %s155 = smul.addr %s154, 4
      %s156 = smul.addr %s155, 2
      %s157 = scalar_lea.vmem %s1, %s156
      %p158 = scmp.lt.s32.totalorder %s13, 1
      %s159 = scalar_select %p158, %s13, 1
      %s160 = smul.addr %s159, 4
      %s161 = scalar_lea.vmem %s2, %s160
      %v162 = vld [vmem:[%s152] sm:$0x3]
      %v163 = vld [vmem:[%s152 + $0x2] sm:$0x3]
      %v164 = vld [vmem:[%s152 + $0x4] sm:$0x3]
      %v165 = vld [vmem:[%s152 + $0x6] sm:$0x3]
      %v166 = vunpack.c.l.bf16 %v162
      %v167 = vunpack.c.l.bf16 %v163
      %v168 = vunpack.c.l.bf16 %v164
      %v169 = vunpack.c.l.bf16 %v165
      %v170 = vld [vmem:[%s157] sm:$0x3]
      %v171 = vld [vmem:[%s157 + $0x2] sm:$0x3]
      %v172 = vld [vmem:[%s157 + $0x4] sm:$0x3]
      %v173 = vld [vmem:[%s157 + $0x6] sm:$0x3]
      %v174 = vunpack.c.l.bf16 %v170
      %v175 = vunpack.c.l.bf16 %v171
      %v176 = vunpack.c.l.bf16 %v172
      %v177 = vunpack.c.l.bf16 %v173
      %v178 = vlaneseq
      %v179 = vand.u32 %v178, 127
      %v180 = vmul.f32 %v166, %v174
      %v181 = vmul.f32 %v167, %v175
      %v182 = vmul.f32 %v168, %v176
      %v183 = vmul.f32 %v169, %v177
      %vm184 = vcmask 125952
      %v185 = vsel %vm184, %v180, 0.0
      %186 = vadd.xlane.f32.xlu0 %v185
      %v187 = vpop.xlane.xlu0 %186
      %v188 = vsel %vm184, %v181, 0.0
      %189 = vadd.xlane.f32.xlu0 %v188
      %v190 = vpop.xlane.xlu0 %189
      %v191 = vsel %vm184, %v182, 0.0
      %192 = vadd.xlane.f32.xlu0 %v191
      %v193 = vpop.xlane.xlu0 %192
      %v194 = vsel %vm184, %v183, 0.0
      %195 = vadd.xlane.f32.xlu0 %v194
      %v196 = vpop.xlane.xlu0 %195
      %v197 = vmul.f32 %v187, 0.0625
      %v198 = vmul.f32 %v190, 0.0625
      %v199 = vmul.f32 %v193, 0.0625
      %v200 = vmul.f32 %v196, 0.0625
      %v201 = vmax.f32 %v197, -1e+30
      %v202 = vmax.f32 %v198, -1e+30
      %v203 = vmax.f32 %v199, -1e+30
      %v204 = vmax.f32 %v200, -1e+30
      %v205 = vsub.f32 -1e+30, %v201
      %v206 = vsub.f32 -1e+30, %v202
      %v207 = vsub.f32 -1e+30, %v203
      %v208 = vsub.f32 -1e+30, %v204
      %v209 = vmul.f32 %v205, 1.442695
      %v210 = vpow.pop %v209
      %v211 = vmul.f32 %v206, 1.442695
      %v212 = vpow.pop %v211
      %v213 = vmul.f32 %v207, 1.442695
      %v214 = vpow.pop %v213
      %v215 = vmul.f32 %v208, 1.442695
      %v216 = vpow.pop %v215
      %v217 = vsub.f32 %v197, %v201
      %v218 = vsub.f32 %v198, %v202
      %v219 = vsub.f32 %v199, %v203
      %v220 = vsub.f32 %v200, %v204
      %v221 = vmul.f32 %v217, 1.442695
      %v222 = vpow.pop %v221
      %v223 = vmul.f32 %v218, 1.442695
      %v224 = vpow.pop %v223
      %v225 = vmul.f32 %v219, 1.442695
      %v226 = vpow.pop %v225
      %v227 = vmul.f32 %v220, 1.442695
      %v228 = vpow.pop %v227
      %v229 = vmul.f32 %v210, 0.0
      %v230 = vmul.f32 %v212, 0.0
      %v231 = vmul.f32 %v214, 0.0
      %v232 = vmul.f32 %v216, 0.0
      %v233 = vadd.f32 %v229, %v222
      %v234 = vadd.f32 %v230, %v224
      %v235 = vadd.f32 %v231, %v226
      %v236 = vadd.f32 %v232, %v228
      %v237 = vmul.f32 %v222, 0.0
      %v238 = vmul.f32 %v224, 0.0
      %v239 = vmul.f32 %v226, 0.0
      %v240 = vmul.f32 %v228, 0.0
      %v241 = vadd.f32 %v229, %v237
      %v242 = vadd.f32 %v230, %v238
      %v243 = vadd.f32 %v231, %v239
      %v244 = vadd.f32 %v232, %v240
      %v249 = vrot.slane %v174, 7
      %v250 = vrot.slane %v175, 7
      %v251 = vrot.slane %v176, 7
      %v252 = vrot.slane %v177, 7
      %vm257 = vcmask 1040384
      %v258 = vsel %vm257, 0.0, %v249
      %v259 = vsel %vm257, 0.0, %v250
      %v260 = vsel %vm257, 0.0, %v251
      %v261 = vsel %vm257, 0.0, %v252
      %v262 = vmul.f32 %v166, %v258
      %v263 = vmul.f32 %v167, %v259
      %v264 = vmul.f32 %v168, %v260
      %v265 = vmul.f32 %v169, %v261
      %v266 = vsel %vm184, %v262, 0.0
      %267 = vadd.xlane.f32.xlu0 %v266
      %v268 = vpop.xlane.xlu0 %267
      %v269 = vsel %vm184, %v263, 0.0
      %270 = vadd.xlane.f32.xlu0 %v269
      %v271 = vpop.xlane.xlu0 %270
      %v272 = vsel %vm184, %v264, 0.0
      %273 = vadd.xlane.f32.xlu0 %v272
      %v274 = vpop.xlane.xlu0 %273
      %v275 = vsel %vm184, %v265, 0.0
      %276 = vadd.xlane.f32.xlu0 %v275
      %v277 = vpop.xlane.xlu0 %276
      %v278 = vmul.f32 %v268, 0.0625
      %v279 = vmul.f32 %v271, 0.0625
      %v280 = vmul.f32 %v274, 0.0625
      %v281 = vmul.f32 %v277, 0.0625
      %vm282 = vcmp.ge.s32.totalorder %v179, 1
      %v287 = vlaneseq
      %v288 = vshrl.u32 %v287, 7
      %v289 = vsub.s32 %v179, %v288
      %v290 = vrot.slane %v278, %v289
      %v291 = vlaneseq
      %v292 = vshrl.u32 %v291, 7
      %v293 = vsub.s32 %v179, %v292
      %v294 = vrot.slane %v279, %v293
      %v295 = vlaneseq
      %v296 = vshrl.u32 %v295, 7
      %v297 = vsub.s32 %v179, %v296
      %v298 = vrot.slane %v280, %v297
      %v299 = vlaneseq
      %v300 = vshrl.u32 %v299, 7
      %v301 = vsub.s32 %v179, %v300
      %v302 = vrot.slane %v281, %v301
      %vm303 = vcmask 1041409
      %v304 = vsel %vm303, %v294, %v290
      %vm305 = vcmask 1042434
      %v306 = vsel %vm305, %v298, %v304
      %vm307 = vcmask 1043459
      %v308 = vsel %vm307, %v302, %v306
      %v310 = vsel %vm282, %v308, -1e+30
      %v312 = vlaneseq
      %v313 = vshrl.u32 %v312, 7
      %v314 = vsub.s32 0, %v313
      %v315 = vrot.slane %v310, %v314
      %317 = vbcast.lane.b32.xlu0 %v315, 256
      %v318 = vpop.permute.xlu0 %317
      %v319 = vlaneseq
      %v320 = vshrl.u32 %v319, 7
      %v321 = vsub.s32 1, %v320
      %v322 = vrot.slane %v310, %v321
      %324 = vbcast.lane.b32.xlu0 %v322, 256
      %v325 = vpop.permute.xlu0 %324
      %v326 = vlaneseq
      %v327 = vshrl.u32 %v326, 7
      %v328 = vsub.s32 2, %v327
      %v329 = vrot.slane %v310, %v328
      %331 = vbcast.lane.b32.xlu0 %v329, 256
      %v332 = vpop.permute.xlu0 %331
      %v333 = vlaneseq
      %v334 = vshrl.u32 %v333, 7
      %v335 = vsub.s32 3, %v334
      %v336 = vrot.slane %v310, %v335
      %338 = vbcast.lane.b32.xlu0 %v336, 256
      %v339 = vpop.permute.xlu0 %338
      %v344 = vmax.f32 %v201, %v318
      %v345 = vmax.f32 %v202, %v325
      %v346 = vmax.f32 %v203, %v332
      %v347 = vmax.f32 %v204, %v339
      %v348 = vsub.f32 %v201, %v344
      %v349 = vsub.f32 %v202, %v345
      %v350 = vsub.f32 %v203, %v346
      %v351 = vsub.f32 %v204, %v347
      %v352 = vmul.f32 %v348, 1.442695
      %v353 = vpow.pop %v352
      %v354 = vmul.f32 %v349, 1.442695
      %v355 = vpow.pop %v354
      %v356 = vmul.f32 %v350, 1.442695
      %v357 = vpow.pop %v356
      %v358 = vmul.f32 %v351, 1.442695
      %v359 = vpow.pop %v358
      %364 = vset.pattern.permute.xlu0 0
      %365 = vperm.xlu0 %364, %v344
      %v366 = vpop.permute.xlu0 %365
      %367 = vset.pattern.permute.xlu0 0
      %368 = vperm.xlu0 %367, %v345
      %v369 = vpop.permute.xlu0 %368
      %370 = vset.pattern.permute.xlu0 0
      %371 = vperm.xlu0 %370, %v346
      %v372 = vpop.permute.xlu0 %371
      %373 = vset.pattern.permute.xlu0 0
      %374 = vperm.xlu0 %373, %v347
      %v375 = vpop.permute.xlu0 %374
      %v376 = vlaneseq
      %v377 = vshrl.u32 %v376, 7
      %v378 = vsub.s32 %v179, %v377
      %v379 = vrot.slane %v366, %v378
      %v380 = vlaneseq
      %v381 = vshrl.u32 %v380, 7
      %v382 = vsub.s32 %v179, %v381
      %v383 = vrot.slane %v369, %v382
      %v384 = vlaneseq
      %v385 = vshrl.u32 %v384, 7
      %v386 = vsub.s32 %v179, %v385
      %v387 = vrot.slane %v372, %v386
      %v388 = vlaneseq
      %v389 = vshrl.u32 %v388, 7
      %v390 = vsub.s32 %v179, %v389
      %v391 = vrot.slane %v375, %v390
      %v392 = vsel %vm303, %v383, %v379
      %v393 = vsel %vm305, %v387, %v392
      %v394 = vsel %vm307, %v391, %v393
      %v396 = vsub.f32 %v310, %v394
      %v397 = vmul.f32 %v396, 1.442695
      %v398 = vpow.pop %v397
      %v399 = vmul.f32 %v233, %v353
      %v400 = vmul.f32 %v234, %v355
      %v401 = vmul.f32 %v235, %v357
      %v402 = vmul.f32 %v236, %v359
      %v404 = vlaneseq
      %v405 = vshrl.u32 %v404, 7
      %v406 = vsub.s32 0, %v405
      %v407 = vrot.slane %v398, %v406
      %409 = vbcast.lane.b32.xlu0 %v407, 256
      %v410 = vpop.permute.xlu0 %409
      %v411 = vlaneseq
      %v412 = vshrl.u32 %v411, 7
      %v413 = vsub.s32 1, %v412
      %v414 = vrot.slane %v398, %v413
      %416 = vbcast.lane.b32.xlu0 %v414, 256
      %v417 = vpop.permute.xlu0 %416
      %v418 = vlaneseq
      %v419 = vshrl.u32 %v418, 7
      %v420 = vsub.s32 2, %v419
      %v421 = vrot.slane %v398, %v420
      %423 = vbcast.lane.b32.xlu0 %v421, 256
      %v424 = vpop.permute.xlu0 %423
      %v425 = vlaneseq
      %v426 = vshrl.u32 %v425, 7
      %v427 = vsub.s32 3, %v426
      %v428 = vrot.slane %v398, %v427
      %430 = vbcast.lane.b32.xlu0 %v428, 256
      %v431 = vpop.permute.xlu0 %430
      %v436 = vadd.f32 %v399, %v410
      %v437 = vadd.f32 %v400, %v417
      %v438 = vadd.f32 %v401, %v424
      %v439 = vadd.f32 %v402, %v431
      %v440 = vmul.f32 %v241, %v353
      %v441 = vmul.f32 %v242, %v355
      %v442 = vmul.f32 %v243, %v357
      %v443 = vmul.f32 %v244, %v359
      %v444 = vadd.f32 %v440, %v410
      %v445 = vadd.f32 %v441, %v417
      %v446 = vadd.f32 %v442, %v424
      %v447 = vadd.f32 %v443, %v431
      %v448 = vrot.slane %v174, 6
      %v449 = vrot.slane %v175, 6
      %v450 = vrot.slane %v176, 6
      %v451 = vrot.slane %v177, 6
      %vm456 = vcmask 1041408
      %v457 = vsel %vm456, 0.0, %v448
      %v458 = vsel %vm456, 0.0, %v449
      %v459 = vsel %vm456, 0.0, %v450
      %v460 = vsel %vm456, 0.0, %v451
      %v461 = vmul.f32 %v166, %v457
      %v462 = vmul.f32 %v167, %v458
      %v463 = vmul.f32 %v168, %v459
      %v464 = vmul.f32 %v169, %v460
      %v465 = vsel %vm184, %v461, 0.0
      %466 = vadd.xlane.f32.xlu0 %v465
      %v467 = vpop.xlane.xlu0 %466
      %v468 = vsel %vm184, %v462, 0.0
      %469 = vadd.xlane.f32.xlu0 %v468
      %v470 = vpop.xlane.xlu0 %469
      %v471 = vsel %vm184, %v463, 0.0
      %472 = vadd.xlane.f32.xlu0 %v471
      %v473 = vpop.xlane.xlu0 %472
      %v474 = vsel %vm184, %v464, 0.0
      %475 = vadd.xlane.f32.xlu0 %v474
      %v476 = vpop.xlane.xlu0 %475
      %v477 = vmul.f32 %v467, 0.0625
      %v478 = vmul.f32 %v470, 0.0625
      %v479 = vmul.f32 %v473, 0.0625
      %v480 = vmul.f32 %v476, 0.0625
      %vm481 = vcmp.ge.s32.totalorder %v179, 2
      %v486 = vlaneseq
      %v487 = vshrl.u32 %v486, 7
      %v488 = vsub.s32 %v179, %v487
      %v489 = vrot.slane %v477, %v488
      %v490 = vlaneseq
      %v491 = vshrl.u32 %v490, 7
      %v492 = vsub.s32 %v179, %v491
      %v493 = vrot.slane %v478, %v492
      %v494 = vlaneseq
      %v495 = vshrl.u32 %v494, 7
      %v496 = vsub.s32 %v179, %v495
      %v497 = vrot.slane %v479, %v496
      %v498 = vlaneseq
      %v499 = vshrl.u32 %v498, 7
      %v500 = vsub.s32 %v179, %v499
      %v501 = vrot.slane %v480, %v500
      %v502 = vsel %vm303, %v493, %v489
      %v503 = vsel %vm305, %v497, %v502
      %v504 = vsel %vm307, %v501, %v503
      %v506 = vsel %vm481, %v504, -1e+30
      %v508 = vlaneseq
      %v509 = vshrl.u32 %v508, 7
      %v510 = vsub.s32 0, %v509
      %v511 = vrot.slane %v506, %v510
      %513 = vbcast.lane.b32.xlu0 %v511, 256
      %v514 = vpop.permute.xlu0 %513
      %v515 = vlaneseq
      %v516 = vshrl.u32 %v515, 7
      %v517 = vsub.s32 1, %v516
      %v518 = vrot.slane %v506, %v517
      %520 = vbcast.lane.b32.xlu0 %v518, 256
      %v521 = vpop.permute.xlu0 %520
      %v522 = vlaneseq
      %v523 = vshrl.u32 %v522, 7
      %v524 = vsub.s32 2, %v523
      %v525 = vrot.slane %v506, %v524
      %527 = vbcast.lane.b32.xlu0 %v525, 256
      %v528 = vpop.permute.xlu0 %527
      %v529 = vlaneseq
      %v530 = vshrl.u32 %v529, 7
      %v531 = vsub.s32 3, %v530
      %v532 = vrot.slane %v506, %v531
      %534 = vbcast.lane.b32.xlu0 %v532, 256
      %v535 = vpop.permute.xlu0 %534
      %v540 = vmax.f32 %v344, %v514
      %v541 = vmax.f32 %v345, %v521
      %v542 = vmax.f32 %v346, %v528
      %v543 = vmax.f32 %v347, %v535
      %v544 = vsub.f32 %v344, %v540
      %v545 = vsub.f32 %v345, %v541
      %v546 = vsub.f32 %v346, %v542
      %v547 = vsub.f32 %v347, %v543
      %v548 = vmul.f32 %v544, 1.442695
      %v549 = vpow.pop %v548
      %v550 = vmul.f32 %v545, 1.442695
      %v551 = vpow.pop %v550
      %v552 = vmul.f32 %v546, 1.442695
      %v553 = vpow.pop %v552
      %v554 = vmul.f32 %v547, 1.442695
      %v555 = vpow.pop %v554
      %560 = vset.pattern.permute.xlu0 0
      %561 = vperm.xlu0 %560, %v540
      %v562 = vpop.permute.xlu0 %561
      %563 = vset.pattern.permute.xlu0 0
      %564 = vperm.xlu0 %563, %v541
      %v565 = vpop.permute.xlu0 %564
      %566 = vset.pattern.permute.xlu0 0
      %567 = vperm.xlu0 %566, %v542
      %v568 = vpop.permute.xlu0 %567
      %569 = vset.pattern.permute.xlu0 0
      %570 = vperm.xlu0 %569, %v543
      %v571 = vpop.permute.xlu0 %570
      %v572 = vlaneseq
      %v573 = vshrl.u32 %v572, 7
      %v574 = vsub.s32 %v179, %v573
      %v575 = vrot.slane %v562, %v574
      %v576 = vlaneseq
      %v577 = vshrl.u32 %v576, 7
      %v578 = vsub.s32 %v179, %v577
      %v579 = vrot.slane %v565, %v578
      %v580 = vlaneseq
      %v581 = vshrl.u32 %v580, 7
      %v582 = vsub.s32 %v179, %v581
      %v583 = vrot.slane %v568, %v582
      %v584 = vlaneseq
      %v585 = vshrl.u32 %v584, 7
      %v586 = vsub.s32 %v179, %v585
      %v587 = vrot.slane %v571, %v586
      %v588 = vsel %vm303, %v579, %v575
      %v589 = vsel %vm305, %v583, %v588
      %v590 = vsel %vm307, %v587, %v589
      %v592 = vsub.f32 %v506, %v590
      %v593 = vmul.f32 %v592, 1.442695
      %v594 = vpow.pop %v593
      %v595 = vmul.f32 %v436, %v549
      %v596 = vmul.f32 %v437, %v551
      %v597 = vmul.f32 %v438, %v553
      %v598 = vmul.f32 %v439, %v555
      %v600 = vlaneseq
      %v601 = vshrl.u32 %v600, 7
      %v602 = vsub.s32 0, %v601
      %v603 = vrot.slane %v594, %v602
      %605 = vbcast.lane.b32.xlu0 %v603, 256
      %v606 = vpop.permute.xlu0 %605
      %v607 = vlaneseq
      %v608 = vshrl.u32 %v607, 7
      %v609 = vsub.s32 1, %v608
      %v610 = vrot.slane %v594, %v609
      %612 = vbcast.lane.b32.xlu0 %v610, 256
      %v613 = vpop.permute.xlu0 %612
      %v614 = vlaneseq
      %v615 = vshrl.u32 %v614, 7
      %v616 = vsub.s32 2, %v615
      %v617 = vrot.slane %v594, %v616
      %619 = vbcast.lane.b32.xlu0 %v617, 256
      %v620 = vpop.permute.xlu0 %619
      %v621 = vlaneseq
      %v622 = vshrl.u32 %v621, 7
      %v623 = vsub.s32 3, %v622
      %v624 = vrot.slane %v594, %v623
      %626 = vbcast.lane.b32.xlu0 %v624, 256
      %v627 = vpop.permute.xlu0 %626
      %v632 = vadd.f32 %v595, %v606
      %v633 = vadd.f32 %v596, %v613
      %v634 = vadd.f32 %v597, %v620
      %v635 = vadd.f32 %v598, %v627
      %v636 = vmul.f32 %v444, %v549
      %v637 = vmul.f32 %v445, %v551
      %v638 = vmul.f32 %v446, %v553
      %v639 = vmul.f32 %v447, %v555
      %v640 = vmul.f32 %v594, 2.0
      %v642 = vlaneseq
      %v643 = vshrl.u32 %v642, 7
      %v644 = vsub.s32 0, %v643
      %v645 = vrot.slane %v640, %v644
      %647 = vbcast.lane.b32.xlu0 %v645, 256
      %v648 = vpop.permute.xlu0 %647
      %v649 = vlaneseq
      %v650 = vshrl.u32 %v649, 7
      %v651 = vsub.s32 1, %v650
      %v652 = vrot.slane %v640, %v651
      %654 = vbcast.lane.b32.xlu0 %v652, 256
      %v655 = vpop.permute.xlu0 %654
      %v656 = vlaneseq
      %v657 = vshrl.u32 %v656, 7
      %v658 = vsub.s32 2, %v657
      %v659 = vrot.slane %v640, %v658
      %661 = vbcast.lane.b32.xlu0 %v659, 256
      %v662 = vpop.permute.xlu0 %661
      %v663 = vlaneseq
      %v664 = vshrl.u32 %v663, 7
      %v665 = vsub.s32 3, %v664
      %v666 = vrot.slane %v640, %v665
      %668 = vbcast.lane.b32.xlu0 %v666, 256
      %v669 = vpop.permute.xlu0 %668
      %v674 = vadd.f32 %v636, %v648
      %v675 = vadd.f32 %v637, %v655
      %v676 = vadd.f32 %v638, %v662
      %v677 = vadd.f32 %v639, %v669
      %v678 = vlaneseq
      %v679 = vshrl.u32 %v678, 7
      %v680 = vsub.s32 0, %v679
      %v681 = vrot.slane %v174, %v680
      %v682 = vlaneseq
      %v683 = vshrl.u32 %v682, 7
      %v684 = vsub.s32 0, %v683
      %v685 = vrot.slane %v175, %v684
      %v686 = vlaneseq
      %v687 = vshrl.u32 %v686, 7
      %v688 = vsub.s32 0, %v687
      %v689 = vrot.slane %v176, %v688
      %v690 = vlaneseq
      %v691 = vshrl.u32 %v690, 7
      %v692 = vsub.s32 0, %v691
      %v693 = vrot.slane %v177, %v692
      %vm698 = vcmask 1042432
      %v699 = vsel %vm698, 0.0, %v681
      %v700 = vsel %vm698, 0.0, %v685
      %v701 = vsel %vm698, 0.0, %v689
      %v702 = vsel %vm698, 0.0, %v693
      %v703 = vmul.f32 %v166, %v699
      %v704 = vmul.f32 %v167, %v700
      %v705 = vmul.f32 %v168, %v701
      %v706 = vmul.f32 %v169, %v702
      %v707 = vsel %vm184, %v703, 0.0
      %708 = vadd.xlane.f32.xlu0 %v707
      %v709 = vpop.xlane.xlu0 %708
      %v710 = vsel %vm184, %v704, 0.0
      %711 = vadd.xlane.f32.xlu0 %v710
      %v712 = vpop.xlane.xlu0 %711
      %v713 = vsel %vm184, %v705, 0.0
      %714 = vadd.xlane.f32.xlu0 %v713
      %v715 = vpop.xlane.xlu0 %714
      %v716 = vsel %vm184, %v706, 0.0
      %717 = vadd.xlane.f32.xlu0 %v716
      %v718 = vpop.xlane.xlu0 %717
      %v719 = vmul.f32 %v709, 0.0625
      %v720 = vmul.f32 %v712, 0.0625
      %v721 = vmul.f32 %v715, 0.0625
      %v722 = vmul.f32 %v718, 0.0625
      %vm723 = vcmp.ge.s32.totalorder %v179, 3
      %v728 = vlaneseq
      %v729 = vshrl.u32 %v728, 7
      %v730 = vsub.s32 %v179, %v729
      %v731 = vrot.slane %v719, %v730
      %v732 = vlaneseq
      %v733 = vshrl.u32 %v732, 7
      %v734 = vsub.s32 %v179, %v733
      %v735 = vrot.slane %v720, %v734
      %v736 = vlaneseq
      %v737 = vshrl.u32 %v736, 7
      %v738 = vsub.s32 %v179, %v737
      %v739 = vrot.slane %v721, %v738
      %v740 = vlaneseq
      %v741 = vshrl.u32 %v740, 7
      %v742 = vsub.s32 %v179, %v741
      %v743 = vrot.slane %v722, %v742
      %v744 = vsel %vm303, %v735, %v731
      %v745 = vsel %vm305, %v739, %v744
      %v746 = vsel %vm307, %v743, %v745
      %v748 = vsel %vm723, %v746, -1e+30
      %v750 = vlaneseq
      %v751 = vshrl.u32 %v750, 7
      %v752 = vsub.s32 0, %v751
      %v753 = vrot.slane %v748, %v752
      %755 = vbcast.lane.b32.xlu0 %v753, 256
      %v756 = vpop.permute.xlu0 %755
      %v757 = vlaneseq
      %v758 = vshrl.u32 %v757, 7
      %v759 = vsub.s32 1, %v758
      %v760 = vrot.slane %v748, %v759
      %762 = vbcast.lane.b32.xlu0 %v760, 256
      %v763 = vpop.permute.xlu0 %762
      %v764 = vlaneseq
      %v765 = vshrl.u32 %v764, 7
      %v766 = vsub.s32 2, %v765
      %v767 = vrot.slane %v748, %v766
      %769 = vbcast.lane.b32.xlu0 %v767, 256
      %v770 = vpop.permute.xlu0 %769
      %v771 = vlaneseq
      %v772 = vshrl.u32 %v771, 7
      %v773 = vsub.s32 3, %v772
      %v774 = vrot.slane %v748, %v773
      %776 = vbcast.lane.b32.xlu0 %v774, 256
      %v777 = vpop.permute.xlu0 %776
      %v782 = vmax.f32 %v540, %v756
      %v783 = vmax.f32 %v541, %v763
      %v784 = vmax.f32 %v542, %v770
      %v785 = vmax.f32 %v543, %v777
      %v786 = vsub.f32 %v540, %v782
      %v787 = vsub.f32 %v541, %v783
      %v788 = vsub.f32 %v542, %v784
      %v789 = vsub.f32 %v543, %v785
      %v790 = vmul.f32 %v786, 1.442695
      %v791 = vpow.pop %v790
      %v792 = vmul.f32 %v787, 1.442695
      %v793 = vpow.pop %v792
      %v794 = vmul.f32 %v788, 1.442695
      %v795 = vpow.pop %v794
      %v796 = vmul.f32 %v789, 1.442695
      %v797 = vpow.pop %v796
      %802 = vset.pattern.permute.xlu0 0
      %803 = vperm.xlu0 %802, %v782
      %v804 = vpop.permute.xlu0 %803
      %805 = vset.pattern.permute.xlu0 0
      %806 = vperm.xlu0 %805, %v783
      %v807 = vpop.permute.xlu0 %806
      %808 = vset.pattern.permute.xlu0 0
      %809 = vperm.xlu0 %808, %v784
      %v810 = vpop.permute.xlu0 %809
      %811 = vset.pattern.permute.xlu0 0
      %812 = vperm.xlu0 %811, %v785
      %v813 = vpop.permute.xlu0 %812
      %v814 = vlaneseq
      %v815 = vshrl.u32 %v814, 7
      %v816 = vsub.s32 %v179, %v815
      %v817 = vrot.slane %v804, %v816
      %v818 = vlaneseq
      %v819 = vshrl.u32 %v818, 7
      %v820 = vsub.s32 %v179, %v819
      %v821 = vrot.slane %v807, %v820
      %v822 = vlaneseq
      %v823 = vshrl.u32 %v822, 7
      %v824 = vsub.s32 %v179, %v823
      %v825 = vrot.slane %v810, %v824
      %v826 = vlaneseq
      %v827 = vshrl.u32 %v826, 7
      %v828 = vsub.s32 %v179, %v827
      %v829 = vrot.slane %v813, %v828
      %v830 = vsel %vm303, %v821, %v817
      %v831 = vsel %vm305, %v825, %v830
      %v832 = vsel %vm307, %v829, %v831
      %v834 = vsub.f32 %v748, %v832
      %v835 = vmul.f32 %v834, 1.442695
      %v836 = vpow.pop %v835
      %v837 = vmul.f32 %v632, %v791
      %v838 = vmul.f32 %v633, %v793
      %v839 = vmul.f32 %v634, %v795
      %v840 = vmul.f32 %v635, %v797
      %v842 = vlaneseq
      %v843 = vshrl.u32 %v842, 7
      %v844 = vsub.s32 0, %v843
      %v845 = vrot.slane %v836, %v844
      %847 = vbcast.lane.b32.xlu0 %v845, 256
      %v848 = vpop.permute.xlu0 %847
      %v849 = vlaneseq
      %v850 = vshrl.u32 %v849, 7
      %v851 = vsub.s32 1, %v850
      %v852 = vrot.slane %v836, %v851
      %854 = vbcast.lane.b32.xlu0 %v852, 256
      %v855 = vpop.permute.xlu0 %854
      %v856 = vlaneseq
      %v857 = vshrl.u32 %v856, 7
      %v858 = vsub.s32 2, %v857
      %v859 = vrot.slane %v836, %v858
      %861 = vbcast.lane.b32.xlu0 %v859, 256
      %v862 = vpop.permute.xlu0 %861
      %v863 = vlaneseq
      %v864 = vshrl.u32 %v863, 7
      %v865 = vsub.s32 3, %v864
      %v866 = vrot.slane %v836, %v865
      %868 = vbcast.lane.b32.xlu0 %v866, 256
      %v869 = vpop.permute.xlu0 %868
      %v874 = vadd.f32 %v837, %v848
      %v875 = vadd.f32 %v838, %v855
      %v876 = vadd.f32 %v839, %v862
      %v877 = vadd.f32 %v840, %v869
      %v878 = vmul.f32 %v674, %v791
      %v879 = vmul.f32 %v675, %v793
      %v880 = vmul.f32 %v676, %v795
      %v881 = vmul.f32 %v677, %v797
      %v882 = vmul.f32 %v836, 3.0
      %v884 = vlaneseq
      %v885 = vshrl.u32 %v884, 7
      %v886 = vsub.s32 0, %v885
      %v887 = vrot.slane %v882, %v886
      %889 = vbcast.lane.b32.xlu0 %v887, 256
      %v890 = vpop.permute.xlu0 %889
      %v891 = vlaneseq
      %v892 = vshrl.u32 %v891, 7
      %v893 = vsub.s32 1, %v892
      %v894 = vrot.slane %v882, %v893
      %896 = vbcast.lane.b32.xlu0 %v894, 256
      %v897 = vpop.permute.xlu0 %896
      %v898 = vlaneseq
      %v899 = vshrl.u32 %v898, 7
      %v900 = vsub.s32 2, %v899
      %v901 = vrot.slane %v882, %v900
      %903 = vbcast.lane.b32.xlu0 %v901, 256
      %v904 = vpop.permute.xlu0 %903
      %v905 = vlaneseq
      %v906 = vshrl.u32 %v905, 7
      %v907 = vsub.s32 3, %v906
      %v908 = vrot.slane %v882, %v907
      %910 = vbcast.lane.b32.xlu0 %v908, 256
      %v911 = vpop.permute.xlu0 %910
      %v916 = vadd.f32 %v878, %v890
      %v917 = vadd.f32 %v879, %v897
      %v918 = vadd.f32 %v880, %v904
      %v919 = vadd.f32 %v881, %v911
      %v920 = vrcp.pop %v874
      %v921 = vrcp.pop %v875
      %v922 = vrcp.pop %v876
      %v923 = vrcp.pop %v877
      %v924 = vmul.f32 %v916, %v920
      %v925 = vmul.f32 %v917, %v921
      %v926 = vmul.f32 %v918, %v922
      %v927 = vmul.f32 %v919, %v923
      %932 = vset.pattern.permute.xlu0 0
      %933 = vperm.xlu0 %932, %v924
      %v934 = vpop.permute.xlu0 %933
      %935 = vset.pattern.permute.xlu0 0
      %936 = vperm.xlu0 %935, %v925
      %v937 = vpop.permute.xlu0 %936
      %938 = vset.pattern.permute.xlu0 0
      %939 = vperm.xlu0 %938, %v926
      %v940 = vpop.permute.xlu0 %939
      %941 = vset.pattern.permute.xlu0 0
      %942 = vperm.xlu0 %941, %v927
      %v943 = vpop.permute.xlu0 %942
      %v944 = vlaneseq
      %v945 = vshrl.u32 %v944, 7
      %v946 = vsub.s32 %v179, %v945
      %v947 = vrot.slane %v934, %v946
      %v948 = vlaneseq
      %v949 = vshrl.u32 %v948, 7
      %v950 = vsub.s32 %v179, %v949
      %v951 = vrot.slane %v937, %v950
      %v952 = vlaneseq
      %v953 = vshrl.u32 %v952, 7
      %v954 = vsub.s32 %v179, %v953
      %v955 = vrot.slane %v940, %v954
      %v956 = vlaneseq
      %v957 = vshrl.u32 %v956, 7
      %v958 = vsub.s32 %v179, %v957
      %v959 = vrot.slane %v943, %v958
      %v960 = vsel %vm303, %v951, %v947
      %v961 = vsel %vm305, %v955, %v960
      %v962 = vsel %vm307, %v959, %v961
      %vm964 = vcmask 27648
      %965 = vst.msk [vmem:[%s161] sm:$0xf] %vm964, %v962
      %p966 = scmp.lt.s32.totalorder %s13, 1
      %s967 = scalar_select %p966, %s13, 1
      %s968 = smul.addr %s967, 4
      %s969 = scalar_lea.vmem %s2, %s968
      // Predicated region
      $region29: #{iasmnet_forward.15} parent=27 // pred_check
        %p970 = pneg %p83
      $region30: #{iasmnet_forward.15} parent=27 // pred_check_branch
        %972 = sbr.rel (%p970) target = $region32
      $region31: #{iasmnet_forward.15} parent=27 // pred_region
        _
      $region32: #{iasmnet_forward.15} parent=27 // pred_fallthru
        _
    $region28: #{iasmnet_forward.15} parent=5 // pred_fallthru
      _
    %p973 = scmp.le.s32.totalorder 2, %s8
    // Predicated region
    $region33: #{iasmnet_forward.15} parent=5 // pred_check
      %p974 = pneg %p973
    $region34: #{iasmnet_forward.15} parent=5 // pred_check_branch
      %976 = sbr.rel (%p974) target = $region36
    $region35: #{iasmnet_forward.15} parent=5 // pred_region
      %s977 = ssub.s32 %s8, 2
      // Predicated region
      $region37: #{iasmnet_forward.15} parent=35 // pred_check
        %p978 = pneg %p89
      $region38: #{iasmnet_forward.15} parent=35 // pred_check_branch
        %980 = sbr.rel (%p978) target = $region40
      $region39: #{iasmnet_forward.15} parent=35 // pred_region
        %p981 = scmp.lt.s32.totalorder %s14, 1
        %s982 = scalar_select %p981, %s14, 1
        %s983 = smul.addr %s982, 4
        %s984 = scalar_lea.vmem %s2, %s983
      $region40: #{iasmnet_forward.15} parent=35 // pred_fallthru
        _
    $region36: #{iasmnet_forward.15} parent=5 // pred_fallthru
      _
  $region6: #{iasmnet_forward.15} parent=0 // loop_footer
    %s12 = sadd.s32 1, %s8
  $region7: #{iasmnet_forward.15} parent=0 // loop_footer_branch
    %7 = sbr.rel target = $region3
  $region8: #{iasmnet_forward.15} parent=0 // loop_exit
    _

// kernel: iasmnet_forward.17
$region0: #{iasmnet_forward.17}
  #allocation0 [shape = 'u32[]', space=smem, size = 0x4, offset = 0x4, fixed_abs, tag = 'smem constant byte address 0x4 - core index']
  #allocation1 [shape = 'u32[144,128]{1,0:T(1,128)}', space=vmem, size = 0x12000, scoped, tag = 'internal scratch']
  %s0 = inlined_call_operand.vmem [shape: bf16[2,10,170], index: 0, kind: input, shape index: {}]
  %s1 = inlined_call_operand.vmem [shape: bf16[3,170,64], index: 1, kind: input, shape index: {}]
  %s2 = inlined_call_operand.vmem [shape: f32[1,64], index: 2, kind: input, shape index: {}]
  %s3 = inlined_call_operand.vmem [shape: bf16[2,8,64], index: 3, kind: output, shape index: {}]
  %s4 = sld [smem:[#allocation0]]
  $region45: #{iasmnet_forward.17} parent=0
    _
  %s6 = ssub.s32 1, %s4
  %s7 = scalar_select 0, %s6, %s4
  loop: start=0, step=1, limit=4
  $region2: #{iasmnet_forward.17} parent=0 // loop_pre_header
    _
  $region3: #{iasmnet_forward.17} parent=0 // loop_header
    %s9 = sphi 0, %s13
    %p10 = scmp.ge.s32.totalorder %s9, 4
    %s19 = sphi 0, %s21
    %s22 = sphi 0, %s19
    %s23 = sphi 0, %s22
    %s39 = sphi 0, %s23
    %s43 = sphi 0, %s43
    %s45 = sphi 0, %s43
    %s46 = sphi 0, %s45
    %s60 = sphi 0, %s46
    %s64 = sphi 0, %s64
    %s66 = sphi 0, %s64
    %s67 = sphi 0, %s66
    %s81 = sphi 0, %s67
    %s87 = sphi 0, %s89
    %s90 = sphi 0, %s87
    %s91 = sphi 0, %s90
    %s107 = sphi 0, %s91
  $region4: #{iasmnet_forward.17} parent=0 // loop_header_branch
    %12 = sbr.rel (%p10) target = $region8
  $region5: #{iasmnet_forward.17} parent=0 // loop_body
    %s14 = ssub.s32 %s9, 1
    %s15 = ssub.s32 %s9, 2
    %s16 = sadd.s32 %s9, 1
    %s17 = ssub.s32 %s9, %s16
    %p18 = scmp.eq.s32.totalorder %s17, 0
    %s20 = sadd.s32 %s19, 1
    %s21 = scalar_select %p18, %s19, %s20
    %p24 = pneg %p18
    %p25 = scmp.eq.s32.totalorder %s9, 1
    %p26 = por %p24, %p25
    %p27 = scmp.ne.s32.totalorder %s19, %s22
    %p28 = scmp.eq.s32.totalorder %s9, 0
    %p29 = por %p27, %p28
    %p30 = scmp.ne.s32.totalorder %s19, %s22
    %p31 = scmp.eq.s32.totalorder %s14, 1
    %p32 = por %p30, %p31
    %p33 = scmp.ne.s32.totalorder %s22, %s23
    %p34 = scmp.eq.s32.totalorder %s14, 0
    %p35 = por %p33, %p34
    %p36 = scmp.ne.s32.totalorder %s22, %s23
    %p37 = scmp.eq.s32.totalorder %s15, 1
    %p38 = por %p36, %p37
    %p40 = scmp.ne.s32.totalorder %s23, %s39
    %p41 = scmp.eq.s32.totalorder %s15, 0
    %p42 = por %p40, %p41
    %s44 = sadd.s32 %s43, 1
    %p47 = scmp.eq.s32.totalorder %s9, 1
    %p48 = scmp.ne.s32.totalorder %s43, %s45
    %p49 = scmp.eq.s32.totalorder %s9, 0
    %p50 = por %p48, %p49
    %p51 = scmp.ne.s32.totalorder %s43, %s45
    %p52 = scmp.eq.s32.totalorder %s14, 1
    %p53 = por %p51, %p52
    %p54 = scmp.ne.s32.totalorder %s45, %s46
    %p55 = scmp.eq.s32.totalorder %s14, 0
    %p56 = por %p54, %p55
    %p57 = scmp.ne.s32.totalorder %s45, %s46
    %p58 = scmp.eq.s32.totalorder %s15, 1
    %p59 = por %p57, %p58
    %p61 = scmp.ne.s32.totalorder %s46, %s60
    %p62 = scmp.eq.s32.totalorder %s15, 0
    %p63 = por %p61, %p62
    %s65 = sadd.s32 %s64, 1
    %p68 = scmp.eq.s32.totalorder %s9, 1
    %p69 = scmp.ne.s32.totalorder %s64, %s66
    %p70 = scmp.eq.s32.totalorder %s9, 0
    %p71 = por %p69, %p70
    %p72 = scmp.ne.s32.totalorder %s64, %s66
    %p73 = scmp.eq.s32.totalorder %s14, 1
    %p74 = por %p72, %p73
    %p75 = scmp.ne.s32.totalorder %s66, %s67
    %p76 = scmp.eq.s32.totalorder %s14, 0
    %p77 = por %p75, %p76
    %p78 = scmp.ne.s32.totalorder %s66, %s67
    %p79 = scmp.eq.s32.totalorder %s15, 1
    %p80 = por %p78, %p79
    %p82 = scmp.ne.s32.totalorder %s67, %s81
    %p83 = scmp.eq.s32.totalorder %s15, 0
    %p84 = por %p82, %p83
    %s85 = ssub.s32 %s9, %s16
    %p86 = scmp.eq.s32.totalorder %s85, 0
    %s88 = sadd.s32 %s87, 1
    %s89 = scalar_select %p86, %s87, %s88
    %p92 = pneg %p86
    %p93 = scmp.eq.s32.totalorder %s9, 1
    %p94 = por %p92, %p93
    %p95 = scmp.ne.s32.totalorder %s87, %s90
    %p96 = scmp.eq.s32.totalorder %s9, 0
    %p97 = por %p95, %p96
    %p98 = scmp.ne.s32.totalorder %s87, %s90
    %p99 = scmp.eq.s32.totalorder %s14, 1
    %p100 = por %p98, %p99
    %p101 = scmp.ne.s32.totalorder %s90, %s91
    %p102 = scmp.eq.s32.totalorder %s14, 0
    %p103 = por %p101, %p102
    %p104 = scmp.ne.s32.totalorder %s90, %s91
    %p105 = scmp.eq.s32.totalorder %s15, 1
    %p106 = por %p104, %p105
    %p108 = scmp.ne.s32.totalorder %s91, %s107
    %p109 = scmp.eq.s32.totalorder %s15, 0
    %p110 = por %p108, %p109
    %p111 = scmp.le.s32.totalorder 1, %s9
    %p112 = scmp.lt.s32.totalorder %s9, 3
    %p113 = pnand %p111, %p112
    %p114 = pneg %p113
    // Predicated region
    $region9: #{iasmnet_forward.17} parent=5 // pred_check
      _
    $region10: #{iasmnet_forward.17} parent=5 // pred_check_branch
      %116 = sbr.rel (%p113) target = $region12
    $region11: #{iasmnet_forward.17} parent=5 // pred_region
      %s117 = ssub.s32 %s9, 1
      // Predicated region
      $region13: #{iasmnet_forward.17} parent=11 // pred_check
        %p118 = pneg %p56
      $region14: #{iasmnet_forward.17} parent=11 // pred_check_branch
        %120 = sbr.rel (%p118) target = $region16
      $region15: #{iasmnet_forward.17} parent=11 // pred_region
        _
      $region16: #{iasmnet_forward.17} parent=11 // pred_fallthru
        _
      // Predicated region
      $region17: #{iasmnet_forward.17} parent=11 // pred_check
        %p121 = pneg %p77
      $region18: #{iasmnet_forward.17} parent=11 // pred_check_branch
        %123 = sbr.rel (%p121) target = $region20
      $region19: #{iasmnet_forward.17} parent=11 // pred_region
        _
      $region20: #{iasmnet_forward.17} parent=11 // pred_fallthru
        _
    $region12: #{iasmnet_forward.17} parent=5 // pred_fallthru
      _
    %p124 = scmp.lt.s32.totalorder %s9, 2
    // Predicated region
    $region21: #{iasmnet_forward.17} parent=5 // pred_check
      %p125 = pneg %p124
    $region22: #{iasmnet_forward.17} parent=5 // pred_check_branch
      %127 = sbr.rel (%p125) target = $region24
    $region23: #{iasmnet_forward.17} parent=5 // pred_region
      // Predicated region
      $region25: #{iasmnet_forward.17} parent=23 // pred_check
        %p128 = pneg %p29
      $region26: #{iasmnet_forward.17} parent=23 // pred_check_branch
        %130 = sbr.rel (%p128) target = $region28
      $region27: #{iasmnet_forward.17} parent=23 // pred_region
        %p131 = scmp.lt.s32.totalorder %s9, 1
        %s132 = scalar_select %p131, %s9, 1
        %s133 = smul.addr %s132, 4
        %s134 = smul.addr %s133, 4
        %s135 = scalar_lea.vmem %s0, %s134
      $region28: #{iasmnet_forward.17} parent=23 // pred_fallthru
        _
    $region24: #{iasmnet_forward.17} parent=5 // pred_fallthru
      _
    %p136 = scmp.le.s32.totalorder 1, %s9
    %p137 = scmp.lt.s32.totalorder %s9, 3
    %p138 = pnand %p136, %p137
    %p139 = pneg %p138
    // Predicated region
    $region29: #{iasmnet_forward.17} parent=5 // pred_check
      _
    $region30: #{iasmnet_forward.17} parent=5 // pred_check_branch
      %141 = sbr.rel (%p138) target = $region32
    $region31: #{iasmnet_forward.17} parent=5 // pred_region
      %s142 = ssub.s32 %s9, 1
      %p143 = scmp.lt.s32.totalorder %s14, 1
      %s144 = scalar_select %p143, %s14, 1
      %s145 = smul.addr %s144, 4
      %s146 = smul.addr %s145, 4
      %s147 = scalar_lea.vmem %s0, %s146
      %p148 = pneg %p35
      %p149 = pneg %p32
      %p150 = pneg %p56
      %p151 = pneg %p53
      %p152 = pneg %p77
      %p153 = pneg %p74
      %p154 = pneg %p103
      %p155 = pneg %p100
      %p156 = scmp.lt.s32.totalorder %s14, 1
      %s157 = scalar_select %p156, %s14, 1
      %s158 = smul.addr %s157, 4
      %s159 = scalar_lea.vmem %s3, %s158
      %p160 = scmp.lt.s32.totalorder %s14, 1
      %s161 = scalar_select %p160, %s14, 1
      %s162 = smul.addr %s161, 4
      %s163 = smul.addr %s162, 4
      %s164 = scalar_lea.vmem %s0, %s163
      %p165 = scmp.lt.s32.totalorder %s14, 1
      %s166 = scalar_select %p165, %s14, 1
      %s167 = smul.addr %s166, 4
      %s168 = scalar_lea.vmem %s3, %s167
      %v170 = vld [vmem:[%s164] sm:$0xff]
      %v171 = vld [vmem:[%s1] sm:$0xf]
      %v172 = vld [vmem:[%s1 + $0x4] sm:$0xf]
      %v173 = vld [vmem:[%s1 + $0x8] sm:$0xf]
      %v174 = vld [vmem:[%s1 + $0xc] sm:$0xf]
      %v175 = vld [vmem:[%s1 + $0x10] sm:$0xf]
      %v176 = vld [vmem:[%s1 + $0x14] sm:$0xf]
      %v177 = vld [vmem:[%s1 + $0x18] sm:$0xf]
      %v178 = vld [vmem:[%s1 + $0x1c] sm:$0xf]
      %v179 = vld [vmem:[%s1 + $0x20] sm:$0xf]
      %v180 = vld [vmem:[%s1 + $0x24] sm:$0xf]
      %v181 = vld [vmem:[%s1 + $0x28] sm:$0xf]
      %v182 = vld [vmem:[%s1 + $0x2c] sm:$0xf]
      %v183 = vld [vmem:[%s1 + $0x30] sm:$0xf]
      %v184 = vld [vmem:[%s1 + $0x34] sm:$0xf]
      %v185 = vld [vmem:[%s1 + $0x38] sm:$0xf]
      %v186 = vld [vmem:[%s1 + $0x3c] sm:$0xf]
      %v187 = vld [vmem:[%s1 + $0x40] sm:$0xf]
      %v188 = vld [vmem:[%s1 + $0x44] sm:$0xf]
      %v189 = vld [vmem:[%s1 + $0x48] sm:$0xf]
      %v190 = vld [vmem:[%s1 + $0x4c] sm:$0xf]
      %v191 = vld [vmem:[%s1 + $0x50] sm:$0xf]
      %v192 = vld [vmem:[%s1 + $0x54] sm:$0x1]
      %v193 = vld [vmem:[%s164 + $0x8] sm:$0x11]
      %s194 = scalar_lea.vmem %s1, 88
      %v195 = vld [vmem:[%s194] sm:$0xf]
      %v196 = vld [vmem:[%s194 + $0x4] sm:$0xf]
      %v197 = vld [vmem:[%s194 + $0x8] sm:$0xf]
      %v198 = vld [vmem:[%s194 + $0xc] sm:$0xf]
      %v199 = vld [vmem:[%s194 + $0x10] sm:$0xf]
      %v200 = vld [vmem:[%s194 + $0x14] sm:$0xf]
      %v201 = vld [vmem:[%s194 + $0x18] sm:$0xf]
      %v202 = vld [vmem:[%s194 + $0x1c] sm:$0xf]
      %v203 = vld [vmem:[%s194 + $0x20] sm:$0xf]
      %v204 = vld [vmem:[%s194 + $0x24] sm:$0xf]
      %v205 = vld [vmem:[%s194 + $0x28] sm:$0xf]
      %v206 = vld [vmem:[%s194 + $0x2c] sm:$0xf]
      %v207 = vld [vmem:[%s194 + $0x30] sm:$0xf]
      %v208 = vld [vmem:[%s194 + $0x34] sm:$0xf]
      %v209 = vld [vmem:[%s194 + $0x38] sm:$0xf]
      %v210 = vld [vmem:[%s194 + $0x3c] sm:$0xf]
      %v211 = vld [vmem:[%s194 + $0x40] sm:$0xf]
      %v212 = vld [vmem:[%s194 + $0x44] sm:$0xf]
      %v213 = vld [vmem:[%s194 + $0x48] sm:$0xf]
      %v214 = vld [vmem:[%s194 + $0x4c] sm:$0xf]
      %v215 = vld [vmem:[%s194 + $0x50] sm:$0xf]
      %v216 = vld [vmem:[%s194 + $0x54] sm:$0x1]
      %v219 = vunpack.c.l.b16 %v170
      %v220 = vunpack.c.h.b16 %v170
      %v221 = vunpack.c.l.b16 %v193
      %v222 = vunpack.c.h.b16 %v193
      %v223 = vpack.c.b16 %v221, %v219
      %v224 = vpack.c.b16 %v222, %v220
      %v226 = vshrl.u32 %v223, 16
      %v228 = vshll.u32 %v223, 16
      %v230 = vrot.slane %v228, 1
      %v231 = vor.u32 %v226, %v230
      %v233 = vshrl.u32 %v224, 16
      %v235 = vshll.u32 %v224, 16
      %v237 = vrot.slane %v235, 1
      %v238 = vor.u32 %v233, %v237
      %v262 = vunpack.c.l.b16 %v195
      %v263 = vunpack.c.l.b16 %v196
      %v264 = vunpack.c.l.b16 %v197
      %v265 = vunpack.c.l.b16 %v198
      %v266 = vunpack.c.l.b16 %v199
      %v267 = vunpack.c.l.b16 %v200
      %v268 = vunpack.c.l.b16 %v201
      %v269 = vunpack.c.l.b16 %v202
      %v270 = vunpack.c.l.b16 %v203
      %v271 = vunpack.c.l.b16 %v204
      %v272 = vunpack.c.l.b16 %v205
      %v273 = vunpack.c.l.b16 %v206
      %v274 = vunpack.c.l.b16 %v207
      %v275 = vunpack.c.l.b16 %v208
      %v276 = vunpack.c.l.b16 %v209
      %v277 = vunpack.c.l.b16 %v210
      %v278 = vunpack.c.l.b16 %v211
      %v279 = vunpack.c.l.b16 %v212
      %v280 = vunpack.c.l.b16 %v213
      %v281 = vunpack.c.l.b16 %v214
      %v282 = vunpack.c.l.b16 %v215
      %v283 = vunpack.c.l.b16 %v216
      %v284 = vpack.c.b16 %v263, %v262
      %v285 = vpack.c.b16 %v265, %v264
      %v286 = vpack.c.b16 %v267, %v266
      %v287 = vpack.c.b16 %v269, %v268
      %v288 = vpack.c.b16 %v271, %v270
      %v289 = vpack.c.b16 %v273, %v272
      %v290 = vpack.c.b16 %v275, %v274
      %v291 = vpack.c.b16 %v277, %v276
      %v292 = vpack.c.b16 %v279, %v278
      %v293 = vpack.c.b16 %v281, %v280
      %v294 = vpack.c.b16 %v283, %v282
      %vm305 = vcmask 343040
      %v307 = vsel %vm305, %v238, 0
      %vm309 = vcmask 1044480
      %v311 = vsel %vm309, %v294, 0
      %313 = vmatprep.subr.bf16.mxu0 0
      %314 = vmatpush1.bf16.msra.mxu0 %v284
      %315 = vmatprep.subr.bf16.mxu0 0
      %316 = vmatpush1.bf16.msra.mxu0 %v285
      %317 = vmatprep.subr.bf16.mxu0 0
      %318 = vmatpush1.bf16.msra.mxu0 %v286
      %319 = vmatprep.subr.bf16.mxu0 0
      %320 = vmatpush1.bf16.msra.mxu0 %v287
      %321 = vmatprep.subr.bf16.mxu0 0
      %322 = vmatpush1.bf16.msra.mxu0 %v288
      %323 = vmatprep.subr.bf16.mxu0 0
      %324 = vmatpush1.bf16.msra.mxu0 %v289
      %325 = vmatprep.subr.bf16.mxu0 0
      %326 = vmatpush1.bf16.msra.mxu0 %v290
      %327 = vmatprep.subr.bf16.mxu0 0
      %328 = vmatpush1.bf16.msra.mxu0 %v291
      %329 = vmatprep.subr.bf16.mxu0 0
      %330 = vmatpush1.bf16.msra.mxu0 %v292
      %331 = vmatprep.subr.bf16.mxu0 0
      %332 = vmatpush1.bf16.msra.mxu0 %v293
      %333 = vmatprep.subr.bf16.mxu0 0
      %334 = vmatpush1.bf16.msra.mxu0 %v311
      %335 = vmatprep.subr.bf16.mxu0 0
      %336 = vmatpush1.bf16.msra.mxu0 0
      %337 = vmatprep.subr.bf16.mxu0 0
      %338 = vmatpush1.bf16.msra.mxu0 0
      %339 = vmatprep.subr.bf16.mxu0 0
      %340 = vmatpush1.bf16.msra.mxu0 0
      %341 = vmatprep.subr.bf16.mxu0 0
      %342 = vmatpush1.bf16.msra.mxu0 0
      %343 = vmatprep.subr.bf16.mxu0 0
      %344 = vmatpush1.bf16.msra.mxu0 0
      %345 = vmatprep.mubr.bf16.mxu0 %v307
      %346 = vmatmul.mubr.bf16.gmra.mrb[0].mxu0 %v231
      %v347 = vpop.f32.mrb[0].mxu0
      %v348 = vadd.f32 0.0, %v347
      %v349 = vpop.f32.mrb[0].mxu0
      %v350 = vpop.f32.mrb[0].mxu0
      %v351 = vpop.f32.mrb[0].mxu0
      %352 = vdwg.mxu0
      %v353 = vpack.c.b16 %v219, %v219
      %v354 = vpack.c.b16 %v220, %v220
      %v378 = vunpack.c.l.b16 %v171
      %v379 = vunpack.c.l.b16 %v172
      %v380 = vunpack.c.l.b16 %v173
      %v381 = vunpack.c.l.b16 %v174
      %v382 = vunpack.c.l.b16 %v175
      %v383 = vunpack.c.l.b16 %v176
      %v384 = vunpack.c.l.b16 %v177
      %v385 = vunpack.c.l.b16 %v178
      %v386 = vunpack.c.l.b16 %v179
      %v387 = vunpack.c.l.b16 %v180
      %v388 = vunpack.c.l.b16 %v181
      %v389 = vunpack.c.l.b16 %v182
      %v390 = vunpack.c.l.b16 %v183
      %v391 = vunpack.c.l.b16 %v184
      %v392 = vunpack.c.l.b16 %v185
      %v393 = vunpack.c.l.b16 %v186
      %v394 = vunpack.c.l.b16 %v187
      %v395 = vunpack.c.l.b16 %v188
      %v396 = vunpack.c.l.b16 %v189
      %v397 = vunpack.c.l.b16 %v190
      %v398 = vunpack.c.l.b16 %v191
      %v399 = vunpack.c.l.b16 %v192
      %v400 = vpack.c.b16 %v379, %v378
      %v401 = vpack.c.b16 %v381, %v380
      %v402 = vpack.c.b16 %v383, %v382
      %v403 = vpack.c.b16 %v385, %v384
      %v404 = vpack.c.b16 %v387, %v386
      %v405 = vpack.c.b16 %v389, %v388
      %v406 = vpack.c.b16 %v391, %v390
      %v407 = vpack.c.b16 %v393, %v392
      %v408 = vpack.c.b16 %v395, %v394
      %v409 = vpack.c.b16 %v397, %v396
      %v410 = vpack.c.b16 %v399, %v398
      %v422 = vsel %vm305, %v354, 0
      %v425 = vsel %vm309, %v410, 0
      %427 = vmatprep.subr.bf16.mxu0 0
      %428 = vmatpush1.bf16.msra.mxu0 %v400
      %429 = vmatprep.subr.bf16.mxu0 0
      %430 = vmatpush1.bf16.msra.mxu0 %v401
      %431 = vmatprep.subr.bf16.mxu0 0
      %432 = vmatpush1.bf16.msra.mxu0 %v402
      %433 = vmatprep.subr.bf16.mxu0 0
      %434 = vmatpush1.bf16.msra.mxu0 %v403
      %435 = vmatprep.subr.bf16.mxu0 0
      %436 = vmatpush1.bf16.msra.mxu0 %v404
      %437 = vmatprep.subr.bf16.mxu0 0
      %438 = vmatpush1.bf16.msra.mxu0 %v405
      %439 = vmatprep.subr.bf16.mxu0 0
      %440 = vmatpush1.bf16.msra.mxu0 %v406
      %441 = vmatprep.subr.bf16.mxu0 0
      %442 = vmatpush1.bf16.msra.mxu0 %v407
      %443 = vmatprep.subr.bf16.mxu0 0
      %444 = vmatpush1.bf16.msra.mxu0 %v408
      %445 = vmatprep.subr.bf16.mxu0 0
      %446 = vmatpush1.bf16.msra.mxu0 %v409
      %447 = vmatprep.subr.bf16.mxu0 0
      %448 = vmatpush1.bf16.msra.mxu0 %v425
      %449 = vmatprep.subr.bf16.mxu0 0
      %450 = vmatpush1.bf16.msra.mxu0 0
      %451 = vmatprep.subr.bf16.mxu0 0
      %452 = vmatpush1.bf16.msra.mxu0 0
      %453 = vmatprep.subr.bf16.mxu0 0
      %454 = vmatpush1.bf16.msra.mxu0 0
      %455 = vmatprep.subr.bf16.mxu0 0
      %456 = vmatpush1.bf16.msra.mxu0 0
      %457 = vmatprep.subr.bf16.mxu0 0
      %458 = vmatpush1.bf16.msra.mxu0 0
      %459 = vmatprep.mubr.bf16.mxu0 %v422
      %460 = vmatmul.mubr.bf16.gmra.mrb[0].mxu0 %v353
      %v461 = vpop.f32.mrb[0].mxu0
      %v462 = vadd.f32 %v348, %v461
      %v463 = vpop.f32.mrb[0].mxu0
      %v464 = vpop.f32.mrb[0].mxu0
      %v465 = vpop.f32.mrb[0].mxu0
      %466 = vdwg.mxu0
      %v467 = vld [vmem:[%s164] sm:$0xee]
      %s468 = scalar_lea.vmem %s1, 176
      %v469 = vld [vmem:[%s468] sm:$0xf]
      %v470 = vld [vmem:[%s468 + $0x4] sm:$0xf]
      %v471 = vld [vmem:[%s468 + $0x8] sm:$0xf]
      %v472 = vld [vmem:[%s468 + $0xc] sm:$0xf]
      %v473 = vld [vmem:[%s468 + $0x10] sm:$0xf]
      %v474 = vld [vmem:[%s468 + $0x14] sm:$0xf]
      %v475 = vld [vmem:[%s468 + $0x18] sm:$0xf]
      %v476 = vld [vmem:[%s468 + $0x1c] sm:$0xf]
      %v477 = vld [vmem:[%s468 + $0x20] sm:$0xf]
      %v478 = vld [vmem:[%s468 + $0x24] sm:$0xf]
      %v479 = vld [vmem:[%s468 + $0x28] sm:$0xf]
      %v480 = vld [vmem:[%s468 + $0x2c] sm:$0xf]
      %v481 = vld [vmem:[%s468 + $0x30] sm:$0xf]
      %v482 = vld [vmem:[%s468 + $0x34] sm:$0xf]
      %v483 = vld [vmem:[%s468 + $0x38] sm:$0xf]
      %v484 = vld [vmem:[%s468 + $0x3c] sm:$0xf]
      %v485 = vld [vmem:[%s468 + $0x40] sm:$0xf]
      %v486 = vld [vmem:[%s468 + $0x44] sm:$0xf]
      %v487 = vld [vmem:[%s468 + $0x48] sm:$0xf]
      %v488 = vld [vmem:[%s468 + $0x4c] sm:$0xf]
      %v489 = vld [vmem:[%s468 + $0x50] sm:$0xf]
      %v490 = vld [vmem:[%s468 + $0x54] sm:$0x1]
      %v492 = vunpack.c.l.b16 %v467
      %v493 = vunpack.c.h.b16 %v467
      %v494 = vpack.c.b16 %v221, %v492
      %v495 = vpack.c.b16 %v222, %v493
      %v496 = vrot.slane %v494, 1
      %v497 = vrot.slane %v495, 1
      %v521 = vunpack.c.l.b16 %v469
      %v522 = vunpack.c.l.b16 %v470
      %v523 = vunpack.c.l.b16 %v471
      %v524 = vunpack.c.l.b16 %v472
      %v525 = vunpack.c.l.b16 %v473
      %v526 = vunpack.c.l.b16 %v474
      %v527 = vunpack.c.l.b16 %v475
      %v528 = vunpack.c.l.b16 %v476
      %v529 = vunpack.c.l.b16 %v477
      %v530 = vunpack.c.l.b16 %v478
      %v531 = vunpack.c.l.b16 %v479
      %v532 = vunpack.c.l.b16 %v480
      %v533 = vunpack.c.l.b16 %v481
      %v534 = vunpack.c.l.b16 %v482
      %v535 = vunpack.c.l.b16 %v483
      %v536 = vunpack.c.l.b16 %v484
      %v537 = vunpack.c.l.b16 %v485
      %v538 = vunpack.c.l.b16 %v486
      %v539 = vunpack.c.l.b16 %v487
      %v540 = vunpack.c.l.b16 %v488
      %v541 = vunpack.c.l.b16 %v489
      %v542 = vunpack.c.l.b16 %v490
      %v543 = vpack.c.b16 %v522, %v521
      %v544 = vpack.c.b16 %v524, %v523
      %v545 = vpack.c.b16 %v526, %v525
      %v546 = vpack.c.b16 %v528, %v527
      %v547 = vpack.c.b16 %v530, %v529
      %v548 = vpack.c.b16 %v532, %v531
      %v549 = vpack.c.b16 %v534, %v533
      %v550 = vpack.c.b16 %v536, %v535
      %v551 = vpack.c.b16 %v538, %v537
      %v552 = vpack.c.b16 %v540, %v539
      %v553 = vpack.c.b16 %v542, %v541
      %v565 = vsel %vm305, %v497, 0
      %v568 = vsel %vm309, %v553, 0
      %570 = vmatprep.subr.bf16.mxu0 0
      %571 = vmatpush1.bf16.msra.mxu0 %v543
      %572 = vmatprep.subr.bf16.mxu0 0
      %573 = vmatpush1.bf16.msra.mxu0 %v544
      %574 = vmatprep.subr.bf16.mxu0 0
      %575 = vmatpush1.bf16.msra.mxu0 %v545
      %576 = vmatprep.subr.bf16.mxu0 0
      %577 = vmatpush1.bf16.msra.mxu0 %v546
      %578 = vmatprep.subr.bf16.mxu0 0
      %579 = vmatpush1.bf16.msra.mxu0 %v547
      %580 = vmatprep.subr.bf16.mxu0 0
      %581 = vmatpush1.bf16.msra.mxu0 %v548
      %582 = vmatprep.subr.bf16.mxu0 0
      %583 = vmatpush1.bf16.msra.mxu0 %v549
      %584 = vmatprep.subr.bf16.mxu0 0
      %585 = vmatpush1.bf16.msra.mxu0 %v550
      %586 = vmatprep.subr.bf16.mxu0 0
      %587 = vmatpush1.bf16.msra.mxu0 %v551
      %588 = vmatprep.subr.bf16.mxu0 0
      %589 = vmatpush1.bf16.msra.mxu0 %v552
      %590 = vmatprep.subr.bf16.mxu0 0
      %591 = vmatpush1.bf16.msra.mxu0 %v568
      %592 = vmatprep.subr.bf16.mxu0 0
      %593 = vmatpush1.bf16.msra.mxu0 0
      %594 = vmatprep.subr.bf16.mxu0 0
      %595 = vmatpush1.bf16.msra.mxu0 0
      %596 = vmatprep.subr.bf16.mxu0 0
      %597 = vmatpush1.bf16.msra.mxu0 0
      %598 = vmatprep.subr.bf16.mxu0 0
      %599 = vmatpush1.bf16.msra.mxu0 0
      %600 = vmatprep.subr.bf16.mxu0 0
      %601 = vmatpush1.bf16.msra.mxu0 0
      %602 = vmatprep.mubr.bf16.mxu0 %v565
      %603 = vmatmul.mubr.bf16.gmra.mrb[0].mxu0 %v496
      %v604 = vpop.f32.mrb[0].mxu0
      %v605 = vadd.f32 0.0, %v604
      %v606 = vpop.f32.mrb[0].mxu0
      %v607 = vpop.f32.mrb[0].mxu0
      %v608 = vpop.f32.mrb[0].mxu0
      %609 = vdwg.mxu0
      %v610 = vadd.f32 %v462, %v605
      %v611 = vld [vmem:[%s2] sm:$0x1]
      %v613 = vlaneseq
      %v614 = vshrl.u32 %v613, 7
      %v615 = vsub.s32 0, %v614
      %v616 = vrot.slane %v611, %v615
      %v618 = vadd.f32 %v610, %v616
      %vm619 = vcmp.gt.f32.partialorder %v618, 0.0
      %v620 = vmul.f32 %v618, 0.2
      %v621 = vsel %vm619, %v618, %v620
      %v622 = vpack.c.bf16 %v621, %v621
      %vm623 = vcmask 519168
      %624 = vst.msk [vmem:[%s168] sm:$0xf] %vm623, %v622
      %p625 = scmp.lt.s32.totalorder %s14, 1
      %s626 = scalar_select %p625, %s14, 1
      %s627 = smul.addr %s626, 4
      %s628 = scalar_lea.vmem %s3, %s627
      // Predicated region
      $region33: #{iasmnet_forward.17} parent=31 // pred_check
        %p629 = pneg %p100
      $region34: #{iasmnet_forward.17} parent=31 // pred_check_branch
        %631 = sbr.rel (%p629) target = $region36
      $region35: #{iasmnet_forward.17} parent=31 // pred_region
        _
      $region36: #{iasmnet_forward.17} parent=31 // pred_fallthru
        _
    $region32: #{iasmnet_forward.17} parent=5 // pred_fallthru
      _
    %p632 = scmp.le.s32.totalorder 2, %s9
    // Predicated region
    $region37: #{iasmnet_forward.17} parent=5 // pred_check
      %p633 = pneg %p632
    $region38: #{iasmnet_forward.17} parent=5 // pred_check_branch
      %635 = sbr.rel (%p633) target = $region40
    $region39: #{iasmnet_forward.17} parent=5 // pred_region
      %s636 = ssub.s32 %s9, 2
      // Predicated region
      $region41: #{iasmnet_forward.17} parent=39 // pred_check
        %p637 = pneg %p106
      $region42: #{iasmnet_forward.17} parent=39 // pred_check_branch
        %639 = sbr.rel (%p637) target = $region44
      $region43: #{iasmnet_forward.17} parent=39 // pred_region
        %p640 = scmp.lt.s32.totalorder %s15, 1
        %s641 = scalar_select %p640, %s15, 1
        %s642 = smul.addr %s641, 4
        %s643 = scalar_lea.vmem %s3, %s642
      $region44: #{iasmnet_forward.17} parent=39 // pred_fallthru
        _
    $region40: #{iasmnet_forward.17} parent=5 // pred_fallthru
      _
  $region6: #{iasmnet_forward.17} parent=0 // loop_footer
    %s13 = sadd.s32 1, %s9
  $region7: #{iasmnet_forward.17} parent=0 // loop_footer_branch
    %8 = sbr.rel target = $region3
  $region8: #{iasmnet_forward.17} parent=0 // loop_exit
    _

// kernel: tile.73
$region0: #{tile.73}
  #allocation0 [shape = 's32[1]{0}', space=sflag, size = 0x4, scoped, tag = 'scoped memory for tile.73']
  %s0 = inlined_call_operand.vmem [shape: f32[8], index: 0, kind: input, shape index: {}]
  %s1 = inlined_call_operand.vmem [shape: f32[16,8], index: 1, kind: output, shape index: {}]
  // Predicated region
  $region2: #{tile.73} parent=0 // pred_check
    _
  $region3: #{tile.73} parent=0 // pred_check_branch
    %3 = sbr.rel (0) target = $region5
  $region4: #{tile.73} parent=0 // pred_region
    _
  $region5: #{tile.73} parent=0 // pred_fallthru
    _
  %v4 = vld [vmem:[%s0] ss:$0 sm:$0xff]
  %5 = vst [vmem:[%s1] sm:$0xff] %v4
  %s6 = scalar_lea.vmem %s1, 8
  %7 = vst [vmem:[%s6] sm:$0xff] %v4

// kernel: tile.74
$region0: #{tile.74}
  %s0 = inlined_call_operand.vmem [shape: f32[16,8], index: 0, kind: input, shape index: {}]
  %s1 = inlined_call_operand.vmem [shape: f32[1,128], index: 1, kind: output, shape index: {}]
  $region1: #{tile.74} parent=0
    #allocation0 [shape = 'u8[4096]{0}', space=vmem, size = 0x1000, scoped, tag = 'scoped mem for output reshape']
    %v2 = vld [vmem:[%s0] sm:$0x1]
    %vm3 = vcmask 64512
    %4 = vst.msk [vmem:[#allocation0] sm:$0x1] %vm3, %v2
    %s5 = scalar_lea.vmem %s0, 15
    %v6 = vld [vmem:[%s5] sm:$0x1]
    %7 = vrot.lane.b32.xlu0 %v6, 120
    %v8 = vpop.permute.xlu0 %7
    %vm9 = vcmask 1048512
    %10 = vst.msk [vmem:[#allocation0] sm:$0x1] %vm9, %v8
    %s11 = scalar_lea.vmem %s0, 14
    %v12 = vld [vmem:[%s11] sm:$0x1]
    %13 = vrot.lane.b32.xlu0 %v12, 112
    %v14 = vpop.permute.xlu0 %13
    %vm15 = vcmask 982912
    %16 = vst.msk [vmem:[#allocation0] sm:$0x1] %vm15, %v14
    %s17 = scalar_lea.vmem %s0, 13
    %v18 = vld [vmem:[%s17] sm:$0x1]
    %19 = vrot.lane.b32.xlu0 %v18, 104
    %v20 = vpop.permute.xlu0 %19
    %vm21 = vcmask 917312
    %22 = vst.msk [vmem:[#allocation0] sm:$0x1] %vm21, %v20
    %s23 = scalar_lea.vmem %s0, 12
    %v24 = vld [vmem:[%s23] sm:$0x1]
    %25 = vrot.lane.b32.xlu0 %v24, 96
    %v26 = vpop.permute.xlu0 %25
    %vm27 = vcmask 851712
    %28 = vst.msk [vmem:[#allocation0] sm:$0x1] %vm27, %v26
    %s29 = scalar_lea.vmem %s0, 11
    %v30 = vld [vmem:[%s29] sm:$0x1]
    %31 = vrot.lane.b32.xlu0 %v30, 88
    %v32 = vpop.permute.xlu0 %31
    %vm33 = vcmask 786112
    %34 = vst.msk [vmem:[#allocation0] sm:$0x1] %vm33, %v32
    %s35 = scalar_lea.vmem %s0, 10
    %v36 = vld [vmem:[%s35] sm:$0x1]
    %37 = vrot.lane.b32.xlu0 %v36, 80
    %v38 = vpop.permute.xlu0 %37
    %vm39 = vcmask 720512
    %40 = vst.msk [vmem:[#allocation0] sm:$0x1] %vm39, %v38
    %s41 = scalar_lea.vmem %s0, 9
    %v42 = vld [vmem:[%s41] sm:$0x1]
    %43 = vrot.lane.b32.xlu0 %v42, 72
    %v44 = vpop.permute.xlu0 %43
    %vm45 = vcmask 654912
    %46 = vst.msk [vmem:[#allocation0] sm:$0x1] %vm45, %v44
    %s47 = scalar_lea.vmem %s0, 8
    %v48 = vld [vmem:[%s47] sm:$0x1]
    %49 = vrot.lane.b32.xlu0 %v48, 64
    %v50 = vpop.permute.xlu0 %49
    %vm51 = vcmask 589312
    %52 = vst.msk [vmem:[#allocation0] sm:$0x1] %vm51, %v50
    %s53 = scalar_lea.vmem %s0, 7
    %v54 = vld [vmem:[%s53] sm:$0x1]
    %55 = vrot.lane.b32.xlu0 %v54, 56
    %v56 = vpop.permute.xlu0 %55
    %vm57 = vcmask 523712
    %58 = vst.msk [vmem:[#allocation0] sm:$0x1] %vm57, %v56
    %s59 = scalar_lea.vmem %s0, 6
    %v60 = vld [vmem:[%s59] sm:$0x1]
    %61 = vrot.lane.b32.xlu0 %v60, 48
    %v62 = vpop.permute.xlu0 %61
    %vm63 = vcmask 458112
    %64 = vst.msk [vmem:[#allocation0] sm:$0x1] %vm63, %v62
    %s65 = scalar_lea.vmem %s0, 5
    %v66 = vld [vmem:[%s65] sm:$0x1]
    %67 = vrot.lane.b32.xlu0 %v66, 40
    %v68 = vpop.permute.xlu0 %67
    %vm69 = vcmask 392512
    %70 = vst.msk [vmem:[#allocation0] sm:$0x1] %vm69, %v68
    %s71 = scalar_lea.vmem %s0, 4
    %v72 = vld [vmem:[%s71] sm:$0x1]
    %73 = vrot.lane.b32.xlu0 %v72, 32
    %v74 = vpop.permute.xlu0 %73
    %vm75 = vcmask 326912
    %76 = vst.msk [vmem:[#allocation0] sm:$0x1] %vm75, %v74
    %s77 = scalar_lea.vmem %s0, 3
    %v78 = vld [vmem:[%s77] sm:$0x1]
    %79 = vrot.lane.b32.xlu0 %v78, 24
    %v80 = vpop.permute.xlu0 %79
    %vm81 = vcmask 261312
    %82 = vst.msk [vmem:[#allocation0] sm:$0x1] %vm81, %v80
    %s83 = scalar_lea.vmem %s0, 2
    %v84 = vld [vmem:[%s83] sm:$0x1]
    %85 = vrot.lane.b32.xlu0 %v84, 16
    %v86 = vpop.permute.xlu0 %85
    %vm87 = vcmask 195712
    %88 = vst.msk [vmem:[#allocation0] sm:$0x1] %vm87, %v86
    %s89 = scalar_lea.vmem %s0, 1
    %v90 = vld [vmem:[%s89] sm:$0x1]
    %91 = vrot.lane.b32.xlu0 %v90, 8
    %v92 = vpop.permute.xlu0 %91
    %vm93 = vcmask 130112
    %94 = vst.msk [vmem:[#allocation0] sm:$0x1] %vm93, %v92
    %s96 = sshllo.u32 0, 1
    %v98 = vld [vmem:[#allocation0] sm:%s96]
    %s99 = sshllo.u32 0, 1
    %100 = vst [vmem:[%s1] sm:%s99] %v98

// kernel: iasmnet_forward.18
$region0: #{iasmnet_forward.18}
  #allocation0 [shape = 'u32[]', space=smem, size = 0x4, offset = 0x4, fixed_abs, tag = 'smem constant byte address 0x4 - core index']
  #allocation1 [shape = 'u32[144,128]{1,0:T(1,128)}', space=vmem, size = 0x12000, scoped, tag = 'internal scratch']
  %s0 = inlined_call_operand.vmem [shape: bf16[4,18,144], index: 0, kind: input, shape index: {}]
  %s1 = inlined_call_operand.vmem [shape: bf16[3,144,128], index: 1, kind: input, shape index: {}]
  %s2 = inlined_call_operand.vmem [shape: f32[1,128], index: 2, kind: input, shape index: {}]
  %s3 = inlined_call_operand.vmem [shape: bf16[4,16,128], index: 3, kind: output, shape index: {}]
  %s4 = sld [smem:[#allocation0]]
  $region45: #{iasmnet_forward.18} parent=0
    _
  %s6 = ssub.s32 1, %s4
  %s7 = scalar_select 0, %s6, %s4
  loop: start=0, step=1, limit=6
  $region2: #{iasmnet_forward.18} parent=0 // loop_pre_header
    _
  $region3: #{iasmnet_forward.18} parent=0 // loop_header
    %s9 = sphi 0, %s13
    %p10 = scmp.ge.s32.totalorder %s9, 6
    %s19 = sphi 0, %s21
    %s22 = sphi 0, %s19
    %s23 = sphi 0, %s22
    %s39 = sphi 0, %s23
    %s43 = sphi 0, %s43
    %s45 = sphi 0, %s43
    %s46 = sphi 0, %s45
    %s60 = sphi 0, %s46
    %s64 = sphi 0, %s64
    %s66 = sphi 0, %s64
    %s67 = sphi 0, %s66
    %s81 = sphi 0, %s67
    %s87 = sphi 0, %s89
    %s90 = sphi 0, %s87
    %s91 = sphi 0, %s90
    %s107 = sphi 0, %s91
  $region4: #{iasmnet_forward.18} parent=0 // loop_header_branch
    %12 = sbr.rel (%p10) target = $region8
  $region5: #{iasmnet_forward.18} parent=0 // loop_body
    %s14 = ssub.s32 %s9, 1
    %s15 = ssub.s32 %s9, 2
    %s16 = sadd.s32 %s9, 1
    %s17 = ssub.s32 %s9, %s16
    %p18 = scmp.eq.s32.totalorder %s17, 0
    %s20 = sadd.s32 %s19, 1
    %s21 = scalar_select %p18, %s19, %s20
    %p24 = pneg %p18
    %p25 = scmp.eq.s32.totalorder %s9, 3
    %p26 = por %p24, %p25
    %p27 = scmp.ne.s32.totalorder %s19, %s22
    %p28 = scmp.eq.s32.totalorder %s9, 0
    %p29 = por %p27, %p28
    %p30 = scmp.ne.s32.totalorder %s19, %s22
    %p31 = scmp.eq.s32.totalorder %s14, 3
    %p32 = por %p30, %p31
    %p33 = scmp.ne.s32.totalorder %s22, %s23
    %p34 = scmp.eq.s32.totalorder %s14, 0
    %p35 = por %p33, %p34
    %p36 = scmp.ne.s32.totalorder %s22, %s23
    %p37 = scmp.eq.s32.totalorder %s15, 3
    %p38 = por %p36, %p37
    %p40 = scmp.ne.s32.totalorder %s23, %s39
    %p41 = scmp.eq.s32.totalorder %s15, 0
    %p42 = por %p40, %p41
    %s44 = sadd.s32 %s43, 1
    %p47 = scmp.eq.s32.totalorder %s9, 3
    %p48 = scmp.ne.s32.totalorder %s43, %s45
    %p49 = scmp.eq.s32.totalorder %s9, 0
    %p50 = por %p48, %p49
    %p51 = scmp.ne.s32.totalorder %s43, %s45
    %p52 = scmp.eq.s32.totalorder %s14, 3
    %p53 = por %p51, %p52
    %p54 = scmp.ne.s32.totalorder %s45, %s46
    %p55 = scmp.eq.s32.totalorder %s14, 0
    %p56 = por %p54, %p55
    %p57 = scmp.ne.s32.totalorder %s45, %s46
    %p58 = scmp.eq.s32.totalorder %s15, 3
    %p59 = por %p57, %p58
    %p61 = scmp.ne.s32.totalorder %s46, %s60
    %p62 = scmp.eq.s32.totalorder %s15, 0
    %p63 = por %p61, %p62
    %s65 = sadd.s32 %s64, 1
    %p68 = scmp.eq.s32.totalorder %s9, 3
    %p69 = scmp.ne.s32.totalorder %s64, %s66
    %p70 = scmp.eq.s32.totalorder %s9, 0
    %p71 = por %p69, %p70
    %p72 = scmp.ne.s32.totalorder %s64, %s66
    %p73 = scmp.eq.s32.totalorder %s14, 3
    %p74 = por %p72, %p73
    %p75 = scmp.ne.s32.totalorder %s66, %s67
    %p76 = scmp.eq.s32.totalorder %s14, 0
    %p77 = por %p75, %p76
    %p78 = scmp.ne.s32.totalorder %s66, %s67
    %p79 = scmp.eq.s32.totalorder %s15, 3
    %p80 = por %p78, %p79
    %p82 = scmp.ne.s32.totalorder %s67, %s81
    %p83 = scmp.eq.s32.totalorder %s15, 0
    %p84 = por %p82, %p83
    %s85 = ssub.s32 %s9, %s16
    %p86 = scmp.eq.s32.totalorder %s85, 0
    %s88 = sadd.s32 %s87, 1
    %s89 = scalar_select %p86, %s87, %s88
    %p92 = pneg %p86
    %p93 = scmp.eq.s32.totalorder %s9, 3
    %p94 = por %p92, %p93
    %p95 = scmp.ne.s32.totalorder %s87, %s90
    %p96 = scmp.eq.s32.totalorder %s9, 0
    %p97 = por %p95, %p96
    %p98 = scmp.ne.s32.totalorder %s87, %s90
    %p99 = scmp.eq.s32.totalorder %s14, 3
    %p100 = por %p98, %p99
    %p101 = scmp.ne.s32.totalorder %s90, %s91
    %p102 = scmp.eq.s32.totalorder %s14, 0
    %p103 = por %p101, %p102
    %p104 = scmp.ne.s32.totalorder %s90, %s91
    %p105 = scmp.eq.s32.totalorder %s15, 3
    %p106 = por %p104, %p105
    %p108 = scmp.ne.s32.totalorder %s91, %s107
    %p109 = scmp.eq.s32.totalorder %s15, 0
    %p110 = por %p108, %p109
    %p111 = scmp.le.s32.totalorder 1, %s9
    %p112 = scmp.lt.s32.totalorder %s9, 5
    %p113 = pnand %p111, %p112
    %p114 = pneg %p113
    // Predicated region
    $region9: #{iasmnet_forward.18} parent=5 // pred_check
      _
    $region10: #{iasmnet_forward.18} parent=5 // pred_check_branch
      %116 = sbr.rel (%p113) target = $region12
    $region11: #{iasmnet_forward.18} parent=5 // pred_region
      %s117 = ssub.s32 %s9, 1
      // Predicated region
      $region13: #{iasmnet_forward.18} parent=11 // pred_check
        %p118 = pneg %p56
      $region14: #{iasmnet_forward.18} parent=11 // pred_check_branch
        %120 = sbr.rel (%p118) target = $region16
      $region15: #{iasmnet_forward.18} parent=11 // pred_region
        _
      $region16: #{iasmnet_forward.18} parent=11 // pred_fallthru
        _
      // Predicated region
      $region17: #{iasmnet_forward.18} parent=11 // pred_check
        %p121 = pneg %p77
      $region18: #{iasmnet_forward.18} parent=11 // pred_check_branch
        %123 = sbr.rel (%p121) target = $region20
      $region19: #{iasmnet_forward.18} parent=11 // pred_region
        _
      $region20: #{iasmnet_forward.18} parent=11 // pred_fallthru
        _
    $region12: #{iasmnet_forward.18} parent=5 // pred_fallthru
      _
    %p124 = scmp.lt.s32.totalorder %s9, 4
    // Predicated region
    $region21: #{iasmnet_forward.18} parent=5 // pred_check
      %p125 = pneg %p124
    $region22: #{iasmnet_forward.18} parent=5 // pred_check_branch
      %127 = sbr.rel (%p125) target = $region24
    $region23: #{iasmnet_forward.18} parent=5 // pred_region
      // Predicated region
      $region25: #{iasmnet_forward.18} parent=23 // pred_check
        %p128 = pneg %p29
      $region26: #{iasmnet_forward.18} parent=23 // pred_check_branch
        %130 = sbr.rel (%p128) target = $region28
      $region27: #{iasmnet_forward.18} parent=23 // pred_region
        %p131 = scmp.lt.s32.totalorder %s9, 3
        %s132 = scalar_select %p131, %s9, 3
        %s133 = smul.addr %s132, 6
        %s134 = smul.addr %s133, 4
        %s135 = scalar_lea.vmem %s0, %s134
      $region28: #{iasmnet_forward.18} parent=23 // pred_fallthru
        _
    $region24: #{iasmnet_forward.18} parent=5 // pred_fallthru
      _
    %p136 = scmp.le.s32.totalorder 1, %s9
    %p137 = scmp.lt.s32.totalorder %s9, 5
    %p138 = pnand %p136, %p137
    %p139 = pneg %p138
    // Predicated region
    $region29: #{iasmnet_forward.18} parent=5 // pred_check
      _
    $region30: #{iasmnet_forward.18} parent=5 // pred_check_branch
      %141 = sbr.rel (%p138) target = $region32
    $region31: #{iasmnet_forward.18} parent=5 // pred_region
      %s142 = ssub.s32 %s9, 1
      %p143 = scmp.lt.s32.totalorder %s14, 3
      %s144 = scalar_select %p143, %s14, 3
      %s145 = smul.addr %s144, 6
      %s146 = smul.addr %s145, 4
      %s147 = scalar_lea.vmem %s0, %s146
      %p148 = pneg %p35
      %p149 = pneg %p32
      %p150 = pneg %p56
      %p151 = pneg %p53
      %p152 = pneg %p77
      %p153 = pneg %p74
      %p154 = pneg %p103
      %p155 = pneg %p100
      %p156 = scmp.lt.s32.totalorder %s14, 3
      %s157 = scalar_select %p156, %s14, 3
      %s158 = smul.addr %s157, 2
      %s159 = smul.addr %s158, 4
      %s160 = scalar_lea.vmem %s3, %s159
      %p161 = scmp.lt.s32.totalorder %s14, 3
      %s162 = scalar_select %p161, %s14, 3
      %s163 = smul.addr %s162, 6
      %s164 = smul.addr %s163, 4
      %s165 = scalar_lea.vmem %s0, %s164
      %p166 = scmp.lt.s32.totalorder %s14, 3
      %s167 = scalar_select %p166, %s14, 3
      %s168 = smul.addr %s167, 2
      %s169 = smul.addr %s168, 4
      %s170 = scalar_lea.vmem %s3, %s169
      %v172 = vld [vmem:[%s165] sm:$0xff]
      %v173 = vld [vmem:[%s165 + $0x8] sm:$0xff]
      %v174 = vld [vmem:[%s1] sm:$0xf]
      %v175 = vld [vmem:[%s1 + $0x4] sm:$0xf]
      %v176 = vld [vmem:[%s1 + $0x8] sm:$0xf]
      %v177 = vld [vmem:[%s1 + $0xc] sm:$0xf]
      %v178 = vld [vmem:[%s1 + $0x10] sm:$0xf]
      %v179 = vld [vmem:[%s1 + $0x14] sm:$0xf]
      %v180 = vld [vmem:[%s1 + $0x18] sm:$0xf]
      %v181 = vld [vmem:[%s1 + $0x1c] sm:$0xf]
      %v182 = vld [vmem:[%s1 + $0x20] sm:$0xf]
      %v183 = vld [vmem:[%s1 + $0x24] sm:$0xf]
      %v184 = vld [vmem:[%s1 + $0x28] sm:$0xf]
      %v185 = vld [vmem:[%s1 + $0x2c] sm:$0xf]
      %v186 = vld [vmem:[%s1 + $0x30] sm:$0xf]
      %v187 = vld [vmem:[%s1 + $0x34] sm:$0xf]
      %v188 = vld [vmem:[%s1 + $0x38] sm:$0xf]
      %v189 = vld [vmem:[%s1 + $0x3c] sm:$0xf]
      %v190 = vld [vmem:[%s1 + $0x40] sm:$0xf]
      %v191 = vld [vmem:[%s1 + $0x44] sm:$0xf]
      %v192 = vld [vmem:[%s165 + $0x10] sm:$0x11]
      %s193 = scalar_lea.vmem %s1, 72
      %v194 = vld [vmem:[%s193] sm:$0xf]
      %v195 = vld [vmem:[%s193 + $0x4] sm:$0xf]
      %v196 = vld [vmem:[%s193 + $0x8] sm:$0xf]
      %v197 = vld [vmem:[%s193 + $0xc] sm:$0xf]
      %v198 = vld [vmem:[%s193 + $0x10] sm:$0xf]
      %v199 = vld [vmem:[%s193 + $0x14] sm:$0xf]
      %v200 = vld [vmem:[%s193 + $0x18] sm:$0xf]
      %v201 = vld [vmem:[%s193 + $0x1c] sm:$0xf]
      %v202 = vld [vmem:[%s193 + $0x20] sm:$0xf]
      %v203 = vld [vmem:[%s193 + $0x24] sm:$0xf]
      %v204 = vld [vmem:[%s193 + $0x28] sm:$0xf]
      %v205 = vld [vmem:[%s193 + $0x2c] sm:$0xf]
      %v206 = vld [vmem:[%s193 + $0x30] sm:$0xf]
      %v207 = vld [vmem:[%s193 + $0x34] sm:$0xf]
      %v208 = vld [vmem:[%s193 + $0x38] sm:$0xf]
      %v209 = vld [vmem:[%s193 + $0x3c] sm:$0xf]
      %v210 = vld [vmem:[%s193 + $0x40] sm:$0xf]
      %v211 = vld [vmem:[%s193 + $0x44] sm:$0xf]
      %v215 = vunpack.c.l.b16 %v172
      %v216 = vunpack.c.h.b16 %v172
      %v217 = vunpack.c.l.b16 %v173
      %v218 = vunpack.c.h.b16 %v173
      %v219 = vunpack.c.l.b16 %v192
      %v220 = vunpack.c.h.b16 %v192
      %v221 = vpack.c.b16 %v217, %v215
      %v222 = vpack.c.b16 %v218, %v216
      %v223 = vpack.c.b16 %v219, %v219
      %v224 = vpack.c.b16 %v220, %v220
      %vm225 = vsmask.f32 7424
      %v227 = vshrl.u32 %v221, 16
      %v229 = vshll.u32 %v221, 16
      %v231 = vrot.slane %v229, 1
      %v232 = vor.u32 %v227, %v231
      %v234 = vshll.u32 %v223, 16
      %v236 = vrot.slane %v234, 1
      %v237 = vsel %vm225, %v232, %v236
      %v239 = vshrl.u32 %v222, 16
      %v241 = vshll.u32 %v222, 16
      %v243 = vrot.slane %v241, 1
      %v244 = vor.u32 %v239, %v243
      %v246 = vshll.u32 %v224, 16
      %v248 = vrot.slane %v246, 1
      %v249 = vsel %vm225, %v244, %v248
      %v269 = vunpack.c.l.b16 %v194
      %v270 = vunpack.c.l.b16 %v195
      %v271 = vunpack.c.l.b16 %v196
      %v272 = vunpack.c.l.b16 %v197
      %v273 = vunpack.c.l.b16 %v198
      %v274 = vunpack.c.l.b16 %v199
      %v275 = vunpack.c.l.b16 %v200
      %v276 = vunpack.c.l.b16 %v201
      %v277 = vunpack.c.l.b16 %v202
      %v278 = vunpack.c.l.b16 %v203
      %v279 = vunpack.c.l.b16 %v204
      %v280 = vunpack.c.l.b16 %v205
      %v281 = vunpack.c.l.b16 %v206
      %v282 = vunpack.c.l.b16 %v207
      %v283 = vunpack.c.l.b16 %v208
      %v284 = vunpack.c.l.b16 %v209
      %v285 = vunpack.c.l.b16 %v210
      %v286 = vunpack.c.l.b16 %v211
      %v287 = vpack.c.b16 %v270, %v269
      %v288 = vpack.c.b16 %v272, %v271
      %v289 = vpack.c.b16 %v274, %v273
      %v290 = vpack.c.b16 %v276, %v275
      %v291 = vpack.c.b16 %v278, %v277
      %v292 = vpack.c.b16 %v280, %v279
      %v293 = vpack.c.b16 %v282, %v281
      %v294 = vpack.c.b16 %v284, %v283
      %v295 = vpack.c.b16 %v286, %v285
      %vm305 = vcmask 130048
      %v307 = vsel %vm305, %v249, 0
      %309 = vmatprep.subr.bf16.mxu0 0
      %310 = vmatpush1.bf16.msra.mxu0 %v287
      %311 = vmatprep.subr.bf16.mxu0 0
      %312 = vmatpush1.bf16.msra.mxu0 %v288
      %313 = vmatprep.subr.bf16.mxu0 0
      %314 = vmatpush1.bf16.msra.mxu0 %v289
      %315 = vmatprep.subr.bf16.mxu0 0
      %316 = vmatpush1.bf16.msra.mxu0 %v290
      %317 = vmatprep.subr.bf16.mxu0 0
      %318 = vmatpush1.bf16.msra.mxu0 %v291
      %319 = vmatprep.subr.bf16.mxu0 0
      %320 = vmatpush1.bf16.msra.mxu0 %v292
      %321 = vmatprep.subr.bf16.mxu0 0
      %322 = vmatpush1.bf16.msra.mxu0 %v293
      %323 = vmatprep.subr.bf16.mxu0 0
      %324 = vmatpush1.bf16.msra.mxu0 %v294
      %325 = vmatprep.subr.bf16.mxu0 0
      %326 = vmatpush1.bf16.msra.mxu0 %v295
      %327 = vmatprep.subr.bf16.mxu0 0
      %328 = vmatpush1.bf16.msra.mxu0 0
      %329 = vmatprep.subr.bf16.mxu0 0
      %330 = vmatpush1.bf16.msra.mxu0 0
      %331 = vmatprep.subr.bf16.mxu0 0
      %332 = vmatpush1.bf16.msra.mxu0 0
      %333 = vmatprep.subr.bf16.mxu0 0
      %334 = vmatpush1.bf16.msra.mxu0 0
      %335 = vmatprep.subr.bf16.mxu0 0
      %336 = vmatpush1.bf16.msra.mxu0 0
      %337 = vmatprep.subr.bf16.mxu0 0
      %338 = vmatpush1.bf16.msra.mxu0 0
      %339 = vmatprep.subr.bf16.mxu0 0
      %340 = vmatpush1.bf16.msra.mxu0 0
      %341 = vmatprep.mubr.bf16.mxu0 %v307
      %342 = vmatmul.mubr.bf16.gmra.mrb[0].mxu0 %v237
      %v343 = vpop.f32.mrb[0].mxu0
      %v344 = vadd.f32 0.0, %v343
      %v345 = vpop.f32.mrb[0].mxu0
      %v346 = vpop.f32.mrb[0].mxu0
      %v347 = vadd.f32 0.0, %v346
      %v348 = vpop.f32.mrb[0].mxu0
      %349 = vdwg.mxu0
      %v369 = vunpack.c.l.b16 %v174
      %v370 = vunpack.c.l.b16 %v175
      %v371 = vunpack.c.l.b16 %v176
      %v372 = vunpack.c.l.b16 %v177
      %v373 = vunpack.c.l.b16 %v178
      %v374 = vunpack.c.l.b16 %v179
      %v375 = vunpack.c.l.b16 %v180
      %v376 = vunpack.c.l.b16 %v181
      %v377 = vunpack.c.l.b16 %v182
      %v378 = vunpack.c.l.b16 %v183
      %v379 = vunpack.c.l.b16 %v184
      %v380 = vunpack.c.l.b16 %v185
      %v381 = vunpack.c.l.b16 %v186
      %v382 = vunpack.c.l.b16 %v187
      %v383 = vunpack.c.l.b16 %v188
      %v384 = vunpack.c.l.b16 %v189
      %v385 = vunpack.c.l.b16 %v190
      %v386 = vunpack.c.l.b16 %v191
      %v387 = vpack.c.b16 %v370, %v369
      %v388 = vpack.c.b16 %v372, %v371
      %v389 = vpack.c.b16 %v374, %v373
      %v390 = vpack.c.b16 %v376, %v375
      %v391 = vpack.c.b16 %v378, %v377
      %v392 = vpack.c.b16 %v380, %v379
      %v393 = vpack.c.b16 %v382, %v381
      %v394 = vpack.c.b16 %v384, %v383
      %v395 = vpack.c.b16 %v386, %v385
      %v405 = vsel %vm305, %v222, 0
      %407 = vmatprep.subr.bf16.mxu0 0
      %408 = vmatpush1.bf16.msra.mxu0 %v387
      %409 = vmatprep.subr.bf16.mxu0 0
      %410 = vmatpush1.bf16.msra.mxu0 %v388
      %411 = vmatprep.subr.bf16.mxu0 0
      %412 = vmatpush1.bf16.msra.mxu0 %v389
      %413 = vmatprep.subr.bf16.mxu0 0
      %414 = vmatpush1.bf16.msra.mxu0 %v390
      %415 = vmatprep.subr.bf16.mxu0 0
      %416 = vmatpush1.bf16.msra.mxu0 %v391
      %417 = vmatprep.subr.bf16.mxu0 0
      %418 = vmatpush1.bf16.msra.mxu0 %v392
      %419 = vmatprep.subr.bf16.mxu0 0
      %420 = vmatpush1.bf16.msra.mxu0 %v393
      %421 = vmatprep.subr.bf16.mxu0 0
      %422 = vmatpush1.bf16.msra.mxu0 %v394
      %423 = vmatprep.subr.bf16.mxu0 0
      %424 = vmatpush1.bf16.msra.mxu0 %v395
      %425 = vmatprep.subr.bf16.mxu0 0
      %426 = vmatpush1.bf16.msra.mxu0 0
      %427 = vmatprep.subr.bf16.mxu0 0
      %428 = vmatpush1.bf16.msra.mxu0 0
      %429 = vmatprep.subr.bf16.mxu0 0
      %430 = vmatpush1.bf16.msra.mxu0 0
      %431 = vmatprep.subr.bf16.mxu0 0
      %432 = vmatpush1.bf16.msra.mxu0 0
      %433 = vmatprep.subr.bf16.mxu0 0
      %434 = vmatpush1.bf16.msra.mxu0 0
      %435 = vmatprep.subr.bf16.mxu0 0
      %436 = vmatpush1.bf16.msra.mxu0 0
      %437 = vmatprep.subr.bf16.mxu0 0
      %438 = vmatpush1.bf16.msra.mxu0 0
      %439 = vmatprep.mubr.bf16.mxu0 %v405
      %440 = vmatmul.mubr.bf16.gmra.mrb[0].mxu0 %v221
      %v441 = vpop.f32.mrb[0].mxu0
      %v442 = vadd.f32 %v344, %v441
      %v443 = vpop.f32.mrb[0].mxu0
      %v444 = vpop.f32.mrb[0].mxu0
      %v445 = vadd.f32 %v347, %v444
      %v446 = vpop.f32.mrb[0].mxu0
      %447 = vdwg.mxu0
      %v448 = vld [vmem:[%s165] sm:$0xee]
      %s449 = scalar_lea.vmem %s1, 144
      %v450 = vld [vmem:[%s449] sm:$0xf]
      %v451 = vld [vmem:[%s449 + $0x4] sm:$0xf]
      %v452 = vld [vmem:[%s449 + $0x8] sm:$0xf]
      %v453 = vld [vmem:[%s449 + $0xc] sm:$0xf]
      %v454 = vld [vmem:[%s449 + $0x10] sm:$0xf]
      %v455 = vld [vmem:[%s449 + $0x14] sm:$0xf]
      %v456 = vld [vmem:[%s449 + $0x18] sm:$0xf]
      %v457 = vld [vmem:[%s449 + $0x1c] sm:$0xf]
      %v458 = vld [vmem:[%s449 + $0x20] sm:$0xf]
      %v459 = vld [vmem:[%s449 + $0x24] sm:$0xf]
      %v460 = vld [vmem:[%s449 + $0x28] sm:$0xf]
      %v461 = vld [vmem:[%s449 + $0x2c] sm:$0xf]
      %v462 = vld [vmem:[%s449 + $0x30] sm:$0xf]
      %v463 = vld [vmem:[%s449 + $0x34] sm:$0xf]
      %v464 = vld [vmem:[%s449 + $0x38] sm:$0xf]
      %v465 = vld [vmem:[%s449 + $0x3c] sm:$0xf]
      %v466 = vld [vmem:[%s449 + $0x40] sm:$0xf]
      %v467 = vld [vmem:[%s449 + $0x44] sm:$0xf]
      %v469 = vunpack.c.l.b16 %v448
      %v470 = vunpack.c.h.b16 %v448
      %v471 = vpack.c.b16 %v217, %v469
      %v472 = vpack.c.b16 %v218, %v470
      %vm473 = vcmask 1046528
      %v474 = vrot.slane %v471, 1
      %v475 = vrot.slane %v223, 1
      %v476 = vsel %vm473, %v474, %v475
      %v477 = vrot.slane %v472, 1
      %v478 = vrot.slane %v224, 1
      %v479 = vsel %vm473, %v477, %v478
      %v499 = vunpack.c.l.b16 %v450
      %v500 = vunpack.c.l.b16 %v451
      %v501 = vunpack.c.l.b16 %v452
      %v502 = vunpack.c.l.b16 %v453
      %v503 = vunpack.c.l.b16 %v454
      %v504 = vunpack.c.l.b16 %v455
      %v505 = vunpack.c.l.b16 %v456
      %v506 = vunpack.c.l.b16 %v457
      %v507 = vunpack.c.l.b16 %v458
      %v508 = vunpack.c.l.b16 %v459
      %v509 = vunpack.c.l.b16 %v460
      %v510 = vunpack.c.l.b16 %v461
      %v511 = vunpack.c.l.b16 %v462
      %v512 = vunpack.c.l.b16 %v463
      %v513 = vunpack.c.l.b16 %v464
      %v514 = vunpack.c.l.b16 %v465
      %v515 = vunpack.c.l.b16 %v466
      %v516 = vunpack.c.l.b16 %v467
      %v517 = vpack.c.b16 %v500, %v499
      %v518 = vpack.c.b16 %v502, %v501
      %v519 = vpack.c.b16 %v504, %v503
      %v520 = vpack.c.b16 %v506, %v505
      %v521 = vpack.c.b16 %v508, %v507
      %v522 = vpack.c.b16 %v510, %v509
      %v523 = vpack.c.b16 %v512, %v511
      %v524 = vpack.c.b16 %v514, %v513
      %v525 = vpack.c.b16 %v516, %v515
      %v536 = vsel %vm305, %v479, 0
      %538 = vmatprep.subr.bf16.mxu0 0
      %539 = vmatpush1.bf16.msra.mxu0 %v517
      %540 = vmatprep.subr.bf16.mxu0 0
      %541 = vmatpush1.bf16.msra.mxu0 %v518
      %542 = vmatprep.subr.bf16.mxu0 0
      %543 = vmatpush1.bf16.msra.mxu0 %v519
      %544 = vmatprep.subr.bf16.mxu0 0
      %545 = vmatpush1.bf16.msra.mxu0 %v520
      %546 = vmatprep.subr.bf16.mxu0 0
      %547 = vmatpush1.bf16.msra.mxu0 %v521
      %548 = vmatprep.subr.bf16.mxu0 0
      %549 = vmatpush1.bf16.msra.mxu0 %v522
      %550 = vmatprep.subr.bf16.mxu0 0
      %551 = vmatpush1.bf16.msra.mxu0 %v523
      %552 = vmatprep.subr.bf16.mxu0 0
      %553 = vmatpush1.bf16.msra.mxu0 %v524
      %554 = vmatprep.subr.bf16.mxu0 0
      %555 = vmatpush1.bf16.msra.mxu0 %v525
      %556 = vmatprep.subr.bf16.mxu0 0
      %557 = vmatpush1.bf16.msra.mxu0 0
      %558 = vmatprep.subr.bf16.mxu0 0
      %559 = vmatpush1.bf16.msra.mxu0 0
      %560 = vmatprep.subr.bf16.mxu0 0
      %561 = vmatpush1.bf16.msra.mxu0 0
      %562 = vmatprep.subr.bf16.mxu0 0
      %563 = vmatpush1.bf16.msra.mxu0 0
      %564 = vmatprep.subr.bf16.mxu0 0
      %565 = vmatpush1.bf16.msra.mxu0 0
      %566 = vmatprep.subr.bf16.mxu0 0
      %567 = vmatpush1.bf16.msra.mxu0 0
      %568 = vmatprep.subr.bf16.mxu0 0
      %569 = vmatpush1.bf16.msra.mxu0 0
      %570 = vmatprep.mubr.bf16.mxu0 %v536
      %571 = vmatmul.mubr.bf16.gmra.mrb[0].mxu0 %v476
      %v572 = vpop.f32.mrb[0].mxu0
      %v573 = vadd.f32 0.0, %v572
      %v574 = vpop.f32.mrb[0].mxu0
      %v575 = vpop.f32.mrb[0].mxu0
      %v576 = vadd.f32 0.0, %v575
      %v577 = vpop.f32.mrb[0].mxu0
      %578 = vdwg.mxu0
      %v579 = vadd.f32 %v442, %v573
      %v580 = vadd.f32 %v445, %v576
      %v581 = vld [vmem:[%s2] sm:$0x1]
      %v583 = vlaneseq
      %v584 = vshrl.u32 %v583, 7
      %v585 = vsub.s32 0, %v584
      %v586 = vrot.slane %v581, %v585
      %v588 = vadd.f32 %v579, %v586
      %v589 = vadd.f32 %v580, %v586
      %vm590 = vcmp.gt.f32.partialorder %v588, 0.0
      %vm591 = vcmp.gt.f32.partialorder %v589, 0.0
      %v592 = vmul.f32 %v588, 0.2
      %v593 = vmul.f32 %v589, 0.2
      %v594 = vsel %vm590, %v588, %v592
      %v595 = vsel %vm591, %v589, %v593
      %v596 = vpack.c.bf16 %v595, %v594
      %v598 = vunpack.c.l.b16 %v596
      %v599 = vunpack.c.h.b16 %v596
      %v600 = vpack.c.b16 %v598, %v598
      %v601 = vpack.c.b16 %v599, %v599
      %604 = vst [vmem:[%s170] sm:$0xf] %v600
      %605 = vst [vmem:[%s170 + $0x4] sm:$0xf] %v601
      %p606 = scmp.lt.s32.totalorder %s14, 3
      %s607 = scalar_select %p606, %s14, 3
      %s608 = smul.addr %s607, 2
      %s609 = smul.addr %s608, 4
      %s610 = scalar_lea.vmem %s3, %s609
      // Predicated region
      $region33: #{iasmnet_forward.18} parent=31 // pred_check
        %p611 = pneg %p100
      $region34: #{iasmnet_forward.18} parent=31 // pred_check_branch
        %613 = sbr.rel (%p611) target = $region36
      $region35: #{iasmnet_forward.18} parent=31 // pred_region
        _
      $region36: #{iasmnet_forward.18} parent=31 // pred_fallthru
        _
    $region32: #{iasmnet_forward.18} parent=5 // pred_fallthru
      _
    %p614 = scmp.le.s32.totalorder 2, %s9
    // Predicated region
    $region37: #{iasmnet_forward.18} parent=5 // pred_check
      %p615 = pneg %p614
    $region38: #{iasmnet_forward.18} parent=5 // pred_check_branch
      %617 = sbr.rel (%p615) target = $region40
    $region39: #{iasmnet_forward.18} parent=5 // pred_region
      %s618 = ssub.s32 %s9, 2
      // Predicated region
      $region41: #{iasmnet_forward.18} parent=39 // pred_check
        %p619 = pneg %p106
      $region42: #{iasmnet_forward.18} parent=39 // pred_check_branch
        %621 = sbr.rel (%p619) target = $region44
      $region43: #{iasmnet_forward.18} parent=39 // pred_region
        %p622 = scmp.lt.s32.totalorder %s15, 3
        %s623 = scalar_select %p622, %s15, 3
        %s624 = smul.addr %s623, 2
        %s625 = smul.addr %s624, 4
        %s626 = scalar_lea.vmem %s3, %s625
      $region44: #{iasmnet_forward.18} parent=39 // pred_fallthru
        _
    $region40: #{iasmnet_forward.18} parent=5 // pred_fallthru
      _
  $region6: #{iasmnet_forward.18} parent=0 // loop_footer
    %s13 = sadd.s32 1, %s9
  $region7: #{iasmnet_forward.18} parent=0 // loop_footer_branch
    %8 = sbr.rel target = $region3
  $region8: #{iasmnet_forward.18} parent=0 // loop_exit
    _

// kernel: tile.78
$region0: #{tile.78}
  #allocation0 [shape = 's32[1]{0}', space=sflag, size = 0x4, scoped, tag = 'scoped memory for tile.78']
  %s0 = inlined_call_operand.vmem [shape: f32[3], index: 0, kind: input, shape index: {}]
  %s1 = inlined_call_operand.vmem [shape: f32[16,3], index: 1, kind: output, shape index: {}]
  // Predicated region
  $region2: #{tile.78} parent=0 // pred_check
    _
  $region3: #{tile.78} parent=0 // pred_check_branch
    %3 = sbr.rel (0) target = $region5
  $region4: #{tile.78} parent=0 // pred_region
    _
  $region5: #{tile.78} parent=0 // pred_fallthru
    _
  %v4 = vld [vmem:[%s0] ss:$0 sm:$0xff]
  %5 = vst [vmem:[%s1] sm:$0xff] %v4
  %s6 = scalar_lea.vmem %s1, 8
  %7 = vst [vmem:[%s6] sm:$0xff] %v4

// kernel: tile.79
$region0: #{tile.79}
  %s0 = inlined_call_operand.vmem [shape: f32[16,3], index: 0, kind: input, shape index: {}]
  %s1 = inlined_call_operand.vmem [shape: f32[1,48], index: 1, kind: output, shape index: {}]
  $region1: #{tile.79} parent=0
    #allocation0 [shape = 'u8[4096]{0}', space=vmem, size = 0x1000, scoped, tag = 'scoped mem for output reshape']
    %v2 = vld [vmem:[%s0] sm:$0x1]
    %vm3 = vcmask 23552
    %4 = vst.msk [vmem:[#allocation0] sm:$0x1] %vm3, %v2
    %s5 = scalar_lea.vmem %s0, 15
    %v6 = vld [vmem:[%s5] sm:$0x1]
    %7 = vrot.lane.b32.xlu0 %v6, 45
    %v8 = vpop.permute.xlu0 %7
    %vm9 = vcmask 392552
    %10 = vst.msk [vmem:[#allocation0] sm:$0x1] %vm9, %v8
    %s11 = scalar_lea.vmem %s0, 14
    %v12 = vld [vmem:[%s11] sm:$0x1]
    %13 = vrot.lane.b32.xlu0 %v12, 42
    %v14 = vpop.permute.xlu0 %13
    %vm15 = vcmask 367952
    %16 = vst.msk [vmem:[#allocation0] sm:$0x1] %vm15, %v14
    %s17 = scalar_lea.vmem %s0, 13
    %v18 = vld [vmem:[%s17] sm:$0x1]
    %19 = vrot.lane.b32.xlu0 %v18, 39
    %v20 = vpop.permute.xlu0 %19
    %vm21 = vcmask 343352
    %22 = vst.msk [vmem:[#allocation0] sm:$0x1] %vm21, %v20
    %s23 = scalar_lea.vmem %s0, 12
    %v24 = vld [vmem:[%s23] sm:$0x1]
    %25 = vrot.lane.b32.xlu0 %v24, 36
    %v26 = vpop.permute.xlu0 %25
    %vm27 = vcmask 318752
    %28 = vst.msk [vmem:[#allocation0] sm:$0x1] %vm27, %v26
    %s29 = scalar_lea.vmem %s0, 11
    %v30 = vld [vmem:[%s29] sm:$0x1]
    %31 = vrot.lane.b32.xlu0 %v30, 33
    %v32 = vpop.permute.xlu0 %31
    %vm33 = vcmask 294152
    %34 = vst.msk [vmem:[#allocation0] sm:$0x1] %vm33, %v32
    %s35 = scalar_lea.vmem %s0, 10
    %v36 = vld [vmem:[%s35] sm:$0x1]
    %37 = vrot.lane.b32.xlu0 %v36, 30
    %v38 = vpop.permute.xlu0 %37
    %vm39 = vcmask 269552
    %40 = vst.msk [vmem:[#allocation0] sm:$0x1] %vm39, %v38
    %s41 = scalar_lea.vmem %s0, 9
    %v42 = vld [vmem:[%s41] sm:$0x1]
    %43 = vrot.lane.b32.xlu0 %v42, 27
    %v44 = vpop.permute.xlu0 %43
    %vm45 = vcmask 244952
    %46 = vst.msk [vmem:[#allocation0] sm:$0x1] %vm45, %v44
    %s47 = scalar_lea.vmem %s0, 8
    %v48 = vld [vmem:[%s47] sm:$0x1]
    %49 = vrot.lane.b32.xlu0 %v48, 24
    %v50 = vpop.permute.xlu0 %49
    %vm51 = vcmask 220352
    %52 = vst.msk [vmem:[#allocation0] sm:$0x1] %vm51, %v50
    %s53 = scalar_lea.vmem %s0, 7
    %v54 = vld [vmem:[%s53] sm:$0x1]
    %55 = vrot.lane.b32.xlu0 %v54, 21
    %v56 = vpop.permute.xlu0 %55
    %vm57 = vcmask 195752
    %58 = vst.msk [vmem:[#allocation0] sm:$0x1] %vm57, %v56
    %s59 = scalar_lea.vmem %s0, 6
    %v60 = vld [vmem:[%s59] sm:$0x1]
    %61 = vrot.lane.b32.xlu0 %v60, 18
    %v62 = vpop.permute.xlu0 %61
    %vm63 = vcmask 171152
    %64 = vst.msk [vmem:[#allocation0] sm:$0x1] %vm63, %v62
    %s65 = scalar_lea.vmem %s0, 5
    %v66 = vld [vmem:[%s65] sm:$0x1]
    %67 = vrot.lane.b32.xlu0 %v66, 15
    %v68 = vpop.permute.xlu0 %67
    %vm69 = vcmask 146552
    %70 = vst.msk [vmem:[#allocation0] sm:$0x1] %vm69, %v68
    %s71 = scalar_lea.vmem %s0, 4
    %v72 = vld [vmem:[%s71] sm:$0x1]
    %73 = vrot.lane.b32.xlu0 %v72, 12
    %v74 = vpop.permute.xlu0 %73
    %vm75 = vcmask 121952
    %76 = vst.msk [vmem:[#allocation0] sm:$0x1] %vm75, %v74
    %s77 = scalar_lea.vmem %s0, 3
    %v78 = vld [vmem:[%s77] sm:$0x1]
    %79 = vrot.lane.b32.xlu0 %v78, 9
    %v80 = vpop.permute.xlu0 %79
    %vm81 = vcmask 97352
    %82 = vst.msk [vmem:[#allocation0] sm:$0x1] %vm81, %v80
    %s83 = scalar_lea.vmem %s0, 2
    %v84 = vld [vmem:[%s83] sm:$0x1]
    %85 = vrot.lane.b32.xlu0 %v84, 6
    %v86 = vpop.permute.xlu0 %85
    %vm87 = vcmask 72752
    %88 = vst.msk [vmem:[#allocation0] sm:$0x1] %vm87, %v86
    %s89 = scalar_lea.vmem %s0, 1
    %v90 = vld [vmem:[%s89] sm:$0x1]
    %91 = vrot.lane.b32.xlu0 %v90, 3
    %v92 = vpop.permute.xlu0 %91
    %vm93 = vcmask 48152
    %94 = vst.msk [vmem:[#allocation0] sm:$0x1] %vm93, %v92
    %s96 = sshllo.u32 0, 1
    %v98 = vld [vmem:[#allocation0] sm:%s96]
    %s99 = sshllo.u32 0, 1
    %100 = vst [vmem:[%s1] sm:%s99] %v98

// kernel: iasmnet_forward.19
$region0: #{iasmnet_forward.19}
  #allocation0 [shape = 'u32[]', space=smem, size = 0x4, offset = 0x4, fixed_abs, tag = 'smem constant byte address 0x4 - core index']
  #allocation1 [shape = 'u32[144,128]{1,0:T(1,128)}', space=vmem, size = 0x12000, scoped, tag = 'internal scratch']
  %s0 = inlined_call_operand.vmem [shape: bf16[4,18,198], index: 0, kind: input, shape index: {}]
  %s1 = inlined_call_operand.vmem [shape: bf16[3,198,48], index: 1, kind: input, shape index: {}]
  %s2 = inlined_call_operand.vmem [shape: f32[1,48], index: 2, kind: input, shape index: {}]
  %s3 = inlined_call_operand.vmem [shape: bf16[4,16,48], index: 3, kind: output, shape index: {}]
  %s4 = sld [smem:[#allocation0]]
  $region45: #{iasmnet_forward.19} parent=0
    _
  %s6 = ssub.s32 1, %s4
  %s7 = scalar_select 0, %s6, %s4
  loop: start=0, step=1, limit=6
  $region2: #{iasmnet_forward.19} parent=0 // loop_pre_header
    _
  $region3: #{iasmnet_forward.19} parent=0 // loop_header
    %s9 = sphi 0, %s13
    %p10 = scmp.ge.s32.totalorder %s9, 6
    %s19 = sphi 0, %s21
    %s22 = sphi 0, %s19
    %s23 = sphi 0, %s22
    %s39 = sphi 0, %s23
    %s43 = sphi 0, %s43
    %s45 = sphi 0, %s43
    %s46 = sphi 0, %s45
    %s60 = sphi 0, %s46
    %s64 = sphi 0, %s64
    %s66 = sphi 0, %s64
    %s67 = sphi 0, %s66
    %s81 = sphi 0, %s67
    %s87 = sphi 0, %s89
    %s90 = sphi 0, %s87
    %s91 = sphi 0, %s90
    %s107 = sphi 0, %s91
  $region4: #{iasmnet_forward.19} parent=0 // loop_header_branch
    %12 = sbr.rel (%p10) target = $region8
  $region5: #{iasmnet_forward.19} parent=0 // loop_body
    %s14 = ssub.s32 %s9, 1
    %s15 = ssub.s32 %s9, 2
    %s16 = sadd.s32 %s9, 1
    %s17 = ssub.s32 %s9, %s16
    %p18 = scmp.eq.s32.totalorder %s17, 0
    %s20 = sadd.s32 %s19, 1
    %s21 = scalar_select %p18, %s19, %s20
    %p24 = pneg %p18
    %p25 = scmp.eq.s32.totalorder %s9, 3
    %p26 = por %p24, %p25
    %p27 = scmp.ne.s32.totalorder %s19, %s22
    %p28 = scmp.eq.s32.totalorder %s9, 0
    %p29 = por %p27, %p28
    %p30 = scmp.ne.s32.totalorder %s19, %s22
    %p31 = scmp.eq.s32.totalorder %s14, 3
    %p32 = por %p30, %p31
    %p33 = scmp.ne.s32.totalorder %s22, %s23
    %p34 = scmp.eq.s32.totalorder %s14, 0
    %p35 = por %p33, %p34
    %p36 = scmp.ne.s32.totalorder %s22, %s23
    %p37 = scmp.eq.s32.totalorder %s15, 3
    %p38 = por %p36, %p37
    %p40 = scmp.ne.s32.totalorder %s23, %s39
    %p41 = scmp.eq.s32.totalorder %s15, 0
    %p42 = por %p40, %p41
    %s44 = sadd.s32 %s43, 1
    %p47 = scmp.eq.s32.totalorder %s9, 3
    %p48 = scmp.ne.s32.totalorder %s43, %s45
    %p49 = scmp.eq.s32.totalorder %s9, 0
    %p50 = por %p48, %p49
    %p51 = scmp.ne.s32.totalorder %s43, %s45
    %p52 = scmp.eq.s32.totalorder %s14, 3
    %p53 = por %p51, %p52
    %p54 = scmp.ne.s32.totalorder %s45, %s46
    %p55 = scmp.eq.s32.totalorder %s14, 0
    %p56 = por %p54, %p55
    %p57 = scmp.ne.s32.totalorder %s45, %s46
    %p58 = scmp.eq.s32.totalorder %s15, 3
    %p59 = por %p57, %p58
    %p61 = scmp.ne.s32.totalorder %s46, %s60
    %p62 = scmp.eq.s32.totalorder %s15, 0
    %p63 = por %p61, %p62
    %s65 = sadd.s32 %s64, 1
    %p68 = scmp.eq.s32.totalorder %s9, 3
    %p69 = scmp.ne.s32.totalorder %s64, %s66
    %p70 = scmp.eq.s32.totalorder %s9, 0
    %p71 = por %p69, %p70
    %p72 = scmp.ne.s32.totalorder %s64, %s66
    %p73 = scmp.eq.s32.totalorder %s14, 3
    %p74 = por %p72, %p73
    %p75 = scmp.ne.s32.totalorder %s66, %s67
    %p76 = scmp.eq.s32.totalorder %s14, 0
    %p77 = por %p75, %p76
    %p78 = scmp.ne.s32.totalorder %s66, %s67
    %p79 = scmp.eq.s32.totalorder %s15, 3
    %p80 = por %p78, %p79
    %p82 = scmp.ne.s32.totalorder %s67, %s81
    %p83 = scmp.eq.s32.totalorder %s15, 0
    %p84 = por %p82, %p83
    %s85 = ssub.s32 %s9, %s16
    %p86 = scmp.eq.s32.totalorder %s85, 0
    %s88 = sadd.s32 %s87, 1
    %s89 = scalar_select %p86, %s87, %s88
    %p92 = pneg %p86
    %p93 = scmp.eq.s32.totalorder %s9, 3
    %p94 = por %p92, %p93
    %p95 = scmp.ne.s32.totalorder %s87, %s90
    %p96 = scmp.eq.s32.totalorder %s9, 0
    %p97 = por %p95, %p96
    %p98 = scmp.ne.s32.totalorder %s87, %s90
    %p99 = scmp.eq.s32.totalorder %s14, 3
    %p100 = por %p98, %p99
    %p101 = scmp.ne.s32.totalorder %s90, %s91
    %p102 = scmp.eq.s32.totalorder %s14, 0
    %p103 = por %p101, %p102
    %p104 = scmp.ne.s32.totalorder %s90, %s91
    %p105 = scmp.eq.s32.totalorder %s15, 3
    %p106 = por %p104, %p105
    %p108 = scmp.ne.s32.totalorder %s91, %s107
    %p109 = scmp.eq.s32.totalorder %s15, 0
    %p110 = por %p108, %p109
    %p111 = scmp.le.s32.totalorder 1, %s9
    %p112 = scmp.lt.s32.totalorder %s9, 5
    %p113 = pnand %p111, %p112
    %p114 = pneg %p113
    // Predicated region
    $region9: #{iasmnet_forward.19} parent=5 // pred_check
      _
    $region10: #{iasmnet_forward.19} parent=5 // pred_check_branch
      %116 = sbr.rel (%p113) target = $region12
    $region11: #{iasmnet_forward.19} parent=5 // pred_region
      %s117 = ssub.s32 %s9, 1
      // Predicated region
      $region13: #{iasmnet_forward.19} parent=11 // pred_check
        %p118 = pneg %p56
      $region14: #{iasmnet_forward.19} parent=11 // pred_check_branch
        %120 = sbr.rel (%p118) target = $region16
      $region15: #{iasmnet_forward.19} parent=11 // pred_region
        _
      $region16: #{iasmnet_forward.19} parent=11 // pred_fallthru
        _
      // Predicated region
      $region17: #{iasmnet_forward.19} parent=11 // pred_check
        %p121 = pneg %p77
      $region18: #{iasmnet_forward.19} parent=11 // pred_check_branch
        %123 = sbr.rel (%p121) target = $region20
      $region19: #{iasmnet_forward.19} parent=11 // pred_region
        _
      $region20: #{iasmnet_forward.19} parent=11 // pred_fallthru
        _
    $region12: #{iasmnet_forward.19} parent=5 // pred_fallthru
      _
    %p124 = scmp.lt.s32.totalorder %s9, 4
    // Predicated region
    $region21: #{iasmnet_forward.19} parent=5 // pred_check
      %p125 = pneg %p124
    $region22: #{iasmnet_forward.19} parent=5 // pred_check_branch
      %127 = sbr.rel (%p125) target = $region24
    $region23: #{iasmnet_forward.19} parent=5 // pred_region
      // Predicated region
      $region25: #{iasmnet_forward.19} parent=23 // pred_check
        %p128 = pneg %p29
      $region26: #{iasmnet_forward.19} parent=23 // pred_check_branch
        %130 = sbr.rel (%p128) target = $region28
      $region27: #{iasmnet_forward.19} parent=23 // pred_region
        %p131 = scmp.lt.s32.totalorder %s9, 3
        %s132 = scalar_select %p131, %s9, 3
        %s133 = smul.addr %s132, 6
        %s134 = smul.addr %s133, 4
        %s135 = scalar_lea.vmem %s0, %s134
      $region28: #{iasmnet_forward.19} parent=23 // pred_fallthru
        _
    $region24: #{iasmnet_forward.19} parent=5 // pred_fallthru
      _
    %p136 = scmp.le.s32.totalorder 1, %s9
    %p137 = scmp.lt.s32.totalorder %s9, 5
    %p138 = pnand %p136, %p137
    %p139 = pneg %p138
    // Predicated region
    $region29: #{iasmnet_forward.19} parent=5 // pred_check
      _
    $region30: #{iasmnet_forward.19} parent=5 // pred_check_branch
      %141 = sbr.rel (%p138) target = $region32
    $region31: #{iasmnet_forward.19} parent=5 // pred_region
      %s142 = ssub.s32 %s9, 1
      %p143 = scmp.lt.s32.totalorder %s14, 3
      %s144 = scalar_select %p143, %s14, 3
      %s145 = smul.addr %s144, 6
      %s146 = smul.addr %s145, 4
      %s147 = scalar_lea.vmem %s0, %s146
      %p148 = pneg %p35
      %p149 = pneg %p32
      %p150 = pneg %p56
      %p151 = pneg %p53
      %p152 = pneg %p77
      %p153 = pneg %p74
      %p154 = pneg %p103
      %p155 = pneg %p100
      %p156 = scmp.lt.s32.totalorder %s14, 3
      %s157 = scalar_select %p156, %s14, 3
      %s158 = smul.addr %s157, 2
      %s159 = smul.addr %s158, 4
      %s160 = scalar_lea.vmem %s3, %s159
      %p161 = scmp.lt.s32.totalorder %s14, 3
      %s162 = scalar_select %p161, %s14, 3
      %s163 = smul.addr %s162, 6
      %s164 = smul.addr %s163, 4
      %s165 = scalar_lea.vmem %s0, %s164
      %p166 = scmp.lt.s32.totalorder %s14, 3
      %s167 = scalar_select %p166, %s14, 3
      %s168 = smul.addr %s167, 2
      %s169 = smul.addr %s168, 4
      %s170 = scalar_lea.vmem %s3, %s169
      %v172 = vld [vmem:[%s165] sm:$0xff]
      %v173 = vld [vmem:[%s165 + $0x8] sm:$0xff]
      %v174 = vld [vmem:[%s1] sm:$0xf]
      %v175 = vld [vmem:[%s1 + $0x4] sm:$0xf]
      %v176 = vld [vmem:[%s1 + $0x8] sm:$0xf]
      %v177 = vld [vmem:[%s1 + $0xc] sm:$0xf]
      %v178 = vld [vmem:[%s1 + $0x10] sm:$0xf]
      %v179 = vld [vmem:[%s1 + $0x14] sm:$0xf]
      %v180 = vld [vmem:[%s1 + $0x18] sm:$0xf]
      %v181 = vld [vmem:[%s1 + $0x1c] sm:$0xf]
      %v182 = vld [vmem:[%s1 + $0x20] sm:$0xf]
      %v183 = vld [vmem:[%s1 + $0x24] sm:$0xf]
      %v184 = vld [vmem:[%s1 + $0x28] sm:$0xf]
      %v185 = vld [vmem:[%s1 + $0x2c] sm:$0xf]
      %v186 = vld [vmem:[%s1 + $0x30] sm:$0xf]
      %v187 = vld [vmem:[%s1 + $0x34] sm:$0xf]
      %v188 = vld [vmem:[%s1 + $0x38] sm:$0xf]
      %v189 = vld [vmem:[%s1 + $0x3c] sm:$0xf]
      %v190 = vld [vmem:[%s1 + $0x40] sm:$0xf]
      %v191 = vld [vmem:[%s1 + $0x44] sm:$0xf]
      %v192 = vld [vmem:[%s1 + $0x48] sm:$0xf]
      %v193 = vld [vmem:[%s1 + $0x4c] sm:$0xf]
      %v194 = vld [vmem:[%s1 + $0x50] sm:$0xf]
      %v195 = vld [vmem:[%s1 + $0x54] sm:$0xf]
      %v196 = vld [vmem:[%s1 + $0x58] sm:$0xf]
      %v197 = vld [vmem:[%s1 + $0x5c] sm:$0xf]
      %v198 = vld [vmem:[%s1 + $0x60] sm:$0x7]
      %v199 = vld [vmem:[%s165 + $0x10] sm:$0x11]
      %s200 = scalar_lea.vmem %s1, 100
      %v201 = vld [vmem:[%s200] sm:$0xf]
      %v202 = vld [vmem:[%s200 + $0x4] sm:$0xf]
      %v203 = vld [vmem:[%s200 + $0x8] sm:$0xf]
      %v204 = vld [vmem:[%s200 + $0xc] sm:$0xf]
      %v205 = vld [vmem:[%s200 + $0x10] sm:$0xf]
      %v206 = vld [vmem:[%s200 + $0x14] sm:$0xf]
      %v207 = vld [vmem:[%s200 + $0x18] sm:$0xf]
      %v208 = vld [vmem:[%s200 + $0x1c] sm:$0xf]
      %v209 = vld [vmem:[%s200 + $0x20] sm:$0xf]
      %v210 = vld [vmem:[%s200 + $0x24] sm:$0xf]
      %v211 = vld [vmem:[%s200 + $0x28] sm:$0xf]
      %v212 = vld [vmem:[%s200 + $0x2c] sm:$0xf]
      %v213 = vld [vmem:[%s200 + $0x30] sm:$0xf]
      %v214 = vld [vmem:[%s200 + $0x34] sm:$0xf]
      %v215 = vld [vmem:[%s200 + $0x38] sm:$0xf]
      %v216 = vld [vmem:[%s200 + $0x3c] sm:$0xf]
      %v217 = vld [vmem:[%s200 + $0x40] sm:$0xf]
      %v218 = vld [vmem:[%s200 + $0x44] sm:$0xf]
      %v219 = vld [vmem:[%s200 + $0x48] sm:$0xf]
      %v220 = vld [vmem:[%s200 + $0x4c] sm:$0xf]
      %v221 = vld [vmem:[%s200 + $0x50] sm:$0xf]
      %v222 = vld [vmem:[%s200 + $0x54] sm:$0xf]
      %v223 = vld [vmem:[%s200 + $0x58] sm:$0xf]
      %v224 = vld [vmem:[%s200 + $0x5c] sm:$0xf]
      %v225 = vld [vmem:[%s200 + $0x60] sm:$0x7]
      %v229 = vunpack.c.l.b16 %v172
      %v230 = vunpack.c.h.b16 %v172
      %v231 = vunpack.c.l.b16 %v173
      %v232 = vunpack.c.h.b16 %v173
      %v233 = vunpack.c.l.b16 %v199
      %v234 = vunpack.c.h.b16 %v199
      %v235 = vpack.c.b16 %v231, %v229
      %v236 = vpack.c.b16 %v232, %v230
      %v237 = vpack.c.b16 %v233, %v233
      %v238 = vpack.c.b16 %v234, %v234
      %vm239 = vsmask.f32 7424
      %v241 = vshrl.u32 %v235, 16
      %v243 = vshll.u32 %v235, 16
      %v245 = vrot.slane %v243, 1
      %v246 = vor.u32 %v241, %v245
      %v248 = vshll.u32 %v237, 16
      %v250 = vrot.slane %v248, 1
      %v251 = vsel %vm239, %v246, %v250
      %v253 = vshrl.u32 %v236, 16
      %v255 = vshll.u32 %v236, 16
      %v257 = vrot.slane %v255, 1
      %v258 = vor.u32 %v253, %v257
      %v260 = vshll.u32 %v238, 16
      %v262 = vrot.slane %v260, 1
      %v263 = vsel %vm239, %v258, %v262
      %v290 = vunpack.c.l.b16 %v201
      %v291 = vunpack.c.l.b16 %v202
      %v292 = vunpack.c.l.b16 %v203
      %v293 = vunpack.c.l.b16 %v204
      %v294 = vunpack.c.l.b16 %v205
      %v295 = vunpack.c.l.b16 %v206
      %v296 = vunpack.c.l.b16 %v207
      %v297 = vunpack.c.l.b16 %v208
      %v298 = vunpack.c.l.b16 %v209
      %v299 = vunpack.c.l.b16 %v210
      %v300 = vunpack.c.l.b16 %v211
      %v301 = vunpack.c.l.b16 %v212
      %v302 = vunpack.c.l.b16 %v213
      %v303 = vunpack.c.l.b16 %v214
      %v304 = vunpack.c.l.b16 %v215
      %v305 = vunpack.c.l.b16 %v216
      %v306 = vunpack.c.l.b16 %v217
      %v307 = vunpack.c.l.b16 %v218
      %v308 = vunpack.c.l.b16 %v219
      %v309 = vunpack.c.l.b16 %v220
      %v310 = vunpack.c.l.b16 %v221
      %v311 = vunpack.c.l.b16 %v222
      %v312 = vunpack.c.l.b16 %v223
      %v313 = vunpack.c.l.b16 %v224
      %v314 = vunpack.c.l.b16 %v225
      %v315 = vpack.c.b16 %v291, %v290
      %v316 = vpack.c.b16 %v293, %v292
      %v317 = vpack.c.b16 %v295, %v294
      %v318 = vpack.c.b16 %v297, %v296
      %v319 = vpack.c.b16 %v299, %v298
      %v320 = vpack.c.b16 %v301, %v300
      %v321 = vpack.c.b16 %v303, %v302
      %v322 = vpack.c.b16 %v305, %v304
      %v323 = vpack.c.b16 %v307, %v306
      %v324 = vpack.c.b16 %v309, %v308
      %v325 = vpack.c.b16 %v311, %v310
      %v326 = vpack.c.b16 %v313, %v312
      %v327 = vpack.c.b16 %v314, %v314
      %vm340 = vcmask 572416
      %v342 = vsel %vm340, %v263, 0
      %vm344 = vcmask 1042432
      %v346 = vsel %vm344, %v327, 0
      %348 = vmatprep.subr.bf16.mxu0 0
      %349 = vmatpush1.bf16.msra.mxu0 %v315
      %350 = vmatprep.subr.bf16.mxu0 0
      %351 = vmatpush1.bf16.msra.mxu0 %v316
      %352 = vmatprep.subr.bf16.mxu0 0
      %353 = vmatpush1.bf16.msra.mxu0 %v317
      %354 = vmatprep.subr.bf16.mxu0 0
      %355 = vmatpush1.bf16.msra.mxu0 %v318
      %356 = vmatprep.subr.bf16.mxu0 0
      %357 = vmatpush1.bf16.msra.mxu0 %v319
      %358 = vmatprep.subr.bf16.mxu0 0
      %359 = vmatpush1.bf16.msra.mxu0 %v320
      %360 = vmatprep.subr.bf16.mxu0 0
      %361 = vmatpush1.bf16.msra.mxu0 %v321
      %362 = vmatprep.subr.bf16.mxu0 0
      %363 = vmatpush1.bf16.msra.mxu0 %v322
      %364 = vmatprep.subr.bf16.mxu0 0
      %365 = vmatpush1.bf16.msra.mxu0 %v323
      %366 = vmatprep.subr.bf16.mxu0 0
      %367 = vmatpush1.bf16.msra.mxu0 %v324
      %368 = vmatprep.subr.bf16.mxu0 0
      %369 = vmatpush1.bf16.msra.mxu0 %v325
      %370 = vmatprep.subr.bf16.mxu0 0
      %371 = vmatpush1.bf16.msra.mxu0 %v326
      %372 = vmatprep.subr.bf16.mxu0 0
      %373 = vmatpush1.bf16.msra.mxu0 %v346
      %374 = vmatprep.subr.bf16.mxu0 0
      %375 = vmatpush1.bf16.msra.mxu0 0
      %376 = vmatprep.subr.bf16.mxu0 0
      %377 = vmatpush1.bf16.msra.mxu0 0
      %378 = vmatprep.subr.bf16.mxu0 0
      %379 = vmatpush1.bf16.msra.mxu0 0
      %380 = vmatprep.mubr.bf16.mxu0 %v342
      %381 = vmatmul.mubr.bf16.gmra.mrb[0].mxu0 %v251
      %v382 = vpop.f32.mrb[0].mxu0
      %v383 = vadd.f32 0.0, %v382
      %v384 = vpop.f32.mrb[0].mxu0
      %v385 = vpop.f32.mrb[0].mxu0
      %v386 = vadd.f32 0.0, %v385
      %v387 = vpop.f32.mrb[0].mxu0
      %388 = vdwg.mxu0
      %v415 = vunpack.c.l.b16 %v174
      %v416 = vunpack.c.l.b16 %v175
      %v417 = vunpack.c.l.b16 %v176
      %v418 = vunpack.c.l.b16 %v177
      %v419 = vunpack.c.l.b16 %v178
      %v420 = vunpack.c.l.b16 %v179
      %v421 = vunpack.c.l.b16 %v180
      %v422 = vunpack.c.l.b16 %v181
      %v423 = vunpack.c.l.b16 %v182
      %v424 = vunpack.c.l.b16 %v183
      %v425 = vunpack.c.l.b16 %v184
      %v426 = vunpack.c.l.b16 %v185
      %v427 = vunpack.c.l.b16 %v186
      %v428 = vunpack.c.l.b16 %v187
      %v429 = vunpack.c.l.b16 %v188
      %v430 = vunpack.c.l.b16 %v189
      %v431 = vunpack.c.l.b16 %v190
      %v432 = vunpack.c.l.b16 %v191
      %v433 = vunpack.c.l.b16 %v192
      %v434 = vunpack.c.l.b16 %v193
      %v435 = vunpack.c.l.b16 %v194
      %v436 = vunpack.c.l.b16 %v195
      %v437 = vunpack.c.l.b16 %v196
      %v438 = vunpack.c.l.b16 %v197
      %v439 = vunpack.c.l.b16 %v198
      %v440 = vpack.c.b16 %v416, %v415
      %v441 = vpack.c.b16 %v418, %v417
      %v442 = vpack.c.b16 %v420, %v419
      %v443 = vpack.c.b16 %v422, %v421
      %v444 = vpack.c.b16 %v424, %v423
      %v445 = vpack.c.b16 %v426, %v425
      %v446 = vpack.c.b16 %v428, %v427
      %v447 = vpack.c.b16 %v430, %v429
      %v448 = vpack.c.b16 %v432, %v431
      %v449 = vpack.c.b16 %v434, %v433
      %v450 = vpack.c.b16 %v436, %v435
      %v451 = vpack.c.b16 %v438, %v437
      %v452 = vpack.c.b16 %v439, %v439
      %v465 = vsel %vm340, %v236, 0
      %v468 = vsel %vm344, %v452, 0
      %470 = vmatprep.subr.bf16.mxu0 0
      %471 = vmatpush1.bf16.msra.mxu0 %v440
      %472 = vmatprep.subr.bf16.mxu0 0
      %473 = vmatpush1.bf16.msra.mxu0 %v441
      %474 = vmatprep.subr.bf16.mxu0 0
      %475 = vmatpush1.bf16.msra.mxu0 %v442
      %476 = vmatprep.subr.bf16.mxu0 0
      %477 = vmatpush1.bf16.msra.mxu0 %v443
      %478 = vmatprep.subr.bf16.mxu0 0
      %479 = vmatpush1.bf16.msra.mxu0 %v444
      %480 = vmatprep.subr.bf16.mxu0 0
      %481 = vmatpush1.bf16.msra.mxu0 %v445
      %482 = vmatprep.subr.bf16.mxu0 0
      %483 = vmatpush1.bf16.msra.mxu0 %v446
      %484 = vmatprep.subr.bf16.mxu0 0
      %485 = vmatpush1.bf16.msra.mxu0 %v447
      %486 = vmatprep.subr.bf16.mxu0 0
      %487 = vmatpush1.bf16.msra.mxu0 %v448
      %488 = vmatprep.subr.bf16.mxu0 0
      %489 = vmatpush1.bf16.msra.mxu0 %v449
      %490 = vmatprep.subr.bf16.mxu0 0
      %491 = vmatpush1.bf16.msra.mxu0 %v450
      %492 = vmatprep.subr.bf16.mxu0 0
      %493 = vmatpush1.bf16.msra.mxu0 %v451
      %494 = vmatprep.subr.bf16.mxu0 0
      %495 = vmatpush1.bf16.msra.mxu0 %v468
      %496 = vmatprep.subr.bf16.mxu0 0
      %497 = vmatpush1.bf16.msra.mxu0 0
      %498 = vmatprep.subr.bf16.mxu0 0
      %499 = vmatpush1.bf16.msra.mxu0 0
      %500 = vmatprep.subr.bf16.mxu0 0
      %501 = vmatpush1.bf16.msra.mxu0 0
      %502 = vmatprep.mubr.bf16.mxu0 %v465
      %503 = vmatmul.mubr.bf16.gmra.mrb[0].mxu0 %v235
      %v504 = vpop.f32.mrb[0].mxu0
      %v505 = vadd.f32 %v383, %v504
      %v506 = vpop.f32.mrb[0].mxu0
      %v507 = vpop.f32.mrb[0].mxu0
      %v508 = vadd.f32 %v386, %v507
      %v509 = vpop.f32.mrb[0].mxu0
      %510 = vdwg.mxu0
      %v511 = vld [vmem:[%s165] sm:$0xee]
      %s512 = scalar_lea.vmem %s1, 200
      %v513 = vld [vmem:[%s512] sm:$0xf]
      %v514 = vld [vmem:[%s512 + $0x4] sm:$0xf]
      %v515 = vld [vmem:[%s512 + $0x8] sm:$0xf]
      %v516 = vld [vmem:[%s512 + $0xc] sm:$0xf]
      %v517 = vld [vmem:[%s512 + $0x10] sm:$0xf]
      %v518 = vld [vmem:[%s512 + $0x14] sm:$0xf]
      %v519 = vld [vmem:[%s512 + $0x18] sm:$0xf]
      %v520 = vld [vmem:[%s512 + $0x1c] sm:$0xf]
      %v521 = vld [vmem:[%s512 + $0x20] sm:$0xf]
      %v522 = vld [vmem:[%s512 + $0x24] sm:$0xf]
      %v523 = vld [vmem:[%s512 + $0x28] sm:$0xf]
      %v524 = vld [vmem:[%s512 + $0x2c] sm:$0xf]
      %v525 = vld [vmem:[%s512 + $0x30] sm:$0xf]
      %v526 = vld [vmem:[%s512 + $0x34] sm:$0xf]
      %v527 = vld [vmem:[%s512 + $0x38] sm:$0xf]
      %v528 = vld [vmem:[%s512 + $0x3c] sm:$0xf]
      %v529 = vld [vmem:[%s512 + $0x40] sm:$0xf]
      %v530 = vld [vmem:[%s512 + $0x44] sm:$0xf]
      %v531 = vld [vmem:[%s512 + $0x48] sm:$0xf]
      %v532 = vld [vmem:[%s512 + $0x4c] sm:$0xf]
      %v533 = vld [vmem:[%s512 + $0x50] sm:$0xf]
      %v534 = vld [vmem:[%s512 + $0x54] sm:$0xf]
      %v535 = vld [vmem:[%s512 + $0x58] sm:$0xf]
      %v536 = vld [vmem:[%s512 + $0x5c] sm:$0xf]
      %v537 = vld [vmem:[%s512 + $0x60] sm:$0x7]
      %v539 = vunpack.c.l.b16 %v511
      %v540 = vunpack.c.h.b16 %v511
      %v541 = vpack.c.b16 %v231, %v539
      %v542 = vpack.c.b16 %v232, %v540
      %vm543 = vcmask 1046528
      %v544 = vrot.slane %v541, 1
      %v545 = vrot.slane %v237, 1
      %v546 = vsel %vm543, %v544, %v545
      %v547 = vrot.slane %v542, 1
      %v548 = vrot.slane %v238, 1
      %v549 = vsel %vm543, %v547, %v548
      %v576 = vunpack.c.l.b16 %v513
      %v577 = vunpack.c.l.b16 %v514
      %v578 = vunpack.c.l.b16 %v515
      %v579 = vunpack.c.l.b16 %v516
      %v580 = vunpack.c.l.b16 %v517
      %v581 = vunpack.c.l.b16 %v518
      %v582 = vunpack.c.l.b16 %v519
      %v583 = vunpack.c.l.b16 %v520
      %v584 = vunpack.c.l.b16 %v521
      %v585 = vunpack.c.l.b16 %v522
      %v586 = vunpack.c.l.b16 %v523
      %v587 = vunpack.c.l.b16 %v524
      %v588 = vunpack.c.l.b16 %v525
      %v589 = vunpack.c.l.b16 %v526
      %v590 = vunpack.c.l.b16 %v527
      %v591 = vunpack.c.l.b16 %v528
      %v592 = vunpack.c.l.b16 %v529
      %v593 = vunpack.c.l.b16 %v530
      %v594 = vunpack.c.l.b16 %v531
      %v595 = vunpack.c.l.b16 %v532
      %v596 = vunpack.c.l.b16 %v533
      %v597 = vunpack.c.l.b16 %v534
      %v598 = vunpack.c.l.b16 %v535
      %v599 = vunpack.c.l.b16 %v536
      %v600 = vunpack.c.l.b16 %v537
      %v601 = vpack.c.b16 %v577, %v576
      %v602 = vpack.c.b16 %v579, %v578
      %v603 = vpack.c.b16 %v581, %v580
      %v604 = vpack.c.b16 %v583, %v582
      %v605 = vpack.c.b16 %v585, %v584
      %v606 = vpack.c.b16 %v587, %v586
      %v607 = vpack.c.b16 %v589, %v588
      %v608 = vpack.c.b16 %v591, %v590
      %v609 = vpack.c.b16 %v593, %v592
      %v610 = vpack.c.b16 %v595, %v594
      %v611 = vpack.c.b16 %v597, %v596
      %v612 = vpack.c.b16 %v599, %v598
      %v613 = vpack.c.b16 %v600, %v600
      %v627 = vsel %vm340, %v549, 0
      %v630 = vsel %vm344, %v613, 0
      %632 = vmatprep.subr.bf16.mxu0 0
      %633 = vmatpush1.bf16.msra.mxu0 %v601
      %634 = vmatprep.subr.bf16.mxu0 0
      %635 = vmatpush1.bf16.msra.mxu0 %v602
      %636 = vmatprep.subr.bf16.mxu0 0
      %637 = vmatpush1.bf16.msra.mxu0 %v603
      %638 = vmatprep.subr.bf16.mxu0 0
      %639 = vmatpush1.bf16.msra.mxu0 %v604
      %640 = vmatprep.subr.bf16.mxu0 0
      %641 = vmatpush1.bf16.msra.mxu0 %v605
      %642 = vmatprep.subr.bf16.mxu0 0
      %643 = vmatpush1.bf16.msra.mxu0 %v606
      %644 = vmatprep.subr.bf16.mxu0 0
      %645 = vmatpush1.bf16.msra.mxu0 %v607
      %646 = vmatprep.subr.bf16.mxu0 0
      %647 = vmatpush1.bf16.msra.mxu0 %v608
      %648 = vmatprep.subr.bf16.mxu0 0
      %649 = vmatpush1.bf16.msra.mxu0 %v609
      %650 = vmatprep.subr.bf16.mxu0 0
      %651 = vmatpush1.bf16.msra.mxu0 %v610
      %652 = vmatprep.subr.bf16.mxu0 0
      %653 = vmatpush1.bf16.msra.mxu0 %v611
      %654 = vmatprep.subr.bf16.mxu0 0
      %655 = vmatpush1.bf16.msra.mxu0 %v612
      %656 = vmatprep.subr.bf16.mxu0 0
      %657 = vmatpush1.bf16.msra.mxu0 %v630
      %658 = vmatprep.subr.bf16.mxu0 0
      %659 = vmatpush1.bf16.msra.mxu0 0
      %660 = vmatprep.subr.bf16.mxu0 0
      %661 = vmatpush1.bf16.msra.mxu0 0
      %662 = vmatprep.subr.bf16.mxu0 0
      %663 = vmatpush1.bf16.msra.mxu0 0
      %664 = vmatprep.mubr.bf16.mxu0 %v627
      %665 = vmatmul.mubr.bf16.gmra.mrb[0].mxu0 %v546
      %v666 = vpop.f32.mrb[0].mxu0
      %v667 = vadd.f32 0.0, %v666
      %v668 = vpop.f32.mrb[0].mxu0
      %v669 = vpop.f32.mrb[0].mxu0
      %v670 = vadd.f32 0.0, %v669
      %v671 = vpop.f32.mrb[0].mxu0
      %672 = vdwg.mxu0
      %v673 = vadd.f32 %v505, %v667
      %v674 = vadd.f32 %v508, %v670
      %v675 = vld [vmem:[%s2] sm:$0x1]
      %v677 = vlaneseq
      %v678 = vshrl.u32 %v677, 7
      %v679 = vsub.s32 0, %v678
      %v680 = vrot.slane %v675, %v679
      %v682 = vadd.f32 %v673, %v680
      %v683 = vadd.f32 %v674, %v680
      %v684 = vtanh.pop %v682
      %v685 = vtanh.pop %v683
      %v686 = vpack.c.bf16 %v685, %v684
      %v688 = vunpack.c.l.b16 %v686
      %v689 = vunpack.c.h.b16 %v686
      %v690 = vpack.c.b16 %v688, %v688
      %v691 = vpack.c.b16 %v689, %v689
      %vm694 = vcmask 388096
      %695 = vst.msk [vmem:[%s170] sm:$0xf] %vm694, %v690
      %696 = vst.msk [vmem:[%s170 + $0x4] sm:$0xf] %vm694, %v691
      %p697 = scmp.lt.s32.totalorder %s14, 3
      %s698 = scalar_select %p697, %s14, 3
      %s699 = smul.addr %s698, 2
      %s700 = smul.addr %s699, 4
      %s701 = scalar_lea.vmem %s3, %s700
      // Predicated region
      $region33: #{iasmnet_forward.19} parent=31 // pred_check
        %p702 = pneg %p100
      $region34: #{iasmnet_forward.19} parent=31 // pred_check_branch
        %704 = sbr.rel (%p702) target = $region36
      $region35: #{iasmnet_forward.19} parent=31 // pred_region
        _
      $region36: #{iasmnet_forward.19} parent=31 // pred_fallthru
        _
    $region32: #{iasmnet_forward.19} parent=5 // pred_fallthru
      _
    %p705 = scmp.le.s32.totalorder 2, %s9
    // Predicated region
    $region37: #{iasmnet_forward.19} parent=5 // pred_check
      %p706 = pneg %p705
    $region38: #{iasmnet_forward.19} parent=5 // pred_check_branch
      %708 = sbr.rel (%p706) target = $region40
    $region39: #{iasmnet_forward.19} parent=5 // pred_region
      %s709 = ssub.s32 %s9, 2
      // Predicated region
      $region41: #{iasmnet_forward.19} parent=39 // pred_check
        %p710 = pneg %p106
      $region42: #{iasmnet_forward.19} parent=39 // pred_check_branch
        %712 = sbr.rel (%p710) target = $region44
      $region43: #{iasmnet_forward.19} parent=39 // pred_region
        %p713 = scmp.lt.s32.totalorder %s15, 3
        %s714 = scalar_select %p713, %s15, 3
        %s715 = smul.addr %s714, 2
        %s716 = smul.addr %s715, 4
        %s717 = scalar_lea.vmem %s3, %s716
      $region44: #{iasmnet_forward.19} parent=39 // pred_fallthru
        _
    $region40: #{iasmnet_forward.19} parent=5 // pred_fallthru
      _
  $region6: #{iasmnet_forward.19} parent=0 // loop_footer
    %s13 = sadd.s32 1, %s9
  $region7: #{iasmnet_forward.19} parent=0 // loop_footer_branch
    %8 = sbr.rel target = $region3
  $region8: #{iasmnet_forward.19} parent=0 // loop_exit
    _

// kernel: iasmnet_forward.16
$region0: #{iasmnet_forward.16}
  #allocation0 [shape = 'u32[]', space=smem, size = 0x4, offset = 0x4, fixed_abs, tag = 'smem constant byte address 0x4 - core index']
  #allocation1 [shape = 'u32[144,128]{1,0:T(1,128)}', space=vmem, size = 0x12000, scoped, tag = 'internal scratch']
  %s0 = inlined_call_operand.vmem [shape: bf16[2,4,4,16], index: 0, kind: input, shape index: {}]
  %s1 = inlined_call_operand.vmem [shape: bf16[2,4,4,16], index: 1, kind: input, shape index: {}]
  %s2 = inlined_call_operand.vmem [shape: f32[2,4,4], index: 2, kind: output, shape index: {}]
  %s3 = sld [smem:[#allocation0]]
  $region41: #{iasmnet_forward.16} parent=0
    _
  %s5 = ssub.s32 1, %s3
  %s6 = scalar_select 0, %s5, %s3
  loop: start=0, step=1, limit=4
  $region2: #{iasmnet_forward.16} parent=0 // loop_pre_header
    _
  $region3: #{iasmnet_forward.16} parent=0 // loop_header
    %s8 = sphi 0, %s12
    %p9 = scmp.ge.s32.totalorder %s8, 4
    %s18 = sphi 0, %s20
    %s21 = sphi 0, %s18
    %s22 = sphi 0, %s21
    %s38 = sphi 0, %s22
    %s44 = sphi 0, %s46
    %s47 = sphi 0, %s44
    %s48 = sphi 0, %s47
    %s64 = sphi 0, %s48
    %s70 = sphi 0, %s72
    %s73 = sphi 0, %s70
    %s74 = sphi 0, %s73
    %s90 = sphi 0, %s74
  $region4: #{iasmnet_forward.16} parent=0 // loop_header_branch
    %11 = sbr.rel (%p9) target = $region8
  $region5: #{iasmnet_forward.16} parent=0 // loop_body
    %s13 = ssub.s32 %s8, 1
    %s14 = ssub.s32 %s8, 2
    %s15 = sadd.s32 %s8, 1
    %s16 = ssub.s32 %s8, %s15
    %p17 = scmp.eq.s32.totalorder %s16, 0
    %s19 = sadd.s32 %s18, 1
    %s20 = scalar_select %p17, %s18, %s19
    %p23 = pneg %p17
    %p24 = scmp.eq.s32.totalorder %s8, 1
    %p25 = por %p23, %p24
    %p26 = scmp.ne.s32.totalorder %s18, %s21
    %p27 = scmp.eq.s32.totalorder %s8, 0
    %p28 = por %p26, %p27
    %p29 = scmp.ne.s32.totalorder %s18, %s21
    %p30 = scmp.eq.s32.totalorder %s13, 1
    %p31 = por %p29, %p30
    %p32 = scmp.ne.s32.totalorder %s21, %s22
    %p33 = scmp.eq.s32.totalorder %s13, 0
    %p34 = por %p32, %p33
    %p35 = scmp.ne.s32.totalorder %s21, %s22
    %p36 = scmp.eq.s32.totalorder %s14, 1
    %p37 = por %p35, %p36
    %p39 = scmp.ne.s32.totalorder %s22, %s38
    %p40 = scmp.eq.s32.totalorder %s14, 0
    %p41 = por %p39, %p40
    %s42 = ssub.s32 %s8, %s15
    %p43 = scmp.eq.s32.totalorder %s42, 0
    %s45 = sadd.s32 %s44, 1
    %s46 = scalar_select %p43, %s44, %s45
    %p49 = pneg %p43
    %p50 = scmp.eq.s32.totalorder %s8, 1
    %p51 = por %p49, %p50
    %p52 = scmp.ne.s32.totalorder %s44, %s47
    %p53 = scmp.eq.s32.totalorder %s8, 0
    %p54 = por %p52, %p53
    %p55 = scmp.ne.s32.totalorder %s44, %s47
    %p56 = scmp.eq.s32.totalorder %s13, 1
    %p57 = por %p55, %p56
    %p58 = scmp.ne.s32.totalorder %s47, %s48
    %p59 = scmp.eq.s32.totalorder %s13, 0
    %p60 = por %p58, %p59
    %p61 = scmp.ne.s32.totalorder %s47, %s48
    %p62 = scmp.eq.s32.totalorder %s14, 1
    %p63 = por %p61, %p62
    %p65 = scmp.ne.s32.totalorder %s48, %s64
    %p66 = scmp.eq.s32.totalorder %s14, 0
    %p67 = por %p65, %p66
    %s68 = ssub.s32 %s8, %s15
    %p69 = scmp.eq.s32.totalorder %s68, 0
    %s71 = sadd.s32 %s70, 1
    %s72 = scalar_select %p69, %s70, %s71
    %p75 = pneg %p69
    %p76 = scmp.eq.s32.totalorder %s8, 1
    %p77 = por %p75, %p76
    %p78 = scmp.ne.s32.totalorder %s70, %s73
    %p79 = scmp.eq.s32.totalorder %s8, 0
    %p80 = por %p78, %p79
    %p81 = scmp.ne.s32.totalorder %s70, %s73
    %p82 = scmp.eq.s32.totalorder %s13, 1
    %p83 = por %p81, %p82
    %p84 = scmp.ne.s32.totalorder %s73, %s74
    %p85 = scmp.eq.s32.totalorder %s13, 0
    %p86 = por %p84, %p85
    %p87 = scmp.ne.s32.totalorder %s73, %s74
    %p88 = scmp.eq.s32.totalorder %s14, 1
    %p89 = por %p87, %p88
    %p91 = scmp.ne.s32.totalorder %s74, %s90
    %p92 = scmp.eq.s32.totalorder %s14, 0
    %p93 = por %p91, %p92
    %p94 = scmp.le.s32.totalorder 1, %s8
    %p95 = scmp.lt.s32.totalorder %s8, 3
    %p96 = pnand %p94, %p95
    %p97 = pneg %p96
    // Predicated region
    $region9: #{iasmnet_forward.16} parent=5 // pred_check
      _
    $region10: #{iasmnet_forward.16} parent=5 // pred_check_branch
      %99 = sbr.rel (%p96) target = $region12
    $region11: #{iasmnet_forward.16} parent=5 // pred_region
      %s100 = ssub.s32 %s8, 1
    $region12: #{iasmnet_forward.16} parent=5 // pred_fallthru
      _
    %p101 = scmp.lt.s32.totalorder %s8, 2
    // Predicated region
    $region13: #{iasmnet_forward.16} parent=5 // pred_check
      %p102 = pneg %p101
    $region14: #{iasmnet_forward.16} parent=5 // pred_check_branch
      %104 = sbr.rel (%p102) target = $region16
    $region15: #{iasmnet_forward.16} parent=5 // pred_region
      // Predicated region
      $region17: #{iasmnet_forward.16} parent=15 // pred_check
        %p105 = pneg %p28
      $region18: #{iasmnet_forward.16} parent=15 // pred_check_branch
        %107 = sbr.rel (%p105) target = $region20
      $region19: #{iasmnet_forward.16} parent=15 // pred_region
        %p108 = scmp.lt.s32.totalorder %s8, 1
        %s109 = scalar_select %p108, %s8, 1
        %s110 = smul.addr %s109, 4
        %s111 = smul.addr %s110, 2
        %s112 = scalar_lea.vmem %s0, %s111
      $region20: #{iasmnet_forward.16} parent=15 // pred_fallthru
        _
      // Predicated region
      $region21: #{iasmnet_forward.16} parent=15 // pred_check
        %p113 = pneg %p54
      $region22: #{iasmnet_forward.16} parent=15 // pred_check_branch
        %115 = sbr.rel (%p113) target = $region24
      $region23: #{iasmnet_forward.16} parent=15 // pred_region
        %p116 = scmp.lt.s32.totalorder %s8, 1
        %s117 = scalar_select %p116, %s8, 1
        %s118 = smul.addr %s117, 4
        %s119 = smul.addr %s118, 2
        %s120 = scalar_lea.vmem %s1, %s119
      $region24: #{iasmnet_forward.16} parent=15 // pred_fallthru
        _
    $region16: #{iasmnet_forward.16} parent=5 // pred_fallthru
      _
    %p121 = scmp.le.s32.totalorder 1, %s8
    %p122 = scmp.lt.s32.totalorder %s8, 3
    %p123 = pnand %p121, %p122
    %p124 = pneg %p123
    // Predicated region
    $region25: #{iasmnet_forward.16} parent=5 // pred_check
      _
    $region26: #{iasmnet_forward.16} parent=5 // pred_check_branch
      %126 = sbr.rel (%p123) target = $region28
    $region27: #{iasmnet_forward.16} parent=5 // pred_region
      %s127 = ssub.s32 %s8, 1
      %p128 = scmp.lt.s32.totalorder %s13, 1
      %s129 = scalar_select %p128, %s13, 1
      %s130 = smul.addr %s129, 4
      %s131 = smul.addr %s130, 2
      %s132 = scalar_lea.vmem %s0, %s131
      %p133 = pneg %p34
      %p134 = pneg %p31
      %p135 = scmp.lt.s32.totalorder %s13, 1
      %s136 = scalar_select %p135, %s13, 1
      %s137 = smul.addr %s136, 4
      %s138 = smul.addr %s137, 2
      %s139 = scalar_lea.vmem %s1, %s138
      %p140 = pneg %p60
      %p141 = pneg %p57
      %p142 = pneg %p86
      %p143 = pneg %p83
      %p144 = scmp.lt.s32.totalorder %s13, 1
      %s145 = scalar_select %p144, %s13, 1
      %s146 = smul.addr %s145, 4
      %s147 = scalar_lea.vmem %s2, %s146
      %p148 = scmp.lt.s32.totalorder %s13, 1
      %s149 = scalar_select %p148, %s13, 1
      %s150 = smul.addr %s149, 4
      %s151 = smul.addr %s150, 2
      %s152 = scalar_lea.vmem %s0, %s151
      %p153 = scmp.lt.s32.totalorder %s13, 1
      %s154 = scalar_select %p153, %s13, 1
      %s155 = smul.addr %s154, 4
      %s156 = smul.addr %s155, 2
      %s157 = scalar_lea.vmem %s1, %s156
      %p158 = scmp.lt.s32.totalorder %s13, 1
      %s159 = scalar_select %p158, %s13, 1
      %s160 = smul.addr %s159, 4
      %s161 = scalar_lea.vmem %s2, %s160
      %v162 = vld [vmem:[%s152] sm:$0x3]
      %v163 = vld [vmem:[%s152 + $0x2] sm:$0x3]
      %v164 = vld [vmem:[%s152 + $0x4] sm:$0x3]
      %v165 = vld [vmem:[%s152 + $0x6] sm:$0x3]
      %v166 = vunpack.c.l.bf16 %v162
      %v167 = vunpack.c.l.bf16 %v163
      %v168 = vunpack.c.l.bf16 %v164
      %v169 = vunpack.c.l.bf16 %v165
      %v170 = vld [vmem:[%s157] sm:$0x3]
      %v171 = vld [vmem:[%s157 + $0x2] sm:$0x3]
      %v172 = vld [vmem:[%s157 + $0x4] sm:$0x3]
      %v173 = vld [vmem:[%s157 + $0x6] sm:$0x3]
      %v174 = vunpack.c.l.bf16 %v170
      %v175 = vunpack.c.l.bf16 %v171
      %v176 = vunpack.c.l.bf16 %v172
      %v177 = vunpack.c.l.bf16 %v173
      %v178 = vlaneseq
      %v179 = vand.u32 %v178, 127
      %v180 = vmul.f32 %v166, %v174
      %v181 = vmul.f32 %v167, %v175
      %v182 = vmul.f32 %v168, %v176
      %v183 = vmul.f32 %v169, %v177
      %vm184 = vcmask 125952
      %v185 = vsel %vm184, %v180, 0.0
      %186 = vadd.xlane.f32.xlu0 %v185
      %v187 = vpop.xlane.xlu0 %186
      %v188 = vsel %vm184, %v181, 0.0
      %189 = vadd.xlane.f32.xlu0 %v188
      %v190 = vpop.xlane.xlu0 %189
      %v191 = vsel %vm184, %v182, 0.0
      %192 = vadd.xlane.f32.xlu0 %v191
      %v193 = vpop.xlane.xlu0 %192
      %v194 = vsel %vm184, %v183, 0.0
      %195 = vadd.xlane.f32.xlu0 %v194
      %v196 = vpop.xlane.xlu0 %195
      %v197 = vmul.f32 %v187, 0.0625
      %v198 = vmul.f32 %v190, 0.0625
      %v199 = vmul.f32 %v193, 0.0625
      %v200 = vmul.f32 %v196, 0.0625
      %v201 = vmax.f32 %v197, -1e+30
      %v202 = vmax.f32 %v198, -1e+30
      %v203 = vmax.f32 %v199, -1e+30
      %v204 = vmax.f32 %v200, -1e+30
      %v205 = vsub.f32 -1e+30, %v201
      %v206 = vsub.f32 -1e+30, %v202
      %v207 = vsub.f32 -1e+30, %v203
      %v208 = vsub.f32 -1e+30, %v204
      %v209 = vmul.f32 %v205, 1.442695
      %v210 = vpow.pop %v209
      %v211 = vmul.f32 %v206, 1.442695
      %v212 = vpow.pop %v211
      %v213 = vmul.f32 %v207, 1.442695
      %v214 = vpow.pop %v213
      %v215 = vmul.f32 %v208, 1.442695
      %v216 = vpow.pop %v215
      %v217 = vsub.f32 %v197, %v201
      %v218 = vsub.f32 %v198, %v202
      %v219 = vsub.f32 %v199, %v203
      %v220 = vsub.f32 %v200, %v204
      %v221 = vmul.f32 %v217, 1.442695
      %v222 = vpow.pop %v221
      %v223 = vmul.f32 %v218, 1.442695
      %v224 = vpow.pop %v223
      %v225 = vmul.f32 %v219, 1.442695
      %v226 = vpow.pop %v225
      %v227 = vmul.f32 %v220, 1.442695
      %v228 = vpow.pop %v227
      %v229 = vmul.f32 %v210, 0.0
      %v230 = vmul.f32 %v212, 0.0
      %v231 = vmul.f32 %v214, 0.0
      %v232 = vmul.f32 %v216, 0.0
      %v233 = vadd.f32 %v229, %v222
      %v234 = vadd.f32 %v230, %v224
      %v235 = vadd.f32 %v231, %v226
      %v236 = vadd.f32 %v232, %v228
      %v237 = vmul.f32 %v222, 0.0
      %v238 = vmul.f32 %v224, 0.0
      %v239 = vmul.f32 %v226, 0.0
      %v240 = vmul.f32 %v228, 0.0
      %v241 = vadd.f32 %v229, %v237
      %v242 = vadd.f32 %v230, %v238
      %v243 = vadd.f32 %v231, %v239
      %v244 = vadd.f32 %v232, %v240
      %v249 = vrot.slane %v174, 1
      %v250 = vrot.slane %v175, 1
      %v251 = vrot.slane %v176, 1
      %v252 = vrot.slane %v177, 1
      %vm257 = vcmask 1042432
      %v258 = vsel %vm257, %v249, 0.0
      %v259 = vsel %vm257, %v250, 0.0
      %v260 = vsel %vm257, %v251, 0.0
      %v261 = vsel %vm257, %v252, 0.0
      %v262 = vmul.f32 %v166, %v258
      %v263 = vmul.f32 %v167, %v259
      %v264 = vmul.f32 %v168, %v260
      %v265 = vmul.f32 %v169, %v261
      %v266 = vsel %vm184, %v262, 0.0
      %267 = vadd.xlane.f32.xlu0 %v266
      %v268 = vpop.xlane.xlu0 %267
      %v269 = vsel %vm184, %v263, 0.0
      %270 = vadd.xlane.f32.xlu0 %v269
      %v271 = vpop.xlane.xlu0 %270
      %v272 = vsel %vm184, %v264, 0.0
      %273 = vadd.xlane.f32.xlu0 %v272
      %v274 = vpop.xlane.xlu0 %273
      %v275 = vsel %vm184, %v265, 0.0
      %276 = vadd.xlane.f32.xlu0 %v275
      %v277 = vpop.xlane.xlu0 %276
      %v278 = vmul.f32 %v268, 0.0625
      %v279 = vmul.f32 %v271, 0.0625
      %v280 = vmul.f32 %v274, 0.0625
      %v281 = vmul.f32 %v277, 0.0625
      %vm282 = vcmp.lt.s32.totalorder %v179, 3
      %v287 = vlaneseq
      %v288 = vshrl.u32 %v287, 7
      %v289 = vsub.s32 %v179, %v288
      %v290 = vrot.slane %v278, %v289
      %v291 = vlaneseq
      %v292 = vshrl.u32 %v291, 7
      %v293 = vsub.s32 %v179, %v292
      %v294 = vrot.slane %v279, %v293
      %v295 = vlaneseq
      %v296 = vshrl.u32 %v295, 7
      %v297 = vsub.s32 %v179, %v296
      %v298 = vrot.slane %v280, %v297
      %v299 = vlaneseq
      %v300 = vshrl.u32 %v299, 7
      %v301 = vsub.s32 %v179, %v300
      %v302 = vrot.slane %v281, %v301
      %vm303 = vcmask 1041409
      %v304 = vsel %vm303, %v294, %v290
      %vm305 = vcmask 1042434
      %v306 = vsel %vm305, %v298, %v304
      %vm307 = vcmask 1043459
      %v308 = vsel %vm307, %v302, %v306
      %v310 = vsel %vm282, %v308, -1e+30
      %v312 = vlaneseq
      %v313 = vshrl.u32 %v312, 7
      %v314 = vsub.s32 0, %v313
      %v315 = vrot.slane %v310, %v314
      %317 = vbcast.lane.b32.xlu0 %v315, 256
      %v318 = vpop.permute.xlu0 %317
      %v319 = vlaneseq
      %v320 = vshrl.u32 %v319, 7
      %v321 = vsub.s32 1, %v320
      %v322 = vrot.slane %v310, %v321
      %324 = vbcast.lane.b32.xlu0 %v322, 256
      %v325 = vpop.permute.xlu0 %324
      %v326 = vlaneseq
      %v327 = vshrl.u32 %v326, 7
      %v328 = vsub.s32 2, %v327
      %v329 = vrot.slane %v310, %v328
      %331 = vbcast.lane.b32.xlu0 %v329, 256
      %v332 = vpop.permute.xlu0 %331
      %v333 = vlaneseq
      %v334 = vshrl.u32 %v333, 7
      %v335 = vsub.s32 3, %v334
      %v336 = vrot.slane %v310, %v335
      %338 = vbcast.lane.b32.xlu0 %v336, 256
      %v339 = vpop.permute.xlu0 %338
      %v344 = vmax.f32 %v201, %v318
      %v345 = vmax.f32 %v202, %v325
      %v346 = vmax.f32 %v203, %v332
      %v347 = vmax.f32 %v204, %v339
      %v348 = vsub.f32 %v201, %v344
      %v349 = vsub.f32 %v202, %v345
      %v350 = vsub.f32 %v203, %v346
      %v351 = vsub.f32 %v204, %v347
      %v352 = vmul.f32 %v348, 1.442695
      %v353 = vpow.pop %v352
      %v354 = vmul.f32 %v349, 1.442695
      %v355 = vpow.pop %v354
      %v356 = vmul.f32 %v350, 1.442695
      %v357 = vpow.pop %v356
      %v358 = vmul.f32 %v351, 1.442695
      %v359 = vpow.pop %v358
      %364 = vset.pattern.permute.xlu0 0
      %365 = vperm.xlu0 %364, %v344
      %v366 = vpop.permute.xlu0 %365
      %367 = vset.pattern.permute.xlu0 0
      %368 = vperm.xlu0 %367, %v345
      %v369 = vpop.permute.xlu0 %368
      %370 = vset.pattern.permute.xlu0 0
      %371 = vperm.xlu0 %370, %v346
      %v372 = vpop.permute.xlu0 %371
      %373 = vset.pattern.permute.xlu0 0
      %374 = vperm.xlu0 %373, %v347
      %v375 = vpop.permute.xlu0 %374
      %v376 = vlaneseq
      %v377 = vshrl.u32 %v376, 7
      %v378 = vsub.s32 %v179, %v377
      %v379 = vrot.slane %v366, %v378
      %v380 = vlaneseq
      %v381 = vshrl.u32 %v380, 7
      %v382 = vsub.s32 %v179, %v381
      %v383 = vrot.slane %v369, %v382
      %v384 = vlaneseq
      %v385 = vshrl.u32 %v384, 7
      %v386 = vsub.s32 %v179, %v385
      %v387 = vrot.slane %v372, %v386
      %v388 = vlaneseq
      %v389 = vshrl.u32 %v388, 7
      %v390 = vsub.s32 %v179, %v389
      %v391 = vrot.slane %v375, %v390
      %v392 = vsel %vm303, %v383, %v379
      %v393 = vsel %vm305, %v387, %v392
      %v394 = vsel %vm307, %v391, %v393
      %v396 = vsub.f32 %v310, %v394
      %v397 = vmul.f32 %v396, 1.442695
      %v398 = vpow.pop %v397
      %v399 = vmul.f32 %v233, %v353
      %v400 = vmul.f32 %v234, %v355
      %v401 = vmul.f32 %v235, %v357
      %v402 = vmul.f32 %v236, %v359
      %v404 = vlaneseq
      %v405 = vshrl.u32 %v404, 7
      %v406 = vsub.s32 0, %v405
      %v407 = vrot.slane %v398, %v406
      %409 = vbcast.lane.b32.xlu0 %v407, 256
      %v410 = vpop.permute.xlu0 %409
      %v411 = vlaneseq
      %v412 = vshrl.u32 %v411, 7
      %v413 = vsub.s32 1, %v412
      %v414 = vrot.slane %v398, %v413
      %416 = vbcast.lane.b32.xlu0 %v414, 256
      %v417 = vpop.permute.xlu0 %416
      %v418 = vlaneseq
      %v419 = vshrl.u32 %v418, 7
      %v420 = vsub.s32 2, %v419
      %v421 = vrot.slane %v398, %v420
      %423 = vbcast.lane.b32.xlu0 %v421, 256
      %v424 = vpop.permute.xlu0 %423
      %v425 = vlaneseq
      %v426 = vshrl.u32 %v425, 7
      %v427 = vsub.s32 3, %v426
      %v428 = vrot.slane %v398, %v427
      %430 = vbcast.lane.b32.xlu0 %v428, 256
      %v431 = vpop.permute.xlu0 %430
      %v436 = vadd.f32 %v399, %v410
      %v437 = vadd.f32 %v400, %v417
      %v438 = vadd.f32 %v401, %v424
      %v439 = vadd.f32 %v402, %v431
      %v440 = vmul.f32 %v241, %v353
      %v441 = vmul.f32 %v242, %v355
      %v442 = vmul.f32 %v243, %v357
      %v443 = vmul.f32 %v244, %v359
      %v444 = vadd.f32 %v440, %v410
      %v445 = vadd.f32 %v441, %v417
      %v446 = vadd.f32 %v442, %v424
      %v447 = vadd.f32 %v443, %v431
      %v448 = vrot.slane %v174, 2
      %v449 = vrot.slane %v175, 2
      %v450 = vrot.slane %v176, 2
      %v451 = vrot.slane %v177, 2
      %vm456 = vcmask 1041408
      %v457 = vsel %vm456, %v448, 0.0
      %v458 = vsel %vm456, %v449, 0.0
      %v459 = vsel %vm456, %v450, 0.0
      %v460 = vsel %vm456, %v451, 0.0
      %v461 = vmul.f32 %v166, %v457
      %v462 = vmul.f32 %v167, %v458
      %v463 = vmul.f32 %v168, %v459
      %v464 = vmul.f32 %v169, %v460
      %v465 = vsel %vm184, %v461, 0.0
      %466 = vadd.xlane.f32.xlu0 %v465
      %v467 = vpop.xlane.xlu0 %466
      %v468 = vsel %vm184, %v462, 0.0
      %469 = vadd.xlane.f32.xlu0 %v468
      %v470 = vpop.xlane.xlu0 %469
      %v471 = vsel %vm184, %v463, 0.0
      %472 = vadd.xlane.f32.xlu0 %v471
      %v473 = vpop.xlane.xlu0 %472
      %v474 = vsel %vm184, %v464, 0.0
      %475 = vadd.xlane.f32.xlu0 %v474
      %v476 = vpop.xlane.xlu0 %475
      %v477 = vmul.f32 %v467, 0.0625
      %v478 = vmul.f32 %v470, 0.0625
      %v479 = vmul.f32 %v473, 0.0625
      %v480 = vmul.f32 %v476, 0.0625
      %vm481 = vcmp.lt.s32.totalorder %v179, 2
      %v486 = vlaneseq
      %v487 = vshrl.u32 %v486, 7
      %v488 = vsub.s32 %v179, %v487
      %v489 = vrot.slane %v477, %v488
      %v490 = vlaneseq
      %v491 = vshrl.u32 %v490, 7
      %v492 = vsub.s32 %v179, %v491
      %v493 = vrot.slane %v478, %v492
      %v494 = vlaneseq
      %v495 = vshrl.u32 %v494, 7
      %v496 = vsub.s32 %v179, %v495
      %v497 = vrot.slane %v479, %v496
      %v498 = vlaneseq
      %v499 = vshrl.u32 %v498, 7
      %v500 = vsub.s32 %v179, %v499
      %v501 = vrot.slane %v480, %v500
      %v502 = vsel %vm303, %v493, %v489
      %v503 = vsel %vm305, %v497, %v502
      %v504 = vsel %vm307, %v501, %v503
      %v506 = vsel %vm481, %v504, -1e+30
      %v508 = vlaneseq
      %v509 = vshrl.u32 %v508, 7
      %v510 = vsub.s32 0, %v509
      %v511 = vrot.slane %v506, %v510
      %513 = vbcast.lane.b32.xlu0 %v511, 256
      %v514 = vpop.permute.xlu0 %513
      %v515 = vlaneseq
      %v516 = vshrl.u32 %v515, 7
      %v517 = vsub.s32 1, %v516
      %v518 = vrot.slane %v506, %v517
      %520 = vbcast.lane.b32.xlu0 %v518, 256
      %v521 = vpop.permute.xlu0 %520
      %v522 = vlaneseq
      %v523 = vshrl.u32 %v522, 7
      %v524 = vsub.s32 2, %v523
      %v525 = vrot.slane %v506, %v524
      %527 = vbcast.lane.b32.xlu0 %v525, 256
      %v528 = vpop.permute.xlu0 %527
      %v529 = vlaneseq
      %v530 = vshrl.u32 %v529, 7
      %v531 = vsub.s32 3, %v530
      %v532 = vrot.slane %v506, %v531
      %534 = vbcast.lane.b32.xlu0 %v532, 256
      %v535 = vpop.permute.xlu0 %534
      %v540 = vmax.f32 %v344, %v514
      %v541 = vmax.f32 %v345, %v521
      %v542 = vmax.f32 %v346, %v528
      %v543 = vmax.f32 %v347, %v535
      %v544 = vsub.f32 %v344, %v540
      %v545 = vsub.f32 %v345, %v541
      %v546 = vsub.f32 %v346, %v542
      %v547 = vsub.f32 %v347, %v543
      %v548 = vmul.f32 %v544, 1.442695
      %v549 = vpow.pop %v548
      %v550 = vmul.f32 %v545, 1.442695
      %v551 = vpow.pop %v550
      %v552 = vmul.f32 %v546, 1.442695
      %v553 = vpow.pop %v552
      %v554 = vmul.f32 %v547, 1.442695
      %v555 = vpow.pop %v554
      %560 = vset.pattern.permute.xlu0 0
      %561 = vperm.xlu0 %560, %v540
      %v562 = vpop.permute.xlu0 %561
      %563 = vset.pattern.permute.xlu0 0
      %564 = vperm.xlu0 %563, %v541
      %v565 = vpop.permute.xlu0 %564
      %566 = vset.pattern.permute.xlu0 0
      %567 = vperm.xlu0 %566, %v542
      %v568 = vpop.permute.xlu0 %567
      %569 = vset.pattern.permute.xlu0 0
      %570 = vperm.xlu0 %569, %v543
      %v571 = vpop.permute.xlu0 %570
      %v572 = vlaneseq
      %v573 = vshrl.u32 %v572, 7
      %v574 = vsub.s32 %v179, %v573
      %v575 = vrot.slane %v562, %v574
      %v576 = vlaneseq
      %v577 = vshrl.u32 %v576, 7
      %v578 = vsub.s32 %v179, %v577
      %v579 = vrot.slane %v565, %v578
      %v580 = vlaneseq
      %v581 = vshrl.u32 %v580, 7
      %v582 = vsub.s32 %v179, %v581
      %v583 = vrot.slane %v568, %v582
      %v584 = vlaneseq
      %v585 = vshrl.u32 %v584, 7
      %v586 = vsub.s32 %v179, %v585
      %v587 = vrot.slane %v571, %v586
      %v588 = vsel %vm303, %v579, %v575
      %v589 = vsel %vm305, %v583, %v588
      %v590 = vsel %vm307, %v587, %v589
      %v592 = vsub.f32 %v506, %v590
      %v593 = vmul.f32 %v592, 1.442695
      %v594 = vpow.pop %v593
      %v595 = vmul.f32 %v436, %v549
      %v596 = vmul.f32 %v437, %v551
      %v597 = vmul.f32 %v438, %v553
      %v598 = vmul.f32 %v439, %v555
      %v600 = vlaneseq
      %v601 = vshrl.u32 %v600, 7
      %v602 = vsub.s32 0, %v601
      %v603 = vrot.slane %v594, %v602
      %605 = vbcast.lane.b32.xlu0 %v603, 256
      %v606 = vpop.permute.xlu0 %605
      %v607 = vlaneseq
      %v608 = vshrl.u32 %v607, 7
      %v609 = vsub.s32 1, %v608
      %v610 = vrot.slane %v594, %v609
      %612 = vbcast.lane.b32.xlu0 %v610, 256
      %v613 = vpop.permute.xlu0 %612
      %v614 = vlaneseq
      %v615 = vshrl.u32 %v614, 7
      %v616 = vsub.s32 2, %v615
      %v617 = vrot.slane %v594, %v616
      %619 = vbcast.lane.b32.xlu0 %v617, 256
      %v620 = vpop.permute.xlu0 %619
      %v621 = vlaneseq
      %v622 = vshrl.u32 %v621, 7
      %v623 = vsub.s32 3, %v622
      %v624 = vrot.slane %v594, %v623
      %626 = vbcast.lane.b32.xlu0 %v624, 256
      %v627 = vpop.permute.xlu0 %626
      %v632 = vadd.f32 %v595, %v606
      %v633 = vadd.f32 %v596, %v613
      %v634 = vadd.f32 %v597, %v620
      %v635 = vadd.f32 %v598, %v627
      %v636 = vmul.f32 %v444, %v549
      %v637 = vmul.f32 %v445, %v551
      %v638 = vmul.f32 %v446, %v553
      %v639 = vmul.f32 %v447, %v555
      %v640 = vmul.f32 %v594, 2.0
      %v642 = vlaneseq
      %v643 = vshrl.u32 %v642, 7
      %v644 = vsub.s32 0, %v643
      %v645 = vrot.slane %v640, %v644
      %647 = vbcast.lane.b32.xlu0 %v645, 256
      %v648 = vpop.permute.xlu0 %647
      %v649 = vlaneseq
      %v650 = vshrl.u32 %v649, 7
      %v651 = vsub.s32 1, %v650
      %v652 = vrot.slane %v640, %v651
      %654 = vbcast.lane.b32.xlu0 %v652, 256
      %v655 = vpop.permute.xlu0 %654
      %v656 = vlaneseq
      %v657 = vshrl.u32 %v656, 7
      %v658 = vsub.s32 2, %v657
      %v659 = vrot.slane %v640, %v658
      %661 = vbcast.lane.b32.xlu0 %v659, 256
      %v662 = vpop.permute.xlu0 %661
      %v663 = vlaneseq
      %v664 = vshrl.u32 %v663, 7
      %v665 = vsub.s32 3, %v664
      %v666 = vrot.slane %v640, %v665
      %668 = vbcast.lane.b32.xlu0 %v666, 256
      %v669 = vpop.permute.xlu0 %668
      %v674 = vadd.f32 %v636, %v648
      %v675 = vadd.f32 %v637, %v655
      %v676 = vadd.f32 %v638, %v662
      %v677 = vadd.f32 %v639, %v669
      %v678 = vlaneseq
      %v679 = vshrl.u32 %v678, 7
      %v680 = vsub.s32 3, %v679
      %v681 = vrot.slane %v174, %v680
      %v682 = vlaneseq
      %v683 = vshrl.u32 %v682, 7
      %v684 = vsub.s32 3, %v683
      %v685 = vrot.slane %v175, %v684
      %v686 = vlaneseq
      %v687 = vshrl.u32 %v686, 7
      %v688 = vsub.s32 3, %v687
      %v689 = vrot.slane %v176, %v688
      %v690 = vlaneseq
      %v691 = vshrl.u32 %v690, 7
      %v692 = vsub.s32 3, %v691
      %v693 = vrot.slane %v177, %v692
      %vm698 = vcmask 1040384
      %v699 = vsel %vm698, %v681, 0.0
      %v700 = vsel %vm698, %v685, 0.0
      %v701 = vsel %vm698, %v689, 0.0
      %v702 = vsel %vm698, %v693, 0.0
      %v703 = vmul.f32 %v166, %v699
      %v704 = vmul.f32 %v167, %v700
      %v705 = vmul.f32 %v168, %v701
      %v706 = vmul.f32 %v169, %v702
      %v707 = vsel %vm184, %v703, 0.0
      %708 = vadd.xlane.f32.xlu0 %v707
      %v709 = vpop.xlane.xlu0 %708
      %v710 = vsel %vm184, %v704, 0.0
      %711 = vadd.xlane.f32.xlu0 %v710
      %v712 = vpop.xlane.xlu0 %711
      %v713 = vsel %vm184, %v705, 0.0
      %714 = vadd.xlane.f32.xlu0 %v713
      %v715 = vpop.xlane.xlu0 %714
      %v716 = vsel %vm184, %v706, 0.0
      %717 = vadd.xlane.f32.xlu0 %v716
      %v718 = vpop.xlane.xlu0 %717
      %v719 = vmul.f32 %v709, 0.0625
      %v720 = vmul.f32 %v712, 0.0625
      %v721 = vmul.f32 %v715, 0.0625
      %v722 = vmul.f32 %v718, 0.0625
      %vm723 = vcmp.lt.s32.totalorder %v179, 1
      %v728 = vlaneseq
      %v729 = vshrl.u32 %v728, 7
      %v730 = vsub.s32 %v179, %v729
      %v731 = vrot.slane %v719, %v730
      %v732 = vlaneseq
      %v733 = vshrl.u32 %v732, 7
      %v734 = vsub.s32 %v179, %v733
      %v735 = vrot.slane %v720, %v734
      %v736 = vlaneseq
      %v737 = vshrl.u32 %v736, 7
      %v738 = vsub.s32 %v179, %v737
      %v739 = vrot.slane %v721, %v738
      %v740 = vlaneseq
      %v741 = vshrl.u32 %v740, 7
      %v742 = vsub.s32 %v179, %v741
      %v743 = vrot.slane %v722, %v742
      %v744 = vsel %vm303, %v735, %v731
      %v745 = vsel %vm305, %v739, %v744
      %v746 = vsel %vm307, %v743, %v745
      %v748 = vsel %vm723, %v746, -1e+30
      %v750 = vlaneseq
      %v751 = vshrl.u32 %v750, 7
      %v752 = vsub.s32 0, %v751
      %v753 = vrot.slane %v748, %v752
      %755 = vbcast.lane.b32.xlu0 %v753, 256
      %v756 = vpop.permute.xlu0 %755
      %v757 = vlaneseq
      %v758 = vshrl.u32 %v757, 7
      %v759 = vsub.s32 1, %v758
      %v760 = vrot.slane %v748, %v759
      %762 = vbcast.lane.b32.xlu0 %v760, 256
      %v763 = vpop.permute.xlu0 %762
      %v764 = vlaneseq
      %v765 = vshrl.u32 %v764, 7
      %v766 = vsub.s32 2, %v765
      %v767 = vrot.slane %v748, %v766
      %769 = vbcast.lane.b32.xlu0 %v767, 256
      %v770 = vpop.permute.xlu0 %769
      %v771 = vlaneseq
      %v772 = vshrl.u32 %v771, 7
      %v773 = vsub.s32 3, %v772
      %v774 = vrot.slane %v748, %v773
      %776 = vbcast.lane.b32.xlu0 %v774, 256
      %v777 = vpop.permute.xlu0 %776
      %v782 = vmax.f32 %v540, %v756
      %v783 = vmax.f32 %v541, %v763
      %v784 = vmax.f32 %v542, %v770
      %v785 = vmax.f32 %v543, %v777
      %v786 = vsub.f32 %v540, %v782
      %v787 = vsub.f32 %v541, %v783
      %v788 = vsub.f32 %v542, %v784
      %v789 = vsub.f32 %v543, %v785
      %v790 = vmul.f32 %v786, 1.442695
      %v791 = vpow.pop %v790
      %v792 = vmul.f32 %v787, 1.442695
      %v793 = vpow.pop %v792
      %v794 = vmul.f32 %v788, 1.442695
      %v795 = vpow.pop %v794
      %v796 = vmul.f32 %v789, 1.442695
      %v797 = vpow.pop %v796
      %802 = vset.pattern.permute.xlu0 0
      %803 = vperm.xlu0 %802, %v782
      %v804 = vpop.permute.xlu0 %803
      %805 = vset.pattern.permute.xlu0 0
      %806 = vperm.xlu0 %805, %v783
      %v807 = vpop.permute.xlu0 %806
      %808 = vset.pattern.permute.xlu0 0
      %809 = vperm.xlu0 %808, %v784
      %v810 = vpop.permute.xlu0 %809
      %811 = vset.pattern.permute.xlu0 0
      %812 = vperm.xlu0 %811, %v785
      %v813 = vpop.permute.xlu0 %812
      %v814 = vlaneseq
      %v815 = vshrl.u32 %v814, 7
      %v816 = vsub.s32 %v179, %v815
      %v817 = vrot.slane %v804, %v816
      %v818 = vlaneseq
      %v819 = vshrl.u32 %v818, 7
      %v820 = vsub.s32 %v179, %v819
      %v821 = vrot.slane %v807, %v820
      %v822 = vlaneseq
      %v823 = vshrl.u32 %v822, 7
      %v824 = vsub.s32 %v179, %v823
      %v825 = vrot.slane %v810, %v824
      %v826 = vlaneseq
      %v827 = vshrl.u32 %v826, 7
      %v828 = vsub.s32 %v179, %v827
      %v829 = vrot.slane %v813, %v828
      %v830 = vsel %vm303, %v821, %v817
      %v831 = vsel %vm305, %v825, %v830
      %v832 = vsel %vm307, %v829, %v831
      %v834 = vsub.f32 %v748, %v832
      %v835 = vmul.f32 %v834, 1.442695
      %v836 = vpow.pop %v835
      %v837 = vmul.f32 %v632, %v791
      %v838 = vmul.f32 %v633, %v793
      %v839 = vmul.f32 %v634, %v795
      %v840 = vmul.f32 %v635, %v797
      %v842 = vlaneseq
      %v843 = vshrl.u32 %v842, 7
      %v844 = vsub.s32 0, %v843
      %v845 = vrot.slane %v836, %v844
      %847 = vbcast.lane.b32.xlu0 %v845, 256
      %v848 = vpop.permute.xlu0 %847
      %v849 = vlaneseq
      %v850 = vshrl.u32 %v849, 7
      %v851 = vsub.s32 1, %v850
      %v852 = vrot.slane %v836, %v851
      %854 = vbcast.lane.b32.xlu0 %v852, 256
      %v855 = vpop.permute.xlu0 %854
      %v856 = vlaneseq
      %v857 = vshrl.u32 %v856, 7
      %v858 = vsub.s32 2, %v857
      %v859 = vrot.slane %v836, %v858
      %861 = vbcast.lane.b32.xlu0 %v859, 256
      %v862 = vpop.permute.xlu0 %861
      %v863 = vlaneseq
      %v864 = vshrl.u32 %v863, 7
      %v865 = vsub.s32 3, %v864
      %v866 = vrot.slane %v836, %v865
      %868 = vbcast.lane.b32.xlu0 %v866, 256
      %v869 = vpop.permute.xlu0 %868
      %v874 = vadd.f32 %v837, %v848
      %v875 = vadd.f32 %v838, %v855
      %v876 = vadd.f32 %v839, %v862
      %v877 = vadd.f32 %v840, %v869
      %v878 = vmul.f32 %v674, %v791
      %v879 = vmul.f32 %v675, %v793
      %v880 = vmul.f32 %v676, %v795
      %v881 = vmul.f32 %v677, %v797
      %v882 = vmul.f32 %v836, 3.0
      %v884 = vlaneseq
      %v885 = vshrl.u32 %v884, 7
      %v886 = vsub.s32 0, %v885
      %v887 = vrot.slane %v882, %v886
      %889 = vbcast.lane.b32.xlu0 %v887, 256
      %v890 = vpop.permute.xlu0 %889
      %v891 = vlaneseq
      %v892 = vshrl.u32 %v891, 7
      %v893 = vsub.s32 1, %v892
      %v894 = vrot.slane %v882, %v893
      %896 = vbcast.lane.b32.xlu0 %v894, 256
      %v897 = vpop.permute.xlu0 %896
      %v898 = vlaneseq
      %v899 = vshrl.u32 %v898, 7
      %v900 = vsub.s32 2, %v899
      %v901 = vrot.slane %v882, %v900
      %903 = vbcast.lane.b32.xlu0 %v901, 256
      %v904 = vpop.permute.xlu0 %903
      %v905 = vlaneseq
      %v906 = vshrl.u32 %v905, 7
      %v907 = vsub.s32 3, %v906
      %v908 = vrot.slane %v882, %v907
      %910 = vbcast.lane.b32.xlu0 %v908, 256
      %v911 = vpop.permute.xlu0 %910
      %v916 = vadd.f32 %v878, %v890
      %v917 = vadd.f32 %v879, %v897
      %v918 = vadd.f32 %v880, %v904
      %v919 = vadd.f32 %v881, %v911
      %v920 = vrcp.pop %v874
      %v921 = vrcp.pop %v875
      %v922 = vrcp.pop %v876
      %v923 = vrcp.pop %v877
      %v924 = vmul.f32 %v916, %v920
      %v925 = vmul.f32 %v917, %v921
      %v926 = vmul.f32 %v918, %v922
      %v927 = vmul.f32 %v919, %v923
      %932 = vset.pattern.permute.xlu0 0
      %933 = vperm.xlu0 %932, %v924
      %v934 = vpop.permute.xlu0 %933
      %935 = vset.pattern.permute.xlu0 0
      %936 = vperm.xlu0 %935, %v925
      %v937 = vpop.permute.xlu0 %936
      %938 = vset.pattern.permute.xlu0 0
      %939 = vperm.xlu0 %938, %v926
      %v940 = vpop.permute.xlu0 %939
      %941 = vset.pattern.permute.xlu0 0
      %942 = vperm.xlu0 %941, %v927
      %v943 = vpop.permute.xlu0 %942
      %v944 = vlaneseq
      %v945 = vshrl.u32 %v944, 7
      %v946 = vsub.s32 %v179, %v945
      %v947 = vrot.slane %v934, %v946
      %v948 = vlaneseq
      %v949 = vshrl.u32 %v948, 7
      %v950 = vsub.s32 %v179, %v949
      %v951 = vrot.slane %v937, %v950
      %v952 = vlaneseq
      %v953 = vshrl.u32 %v952, 7
      %v954 = vsub.s32 %v179, %v953
      %v955 = vrot.slane %v940, %v954
      %v956 = vlaneseq
      %v957 = vshrl.u32 %v956, 7
      %v958 = vsub.s32 %v179, %v957
      %v959 = vrot.slane %v943, %v958
      %v960 = vsel %vm303, %v951, %v947
      %v961 = vsel %vm305, %v955, %v960
      %v962 = vsel %vm307, %v959, %v961
      %vm964 = vcmask 27648
      %965 = vst.msk [vmem:[%s161] sm:$0xf] %vm964, %v962
      %p966 = scmp.lt.s32.totalorder %s13, 1
      %s967 = scalar_select %p966, %s13, 1
      %s968 = smul.addr %s967, 4
      %s969 = scalar_lea.vmem %s2, %s968
      // Predicated region
      $region29: #{iasmnet_forward.16} parent=27 // pred_check
        %p970 = pneg %p83
      $region30: #{iasmnet_forward.16} parent=27 // pred_check_branch
        %972 = sbr.rel (%p970) target = $region32
      $region31: #{iasmnet_forward.16} parent=27 // pred_region
        _
      $region32: #{iasmnet_forward.16} parent=27 // pred_fallthru
        _
    $region28: #{iasmnet_forward.16} parent=5 // pred_fallthru
      _
    %p973 = scmp.le.s32.totalorder 2, %s8
    // Predicated region
    $region33: #{iasmnet_forward.16} parent=5 // pred_check
      %p974 = pneg %p973
    $region34: #{iasmnet_forward.16} parent=5 // pred_check_branch
      %976 = sbr.rel (%p974) target = $region36
    $region35: #{iasmnet_forward.16} parent=5 // pred_region
      %s977 = ssub.s32 %s8, 2
      // Predicated region
      $region37: #{iasmnet_forward.16} parent=35 // pred_check
        %p978 = pneg %p89
      $region38: #{iasmnet_forward.16} parent=35 // pred_check_branch
        %980 = sbr.rel (%p978) target = $region40
      $region39: #{iasmnet_forward.16} parent=35 // pred_region
        %p981 = scmp.lt.s32.totalorder %s14, 1
        %s982 = scalar_select %p981, %s14, 1
        %s983 = smul.addr %s982, 4
        %s984 = scalar_lea.vmem %s2, %s983
      $region40: #{iasmnet_forward.16} parent=35 // pred_fallthru
        _
    $region36: #{iasmnet_forward.16} parent=5 // pred_fallthru
      _
  $region6: #{iasmnet_forward.16} parent=0 // loop_footer
    %s12 = sadd.s32 1, %s8
  $region7: #{iasmnet_forward.16} parent=0 // loop_footer_branch
    %7 = sbr.rel target = $region3
  $region8: #{iasmnet_forward.16} parent=0 // loop_exit
    _

</llo_original>
